<compile_context>
chip_gen: v5e
topology: v5e:2x2
jax: 0.10.0
libtpu: 0.0.40
codegen_flags: <defaults>
</compile_context>

<pallas_src>
import functools

import jax
import jax.numpy as jnp
from jax import lax
from jax.experimental import pallas as pl
from jax.experimental.pallas import tpu as pltpu

_EPS = 1e-5


def _round_up(x, m):
    return (x + m - 1) // m * m


def _vmem_limit_bytes():
    # 128-MiB-VMEM parts (v4/v5e/v5p/v6e): larger resident tiles help the
    # mem-bound layers.  v7x (64 MiB) / unknown: conservative budget.
    try:
        kind = jax.devices()[0].device_kind.lower()
    except Exception:  # pragma: no cover
        kind = ""
    if any(t in kind for t in ("v4", "v5", "v6")):
        return 100 * 1024 * 1024
    return 48 * 1024 * 1024


_VMEM_LIMIT = _vmem_limit_bytes()


# --------------------------------------------------------------------------- kernel
def _conv_kernel(*refs, taps, cin_p, ho, wo, ws, m_tile, n_tiles,
                 norm, relu, tanh, has_res, has_bias, phases, eps):
    """Fused conv [+bias] [+InstanceNorm] [+ReLU] [+residual] [+tanh].

    refs (in order):
      x_ref    : (planes, L)        bf16  stride-parity plane stack (one sample)
      w_ref    : (rows, K_aug)      bf16  tap-stacked weights [+ bias column]
      r_ref    : (rows, M_pad)      bf16  residual            (only if has_res)
      o_ref    : (rows, M_pad)      out   output, pixels on lanes
      xcol_ref : (K_aug, m_tile)    bf16  VMEM im2col slab scratch
      acc_ref  : (rows, M_pad)      f32   VMEM conv-result scratch (only if norm)
    """
    x_ref, w_ref = refs[0], refs[1]
    i = 2
    r_ref = None
    if has_res:
        r_ref = refs[i]
        i += 1
    o_ref = refs[i]
    i += 1
    xcol_ref = refs[i]
    i += 1
    acc_ref = refs[i] if norm else None

    rows = o_ref.shape[0]
    ntaps = len(taps)
    unroll = n_tiles <= 4

    if has_bias:
        # constant ones row -> bias comes out of the single matmul
        xcol_ref[ntaps * cin_p:ntaps * cin_p + 1, :] = jnp.ones(
            (1, m_tile), dtype=x_ref.dtype)

    def assemble_and_dot(t):
        # im2col slab for this pixel tile, assembled from unit-stride windows
        # of the VMEM-resident plane stack (input data read once from HBM).
        for k, (r0, off) in enumerate(taps):
            xcol_ref[k * cin_p:(k + 1) * cin_p, :] = x_ref[
                r0:r0 + cin_p, pl.ds(off + t * m_tile, m_tile)]
        # one MXU matmul per tile: (rows, K_aug) @ (K_aug, m_tile) -> f32
        return jnp.dot(w_ref[...], xcol_ref[...],
                       preferred_element_type=jnp.float32)

    if norm:
        inv_n = 1.0 / float(phases * ho * wo)

        def pass1(t, carry):
            s1, s2 = carry
            acc = assemble_and_dot(t)
            start = pl.multiple_of(t * m_tile, 128)
            # validity mask (hides width-padding + M-padding garbage columns)
            flat = start + lax.broadcasted_iota(jnp.int32, (1, m_tile), 1)
            valid = jnp.logical_and(flat % ws < wo, flat < ho * ws)
            mask = valid.astype(jnp.float32)
            am = acc * mask
            s1 = s1 + jnp.sum(am, axis=-1, keepdims=True)
            s2 = s2 + jnp.sum(acc * am, axis=-1, keepdims=True)
            acc_ref[:, pl.ds(start, m_tile)] = acc
            return s1, s2

        zero = jnp.zeros((rows, 1), jnp.float32)
        s1, s2 = lax.fori_loop(0, n_tiles, pass1, (zero, zero), unroll=unroll)

        if phases > 1:
            # group stats across the `phases` stacked sub-pixel outputs of each
            # channel (rows are phase-major: row = p * Cout + oc).
            g = rows // phases
            gs, gq = s1[0:g, :], s2[0:g, :]
            for p in range(1, phases):
                gs = gs + s1[p * g:(p + 1) * g, :]
                gq = gq + s2[p * g:(p + 1) * g, :]
            s1 = jnp.concatenate([gs] * phases, axis=0)
            s2 = jnp.concatenate([gq] * phases, axis=0)

        mean = s1 * inv_n
        var = jnp.maximum(s2 * inv_n - mean * mean, 0.0)
        inv_std = lax.rsqrt(var + eps)

        def pass2(t, _):
            start = pl.multiple_of(t * m_tile, 128)
            y = (acc_ref[:, pl.ds(start, m_tile)] - mean) * inv_std
            if relu:
                y = jnp.maximum(y, 0.0)
            if has_res:
                y = y + r_ref[:, pl.ds(start, m_tile)].astype(jnp.float32)
            if tanh:
                y = jnp.tanh(y)
            o_ref[:, pl.ds(start, m_tile)] = y.astype(o_ref.dtype)
            return 0

        lax.fori_loop(0, n_tiles, pass2, 0, unroll=unroll)
    else:
        def pass0(t, _):
            acc = assemble_and_dot(t)
            start = pl.multiple_of(t * m_tile, 128)
            y = acc
            if relu:
                y = jnp.maximum(y, 0.0)
            if has_res:
                y = y + r_ref[:, pl.ds(start, m_tile)].astype(jnp.float32)
            if tanh:
                y = jnp.tanh(y)
            o_ref[:, pl.ds(start, m_tile)] = y.astype(o_ref.dtype)
            return 0

        lax.fori_loop(0, n_tiles, pass0, 0, unroll=unroll)


# --------------------------------------------------------------------------- wrapper
def conv2d_fused(x, w, b=None, *, stride=1, padding=((0, 0), (0, 0)),
                 pad_mode="zero", norm=False, relu=False, tanh=False,
                 residual=None, phases=1, out_dtype=jnp.bfloat16, eps=_EPS):
    """PyTorch-semantics Conv2d (NCHW) with fused epilogues in one Pallas kernel."""
    N, Cin, H, W = x.shape
    R, _, kh, kw = w.shape          # R = total output rows (Cout, or phases*Cout)
    s = stride
    has_res = residual is not None
    # Bias is a mathematical no-op before InstanceNorm2d(affine=False) -> skip it.
    has_bias = (b is not None) and (not norm)

    mode = "reflect" if pad_mode == "reflect" else "constant"
    xpad = jnp.pad(x, ((0, 0), (0, 0), padding[0], padding[1]), mode=mode)
    Hp, Wp = xpad.shape[2], xpad.shape[3]
    Ho = (Hp - kh) // s + 1
    Wo = (Wp - kw) // s + 1
    Hs = (kh - 1) // s + Ho
    Ws = (kw - 1) // s + Wo

    cin_p = _round_up(Cin, 8)       # sublane-aligned channel blocks

    # pixel tiling (lane-dense: m_tile and M_pad are multiples of 128)
    M_valid = Ho * Ws
    m_tile = min(512, _round_up(M_valid, 128))
    n_tiles = pl.cdiv(M_valid, m_tile)
    M_pad = n_tiles * m_tile

    # tap table: (plane row start, lane offset) per (ky, kx), row-major
    taps = []
    for ky in range(kh):
        for kx in range(kw):
            pi = (ky % s) * s + (kx % s)
            off = (ky // s) * Ws + (kx // s)
            taps.append((pi * cin_p, off))
    max_off = max(off for _, off in taps)
    L = _round_up(max_off + M_pad, 128)

    # stride-parity plane stack (input re-laid-out exactly once, bf16)
    # TODO(synk): persist this layout (and the reflect/zero halo) across layers
    # to delete the per-layer XLA pad/relayout passes entirely.
    xpad = jnp.pad(xpad, ((0, 0), (0, cin_p - Cin),
                          (0, s * Hs - Hp), (0, s * Ws - Wp)))
    planes = xpad.reshape(N, cin_p, Hs, s, Ws, s).transpose(0, 3, 5, 1, 2, 4)
    planes = planes.reshape(N, s * s * cin_p, Hs * Ws)
    planes = jnp.pad(planes, ((0, 0), (0, 0), (0, L - Hs * Ws)))
    planes = planes.astype(jnp.bfloat16)

    # tap-stacked weight (tap-major, channel-minor) [+ bias column]
    w_p = jnp.pad(w, ((0, 0), (0, cin_p - Cin), (0, 0), (0, 0)))
    w_stk = jnp.transpose(w_p, (0, 2, 3, 1)).reshape(R, kh * kw * cin_p)
    if has_bias:
        w_stk = jnp.concatenate([w_stk, b.reshape(R, 1)], axis=1)
    w_stk = w_stk.astype(jnp.bfloat16)
    K_aug = w_stk.shape[1]

    # channel-axis grid tiling: second parallel axis (v7x 2 TCs) + bounded blocks.
    if phases == 1 and R > 128 and R % 128 == 0:
        cout_tile = 128
    else:
        cout_tile = R
    c_tiles = R // cout_tile

    inputs = [planes, w_stk]
    in_specs = [
        pl.BlockSpec((None, s * s * cin_p, L), lambda n, c: (n, 0, 0)),
        pl.BlockSpec((cout_tile, K_aug), lambda n, c: (c, 0)),
    ]
    if has_res:
        rpad = jnp.pad(residual.astype(jnp.bfloat16),
                       ((0, 0), (0, 0), (0, 0), (0, Ws - Wo)))
        rpad = rpad.reshape(N, R, M_valid)
        rpad = jnp.pad(rpad, ((0, 0), (0, 0), (0, M_pad - M_valid)))
        inputs.append(rpad)
        in_specs.append(pl.BlockSpec((None, cout_tile, M_pad),
                                     lambda n, c: (n, c, 0)))

    scratch = [pltpu.VMEM((K_aug, m_tile), jnp.bfloat16)]        # im2col slab
    if norm:
        scratch.append(pltpu.VMEM((cout_tile, M_pad), jnp.float32))

    kern = functools.partial(
        _conv_kernel, taps=tuple(taps), cin_p=cin_p, ho=Ho, wo=Wo, ws=Ws,
        m_tile=m_tile, n_tiles=n_tiles, norm=norm, relu=relu, tanh=tanh,
        has_res=has_res, has_bias=has_bias, phases=phases, eps=eps)

    out = pl.pallas_call(
        kern,
        out_shape=jax.ShapeDtypeStruct((N, R, M_pad), out_dtype),
        grid=(N, c_tiles),
        in_specs=in_specs,
        out_specs=pl.BlockSpec((None, cout_tile, M_pad), lambda n, c: (n, c, 0)),
        scratch_shapes=scratch,
        compiler_params=pltpu.CompilerParams(
            dimension_semantics=("parallel", "parallel"),
            vmem_limit_bytes=_VMEM_LIMIT),
    )(*inputs)

    # TODO(synk): for very large images, add an H-tile grid axis with a
    # (kh-1)-row halo so per-step blocks stay within v7x's 64 MiB VMEM.
    out = out[:, :, :M_valid].reshape(N, R, Ho, Ws)
    if Ws != Wo:
        out = out[:, :, :, :Wo]
    return out


def conv_transpose2d_fused(x, w_t, b):
    """ConvTranspose2d(k=3, s=2, p=1, output_padding=1) + InstanceNorm + ReLU,
    fused into ONE kernel via the 4-phase subpixel decomposition (phase-major
    stacked output rows, norm stats grouped across phases in the epilogue).
    Only the final phase interleave (a pure permutation) stays in XLA.
    Note: the bias `b` is a no-op before InstanceNorm(affine=False)."""
    N, Cin, H, W = x.shape
    wc = jnp.transpose(w_t, (1, 0, 2, 3))          # (Cout, Cin, 3, 3)
    Cout = wc.shape[0]
    z = jnp.zeros_like(wc[:, :, 0, 0])

    def ph(t00, t01, t10, t11):                    # -> (Cout, Cin, 2, 2)
        return jnp.stack([jnp.stack([t00, t01], axis=-1),
                          jnp.stack([t10, t11], axis=-1)], axis=-2)

    # phase-major stacked 2x2 conv weight over the (right/bottom zero-padded) input
    w_stk = jnp.concatenate([
        ph(wc[:, :, 1, 1], z, z, z),                                    # (2a,   2b)
        ph(wc[:, :, 1, 2], wc[:, :, 1, 0], z, z),                       # (2a,   2b+1)
        ph(wc[:, :, 2, 1], z, wc[:, :, 0, 1], z),                       # (2a+1, 2b)
        ph(wc[:, :, 2, 2], wc[:, :, 2, 0], wc[:, :, 0, 2], wc[:, :, 0, 0]),
    ], axis=0)                                      # (4*Cout, Cin, 2, 2)

    y = conv2d_fused(x, w_stk, None, stride=1, padding=((0, 1), (0, 1)),
                     pad_mode="zero", norm=True, relu=True, phases=4)
    # (N, 4*Cout, H, W) -> interleave the 4 phases into (N, Cout, 2H, 2W)
    y = y.reshape(N, 2, 2, Cout, H, W).transpose(0, 3, 4, 1, 5, 2)
    return y.reshape(N, Cout, 2 * H, 2 * W)


# --------------------------------------------------------------------------- model
def init_params(key, input_nc=3, output_nc=3, ngf=8, n_blocks=2, n_downsampling=2):
    ks = iter(jax.random.split(key, 64))

    def w_init(k_, shape):
        return jax.random.normal(k_, shape, jnp.float32) * 0.02

    def b_init(k_, c):
        return jax.random.normal(k_, (c,), jnp.float32) * 0.02

    params = {
        "c0_w": w_init(next(ks), (ngf, input_nc, 7, 7)),
        "c0_b": b_init(next(ks), ngf),
    }
    params["down"] = []
    for i in range(n_downsampling):
        mult = 2 ** i
        params["down"].append(
            (w_init(next(ks), (ngf * mult * 2, ngf * mult, 3, 3)),
             b_init(next(ks), ngf * mult * 2)))
    mult = 2 ** n_downsampling
    params["blocks"] = []
    for _ in range(n_blocks):
        params["blocks"].append(
            (w_init(next(ks), (ngf * mult, ngf * mult, 3, 3)), b_init(next(ks), ngf * mult),
             w_init(next(ks), (ngf * mult, ngf * mult, 3, 3)), b_init(next(ks), ngf * mult)))
    params["up"] = []
    for i in range(n_downsampling):
        m = 2 ** (n_downsampling - i)
        cin, cout = ngf * m, ngf * m // 2
        # ConvTranspose2d weight layout: (in_channels, out_channels, k, k)
        params["up"].append((w_init(next(ks), (cin, cout, 3, 3)), b_init(next(ks), cout)))
    params["cf_w"] = w_init(next(ks), (output_nc, ngf, 7, 7))
    params["cf_b"] = b_init(next(ks), output_nc)
    return params


def resnet_generator_forward(params, x):
    # ReflectionPad2d(3) -> Conv2d(input_nc, ngf, 7) -> InstanceNorm -> ReLU (fused)
    h = conv2d_fused(x, params["c0_w"], params["c0_b"],
                     padding=((3, 3), (3, 3)), pad_mode="reflect",
                     norm=True, relu=True)
    # Downsampling: Conv2d(k=3, s=2, p=1) -> norm -> ReLU (fused)
    for w, b in params["down"]:
        h = conv2d_fused(h, w, b, stride=2, padding=((1, 1), (1, 1)),
                         pad_mode="zero", norm=True, relu=True)
    # Resnet blocks: (reflect-pad conv norm relu) (reflect-pad conv norm) + skip.
    # TODO(synk): fuse the two convs of each block into one kernel with the
    # intermediate activation kept in a VMEM scratch (reflect halo built in-kernel).
    for w1, b1, w2, b2 in params["blocks"]:
        y = conv2d_fused(h, w1, b1, padding=((1, 1), (1, 1)), pad_mode="reflect",
                         norm=True, relu=True)
        h = conv2d_fused(y, w2, b2, padding=((1, 1), (1, 1)), pad_mode="reflect",
                         norm=True, relu=False, residual=h)
    # Upsampling: ConvTranspose2d(k=3,s=2,p=1,op=1) -> norm -> ReLU (single fused kernel)
    for w, b in params["up"]:
        h = conv_transpose2d_fused(h, w, b)
    # ReflectionPad2d(3) -> Conv2d(ngf, output_nc, 7) -> Tanh (fused, f32 output)
    h = conv2d_fused(h, params["cf_w"], params["cf_b"],
                     padding=((3, 3), (3, 3)), pad_mode="reflect",
                     norm=False, relu=False, tanh=True, out_dtype=jnp.float32)
    return h


if __name__ == "__main__":
    key = jax.random.PRNGKey(0)
    k_param, k_input = jax.random.split(key)

    # Small, shape-consistent configuration: input_nc=3, output_nc=3, ngf=8, n_blocks=2.
    INPUT_NC, OUTPUT_NC, NGF, N_BLOCKS = 3, 3, 8, 2
    params = init_params(k_param, input_nc=INPUT_NC, output_nc=OUTPUT_NC,
                         ngf=NGF, n_blocks=N_BLOCKS)

    x = jax.random.normal(k_input, (2, INPUT_NC, 16, 16), jnp.float32)  # NCHW

    fwd = jax.jit(resnet_generator_forward)
    out = fwd(params, x)
    out = jax.block_until_ready(out)

    assert out.shape == (2, OUTPUT_NC, 16, 16), out.shape
    assert bool(jnp.all(jnp.isfinite(out)))
    assert bool(jnp.all(jnp.abs(out) <= 1.0))  # tanh output range
    print("KERNEL_OK")
</pallas_src>

<mosaic_0001>
module attributes {stable_mosaic.version = 11 : i64} {
  func.func @_conv_kernel(%arg0: i32, %arg1: i32, %arg2: memref<1x8x640xbf16, #tpu.memory_space<vmem>>, %arg3: memref<8x392xbf16, #tpu.memory_space<vmem>>, %arg4: memref<1x8x384xbf16, #tpu.memory_space<vmem>>, %arg5: memref<392x384xbf16, #tpu.memory_space<vmem>>, %arg6: memref<8x384xf32, #tpu.memory_space<vmem>>) attributes {dimension_semantics = [#tpu.dimension_semantics<parallel>, #tpu.dimension_semantics<parallel>], iteration_bounds = array<i64: 2, 1>, scalar_prefetch = 0 : i64, scratch_operands = 2 : i64, tpu.core_type = #tpu.core_type<tc>, window_params = [{transform_indices = @transform_0, window_bounds = array<i64: 1, 8, 640>}, {transform_indices = @transform_1, window_bounds = array<i64: 8, 392>}, {transform_indices = @transform_2, window_bounds = array<i64: 1, 8, 384>}]} {
    %cst = arith.constant 0.000000e+00 : f32
    %0 = vector.broadcast %cst : f32 to vector<8x1xf32>
    %c0_i32 = arith.constant 0 : i32
    %c384_i32 = arith.constant 384 : i32
    %1 = arith.muli %c0_i32, %c384_i32 : i32
    %c0_i32_0 = arith.constant 0 : i32
    %2 = arith.addi %c0_i32_0, %1 : i32
    %c0 = arith.constant 0 : index
    %c0_1 = arith.constant 0 : index
    %3 = arith.index_cast %2 : i32 to index
    %4 = vector.load %arg2[%c0, %c0_1, %3] : memref<1x8x640xbf16, #tpu.memory_space<vmem>>, vector<1x8x384xbf16>
    %5 = vector.shape_cast %4 : vector<1x8x384xbf16> to vector<8x384xbf16>
    %c0_2 = arith.constant 0 : index
    %c0_3 = arith.constant 0 : index
    %6 = vector.load %arg5[%c0_2, %c0_3] : memref<392x384xbf16, #tpu.memory_space<vmem>>, vector<8x384xbf16>
    tpu.vector_store %arg5[%c0_2, %c0_3], %5 {strides = array<i32>} : memref<392x384xbf16, #tpu.memory_space<vmem>>, vector<8x384xbf16>,
    %c384_i32_4 = arith.constant 384 : i32
    %7 = arith.muli %c0_i32, %c384_i32_4 : i32
    %c1_i32 = arith.constant 1 : i32
    %8 = arith.addi %c1_i32, %7 : i32
    %c0_5 = arith.constant 0 : index
    %c0_6 = arith.constant 0 : index
    %9 = arith.index_cast %8 : i32 to index
    %10 = vector.load %arg2[%c0_5, %c0_6, %9] : memref<1x8x640xbf16, #tpu.memory_space<vmem>>, vector<1x8x384xbf16>
    %11 = vector.shape_cast %10 : vector<1x8x384xbf16> to vector<8x384xbf16>
    %c8 = arith.constant 8 : index
    %c0_7 = arith.constant 0 : index
    %12 = vector.load %arg5[%c8, %c0_7] : memref<392x384xbf16, #tpu.memory_space<vmem>>, vector<8x384xbf16>
    tpu.vector_store %arg5[%c8, %c0_7], %11 {strides = array<i32>} : memref<392x384xbf16, #tpu.memory_space<vmem>>, vector<8x384xbf16>,
    %c384_i32_8 = arith.constant 384 : i32
    %13 = arith.muli %c0_i32, %c384_i32_8 : i32
    %c2_i32 = arith.constant 2 : i32
    %14 = arith.addi %c2_i32, %13 : i32
    %c0_9 = arith.constant 0 : index
    %c0_10 = arith.constant 0 : index
    %15 = arith.index_cast %14 : i32 to index
    %16 = vector.load %arg2[%c0_9, %c0_10, %15] : memref<1x8x640xbf16, #tpu.memory_space<vmem>>, vector<1x8x384xbf16>
    %17 = vector.shape_cast %16 : vector<1x8x384xbf16> to vector<8x384xbf16>
    %c16 = arith.constant 16 : index
    %c0_11 = arith.constant 0 : index
    %18 = vector.load %arg5[%c16, %c0_11] : memref<392x384xbf16, #tpu.memory_space<vmem>>, vector<8x384xbf16>
    tpu.vector_store %arg5[%c16, %c0_11], %17 {strides = array<i32>} : memref<392x384xbf16, #tpu.memory_space<vmem>>, vector<8x384xbf16>,
    %c384_i32_12 = arith.constant 384 : i32
    %19 = arith.muli %c0_i32, %c384_i32_12 : i32
    %c3_i32 = arith.constant 3 : i32
    %20 = arith.addi %c3_i32, %19 : i32
    %c0_13 = arith.constant 0 : index
    %c0_14 = arith.constant 0 : index
    %21 = arith.index_cast %20 : i32 to index
    %22 = vector.load %arg2[%c0_13, %c0_14, %21] : memref<1x8x640xbf16, #tpu.memory_space<vmem>>, vector<1x8x384xbf16>
    %23 = vector.shape_cast %22 : vector<1x8x384xbf16> to vector<8x384xbf16>
    %c24 = arith.constant 24 : index
    %c0_15 = arith.constant 0 : index
    %24 = vector.load %arg5[%c24, %c0_15] : memref<392x384xbf16, #tpu.memory_space<vmem>>, vector<8x384xbf16>
    tpu.vector_store %arg5[%c24, %c0_15], %23 {strides = array<i32>} : memref<392x384xbf16, #tpu.memory_space<vmem>>, vector<8x384xbf16>,
    %c384_i32_16 = arith.constant 384 : i32
    %25 = arith.muli %c0_i32, %c384_i32_16 : i32
    %c4_i32 = arith.constant 4 : i32
    %26 = arith.addi %c4_i32, %25 : i32
    %c0_17 = arith.constant 0 : index
    %c0_18 = arith.constant 0 : index
    %27 = arith.index_cast %26 : i32 to index
    %28 = vector.load %arg2[%c0_17, %c0_18, %27] : memref<1x8x640xbf16, #tpu.memory_space<vmem>>, vector<1x8x384xbf16>
    %29 = vector.shape_cast %28 : vector<1x8x384xbf16> to vector<8x384xbf16>
    %c32 = arith.constant 32 : index
    %c0_19 = arith.constant 0 : index
    %30 = vector.load %arg5[%c32, %c0_19] : memref<392x384xbf16, #tpu.memory_space<vmem>>, vector<8x384xbf16>
    tpu.vector_store %arg5[%c32, %c0_19], %29 {strides = array<i32>} : memref<392x384xbf16, #tpu.memory_space<vmem>>, vector<8x384xbf16>,
    %c384_i32_20 = arith.constant 384 : i32
    %31 = arith.muli %c0_i32, %c384_i32_20 : i32
    %c5_i32 = arith.constant 5 : i32
    %32 = arith.addi %c5_i32, %31 : i32
    %c0_21 = arith.constant 0 : index
    %c0_22 = arith.constant 0 : index
    %33 = arith.index_cast %32 : i32 to index
    %34 = vector.load %arg2[%c0_21, %c0_22, %33] : memref<1x8x640xbf16, #tpu.memory_space<vmem>>, vector<1x8x384xbf16>
    %35 = vector.shape_cast %34 : vector<1x8x384xbf16> to vector<8x384xbf16>
    %c40 = arith.constant 40 : index
    %c0_23 = arith.constant 0 : index
    %36 = vector.load %arg5[%c40, %c0_23] : memref<392x384xbf16, #tpu.memory_space<vmem>>, vector<8x384xbf16>
    tpu.vector_store %arg5[%c40, %c0_23], %35 {strides = array<i32>} : memref<392x384xbf16, #tpu.memory_space<vmem>>, vector<8x384xbf16>,
    %c384_i32_24 = arith.constant 384 : i32
    %37 = arith.muli %c0_i32, %c384_i32_24 : i32
    %c6_i32 = arith.constant 6 : i32
    %38 = arith.addi %c6_i32, %37 : i32
    %c0_25 = arith.constant 0 : index
    %c0_26 = arith.constant 0 : index
    %39 = arith.index_cast %38 : i32 to index
    %40 = vector.load %arg2[%c0_25, %c0_26, %39] : memref<1x8x640xbf16, #tpu.memory_space<vmem>>, vector<1x8x384xbf16>
    %41 = vector.shape_cast %40 : vector<1x8x384xbf16> to vector<8x384xbf16>
    %c48 = arith.constant 48 : index
    %c0_27 = arith.constant 0 : index
    %42 = vector.load %arg5[%c48, %c0_27] : memref<392x384xbf16, #tpu.memory_space<vmem>>, vector<8x384xbf16>
    tpu.vector_store %arg5[%c48, %c0_27], %41 {strides = array<i32>} : memref<392x384xbf16, #tpu.memory_space<vmem>>, vector<8x384xbf16>,
    %c384_i32_28 = arith.constant 384 : i32
    %43 = arith.muli %c0_i32, %c384_i32_28 : i32
    %c22_i32 = arith.constant 22 : i32
    %44 = arith.addi %c22_i32, %43 : i32
    %c0_29 = arith.constant 0 : index
    %c0_30 = arith.constant 0 : index
    %45 = arith.index_cast %44 : i32 to index
    %46 = vector.load %arg2[%c0_29, %c0_30, %45] : memref<1x8x640xbf16, #tpu.memory_space<vmem>>, vector<1x8x384xbf16>
    %47 = vector.shape_cast %46 : vector<1x8x384xbf16> to vector<8x384xbf16>
    %c56 = arith.constant 56 : index
    %c0_31 = arith.constant 0 : index
    %48 = vector.load %arg5[%c56, %c0_31] : memref<392x384xbf16, #tpu.memory_space<vmem>>, vector<8x384xbf16>
    tpu.vector_store %arg5[%c56, %c0_31], %47 {strides = array<i32>} : memref<392x384xbf16, #tpu.memory_space<vmem>>, vector<8x384xbf16>,
    %c384_i32_32 = arith.constant 384 : i32
    %49 = arith.muli %c0_i32, %c384_i32_32 : i32
    %c23_i32 = arith.constant 23 : i32
    %50 = arith.addi %c23_i32, %49 : i32
    %c0_33 = arith.constant 0 : index
    %c0_34 = arith.constant 0 : index
    %51 = arith.index_cast %50 : i32 to index
    %52 = vector.load %arg2[%c0_33, %c0_34, %51] : memref<1x8x640xbf16, #tpu.memory_space<vmem>>, vector<1x8x384xbf16>
    %53 = vector.shape_cast %52 : vector<1x8x384xbf16> to vector<8x384xbf16>
    %c64 = arith.constant 64 : index
    %c0_35 = arith.constant 0 : index
    %54 = vector.load %arg5[%c64, %c0_35] : memref<392x384xbf16, #tpu.memory_space<vmem>>, vector<8x384xbf16>
    tpu.vector_store %arg5[%c64, %c0_35], %53 {strides = array<i32>} : memref<392x384xbf16, #tpu.memory_space<vmem>>, vector<8x384xbf16>,
    %c384_i32_36 = arith.constant 384 : i32
    %55 = arith.muli %c0_i32, %c384_i32_36 : i32
    %c24_i32 = arith.constant 24 : i32
    %56 = arith.addi %c24_i32, %55 : i32
    %c0_37 = arith.constant 0 : index
    %c0_38 = arith.constant 0 : index
    %57 = arith.index_cast %56 : i32 to index
    %58 = vector.load %arg2[%c0_37, %c0_38, %57] : memref<1x8x640xbf16, #tpu.memory_space<vmem>>, vector<1x8x384xbf16>
    %59 = vector.shape_cast %58 : vector<1x8x384xbf16> to vector<8x384xbf16>
    %c72 = arith.constant 72 : index
    %c0_39 = arith.constant 0 : index
    %60 = vector.load %arg5[%c72, %c0_39] : memref<392x384xbf16, #tpu.memory_space<vmem>>, vector<8x384xbf16>
    tpu.vector_store %arg5[%c72, %c0_39], %59 {strides = array<i32>} : memref<392x384xbf16, #tpu.memory_space<vmem>>, vector<8x384xbf16>,
    %c384_i32_40 = arith.constant 384 : i32
    %61 = arith.muli %c0_i32, %c384_i32_40 : i32
    %c25_i32 = arith.constant 25 : i32
    %62 = arith.addi %c25_i32, %61 : i32
    %c0_41 = arith.constant 0 : index
    %c0_42 = arith.constant 0 : index
    %63 = arith.index_cast %62 : i32 to index
    %64 = vector.load %arg2[%c0_41, %c0_42, %63] : memref<1x8x640xbf16, #tpu.memory_space<vmem>>, vector<1x8x384xbf16>
    %65 = vector.shape_cast %64 : vector<1x8x384xbf16> to vector<8x384xbf16>
    %c80 = arith.constant 80 : index
    %c0_43 = arith.constant 0 : index
    %66 = vector.load %arg5[%c80, %c0_43] : memref<392x384xbf16, #tpu.memory_space<vmem>>, vector<8x384xbf16>
    tpu.vector_store %arg5[%c80, %c0_43], %65 {strides = array<i32>} : memref<392x384xbf16, #tpu.memory_space<vmem>>, vector<8x384xbf16>,
    %c384_i32_44 = arith.constant 384 : i32
    %67 = arith.muli %c0_i32, %c384_i32_44 : i32
    %c26_i32 = arith.constant 26 : i32
    %68 = arith.addi %c26_i32, %67 : i32
    %c0_45 = arith.constant 0 : index
    %c0_46 = arith.constant 0 : index
    %69 = arith.index_cast %68 : i32 to index
    %70 = vector.load %arg2[%c0_45, %c0_46, %69] : memref<1x8x640xbf16, #tpu.memory_space<vmem>>, vector<1x8x384xbf16>
    %71 = vector.shape_cast %70 : vector<1x8x384xbf16> to vector<8x384xbf16>
    %c88 = arith.constant 88 : index
    %c0_47 = arith.constant 0 : index
    %72 = vector.load %arg5[%c88, %c0_47] : memref<392x384xbf16, #tpu.memory_space<vmem>>, vector<8x384xbf16>
    tpu.vector_store %arg5[%c88, %c0_47], %71 {strides = array<i32>} : memref<392x384xbf16, #tpu.memory_space<vmem>>, vector<8x384xbf16>,
    %c384_i32_48 = arith.constant 384 : i32
    %73 = arith.muli %c0_i32, %c384_i32_48 : i32
    %c27_i32 = arith.constant 27 : i32
    %74 = arith.addi %c27_i32, %73 : i32
    %c0_49 = arith.constant 0 : index
    %c0_50 = arith.constant 0 : index
    %75 = arith.index_cast %74 : i32 to index
    %76 = vector.load %arg2[%c0_49, %c0_50, %75] : memref<1x8x640xbf16, #tpu.memory_space<vmem>>, vector<1x8x384xbf16>
    %77 = vector.shape_cast %76 : vector<1x8x384xbf16> to vector<8x384xbf16>
    %c96 = arith.constant 96 : index
    %c0_51 = arith.constant 0 : index
    %78 = vector.load %arg5[%c96, %c0_51] : memref<392x384xbf16, #tpu.memory_space<vmem>>, vector<8x384xbf16>
    tpu.vector_store %arg5[%c96, %c0_51], %77 {strides = array<i32>} : memref<392x384xbf16, #tpu.memory_space<vmem>>, vector<8x384xbf16>,
    %c384_i32_52 = arith.constant 384 : i32
    %79 = arith.muli %c0_i32, %c384_i32_52 : i32
    %c28_i32 = arith.constant 28 : i32
    %80 = arith.addi %c28_i32, %79 : i32
    %c0_53 = arith.constant 0 : index
    %c0_54 = arith.constant 0 : index
    %81 = arith.index_cast %80 : i32 to index
    %82 = vector.load %arg2[%c0_53, %c0_54, %81] : memref<1x8x640xbf16, #tpu.memory_space<vmem>>, vector<1x8x384xbf16>
    %83 = vector.shape_cast %82 : vector<1x8x384xbf16> to vector<8x384xbf16>
    %c104 = arith.constant 104 : index
    %c0_55 = arith.constant 0 : index
    %84 = vector.load %arg5[%c104, %c0_55] : memref<392x384xbf16, #tpu.memory_space<vmem>>, vector<8x384xbf16>
    tpu.vector_store %arg5[%c104, %c0_55], %83 {strides = array<i32>} : memref<392x384xbf16, #tpu.memory_space<vmem>>, vector<8x384xbf16>,
    %c384_i32_56 = arith.constant 384 : i32
    %85 = arith.muli %c0_i32, %c384_i32_56 : i32
    %c44_i32 = arith.constant 44 : i32
    %86 = arith.addi %c44_i32, %85 : i32
    %c0_57 = arith.constant 0 : index
    %c0_58 = arith.constant 0 : index
    %87 = arith.index_cast %86 : i32 to index
    %88 = vector.load %arg2[%c0_57, %c0_58, %87] : memref<1x8x640xbf16, #tpu.memory_space<vmem>>, vector<1x8x384xbf16>
    %89 = vector.shape_cast %88 : vector<1x8x384xbf16> to vector<8x384xbf16>
    %c112 = arith.constant 112 : index
    %c0_59 = arith.constant 0 : index
    %90 = vector.load %arg5[%c112, %c0_59] : memref<392x384xbf16, #tpu.memory_space<vmem>>, vector<8x384xbf16>
    tpu.vector_store %arg5[%c112, %c0_59], %89 {strides = array<i32>} : memref<392x384xbf16, #tpu.memory_space<vmem>>, vector<8x384xbf16>,
    %c384_i32_60 = arith.constant 384 : i32
    %91 = arith.muli %c0_i32, %c384_i32_60 : i32
    %c45_i32 = arith.constant 45 : i32
    %92 = arith.addi %c45_i32, %91 : i32
    %c0_61 = arith.constant 0 : index
    %c0_62 = arith.constant 0 : index
    %93 = arith.index_cast %92 : i32 to index
    %94 = vector.load %arg2[%c0_61, %c0_62, %93] : memref<1x8x640xbf16, #tpu.memory_space<vmem>>, vector<1x8x384xbf16>
    %95 = vector.shape_cast %94 : vector<1x8x384xbf16> to vector<8x384xbf16>
    %c120 = arith.constant 120 : index
    %c0_63 = arith.constant 0 : index
    %96 = vector.load %arg5[%c120, %c0_63] : memref<392x384xbf16, #tpu.memory_space<vmem>>, vector<8x384xbf16>
    tpu.vector_store %arg5[%c120, %c0_63], %95 {strides = array<i32>} : memref<392x384xbf16, #tpu.memory_space<vmem>>, vector<8x384xbf16>,
    %c384_i32_64 = arith.constant 384 : i32
    %97 = arith.muli %c0_i32, %c384_i32_64 : i32
    %c46_i32 = arith.constant 46 : i32
    %98 = arith.addi %c46_i32, %97 : i32
    %c0_65 = arith.constant 0 : index
    %c0_66 = arith.constant 0 : index
    %99 = arith.index_cast %98 : i32 to index
    %100 = vector.load %arg2[%c0_65, %c0_66, %99] : memref<1x8x640xbf16, #tpu.memory_space<vmem>>, vector<1x8x384xbf16>
    %101 = vector.shape_cast %100 : vector<1x8x384xbf16> to vector<8x384xbf16>
    %c128 = arith.constant 128 : index
    %c0_67 = arith.constant 0 : index
    %102 = vector.load %arg5[%c128, %c0_67] : memref<392x384xbf16, #tpu.memory_space<vmem>>, vector<8x384xbf16>
    tpu.vector_store %arg5[%c128, %c0_67], %101 {strides = array<i32>} : memref<392x384xbf16, #tpu.memory_space<vmem>>, vector<8x384xbf16>,
    %c384_i32_68 = arith.constant 384 : i32
    %103 = arith.muli %c0_i32, %c384_i32_68 : i32
    %c47_i32 = arith.constant 47 : i32
    %104 = arith.addi %c47_i32, %103 : i32
    %c0_69 = arith.constant 0 : index
    %c0_70 = arith.constant 0 : index
    %105 = arith.index_cast %104 : i32 to index
    %106 = vector.load %arg2[%c0_69, %c0_70, %105] : memref<1x8x640xbf16, #tpu.memory_space<vmem>>, vector<1x8x384xbf16>
    %107 = vector.shape_cast %106 : vector<1x8x384xbf16> to vector<8x384xbf16>
    %c136 = arith.constant 136 : index
    %c0_71 = arith.constant 0 : index
    %108 = vector.load %arg5[%c136, %c0_71] : memref<392x384xbf16, #tpu.memory_space<vmem>>, vector<8x384xbf16>
    tpu.vector_store %arg5[%c136, %c0_71], %107 {strides = array<i32>} : memref<392x384xbf16, #tpu.memory_space<vmem>>, vector<8x384xbf16>,
    %c384_i32_72 = arith.constant 384 : i32
    %109 = arith.muli %c0_i32, %c384_i32_72 : i32
    %c48_i32 = arith.constant 48 : i32
    %110 = arith.addi %c48_i32, %109 : i32
    %c0_73 = arith.constant 0 : index
    %c0_74 = arith.constant 0 : index
    %111 = arith.index_cast %110 : i32 to index
    %112 = vector.load %arg2[%c0_73, %c0_74, %111] : memref<1x8x640xbf16, #tpu.memory_space<vmem>>, vector<1x8x384xbf16>
    %113 = vector.shape_cast %112 : vector<1x8x384xbf16> to vector<8x384xbf16>
    %c144 = arith.constant 144 : index
    %c0_75 = arith.constant 0 : index
    %114 = vector.load %arg5[%c144, %c0_75] : memref<392x384xbf16, #tpu.memory_space<vmem>>, vector<8x384xbf16>
    tpu.vector_store %arg5[%c144, %c0_75], %113 {strides = array<i32>} : memref<392x384xbf16, #tpu.memory_space<vmem>>, vector<8x384xbf16>,
    %c384_i32_76 = arith.constant 384 : i32
    %115 = arith.muli %c0_i32, %c384_i32_76 : i32
    %c49_i32 = arith.constant 49 : i32
    %116 = arith.addi %c49_i32, %115 : i32
    %c0_77 = arith.constant 0 : index
    %c0_78 = arith.constant 0 : index
    %117 = arith.index_cast %116 : i32 to index
    %118 = vector.load %arg2[%c0_77, %c0_78, %117] : memref<1x8x640xbf16, #tpu.memory_space<vmem>>, vector<1x8x384xbf16>
    %119 = vector.shape_cast %118 : vector<1x8x384xbf16> to vector<8x384xbf16>
    %c152 = arith.constant 152 : index
    %c0_79 = arith.constant 0 : index
    %120 = vector.load %arg5[%c152, %c0_79] : memref<392x384xbf16, #tpu.memory_space<vmem>>, vector<8x384xbf16>
    tpu.vector_store %arg5[%c152, %c0_79], %119 {strides = array<i32>} : memref<392x384xbf16, #tpu.memory_space<vmem>>, vector<8x384xbf16>,
    %c384_i32_80 = arith.constant 384 : i32
    %121 = arith.muli %c0_i32, %c384_i32_80 : i32
    %c50_i32 = arith.constant 50 : i32
    %122 = arith.addi %c50_i32, %121 : i32
    %c0_81 = arith.constant 0 : index
    %c0_82 = arith.constant 0 : index
    %123 = arith.index_cast %122 : i32 to index
    %124 = vector.load %arg2[%c0_81, %c0_82, %123] : memref<1x8x640xbf16, #tpu.memory_space<vmem>>, vector<1x8x384xbf16>
    %125 = vector.shape_cast %124 : vector<1x8x384xbf16> to vector<8x384xbf16>
    %c160 = arith.constant 160 : index
    %c0_83 = arith.constant 0 : index
    %126 = vector.load %arg5[%c160, %c0_83] : memref<392x384xbf16, #tpu.memory_space<vmem>>, vector<8x384xbf16>
    tpu.vector_store %arg5[%c160, %c0_83], %125 {strides = array<i32>} : memref<392x384xbf16, #tpu.memory_space<vmem>>, vector<8x384xbf16>,
    %c384_i32_84 = arith.constant 384 : i32
    %127 = arith.muli %c0_i32, %c384_i32_84 : i32
    %c66_i32 = arith.constant 66 : i32
    %128 = arith.addi %c66_i32, %127 : i32
    %c0_85 = arith.constant 0 : index
    %c0_86 = arith.constant 0 : index
    %129 = arith.index_cast %128 : i32 to index
    %130 = vector.load %arg2[%c0_85, %c0_86, %129] : memref<1x8x640xbf16, #tpu.memory_space<vmem>>, vector<1x8x384xbf16>
    %131 = vector.shape_cast %130 : vector<1x8x384xbf16> to vector<8x384xbf16>
    %c168 = arith.constant 168 : index
    %c0_87 = arith.constant 0 : index
    %132 = vector.load %arg5[%c168, %c0_87] : memref<392x384xbf16, #tpu.memory_space<vmem>>, vector<8x384xbf16>
    tpu.vector_store %arg5[%c168, %c0_87], %131 {strides = array<i32>} : memref<392x384xbf16, #tpu.memory_space<vmem>>, vector<8x384xbf16>,
    %c384_i32_88 = arith.constant 384 : i32
    %133 = arith.muli %c0_i32, %c384_i32_88 : i32
    %c67_i32 = arith.constant 67 : i32
    %134 = arith.addi %c67_i32, %133 : i32
    %c0_89 = arith.constant 0 : index
    %c0_90 = arith.constant 0 : index
    %135 = arith.index_cast %134 : i32 to index
    %136 = vector.load %arg2[%c0_89, %c0_90, %135] : memref<1x8x640xbf16, #tpu.memory_space<vmem>>, vector<1x8x384xbf16>
    %137 = vector.shape_cast %136 : vector<1x8x384xbf16> to vector<8x384xbf16>
    %c176 = arith.constant 176 : index
    %c0_91 = arith.constant 0 : index
    %138 = vector.load %arg5[%c176, %c0_91] : memref<392x384xbf16, #tpu.memory_space<vmem>>, vector<8x384xbf16>
    tpu.vector_store %arg5[%c176, %c0_91], %137 {strides = array<i32>} : memref<392x384xbf16, #tpu.memory_space<vmem>>, vector<8x384xbf16>,
    %c384_i32_92 = arith.constant 384 : i32
    %139 = arith.muli %c0_i32, %c384_i32_92 : i32
    %c68_i32 = arith.constant 68 : i32
    %140 = arith.addi %c68_i32, %139 : i32
    %c0_93 = arith.constant 0 : index
    %c0_94 = arith.constant 0 : index
    %141 = arith.index_cast %140 : i32 to index
    %142 = vector.load %arg2[%c0_93, %c0_94, %141] : memref<1x8x640xbf16, #tpu.memory_space<vmem>>, vector<1x8x384xbf16>
    %143 = vector.shape_cast %142 : vector<1x8x384xbf16> to vector<8x384xbf16>
    %c184 = arith.constant 184 : index
    %c0_95 = arith.constant 0 : index
    %144 = vector.load %arg5[%c184, %c0_95] : memref<392x384xbf16, #tpu.memory_space<vmem>>, vector<8x384xbf16>
    tpu.vector_store %arg5[%c184, %c0_95], %143 {strides = array<i32>} : memref<392x384xbf16, #tpu.memory_space<vmem>>, vector<8x384xbf16>,
    %c384_i32_96 = arith.constant 384 : i32
    %145 = arith.muli %c0_i32, %c384_i32_96 : i32
    %c69_i32 = arith.constant 69 : i32
    %146 = arith.addi %c69_i32, %145 : i32
    %c0_97 = arith.constant 0 : index
    %c0_98 = arith.constant 0 : index
    %147 = arith.index_cast %146 : i32 to index
    %148 = vector.load %arg2[%c0_97, %c0_98, %147] : memref<1x8x640xbf16, #tpu.memory_space<vmem>>, vector<1x8x384xbf16>
    %149 = vector.shape_cast %148 : vector<1x8x384xbf16> to vector<8x384xbf16>
    %c192 = arith.constant 192 : index
    %c0_99 = arith.constant 0 : index
    %150 = vector.load %arg5[%c192, %c0_99] : memref<392x384xbf16, #tpu.memory_space<vmem>>, vector<8x384xbf16>
    tpu.vector_store %arg5[%c192, %c0_99], %149 {strides = array<i32>} : memref<392x384xbf16, #tpu.memory_space<vmem>>, vector<8x384xbf16>,
    %c384_i32_100 = arith.constant 384 : i32
    %151 = arith.muli %c0_i32, %c384_i32_100 : i32
    %c70_i32 = arith.constant 70 : i32
    %152 = arith.addi %c70_i32, %151 : i32
    %c0_101 = arith.constant 0 : index
    %c0_102 = arith.constant 0 : index
    %153 = arith.index_cast %152 : i32 to index
    %154 = vector.load %arg2[%c0_101, %c0_102, %153] : memref<1x8x640xbf16, #tpu.memory_space<vmem>>, vector<1x8x384xbf16>
    %155 = vector.shape_cast %154 : vector<1x8x384xbf16> to vector<8x384xbf16>
    %c200 = arith.constant 200 : index
    %c0_103 = arith.constant 0 : index
    %156 = vector.load %arg5[%c200, %c0_103] : memref<392x384xbf16, #tpu.memory_space<vmem>>, vector<8x384xbf16>
    tpu.vector_store %arg5[%c200, %c0_103], %155 {strides = array<i32>} : memref<392x384xbf16, #tpu.memory_space<vmem>>, vector<8x384xbf16>,
    %c384_i32_104 = arith.constant 384 : i32
    %157 = arith.muli %c0_i32, %c384_i32_104 : i32
    %c71_i32 = arith.constant 71 : i32
    %158 = arith.addi %c71_i32, %157 : i32
    %c0_105 = arith.constant 0 : index
    %c0_106 = arith.constant 0 : index
    %159 = arith.index_cast %158 : i32 to index
    %160 = vector.load %arg2[%c0_105, %c0_106, %159] : memref<1x8x640xbf16, #tpu.memory_space<vmem>>, vector<1x8x384xbf16>
    %161 = vector.shape_cast %160 : vector<1x8x384xbf16> to vector<8x384xbf16>
    %c208 = arith.constant 208 : index
    %c0_107 = arith.constant 0 : index
    %162 = vector.load %arg5[%c208, %c0_107] : memref<392x384xbf16, #tpu.memory_space<vmem>>, vector<8x384xbf16>
    tpu.vector_store %arg5[%c208, %c0_107], %161 {strides = array<i32>} : memref<392x384xbf16, #tpu.memory_space<vmem>>, vector<8x384xbf16>,
    %c384_i32_108 = arith.constant 384 : i32
    %163 = arith.muli %c0_i32, %c384_i32_108 : i32
    %c72_i32 = arith.constant 72 : i32
    %164 = arith.addi %c72_i32, %163 : i32
    %c0_109 = arith.constant 0 : index
    %c0_110 = arith.constant 0 : index
    %165 = arith.index_cast %164 : i32 to index
    %166 = vector.load %arg2[%c0_109, %c0_110, %165] : memref<1x8x640xbf16, #tpu.memory_space<vmem>>, vector<1x8x384xbf16>
    %167 = vector.shape_cast %166 : vector<1x8x384xbf16> to vector<8x384xbf16>
    %c216 = arith.constant 216 : index
    %c0_111 = arith.constant 0 : index
    %168 = vector.load %arg5[%c216, %c0_111] : memref<392x384xbf16, #tpu.memory_space<vmem>>, vector<8x384xbf16>
    tpu.vector_store %arg5[%c216, %c0_111], %167 {strides = array<i32>} : memref<392x384xbf16, #tpu.memory_space<vmem>>, vector<8x384xbf16>,
    %c384_i32_112 = arith.constant 384 : i32
    %169 = arith.muli %c0_i32, %c384_i32_112 : i32
    %c88_i32 = arith.constant 88 : i32
    %170 = arith.addi %c88_i32, %169 : i32
    %c0_113 = arith.constant 0 : index
    %c0_114 = arith.constant 0 : index
    %171 = arith.index_cast %170 : i32 to index
    %172 = vector.load %arg2[%c0_113, %c0_114, %171] : memref<1x8x640xbf16, #tpu.memory_space<vmem>>, vector<1x8x384xbf16>
    %173 = vector.shape_cast %172 : vector<1x8x384xbf16> to vector<8x384xbf16>
    %c224 = arith.constant 224 : index
    %c0_115 = arith.constant 0 : index
    %174 = vector.load %arg5[%c224, %c0_115] : memref<392x384xbf16, #tpu.memory_space<vmem>>, vector<8x384xbf16>
    tpu.vector_store %arg5[%c224, %c0_115], %173 {strides = array<i32>} : memref<392x384xbf16, #tpu.memory_space<vmem>>, vector<8x384xbf16>,
    %c384_i32_116 = arith.constant 384 : i32
    %175 = arith.muli %c0_i32, %c384_i32_116 : i32
    %c89_i32 = arith.constant 89 : i32
    %176 = arith.addi %c89_i32, %175 : i32
    %c0_117 = arith.constant 0 : index
    %c0_118 = arith.constant 0 : index
    %177 = arith.index_cast %176 : i32 to index
    %178 = vector.load %arg2[%c0_117, %c0_118, %177] : memref<1x8x640xbf16, #tpu.memory_space<vmem>>, vector<1x8x384xbf16>
    %179 = vector.shape_cast %178 : vector<1x8x384xbf16> to vector<8x384xbf16>
    %c232 = arith.constant 232 : index
    %c0_119 = arith.constant 0 : index
    %180 = vector.load %arg5[%c232, %c0_119] : memref<392x384xbf16, #tpu.memory_space<vmem>>, vector<8x384xbf16>
    tpu.vector_store %arg5[%c232, %c0_119], %179 {strides = array<i32>} : memref<392x384xbf16, #tpu.memory_space<vmem>>, vector<8x384xbf16>,
    %c384_i32_120 = arith.constant 384 : i32
    %181 = arith.muli %c0_i32, %c384_i32_120 : i32
    %c90_i32 = arith.constant 90 : i32
    %182 = arith.addi %c90_i32, %181 : i32
    %c0_121 = arith.constant 0 : index
    %c0_122 = arith.constant 0 : index
    %183 = arith.index_cast %182 : i32 to index
    %184 = vector.load %arg2[%c0_121, %c0_122, %183] : memref<1x8x640xbf16, #tpu.memory_space<vmem>>, vector<1x8x384xbf16>
    %185 = vector.shape_cast %184 : vector<1x8x384xbf16> to vector<8x384xbf16>
    %c240 = arith.constant 240 : index
    %c0_123 = arith.constant 0 : index
    %186 = vector.load %arg5[%c240, %c0_123] : memref<392x384xbf16, #tpu.memory_space<vmem>>, vector<8x384xbf16>
    tpu.vector_store %arg5[%c240, %c0_123], %185 {strides = array<i32>} : memref<392x384xbf16, #tpu.memory_space<vmem>>, vector<8x384xbf16>,
    %c384_i32_124 = arith.constant 384 : i32
    %187 = arith.muli %c0_i32, %c384_i32_124 : i32
    %c91_i32 = arith.constant 91 : i32
    %188 = arith.addi %c91_i32, %187 : i32
    %c0_125 = arith.constant 0 : index
    %c0_126 = arith.constant 0 : index
    %189 = arith.index_cast %188 : i32 to index
    %190 = vector.load %arg2[%c0_125, %c0_126, %189] : memref<1x8x640xbf16, #tpu.memory_space<vmem>>, vector<1x8x384xbf16>
    %191 = vector.shape_cast %190 : vector<1x8x384xbf16> to vector<8x384xbf16>
    %c248 = arith.constant 248 : index
    %c0_127 = arith.constant 0 : index
    %192 = vector.load %arg5[%c248, %c0_127] : memref<392x384xbf16, #tpu.memory_space<vmem>>, vector<8x384xbf16>
    tpu.vector_store %arg5[%c248, %c0_127], %191 {strides = array<i32>} : memref<392x384xbf16, #tpu.memory_space<vmem>>, vector<8x384xbf16>,
    %c384_i32_128 = arith.constant 384 : i32
    %193 = arith.muli %c0_i32, %c384_i32_128 : i32
    %c92_i32 = arith.constant 92 : i32
    %194 = arith.addi %c92_i32, %193 : i32
    %c0_129 = arith.constant 0 : index
    %c0_130 = arith.constant 0 : index
    %195 = arith.index_cast %194 : i32 to index
    %196 = vector.load %arg2[%c0_129, %c0_130, %195] : memref<1x8x640xbf16, #tpu.memory_space<vmem>>, vector<1x8x384xbf16>
    %197 = vector.shape_cast %196 : vector<1x8x384xbf16> to vector<8x384xbf16>
    %c256 = arith.constant 256 : index
    %c0_131 = arith.constant 0 : index
    %198 = vector.load %arg5[%c256, %c0_131] : memref<392x384xbf16, #tpu.memory_space<vmem>>, vector<8x384xbf16>
    tpu.vector_store %arg5[%c256, %c0_131], %197 {strides = array<i32>} : memref<392x384xbf16, #tpu.memory_space<vmem>>, vector<8x384xbf16>,
    %c384_i32_132 = arith.constant 384 : i32
    %199 = arith.muli %c0_i32, %c384_i32_132 : i32
    %c93_i32 = arith.constant 93 : i32
    %200 = arith.addi %c93_i32, %199 : i32
    %c0_133 = arith.constant 0 : index
    %c0_134 = arith.constant 0 : index
    %201 = arith.index_cast %200 : i32 to index
    %202 = vector.load %arg2[%c0_133, %c0_134, %201] : memref<1x8x640xbf16, #tpu.memory_space<vmem>>, vector<1x8x384xbf16>
    %203 = vector.shape_cast %202 : vector<1x8x384xbf16> to vector<8x384xbf16>
    %c264 = arith.constant 264 : index
    %c0_135 = arith.constant 0 : index
    %204 = vector.load %arg5[%c264, %c0_135] : memref<392x384xbf16, #tpu.memory_space<vmem>>, vector<8x384xbf16>
    tpu.vector_store %arg5[%c264, %c0_135], %203 {strides = array<i32>} : memref<392x384xbf16, #tpu.memory_space<vmem>>, vector<8x384xbf16>,
    %c384_i32_136 = arith.constant 384 : i32
    %205 = arith.muli %c0_i32, %c384_i32_136 : i32
    %c94_i32 = arith.constant 94 : i32
    %206 = arith.addi %c94_i32, %205 : i32
    %c0_137 = arith.constant 0 : index
    %c0_138 = arith.constant 0 : index
    %207 = arith.index_cast %206 : i32 to index
    %208 = vector.load %arg2[%c0_137, %c0_138, %207] : memref<1x8x640xbf16, #tpu.memory_space<vmem>>, vector<1x8x384xbf16>
    %209 = vector.shape_cast %208 : vector<1x8x384xbf16> to vector<8x384xbf16>
    %c272 = arith.constant 272 : index
    %c0_139 = arith.constant 0 : index
    %210 = vector.load %arg5[%c272, %c0_139] : memref<392x384xbf16, #tpu.memory_space<vmem>>, vector<8x384xbf16>
    tpu.vector_store %arg5[%c272, %c0_139], %209 {strides = array<i32>} : memref<392x384xbf16, #tpu.memory_space<vmem>>, vector<8x384xbf16>,
    %c384_i32_140 = arith.constant 384 : i32
    %211 = arith.muli %c0_i32, %c384_i32_140 : i32
    %c110_i32 = arith.constant 110 : i32
    %212 = arith.addi %c110_i32, %211 : i32
    %c0_141 = arith.constant 0 : index
    %c0_142 = arith.constant 0 : index
    %213 = arith.index_cast %212 : i32 to index
    %214 = vector.load %arg2[%c0_141, %c0_142, %213] : memref<1x8x640xbf16, #tpu.memory_space<vmem>>, vector<1x8x384xbf16>
    %215 = vector.shape_cast %214 : vector<1x8x384xbf16> to vector<8x384xbf16>
    %c280 = arith.constant 280 : index
    %c0_143 = arith.constant 0 : index
    %216 = vector.load %arg5[%c280, %c0_143] : memref<392x384xbf16, #tpu.memory_space<vmem>>, vector<8x384xbf16>
    tpu.vector_store %arg5[%c280, %c0_143], %215 {strides = array<i32>} : memref<392x384xbf16, #tpu.memory_space<vmem>>, vector<8x384xbf16>,
    %c384_i32_144 = arith.constant 384 : i32
    %217 = arith.muli %c0_i32, %c384_i32_144 : i32
    %c111_i32 = arith.constant 111 : i32
    %218 = arith.addi %c111_i32, %217 : i32
    %c0_145 = arith.constant 0 : index
    %c0_146 = arith.constant 0 : index
    %219 = arith.index_cast %218 : i32 to index
    %220 = vector.load %arg2[%c0_145, %c0_146, %219] : memref<1x8x640xbf16, #tpu.memory_space<vmem>>, vector<1x8x384xbf16>
    %221 = vector.shape_cast %220 : vector<1x8x384xbf16> to vector<8x384xbf16>
    %c288 = arith.constant 288 : index
    %c0_147 = arith.constant 0 : index
    %222 = vector.load %arg5[%c288, %c0_147] : memref<392x384xbf16, #tpu.memory_space<vmem>>, vector<8x384xbf16>
    tpu.vector_store %arg5[%c288, %c0_147], %221 {strides = array<i32>} : memref<392x384xbf16, #tpu.memory_space<vmem>>, vector<8x384xbf16>,
    %c384_i32_148 = arith.constant 384 : i32
    %223 = arith.muli %c0_i32, %c384_i32_148 : i32
    %c112_i32 = arith.constant 112 : i32
    %224 = arith.addi %c112_i32, %223 : i32
    %c0_149 = arith.constant 0 : index
    %c0_150 = arith.constant 0 : index
    %225 = arith.index_cast %224 : i32 to index
    %226 = vector.load %arg2[%c0_149, %c0_150, %225] : memref<1x8x640xbf16, #tpu.memory_space<vmem>>, vector<1x8x384xbf16>
    %227 = vector.shape_cast %226 : vector<1x8x384xbf16> to vector<8x384xbf16>
    %c296 = arith.constant 296 : index
    %c0_151 = arith.constant 0 : index
    %228 = vector.load %arg5[%c296, %c0_151] : memref<392x384xbf16, #tpu.memory_space<vmem>>, vector<8x384xbf16>
    tpu.vector_store %arg5[%c296, %c0_151], %227 {strides = array<i32>} : memref<392x384xbf16, #tpu.memory_space<vmem>>, vector<8x384xbf16>,
    %c384_i32_152 = arith.constant 384 : i32
    %229 = arith.muli %c0_i32, %c384_i32_152 : i32
    %c113_i32 = arith.constant 113 : i32
    %230 = arith.addi %c113_i32, %229 : i32
    %c0_153 = arith.constant 0 : index
    %c0_154 = arith.constant 0 : index
    %231 = arith.index_cast %230 : i32 to index
    %232 = vector.load %arg2[%c0_153, %c0_154, %231] : memref<1x8x640xbf16, #tpu.memory_space<vmem>>, vector<1x8x384xbf16>
    %233 = vector.shape_cast %232 : vector<1x8x384xbf16> to vector<8x384xbf16>
    %c304 = arith.constant 304 : index
    %c0_155 = arith.constant 0 : index
    %234 = vector.load %arg5[%c304, %c0_155] : memref<392x384xbf16, #tpu.memory_space<vmem>>, vector<8x384xbf16>
    tpu.vector_store %arg5[%c304, %c0_155], %233 {strides = array<i32>} : memref<392x384xbf16, #tpu.memory_space<vmem>>, vector<8x384xbf16>,
    %c384_i32_156 = arith.constant 384 : i32
    %235 = arith.muli %c0_i32, %c384_i32_156 : i32
    %c114_i32 = arith.constant 114 : i32
    %236 = arith.addi %c114_i32, %235 : i32
    %c0_157 = arith.constant 0 : index
    %c0_158 = arith.constant 0 : index
    %237 = arith.index_cast %236 : i32 to index
    %238 = vector.load %arg2[%c0_157, %c0_158, %237] : memref<1x8x640xbf16, #tpu.memory_space<vmem>>, vector<1x8x384xbf16>
    %239 = vector.shape_cast %238 : vector<1x8x384xbf16> to vector<8x384xbf16>
    %c312 = arith.constant 312 : index
    %c0_159 = arith.constant 0 : index
    %240 = vector.load %arg5[%c312, %c0_159] : memref<392x384xbf16, #tpu.memory_space<vmem>>, vector<8x384xbf16>
    tpu.vector_store %arg5[%c312, %c0_159], %239 {strides = array<i32>} : memref<392x384xbf16, #tpu.memory_space<vmem>>, vector<8x384xbf16>,
    %c384_i32_160 = arith.constant 384 : i32
    %241 = arith.muli %c0_i32, %c384_i32_160 : i32
    %c115_i32 = arith.constant 115 : i32
    %242 = arith.addi %c115_i32, %241 : i32
    %c0_161 = arith.constant 0 : index
    %c0_162 = arith.constant 0 : index
    %243 = arith.index_cast %242 : i32 to index
    %244 = vector.load %arg2[%c0_161, %c0_162, %243] : memref<1x8x640xbf16, #tpu.memory_space<vmem>>, vector<1x8x384xbf16>
    %245 = vector.shape_cast %244 : vector<1x8x384xbf16> to vector<8x384xbf16>
    %c320 = arith.constant 320 : index
    %c0_163 = arith.constant 0 : index
    %246 = vector.load %arg5[%c320, %c0_163] : memref<392x384xbf16, #tpu.memory_space<vmem>>, vector<8x384xbf16>
    tpu.vector_store %arg5[%c320, %c0_163], %245 {strides = array<i32>} : memref<392x384xbf16, #tpu.memory_space<vmem>>, vector<8x384xbf16>,
    %c384_i32_164 = arith.constant 384 : i32
    %247 = arith.muli %c0_i32, %c384_i32_164 : i32
    %c116_i32 = arith.constant 116 : i32
    %248 = arith.addi %c116_i32, %247 : i32
    %c0_165 = arith.constant 0 : index
    %c0_166 = arith.constant 0 : index
    %249 = arith.index_cast %248 : i32 to index
    %250 = vector.load %arg2[%c0_165, %c0_166, %249] : memref<1x8x640xbf16, #tpu.memory_space<vmem>>, vector<1x8x384xbf16>
    %251 = vector.shape_cast %250 : vector<1x8x384xbf16> to vector<8x384xbf16>
    %c328 = arith.constant 328 : index
    %c0_167 = arith.constant 0 : index
    %252 = vector.load %arg5[%c328, %c0_167] : memref<392x384xbf16, #tpu.memory_space<vmem>>, vector<8x384xbf16>
    tpu.vector_store %arg5[%c328, %c0_167], %251 {strides = array<i32>} : memref<392x384xbf16, #tpu.memory_space<vmem>>, vector<8x384xbf16>,
    %c384_i32_168 = arith.constant 384 : i32
    %253 = arith.muli %c0_i32, %c384_i32_168 : i32
    %c132_i32 = arith.constant 132 : i32
    %254 = arith.addi %c132_i32, %253 : i32
    %c0_169 = arith.constant 0 : index
    %c0_170 = arith.constant 0 : index
    %255 = arith.index_cast %254 : i32 to index
    %256 = vector.load %arg2[%c0_169, %c0_170, %255] : memref<1x8x640xbf16, #tpu.memory_space<vmem>>, vector<1x8x384xbf16>
    %257 = vector.shape_cast %256 : vector<1x8x384xbf16> to vector<8x384xbf16>
    %c336 = arith.constant 336 : index
    %c0_171 = arith.constant 0 : index
    %258 = vector.load %arg5[%c336, %c0_171] : memref<392x384xbf16, #tpu.memory_space<vmem>>, vector<8x384xbf16>
    tpu.vector_store %arg5[%c336, %c0_171], %257 {strides = array<i32>} : memref<392x384xbf16, #tpu.memory_space<vmem>>, vector<8x384xbf16>,
    %c384_i32_172 = arith.constant 384 : i32
    %259 = arith.muli %c0_i32, %c384_i32_172 : i32
    %c133_i32 = arith.constant 133 : i32
    %260 = arith.addi %c133_i32, %259 : i32
    %c0_173 = arith.constant 0 : index
    %c0_174 = arith.constant 0 : index
    %261 = arith.index_cast %260 : i32 to index
    %262 = vector.load %arg2[%c0_173, %c0_174, %261] : memref<1x8x640xbf16, #tpu.memory_space<vmem>>, vector<1x8x384xbf16>
    %263 = vector.shape_cast %262 : vector<1x8x384xbf16> to vector<8x384xbf16>
    %c344 = arith.constant 344 : index
    %c0_175 = arith.constant 0 : index
    %264 = vector.load %arg5[%c344, %c0_175] : memref<392x384xbf16, #tpu.memory_space<vmem>>, vector<8x384xbf16>
    tpu.vector_store %arg5[%c344, %c0_175], %263 {strides = array<i32>} : memref<392x384xbf16, #tpu.memory_space<vmem>>, vector<8x384xbf16>,
    %c384_i32_176 = arith.constant 384 : i32
    %265 = arith.muli %c0_i32, %c384_i32_176 : i32
    %c134_i32 = arith.constant 134 : i32
    %266 = arith.addi %c134_i32, %265 : i32
    %c0_177 = arith.constant 0 : index
    %c0_178 = arith.constant 0 : index
    %267 = arith.index_cast %266 : i32 to index
    %268 = vector.load %arg2[%c0_177, %c0_178, %267] : memref<1x8x640xbf16, #tpu.memory_space<vmem>>, vector<1x8x384xbf16>
    %269 = vector.shape_cast %268 : vector<1x8x384xbf16> to vector<8x384xbf16>
    %c352 = arith.constant 352 : index
    %c0_179 = arith.constant 0 : index
    %270 = vector.load %arg5[%c352, %c0_179] : memref<392x384xbf16, #tpu.memory_space<vmem>>, vector<8x384xbf16>
    tpu.vector_store %arg5[%c352, %c0_179], %269 {strides = array<i32>} : memref<392x384xbf16, #tpu.memory_space<vmem>>, vector<8x384xbf16>,
    %c384_i32_180 = arith.constant 384 : i32
    %271 = arith.muli %c0_i32, %c384_i32_180 : i32
    %c135_i32 = arith.constant 135 : i32
    %272 = arith.addi %c135_i32, %271 : i32
    %c0_181 = arith.constant 0 : index
    %c0_182 = arith.constant 0 : index
    %273 = arith.index_cast %272 : i32 to index
    %274 = vector.load %arg2[%c0_181, %c0_182, %273] : memref<1x8x640xbf16, #tpu.memory_space<vmem>>, vector<1x8x384xbf16>
    %275 = vector.shape_cast %274 : vector<1x8x384xbf16> to vector<8x384xbf16>
    %c360 = arith.constant 360 : index
    %c0_183 = arith.constant 0 : index
    %276 = vector.load %arg5[%c360, %c0_183] : memref<392x384xbf16, #tpu.memory_space<vmem>>, vector<8x384xbf16>
    tpu.vector_store %arg5[%c360, %c0_183], %275 {strides = array<i32>} : memref<392x384xbf16, #tpu.memory_space<vmem>>, vector<8x384xbf16>,
    %c384_i32_184 = arith.constant 384 : i32
    %277 = arith.muli %c0_i32, %c384_i32_184 : i32
    %c136_i32 = arith.constant 136 : i32
    %278 = arith.addi %c136_i32, %277 : i32
    %c0_185 = arith.constant 0 : index
    %c0_186 = arith.constant 0 : index
    %279 = arith.index_cast %278 : i32 to index
    %280 = vector.load %arg2[%c0_185, %c0_186, %279] : memref<1x8x640xbf16, #tpu.memory_space<vmem>>, vector<1x8x384xbf16>
    %281 = vector.shape_cast %280 : vector<1x8x384xbf16> to vector<8x384xbf16>
    %c368 = arith.constant 368 : index
    %c0_187 = arith.constant 0 : index
    %282 = vector.load %arg5[%c368, %c0_187] : memref<392x384xbf16, #tpu.memory_space<vmem>>, vector<8x384xbf16>
    tpu.vector_store %arg5[%c368, %c0_187], %281 {strides = array<i32>} : memref<392x384xbf16, #tpu.memory_space<vmem>>, vector<8x384xbf16>,
    %c384_i32_188 = arith.constant 384 : i32
    %283 = arith.muli %c0_i32, %c384_i32_188 : i32
    %c137_i32 = arith.constant 137 : i32
    %284 = arith.addi %c137_i32, %283 : i32
    %c0_189 = arith.constant 0 : index
    %c0_190 = arith.constant 0 : index
    %285 = arith.index_cast %284 : i32 to index
    %286 = vector.load %arg2[%c0_189, %c0_190, %285] : memref<1x8x640xbf16, #tpu.memory_space<vmem>>, vector<1x8x384xbf16>
    %287 = vector.shape_cast %286 : vector<1x8x384xbf16> to vector<8x384xbf16>
    %c376 = arith.constant 376 : index
    %c0_191 = arith.constant 0 : index
    %288 = vector.load %arg5[%c376, %c0_191] : memref<392x384xbf16, #tpu.memory_space<vmem>>, vector<8x384xbf16>
    tpu.vector_store %arg5[%c376, %c0_191], %287 {strides = array<i32>} : memref<392x384xbf16, #tpu.memory_space<vmem>>, vector<8x384xbf16>,
    %c384_i32_192 = arith.constant 384 : i32
    %289 = arith.muli %c0_i32, %c384_i32_192 : i32
    %c138_i32 = arith.constant 138 : i32
    %290 = arith.addi %c138_i32, %289 : i32
    %c0_193 = arith.constant 0 : index
    %c0_194 = arith.constant 0 : index
    %291 = arith.index_cast %290 : i32 to index
    %292 = vector.load %arg2[%c0_193, %c0_194, %291] : memref<1x8x640xbf16, #tpu.memory_space<vmem>>, vector<1x8x384xbf16>
    %293 = vector.shape_cast %292 : vector<1x8x384xbf16> to vector<8x384xbf16>
    %c384 = arith.constant 384 : index
    %c0_195 = arith.constant 0 : index
    %294 = vector.load %arg5[%c384, %c0_195] : memref<392x384xbf16, #tpu.memory_space<vmem>>, vector<8x384xbf16>
    tpu.vector_store %arg5[%c384, %c0_195], %293 {strides = array<i32>} : memref<392x384xbf16, #tpu.memory_space<vmem>>, vector<8x384xbf16>,
    %c0_196 = arith.constant 0 : index
    %c0_197 = arith.constant 0 : index
    %295 = vector.load %arg3[%c0_196, %c0_197] : memref<8x392xbf16, #tpu.memory_space<vmem>>, vector<8x392xbf16>
    %c0_198 = arith.constant 0 : index
    %c0_199 = arith.constant 0 : index
    %296 = vector.load %arg5[%c0_198, %c0_199] : memref<392x384xbf16, #tpu.memory_space<vmem>>, vector<392x384xbf16>
    %cst_200 = arith.constant dense<0.000000e+00> : vector<8x384xf32>
    %297 = tpu.matmul %295, %296, %cst_200 {dimension_numbers = #tpu.dot_dimension_numbers<[1], [0], [0], [1], [0, 0, 1, 1], [], []>} : vector<8x392xbf16>, vector<392x384xbf16>, vector<8x384xf32> -> vector<8x384xf32>
    %c384_i32_201 = arith.constant 384 : i32
    %298 = arith.muli %c0_i32, %c384_i32_201 : i32
    %299 = tpu.assume_multiple %298, 128 : i32
    %300 = tpu.iota {dimensions = array<i32: 1>} : vector<1x384xi32>
    %301 = vector.broadcast %299 : i32 to vector<1x384xi32>
    %302 = arith.addi %301, %300 : vector<1x384xi32>
    %c22_i32_202 = arith.constant 22 : i32
    %c0_i32_203 = arith.constant 0 : i32
    %303 = arith.cmpi eq, %c22_i32_202, %c0_i32_203 : i32
    %c1_i32_204 = arith.constant 1 : i32
    %304 = arith.select %303, %c1_i32_204, %c22_i32_202 : i32
    %305 = vector.broadcast %304 : i32 to vector<1x384xi32>
    %306 = arith.remsi %302, %305 : vector<1x384xi32>
    %c0_i32_205 = arith.constant 0 : i32
    %307 = vector.broadcast %c0_i32_205 : i32 to vector<1x384xi32>
    %308 = arith.cmpi ne, %306, %307 : vector<1x384xi32>
    %c0_i32_206 = arith.constant 0 : i32
    %309 = vector.broadcast %c0_i32_206 : i32 to vector<1x384xi32>
    %310 = arith.cmpi slt, %306, %309 : vector<1x384xi32>
    %c0_i32_207 = arith.constant 0 : i32
    %311 = arith.cmpi slt, %304, %c0_i32_207 : i32
    %312 = vector.broadcast %311 : i1 to vector<1x384xi1>
    %313 = vector.broadcast %312 : vector<1x384xi1> to vector<1x384xi1>
    %314 = arith.xori %310, %313 : vector<1x384xi1>
    %315 = arith.andi %314, %308 : vector<1x384xi1>
    %316 = vector.broadcast %304 : i32 to vector<1x384xi32>
    %317 = arith.addi %306, %316 : vector<1x384xi32>
    %318 = arith.select %315, %317, %306 : vector<1x384xi1>, vector<1x384xi32>
    %c16_i32 = arith.constant 16 : i32
    %319 = vector.broadcast %c16_i32 : i32 to vector<1x384xi32>
    %320 = arith.cmpi slt, %318, %319 : vector<1x384xi32>
    %c352_i32 = arith.constant 352 : i32
    %321 = vector.broadcast %c352_i32 : i32 to vector<1x384xi32>
    %322 = arith.cmpi slt, %302, %321 : vector<1x384xi32>
    %323 = arith.andi %320, %322 : vector<1x384xi1>
    %324 = arith.extui %323 : vector<1x384xi1> to vector<1x384xi32>
    %325 = arith.sitofp %324 : vector<1x384xi32> to vector<1x384xf32>
    %326 = vector.broadcast %325 : vector<1x384xf32> to vector<8x384xf32>
    %327 = arith.mulf %297, %326 : vector<8x384xf32>
    %cst_208 = arith.constant dense<0.000000e+00> : vector<8xf32>
    %328 = vector.multi_reduction <add>, %327, %cst_208 [1] : vector<8x384xf32> to vector<8xf32>
    %329 = vector.shape_cast %328 : vector<8xf32> to vector<8x1xf32>
    %330 = arith.addf %0, %329 : vector<8x1xf32>
    %331 = arith.mulf %297, %327 : vector<8x384xf32>
    %cst_209 = arith.constant dense<0.000000e+00> : vector<8xf32>
    %332 = vector.multi_reduction <add>, %331, %cst_209 [1] : vector<8x384xf32> to vector<8xf32>
    %333 = vector.shape_cast %332 : vector<8xf32> to vector<8x1xf32>
    %334 = arith.addf %0, %333 : vector<8x1xf32>
    %c0_210 = arith.constant 0 : index
    %335 = arith.index_cast %299 : i32 to index
    %336 = vector.load %arg6[%c0_210, %335] : memref<8x384xf32, #tpu.memory_space<vmem>>, vector<8x384xf32>
    tpu.vector_store %arg6[%c0_210, %335], %297 {strides = array<i32>} : memref<8x384xf32, #tpu.memory_space<vmem>>, vector<8x384xf32>,
    %c1_i32_211 = arith.constant 1 : i32
    %cst_212 = arith.constant 3.906250e-03 : f32
    %337 = vector.broadcast %cst_212 : f32 to vector<8x1xf32>
    %338 = arith.mulf %330, %337 : vector<8x1xf32>
    %cst_213 = arith.constant 3.906250e-03 : f32
    %339 = vector.broadcast %cst_213 : f32 to vector<8x1xf32>
    %340 = arith.mulf %334, %339 : vector<8x1xf32>
    %341 = arith.mulf %338, %338 : vector<8x1xf32>
    %342 = arith.subf %340, %341 : vector<8x1xf32>
    %cst_214 = arith.constant 0.000000e+00 : f32
    %343 = vector.broadcast %cst_214 : f32 to vector<8x1xf32>
    %344 = arith.maximumf %342, %343 : vector<8x1xf32>
    %cst_215 = arith.constant 9.99999974E-6 : f32
    %345 = vector.broadcast %cst_215 : f32 to vector<8x1xf32>
    %346 = arith.addf %344, %345 : vector<8x1xf32>
    %347 = math.rsqrt %346 : vector<8x1xf32>
    %c0_i32_216 = arith.constant 0 : i32
    %c384_i32_217 = arith.constant 384 : i32
    %348 = arith.muli %c0_i32_216, %c384_i32_217 : i32
    %349 = tpu.assume_multiple %348, 128 : i32
    %c0_218 = arith.constant 0 : index
    %350 = arith.index_cast %349 : i32 to index
    %351 = vector.load %arg6[%c0_218, %350] : memref<8x384xf32, #tpu.memory_space<vmem>>, vector<8x384xf32>
    %352 = vector.broadcast %338 : vector<8x1xf32> to vector<8x384xf32>
    %353 = arith.subf %351, %352 : vector<8x384xf32>
    %354 = vector.broadcast %347 : vector<8x1xf32> to vector<8x384xf32>
    %355 = arith.mulf %353, %354 : vector<8x384xf32>
    %cst_219 = arith.constant 0.000000e+00 : f32
    %356 = vector.broadcast %cst_219 : f32 to vector<8x384xf32>
    %357 = arith.maximumf %355, %356 : vector<8x384xf32>
    %358 = arith.truncf %357 : vector<8x384xf32> to vector<8x384xbf16>
    %c0_220 = arith.constant 0 : index
    %c0_221 = arith.constant 0 : index
    %359 = arith.index_cast %349 : i32 to index
    %360 = vector.load %arg4[%c0_220, %c0_221, %359] : memref<1x8x384xbf16, #tpu.memory_space<vmem>>, vector<1x8x384xbf16>
    %361 = vector.shape_cast %360 : vector<1x8x384xbf16> to vector<8x384xbf16>
    %362 = vector.shape_cast %358 : vector<8x384xbf16> to vector<1x8x384xbf16>
    tpu.vector_store %arg4[%c0_220, %c0_221, %359], %362 {strides = array<i32>} : memref<1x8x384xbf16, #tpu.memory_space<vmem>>, vector<1x8x384xbf16>,
    %c1_i32_222 = arith.constant 1 : i32
    return
  }
  func.func @transform_0(%arg0: i32, %arg1: i32) -> (i32, i32, i32) {
    %c0_i32 = arith.constant 0 : i32
    %c0_i32_0 = arith.constant 0 : i32
    %c0_i32_1 = arith.constant 0 : i32
    return %arg0, %c0_i32, %c0_i32_0 : i32, i32, i32
  }
  func.func @transform_1(%arg0: i32, %arg1: i32) -> (i32, i32) {
    %c0_i32 = arith.constant 0 : i32
    %c0_i32_0 = arith.constant 0 : i32
    return %arg1, %c0_i32 : i32, i32
  }
  func.func @transform_2(%arg0: i32, %arg1: i32) -> (i32, i32, i32) {
    %c0_i32 = arith.constant 0 : i32
    %c0_i32_0 = arith.constant 0 : i32
    return %arg0, %arg1, %c0_i32 : i32, i32, i32
  }
}

module attributes {stable_mosaic.version = 11 : i64} {
  func.func @_conv_kernel(%arg0: i32, %arg1: i32, %arg2: memref<1x32x256xbf16, #tpu.memory_space<vmem>>, %arg3: memref<16x72xbf16, #tpu.memory_space<vmem>>, %arg4: memref<1x16x128xbf16, #tpu.memory_space<vmem>>, %arg5: memref<72x128xbf16, #tpu.memory_space<vmem>>, %arg6: memref<16x128xf32, #tpu.memory_space<vmem>>) attributes {dimension_semantics = [#tpu.dimension_semantics<parallel>, #tpu.dimension_semantics<parallel>], iteration_bounds = array<i64: 2, 1>, scalar_prefetch = 0 : i64, scratch_operands = 2 : i64, tpu.core_type = #tpu.core_type<tc>, window_params = [{transform_indices = @transform_0, window_bounds = array<i64: 1, 32, 256>}, {transform_indices = @transform_1, window_bounds = array<i64: 16, 72>}, {transform_indices = @transform_2, window_bounds = array<i64: 1, 16, 128>}]} {
    %cst = arith.constant 0.000000e+00 : f32
    %0 = vector.broadcast %cst : f32 to vector<16x1xf32>
    %c0_i32 = arith.constant 0 : i32
    %c128_i32 = arith.constant 128 : i32
    %1 = arith.muli %c0_i32, %c128_i32 : i32
    %c0_i32_0 = arith.constant 0 : i32
    %2 = arith.addi %c0_i32_0, %1 : i32
    %c0 = arith.constant 0 : index
    %c0_1 = arith.constant 0 : index
    %3 = arith.index_cast %2 : i32 to index
    %4 = vector.load %arg2[%c0, %c0_1, %3] : memref<1x32x256xbf16, #tpu.memory_space<vmem>>, vector<1x8x128xbf16>
    %5 = vector.shape_cast %4 : vector<1x8x128xbf16> to vector<8x128xbf16>
    %c0_2 = arith.constant 0 : index
    %c0_3 = arith.constant 0 : index
    %6 = vector.load %arg5[%c0_2, %c0_3] : memref<72x128xbf16, #tpu.memory_space<vmem>>, vector<8x128xbf16>
    tpu.vector_store %arg5[%c0_2, %c0_3], %5 {strides = array<i32>} : memref<72x128xbf16, #tpu.memory_space<vmem>>, vector<8x128xbf16>,
    %c128_i32_4 = arith.constant 128 : i32
    %7 = arith.muli %c0_i32, %c128_i32_4 : i32
    %c0_i32_5 = arith.constant 0 : i32
    %8 = arith.addi %c0_i32_5, %7 : i32
    %c0_6 = arith.constant 0 : index
    %c8 = arith.constant 8 : index
    %9 = arith.index_cast %8 : i32 to index
    %10 = vector.load %arg2[%c0_6, %c8, %9] : memref<1x32x256xbf16, #tpu.memory_space<vmem>>, vector<1x8x128xbf16>
    %11 = vector.shape_cast %10 : vector<1x8x128xbf16> to vector<8x128xbf16>
    %c8_7 = arith.constant 8 : index
    %c0_8 = arith.constant 0 : index
    %12 = vector.load %arg5[%c8_7, %c0_8] : memref<72x128xbf16, #tpu.memory_space<vmem>>, vector<8x128xbf16>
    tpu.vector_store %arg5[%c8_7, %c0_8], %11 {strides = array<i32>} : memref<72x128xbf16, #tpu.memory_space<vmem>>, vector<8x128xbf16>,
    %c128_i32_9 = arith.constant 128 : i32
    %13 = arith.muli %c0_i32, %c128_i32_9 : i32
    %c1_i32 = arith.constant 1 : i32
    %14 = arith.addi %c1_i32, %13 : i32
    %c0_10 = arith.constant 0 : index
    %c0_11 = arith.constant 0 : index
    %15 = arith.index_cast %14 : i32 to index
    %16 = vector.load %arg2[%c0_10, %c0_11, %15] : memref<1x32x256xbf16, #tpu.memory_space<vmem>>, vector<1x8x128xbf16>
    %17 = vector.shape_cast %16 : vector<1x8x128xbf16> to vector<8x128xbf16>
    %c16 = arith.constant 16 : index
    %c0_12 = arith.constant 0 : index
    %18 = vector.load %arg5[%c16, %c0_12] : memref<72x128xbf16, #tpu.memory_space<vmem>>, vector<8x128xbf16>
    tpu.vector_store %arg5[%c16, %c0_12], %17 {strides = array<i32>} : memref<72x128xbf16, #tpu.memory_space<vmem>>, vector<8x128xbf16>,
    %c128_i32_13 = arith.constant 128 : i32
    %19 = arith.muli %c0_i32, %c128_i32_13 : i32
    %c0_i32_14 = arith.constant 0 : i32
    %20 = arith.addi %c0_i32_14, %19 : i32
    %c0_15 = arith.constant 0 : index
    %c16_16 = arith.constant 16 : index
    %21 = arith.index_cast %20 : i32 to index
    %22 = vector.load %arg2[%c0_15, %c16_16, %21] : memref<1x32x256xbf16, #tpu.memory_space<vmem>>, vector<1x8x128xbf16>
    %23 = vector.shape_cast %22 : vector<1x8x128xbf16> to vector<8x128xbf16>
    %c24 = arith.constant 24 : index
    %c0_17 = arith.constant 0 : index
    %24 = vector.load %arg5[%c24, %c0_17] : memref<72x128xbf16, #tpu.memory_space<vmem>>, vector<8x128xbf16>
    tpu.vector_store %arg5[%c24, %c0_17], %23 {strides = array<i32>} : memref<72x128xbf16, #tpu.memory_space<vmem>>, vector<8x128xbf16>,
    %c128_i32_18 = arith.constant 128 : i32
    %25 = arith.muli %c0_i32, %c128_i32_18 : i32
    %c0_i32_19 = arith.constant 0 : i32
    %26 = arith.addi %c0_i32_19, %25 : i32
    %c0_20 = arith.constant 0 : index
    %c24_21 = arith.constant 24 : index
    %27 = arith.index_cast %26 : i32 to index
    %28 = vector.load %arg2[%c0_20, %c24_21, %27] : memref<1x32x256xbf16, #tpu.memory_space<vmem>>, vector<1x8x128xbf16>
    %29 = vector.shape_cast %28 : vector<1x8x128xbf16> to vector<8x128xbf16>
    %c32 = arith.constant 32 : index
    %c0_22 = arith.constant 0 : index
    %30 = vector.load %arg5[%c32, %c0_22] : memref<72x128xbf16, #tpu.memory_space<vmem>>, vector<8x128xbf16>
    tpu.vector_store %arg5[%c32, %c0_22], %29 {strides = array<i32>} : memref<72x128xbf16, #tpu.memory_space<vmem>>, vector<8x128xbf16>,
    %c128_i32_23 = arith.constant 128 : i32
    %31 = arith.muli %c0_i32, %c128_i32_23 : i32
    %c1_i32_24 = arith.constant 1 : i32
    %32 = arith.addi %c1_i32_24, %31 : i32
    %c0_25 = arith.constant 0 : index
    %c16_26 = arith.constant 16 : index
    %33 = arith.index_cast %32 : i32 to index
    %34 = vector.load %arg2[%c0_25, %c16_26, %33] : memref<1x32x256xbf16, #tpu.memory_space<vmem>>, vector<1x8x128xbf16>
    %35 = vector.shape_cast %34 : vector<1x8x128xbf16> to vector<8x128xbf16>
    %c40 = arith.constant 40 : index
    %c0_27 = arith.constant 0 : index
    %36 = vector.load %arg5[%c40, %c0_27] : memref<72x128xbf16, #tpu.memory_space<vmem>>, vector<8x128xbf16>
    tpu.vector_store %arg5[%c40, %c0_27], %35 {strides = array<i32>} : memref<72x128xbf16, #tpu.memory_space<vmem>>, vector<8x128xbf16>,
    %c128_i32_28 = arith.constant 128 : i32
    %37 = arith.muli %c0_i32, %c128_i32_28 : i32
    %c9_i32 = arith.constant 9 : i32
    %38 = arith.addi %c9_i32, %37 : i32
    %c0_29 = arith.constant 0 : index
    %c0_30 = arith.constant 0 : index
    %39 = arith.index_cast %38 : i32 to index
    %40 = vector.load %arg2[%c0_29, %c0_30, %39] : memref<1x32x256xbf16, #tpu.memory_space<vmem>>, vector<1x8x128xbf16>
    %41 = vector.shape_cast %40 : vector<1x8x128xbf16> to vector<8x128xbf16>
    %c48 = arith.constant 48 : index
    %c0_31 = arith.constant 0 : index
    %42 = vector.load %arg5[%c48, %c0_31] : memref<72x128xbf16, #tpu.memory_space<vmem>>, vector<8x128xbf16>
    tpu.vector_store %arg5[%c48, %c0_31], %41 {strides = array<i32>} : memref<72x128xbf16, #tpu.memory_space<vmem>>, vector<8x128xbf16>,
    %c128_i32_32 = arith.constant 128 : i32
    %43 = arith.muli %c0_i32, %c128_i32_32 : i32
    %c9_i32_33 = arith.constant 9 : i32
    %44 = arith.addi %c9_i32_33, %43 : i32
    %c0_34 = arith.constant 0 : index
    %c8_35 = arith.constant 8 : index
    %45 = arith.index_cast %44 : i32 to index
    %46 = vector.load %arg2[%c0_34, %c8_35, %45] : memref<1x32x256xbf16, #tpu.memory_space<vmem>>, vector<1x8x128xbf16>
    %47 = vector.shape_cast %46 : vector<1x8x128xbf16> to vector<8x128xbf16>
    %c56 = arith.constant 56 : index
    %c0_36 = arith.constant 0 : index
    %48 = vector.load %arg5[%c56, %c0_36] : memref<72x128xbf16, #tpu.memory_space<vmem>>, vector<8x128xbf16>
    tpu.vector_store %arg5[%c56, %c0_36], %47 {strides = array<i32>} : memref<72x128xbf16, #tpu.memory_space<vmem>>, vector<8x128xbf16>,
    %c128_i32_37 = arith.constant 128 : i32
    %49 = arith.muli %c0_i32, %c128_i32_37 : i32
    %c10_i32 = arith.constant 10 : i32
    %50 = arith.addi %c10_i32, %49 : i32
    %c0_38 = arith.constant 0 : index
    %c0_39 = arith.constant 0 : index
    %51 = arith.index_cast %50 : i32 to index
    %52 = vector.load %arg2[%c0_38, %c0_39, %51] : memref<1x32x256xbf16, #tpu.memory_space<vmem>>, vector<1x8x128xbf16>
    %53 = vector.shape_cast %52 : vector<1x8x128xbf16> to vector<8x128xbf16>
    %c64 = arith.constant 64 : index
    %c0_40 = arith.constant 0 : index
    %54 = vector.load %arg5[%c64, %c0_40] : memref<72x128xbf16, #tpu.memory_space<vmem>>, vector<8x128xbf16>
    tpu.vector_store %arg5[%c64, %c0_40], %53 {strides = array<i32>} : memref<72x128xbf16, #tpu.memory_space<vmem>>, vector<8x128xbf16>,
    %c0_41 = arith.constant 0 : index
    %c0_42 = arith.constant 0 : index
    %55 = vector.load %arg3[%c0_41, %c0_42] : memref<16x72xbf16, #tpu.memory_space<vmem>>, vector<16x72xbf16>
    %c0_43 = arith.constant 0 : index
    %c0_44 = arith.constant 0 : index
    %56 = vector.load %arg5[%c0_43, %c0_44] : memref<72x128xbf16, #tpu.memory_space<vmem>>, vector<72x128xbf16>
    %cst_45 = arith.constant dense<0.000000e+00> : vector<16x128xf32>
    %57 = tpu.matmul %55, %56, %cst_45 {dimension_numbers = #tpu.dot_dimension_numbers<[1], [0], [0], [1], [0, 0, 1, 1], [], []>} : vector<16x72xbf16>, vector<72x128xbf16>, vector<16x128xf32> -> vector<16x128xf32>
    %c128_i32_46 = arith.constant 128 : i32
    %58 = arith.muli %c0_i32, %c128_i32_46 : i32
    %59 = tpu.assume_multiple %58, 128 : i32
    %60 = tpu.iota {dimensions = array<i32: 1>} : vector<1x128xi32>
    %61 = vector.broadcast %59 : i32 to vector<1x128xi32>
    %62 = arith.addi %61, %60 : vector<1x128xi32>
    %c9_i32_47 = arith.constant 9 : i32
    %c0_i32_48 = arith.constant 0 : i32
    %63 = arith.cmpi eq, %c9_i32_47, %c0_i32_48 : i32
    %c1_i32_49 = arith.constant 1 : i32
    %64 = arith.select %63, %c1_i32_49, %c9_i32_47 : i32
    %65 = vector.broadcast %64 : i32 to vector<1x128xi32>
    %66 = arith.remsi %62, %65 : vector<1x128xi32>
    %c0_i32_50 = arith.constant 0 : i32
    %67 = vector.broadcast %c0_i32_50 : i32 to vector<1x128xi32>
    %68 = arith.cmpi ne, %66, %67 : vector<1x128xi32>
    %c0_i32_51 = arith.constant 0 : i32
    %69 = vector.broadcast %c0_i32_51 : i32 to vector<1x128xi32>
    %70 = arith.cmpi slt, %66, %69 : vector<1x128xi32>
    %c0_i32_52 = arith.constant 0 : i32
    %71 = arith.cmpi slt, %64, %c0_i32_52 : i32
    %72 = vector.broadcast %71 : i1 to vector<1x128xi1>
    %73 = vector.broadcast %72 : vector<1x128xi1> to vector<1x128xi1>
    %74 = arith.xori %70, %73 : vector<1x128xi1>
    %75 = arith.andi %74, %68 : vector<1x128xi1>
    %76 = vector.broadcast %64 : i32 to vector<1x128xi32>
    %77 = arith.addi %66, %76 : vector<1x128xi32>
    %78 = arith.select %75, %77, %66 : vector<1x128xi1>, vector<1x128xi32>
    %c8_i32 = arith.constant 8 : i32
    %79 = vector.broadcast %c8_i32 : i32 to vector<1x128xi32>
    %80 = arith.cmpi slt, %78, %79 : vector<1x128xi32>
    %c72_i32 = arith.constant 72 : i32
    %81 = vector.broadcast %c72_i32 : i32 to vector<1x128xi32>
    %82 = arith.cmpi slt, %62, %81 : vector<1x128xi32>
    %83 = arith.andi %80, %82 : vector<1x128xi1>
    %84 = arith.extui %83 : vector<1x128xi1> to vector<1x128xi32>
    %85 = arith.sitofp %84 : vector<1x128xi32> to vector<1x128xf32>
    %86 = vector.broadcast %85 : vector<1x128xf32> to vector<16x128xf32>
    %87 = arith.mulf %57, %86 : vector<16x128xf32>
    %cst_53 = arith.constant dense<0.000000e+00> : vector<16xf32>
    %88 = vector.multi_reduction <add>, %87, %cst_53 [1] : vector<16x128xf32> to vector<16xf32>
    %89 = vector.shape_cast %88 : vector<16xf32> to vector<16x1xf32>
    %90 = arith.addf %0, %89 : vector<16x1xf32>
    %91 = arith.mulf %57, %87 : vector<16x128xf32>
    %cst_54 = arith.constant dense<0.000000e+00> : vector<16xf32>
    %92 = vector.multi_reduction <add>, %91, %cst_54 [1] : vector<16x128xf32> to vector<16xf32>
    %93 = vector.shape_cast %92 : vector<16xf32> to vector<16x1xf32>
    %94 = arith.addf %0, %93 : vector<16x1xf32>
    %c0_55 = arith.constant 0 : index
    %95 = arith.index_cast %59 : i32 to index
    %96 = vector.load %arg6[%c0_55, %95] : memref<16x128xf32, #tpu.memory_space<vmem>>, vector<16x128xf32>
    tpu.vector_store %arg6[%c0_55, %95], %57 {strides = array<i32>} : memref<16x128xf32, #tpu.memory_space<vmem>>, vector<16x128xf32>,
    %c1_i32_56 = arith.constant 1 : i32
    %cst_57 = arith.constant 1.562500e-02 : f32
    %97 = vector.broadcast %cst_57 : f32 to vector<16x1xf32>
    %98 = arith.mulf %90, %97 : vector<16x1xf32>
    %cst_58 = arith.constant 1.562500e-02 : f32
    %99 = vector.broadcast %cst_58 : f32 to vector<16x1xf32>
    %100 = arith.mulf %94, %99 : vector<16x1xf32>
    %101 = arith.mulf %98, %98 : vector<16x1xf32>
    %102 = arith.subf %100, %101 : vector<16x1xf32>
    %cst_59 = arith.constant 0.000000e+00 : f32
    %103 = vector.broadcast %cst_59 : f32 to vector<16x1xf32>
    %104 = arith.maximumf %102, %103 : vector<16x1xf32>
    %cst_60 = arith.constant 9.99999974E-6 : f32
    %105 = vector.broadcast %cst_60 : f32 to vector<16x1xf32>
    %106 = arith.addf %104, %105 : vector<16x1xf32>
    %107 = math.rsqrt %106 : vector<16x1xf32>
    %c0_i32_61 = arith.constant 0 : i32
    %c128_i32_62 = arith.constant 128 : i32
    %108 = arith.muli %c0_i32_61, %c128_i32_62 : i32
    %109 = tpu.assume_multiple %108, 128 : i32
    %c0_63 = arith.constant 0 : index
    %110 = arith.index_cast %109 : i32 to index
    %111 = vector.load %arg6[%c0_63, %110] : memref<16x128xf32, #tpu.memory_space<vmem>>, vector<16x128xf32>
    %112 = vector.broadcast %98 : vector<16x1xf32> to vector<16x128xf32>
    %113 = arith.subf %111, %112 : vector<16x128xf32>
    %114 = vector.broadcast %107 : vector<16x1xf32> to vector<16x128xf32>
    %115 = arith.mulf %113, %114 : vector<16x128xf32>
    %cst_64 = arith.constant 0.000000e+00 : f32
    %116 = vector.broadcast %cst_64 : f32 to vector<16x128xf32>
    %117 = arith.maximumf %115, %116 : vector<16x128xf32>
    %118 = arith.truncf %117 : vector<16x128xf32> to vector<16x128xbf16>
    %c0_65 = arith.constant 0 : index
    %c0_66 = arith.constant 0 : index
    %119 = arith.index_cast %109 : i32 to index
    %120 = vector.load %arg4[%c0_65, %c0_66, %119] : memref<1x16x128xbf16, #tpu.memory_space<vmem>>, vector<1x16x128xbf16>
    %121 = vector.shape_cast %120 : vector<1x16x128xbf16> to vector<16x128xbf16>
    %122 = vector.shape_cast %118 : vector<16x128xbf16> to vector<1x16x128xbf16>
    tpu.vector_store %arg4[%c0_65, %c0_66, %119], %122 {strides = array<i32>} : memref<1x16x128xbf16, #tpu.memory_space<vmem>>, vector<1x16x128xbf16>,
    %c1_i32_67 = arith.constant 1 : i32
    return
  }
  func.func @transform_0(%arg0: i32, %arg1: i32) -> (i32, i32, i32) {
    %c0_i32 = arith.constant 0 : i32
    %c0_i32_0 = arith.constant 0 : i32
    %c0_i32_1 = arith.constant 0 : i32
    return %arg0, %c0_i32, %c0_i32_0 : i32, i32, i32
  }
  func.func @transform_1(%arg0: i32, %arg1: i32) -> (i32, i32) {
    %c0_i32 = arith.constant 0 : i32
    %c0_i32_0 = arith.constant 0 : i32
    return %arg1, %c0_i32 : i32, i32
  }
  func.func @transform_2(%arg0: i32, %arg1: i32) -> (i32, i32, i32) {
    %c0_i32 = arith.constant 0 : i32
    %c0_i32_0 = arith.constant 0 : i32
    return %arg0, %arg1, %c0_i32 : i32, i32, i32
  }
}

module attributes {stable_mosaic.version = 11 : i64} {
  func.func @_conv_kernel(%arg0: i32, %arg1: i32, %arg2: memref<1x64x256xbf16, #tpu.memory_space<vmem>>, %arg3: memref<32x144xbf16, #tpu.memory_space<vmem>>, %arg4: memref<1x32x128xbf16, #tpu.memory_space<vmem>>, %arg5: memref<144x128xbf16, #tpu.memory_space<vmem>>, %arg6: memref<32x128xf32, #tpu.memory_space<vmem>>) attributes {dimension_semantics = [#tpu.dimension_semantics<parallel>, #tpu.dimension_semantics<parallel>], iteration_bounds = array<i64: 2, 1>, scalar_prefetch = 0 : i64, scratch_operands = 2 : i64, tpu.core_type = #tpu.core_type<tc>, window_params = [{transform_indices = @transform_0, window_bounds = array<i64: 1, 64, 256>}, {transform_indices = @transform_1, window_bounds = array<i64: 32, 144>}, {transform_indices = @transform_2, window_bounds = array<i64: 1, 32, 128>}]} {
    %cst = arith.constant 0.000000e+00 : f32
    %0 = vector.broadcast %cst : f32 to vector<32x1xf32>
    %c0_i32 = arith.constant 0 : i32
    %c128_i32 = arith.constant 128 : i32
    %1 = arith.muli %c0_i32, %c128_i32 : i32
    %c0_i32_0 = arith.constant 0 : i32
    %2 = arith.addi %c0_i32_0, %1 : i32
    %c0 = arith.constant 0 : index
    %c0_1 = arith.constant 0 : index
    %3 = arith.index_cast %2 : i32 to index
    %4 = vector.load %arg2[%c0, %c0_1, %3] : memref<1x64x256xbf16, #tpu.memory_space<vmem>>, vector<1x16x128xbf16>
    %5 = vector.shape_cast %4 : vector<1x16x128xbf16> to vector<16x128xbf16>
    %c0_2 = arith.constant 0 : index
    %c0_3 = arith.constant 0 : index
    %6 = vector.load %arg5[%c0_2, %c0_3] : memref<144x128xbf16, #tpu.memory_space<vmem>>, vector<16x128xbf16>
    tpu.vector_store %arg5[%c0_2, %c0_3], %5 {strides = array<i32>} : memref<144x128xbf16, #tpu.memory_space<vmem>>, vector<16x128xbf16>,
    %c128_i32_4 = arith.constant 128 : i32
    %7 = arith.muli %c0_i32, %c128_i32_4 : i32
    %c0_i32_5 = arith.constant 0 : i32
    %8 = arith.addi %c0_i32_5, %7 : i32
    %c0_6 = arith.constant 0 : index
    %c16 = arith.constant 16 : index
    %9 = arith.index_cast %8 : i32 to index
    %10 = vector.load %arg2[%c0_6, %c16, %9] : memref<1x64x256xbf16, #tpu.memory_space<vmem>>, vector<1x16x128xbf16>
    %11 = vector.shape_cast %10 : vector<1x16x128xbf16> to vector<16x128xbf16>
    %c16_7 = arith.constant 16 : index
    %c0_8 = arith.constant 0 : index
    %12 = vector.load %arg5[%c16_7, %c0_8] : memref<144x128xbf16, #tpu.memory_space<vmem>>, vector<16x128xbf16>
    tpu.vector_store %arg5[%c16_7, %c0_8], %11 {strides = array<i32>} : memref<144x128xbf16, #tpu.memory_space<vmem>>, vector<16x128xbf16>,
    %c128_i32_9 = arith.constant 128 : i32
    %13 = arith.muli %c0_i32, %c128_i32_9 : i32
    %c1_i32 = arith.constant 1 : i32
    %14 = arith.addi %c1_i32, %13 : i32
    %c0_10 = arith.constant 0 : index
    %c0_11 = arith.constant 0 : index
    %15 = arith.index_cast %14 : i32 to index
    %16 = vector.load %arg2[%c0_10, %c0_11, %15] : memref<1x64x256xbf16, #tpu.memory_space<vmem>>, vector<1x16x128xbf16>
    %17 = vector.shape_cast %16 : vector<1x16x128xbf16> to vector<16x128xbf16>
    %c32 = arith.constant 32 : index
    %c0_12 = arith.constant 0 : index
    %18 = vector.load %arg5[%c32, %c0_12] : memref<144x128xbf16, #tpu.memory_space<vmem>>, vector<16x128xbf16>
    tpu.vector_store %arg5[%c32, %c0_12], %17 {strides = array<i32>} : memref<144x128xbf16, #tpu.memory_space<vmem>>, vector<16x128xbf16>,
    %c128_i32_13 = arith.constant 128 : i32
    %19 = arith.muli %c0_i32, %c128_i32_13 : i32
    %c0_i32_14 = arith.constant 0 : i32
    %20 = arith.addi %c0_i32_14, %19 : i32
    %c0_15 = arith.constant 0 : index
    %c32_16 = arith.constant 32 : index
    %21 = arith.index_cast %20 : i32 to index
    %22 = vector.load %arg2[%c0_15, %c32_16, %21] : memref<1x64x256xbf16, #tpu.memory_space<vmem>>, vector<1x16x128xbf16>
    %23 = vector.shape_cast %22 : vector<1x16x128xbf16> to vector<16x128xbf16>
    %c48 = arith.constant 48 : index
    %c0_17 = arith.constant 0 : index
    %24 = vector.load %arg5[%c48, %c0_17] : memref<144x128xbf16, #tpu.memory_space<vmem>>, vector<16x128xbf16>
    tpu.vector_store %arg5[%c48, %c0_17], %23 {strides = array<i32>} : memref<144x128xbf16, #tpu.memory_space<vmem>>, vector<16x128xbf16>,
    %c128_i32_18 = arith.constant 128 : i32
    %25 = arith.muli %c0_i32, %c128_i32_18 : i32
    %c0_i32_19 = arith.constant 0 : i32
    %26 = arith.addi %c0_i32_19, %25 : i32
    %c0_20 = arith.constant 0 : index
    %c48_21 = arith.constant 48 : index
    %27 = arith.index_cast %26 : i32 to index
    %28 = vector.load %arg2[%c0_20, %c48_21, %27] : memref<1x64x256xbf16, #tpu.memory_space<vmem>>, vector<1x16x128xbf16>
    %29 = vector.shape_cast %28 : vector<1x16x128xbf16> to vector<16x128xbf16>
    %c64 = arith.constant 64 : index
    %c0_22 = arith.constant 0 : index
    %30 = vector.load %arg5[%c64, %c0_22] : memref<144x128xbf16, #tpu.memory_space<vmem>>, vector<16x128xbf16>
    tpu.vector_store %arg5[%c64, %c0_22], %29 {strides = array<i32>} : memref<144x128xbf16, #tpu.memory_space<vmem>>, vector<16x128xbf16>,
    %c128_i32_23 = arith.constant 128 : i32
    %31 = arith.muli %c0_i32, %c128_i32_23 : i32
    %c1_i32_24 = arith.constant 1 : i32
    %32 = arith.addi %c1_i32_24, %31 : i32
    %c0_25 = arith.constant 0 : index
    %c32_26 = arith.constant 32 : index
    %33 = arith.index_cast %32 : i32 to index
    %34 = vector.load %arg2[%c0_25, %c32_26, %33] : memref<1x64x256xbf16, #tpu.memory_space<vmem>>, vector<1x16x128xbf16>
    %35 = vector.shape_cast %34 : vector<1x16x128xbf16> to vector<16x128xbf16>
    %c80 = arith.constant 80 : index
    %c0_27 = arith.constant 0 : index
    %36 = vector.load %arg5[%c80, %c0_27] : memref<144x128xbf16, #tpu.memory_space<vmem>>, vector<16x128xbf16>
    tpu.vector_store %arg5[%c80, %c0_27], %35 {strides = array<i32>} : memref<144x128xbf16, #tpu.memory_space<vmem>>, vector<16x128xbf16>,
    %c128_i32_28 = arith.constant 128 : i32
    %37 = arith.muli %c0_i32, %c128_i32_28 : i32
    %c5_i32 = arith.constant 5 : i32
    %38 = arith.addi %c5_i32, %37 : i32
    %c0_29 = arith.constant 0 : index
    %c0_30 = arith.constant 0 : index
    %39 = arith.index_cast %38 : i32 to index
    %40 = vector.load %arg2[%c0_29, %c0_30, %39] : memref<1x64x256xbf16, #tpu.memory_space<vmem>>, vector<1x16x128xbf16>
    %41 = vector.shape_cast %40 : vector<1x16x128xbf16> to vector<16x128xbf16>
    %c96 = arith.constant 96 : index
    %c0_31 = arith.constant 0 : index
    %42 = vector.load %arg5[%c96, %c0_31] : memref<144x128xbf16, #tpu.memory_space<vmem>>, vector<16x128xbf16>
    tpu.vector_store %arg5[%c96, %c0_31], %41 {strides = array<i32>} : memref<144x128xbf16, #tpu.memory_space<vmem>>, vector<16x128xbf16>,
    %c128_i32_32 = arith.constant 128 : i32
    %43 = arith.muli %c0_i32, %c128_i32_32 : i32
    %c5_i32_33 = arith.constant 5 : i32
    %44 = arith.addi %c5_i32_33, %43 : i32
    %c0_34 = arith.constant 0 : index
    %c16_35 = arith.constant 16 : index
    %45 = arith.index_cast %44 : i32 to index
    %46 = vector.load %arg2[%c0_34, %c16_35, %45] : memref<1x64x256xbf16, #tpu.memory_space<vmem>>, vector<1x16x128xbf16>
    %47 = vector.shape_cast %46 : vector<1x16x128xbf16> to vector<16x128xbf16>
    %c112 = arith.constant 112 : index
    %c0_36 = arith.constant 0 : index
    %48 = vector.load %arg5[%c112, %c0_36] : memref<144x128xbf16, #tpu.memory_space<vmem>>, vector<16x128xbf16>
    tpu.vector_store %arg5[%c112, %c0_36], %47 {strides = array<i32>} : memref<144x128xbf16, #tpu.memory_space<vmem>>, vector<16x128xbf16>,
    %c128_i32_37 = arith.constant 128 : i32
    %49 = arith.muli %c0_i32, %c128_i32_37 : i32
    %c6_i32 = arith.constant 6 : i32
    %50 = arith.addi %c6_i32, %49 : i32
    %c0_38 = arith.constant 0 : index
    %c0_39 = arith.constant 0 : index
    %51 = arith.index_cast %50 : i32 to index
    %52 = vector.load %arg2[%c0_38, %c0_39, %51] : memref<1x64x256xbf16, #tpu.memory_space<vmem>>, vector<1x16x128xbf16>
    %53 = vector.shape_cast %52 : vector<1x16x128xbf16> to vector<16x128xbf16>
    %c128 = arith.constant 128 : index
    %c0_40 = arith.constant 0 : index
    %54 = vector.load %arg5[%c128, %c0_40] : memref<144x128xbf16, #tpu.memory_space<vmem>>, vector<16x128xbf16>
    tpu.vector_store %arg5[%c128, %c0_40], %53 {strides = array<i32>} : memref<144x128xbf16, #tpu.memory_space<vmem>>, vector<16x128xbf16>,
    %c0_41 = arith.constant 0 : index
    %c0_42 = arith.constant 0 : index
    %55 = vector.load %arg3[%c0_41, %c0_42] : memref<32x144xbf16, #tpu.memory_space<vmem>>, vector<32x144xbf16>
    %c0_43 = arith.constant 0 : index
    %c0_44 = arith.constant 0 : index
    %56 = vector.load %arg5[%c0_43, %c0_44] : memref<144x128xbf16, #tpu.memory_space<vmem>>, vector<144x128xbf16>
    %cst_45 = arith.constant dense<0.000000e+00> : vector<32x128xf32>
    %57 = tpu.matmul %55, %56, %cst_45 {dimension_numbers = #tpu.dot_dimension_numbers<[1], [0], [0], [1], [0, 0, 1, 1], [], []>} : vector<32x144xbf16>, vector<144x128xbf16>, vector<32x128xf32> -> vector<32x128xf32>
    %c128_i32_46 = arith.constant 128 : i32
    %58 = arith.muli %c0_i32, %c128_i32_46 : i32
    %59 = tpu.assume_multiple %58, 128 : i32
    %60 = tpu.iota {dimensions = array<i32: 1>} : vector<1x128xi32>
    %61 = vector.broadcast %59 : i32 to vector<1x128xi32>
    %62 = arith.addi %61, %60 : vector<1x128xi32>
    %c5_i32_47 = arith.constant 5 : i32
    %c0_i32_48 = arith.constant 0 : i32
    %63 = arith.cmpi eq, %c5_i32_47, %c0_i32_48 : i32
    %c1_i32_49 = arith.constant 1 : i32
    %64 = arith.select %63, %c1_i32_49, %c5_i32_47 : i32
    %65 = vector.broadcast %64 : i32 to vector<1x128xi32>
    %66 = arith.remsi %62, %65 : vector<1x128xi32>
    %c0_i32_50 = arith.constant 0 : i32
    %67 = vector.broadcast %c0_i32_50 : i32 to vector<1x128xi32>
    %68 = arith.cmpi ne, %66, %67 : vector<1x128xi32>
    %c0_i32_51 = arith.constant 0 : i32
    %69 = vector.broadcast %c0_i32_51 : i32 to vector<1x128xi32>
    %70 = arith.cmpi slt, %66, %69 : vector<1x128xi32>
    %c0_i32_52 = arith.constant 0 : i32
    %71 = arith.cmpi slt, %64, %c0_i32_52 : i32
    %72 = vector.broadcast %71 : i1 to vector<1x128xi1>
    %73 = vector.broadcast %72 : vector<1x128xi1> to vector<1x128xi1>
    %74 = arith.xori %70, %73 : vector<1x128xi1>
    %75 = arith.andi %74, %68 : vector<1x128xi1>
    %76 = vector.broadcast %64 : i32 to vector<1x128xi32>
    %77 = arith.addi %66, %76 : vector<1x128xi32>
    %78 = arith.select %75, %77, %66 : vector<1x128xi1>, vector<1x128xi32>
    %c4_i32 = arith.constant 4 : i32
    %79 = vector.broadcast %c4_i32 : i32 to vector<1x128xi32>
    %80 = arith.cmpi slt, %78, %79 : vector<1x128xi32>
    %c20_i32 = arith.constant 20 : i32
    %81 = vector.broadcast %c20_i32 : i32 to vector<1x128xi32>
    %82 = arith.cmpi slt, %62, %81 : vector<1x128xi32>
    %83 = arith.andi %80, %82 : vector<1x128xi1>
    %84 = arith.extui %83 : vector<1x128xi1> to vector<1x128xi32>
    %85 = arith.sitofp %84 : vector<1x128xi32> to vector<1x128xf32>
    %86 = vector.broadcast %85 : vector<1x128xf32> to vector<32x128xf32>
    %87 = arith.mulf %57, %86 : vector<32x128xf32>
    %cst_53 = arith.constant dense<0.000000e+00> : vector<32xf32>
    %88 = vector.multi_reduction <add>, %87, %cst_53 [1] : vector<32x128xf32> to vector<32xf32>
    %89 = vector.shape_cast %88 : vector<32xf32> to vector<32x1xf32>
    %90 = arith.addf %0, %89 : vector<32x1xf32>
    %91 = arith.mulf %57, %87 : vector<32x128xf32>
    %cst_54 = arith.constant dense<0.000000e+00> : vector<32xf32>
    %92 = vector.multi_reduction <add>, %91, %cst_54 [1] : vector<32x128xf32> to vector<32xf32>
    %93 = vector.shape_cast %92 : vector<32xf32> to vector<32x1xf32>
    %94 = arith.addf %0, %93 : vector<32x1xf32>
    %c0_55 = arith.constant 0 : index
    %95 = arith.index_cast %59 : i32 to index
    %96 = vector.load %arg6[%c0_55, %95] : memref<32x128xf32, #tpu.memory_space<vmem>>, vector<32x128xf32>
    tpu.vector_store %arg6[%c0_55, %95], %57 {strides = array<i32>} : memref<32x128xf32, #tpu.memory_space<vmem>>, vector<32x128xf32>,
    %c1_i32_56 = arith.constant 1 : i32
    %cst_57 = arith.constant 6.250000e-02 : f32
    %97 = vector.broadcast %cst_57 : f32 to vector<32x1xf32>
    %98 = arith.mulf %90, %97 : vector<32x1xf32>
    %cst_58 = arith.constant 6.250000e-02 : f32
    %99 = vector.broadcast %cst_58 : f32 to vector<32x1xf32>
    %100 = arith.mulf %94, %99 : vector<32x1xf32>
    %101 = arith.mulf %98, %98 : vector<32x1xf32>
    %102 = arith.subf %100, %101 : vector<32x1xf32>
    %cst_59 = arith.constant 0.000000e+00 : f32
    %103 = vector.broadcast %cst_59 : f32 to vector<32x1xf32>
    %104 = arith.maximumf %102, %103 : vector<32x1xf32>
    %cst_60 = arith.constant 9.99999974E-6 : f32
    %105 = vector.broadcast %cst_60 : f32 to vector<32x1xf32>
    %106 = arith.addf %104, %105 : vector<32x1xf32>
    %107 = math.rsqrt %106 : vector<32x1xf32>
    %c0_i32_61 = arith.constant 0 : i32
    %c128_i32_62 = arith.constant 128 : i32
    %108 = arith.muli %c0_i32_61, %c128_i32_62 : i32
    %109 = tpu.assume_multiple %108, 128 : i32
    %c0_63 = arith.constant 0 : index
    %110 = arith.index_cast %109 : i32 to index
    %111 = vector.load %arg6[%c0_63, %110] : memref<32x128xf32, #tpu.memory_space<vmem>>, vector<32x128xf32>
    %112 = vector.broadcast %98 : vector<32x1xf32> to vector<32x128xf32>
    %113 = arith.subf %111, %112 : vector<32x128xf32>
    %114 = vector.broadcast %107 : vector<32x1xf32> to vector<32x128xf32>
    %115 = arith.mulf %113, %114 : vector<32x128xf32>
    %cst_64 = arith.constant 0.000000e+00 : f32
    %116 = vector.broadcast %cst_64 : f32 to vector<32x128xf32>
    %117 = arith.maximumf %115, %116 : vector<32x128xf32>
    %118 = arith.truncf %117 : vector<32x128xf32> to vector<32x128xbf16>
    %c0_65 = arith.constant 0 : index
    %c0_66 = arith.constant 0 : index
    %119 = arith.index_cast %109 : i32 to index
    %120 = vector.load %arg4[%c0_65, %c0_66, %119] : memref<1x32x128xbf16, #tpu.memory_space<vmem>>, vector<1x32x128xbf16>
    %121 = vector.shape_cast %120 : vector<1x32x128xbf16> to vector<32x128xbf16>
    %122 = vector.shape_cast %118 : vector<32x128xbf16> to vector<1x32x128xbf16>
    tpu.vector_store %arg4[%c0_65, %c0_66, %119], %122 {strides = array<i32>} : memref<1x32x128xbf16, #tpu.memory_space<vmem>>, vector<1x32x128xbf16>,
    %c1_i32_67 = arith.constant 1 : i32
    return
  }
  func.func @transform_0(%arg0: i32, %arg1: i32) -> (i32, i32, i32) {
    %c0_i32 = arith.constant 0 : i32
    %c0_i32_0 = arith.constant 0 : i32
    %c0_i32_1 = arith.constant 0 : i32
    return %arg0, %c0_i32, %c0_i32_0 : i32, i32, i32
  }
  func.func @transform_1(%arg0: i32, %arg1: i32) -> (i32, i32) {
    %c0_i32 = arith.constant 0 : i32
    %c0_i32_0 = arith.constant 0 : i32
    return %arg1, %c0_i32 : i32, i32
  }
  func.func @transform_2(%arg0: i32, %arg1: i32) -> (i32, i32, i32) {
    %c0_i32 = arith.constant 0 : i32
    %c0_i32_0 = arith.constant 0 : i32
    return %arg0, %arg1, %c0_i32 : i32, i32, i32
  }
}

module attributes {stable_mosaic.version = 11 : i64} {
  func.func @_conv_kernel(%arg0: i32, %arg1: i32, %arg2: memref<1x32x256xbf16, #tpu.memory_space<vmem>>, %arg3: memref<32x288xbf16, #tpu.memory_space<vmem>>, %arg4: memref<1x32x128xbf16, #tpu.memory_space<vmem>>, %arg5: memref<288x128xbf16, #tpu.memory_space<vmem>>, %arg6: memref<32x128xf32, #tpu.memory_space<vmem>>) attributes {dimension_semantics = [#tpu.dimension_semantics<parallel>, #tpu.dimension_semantics<parallel>], iteration_bounds = array<i64: 2, 1>, scalar_prefetch = 0 : i64, scratch_operands = 2 : i64, tpu.core_type = #tpu.core_type<tc>, window_params = [{transform_indices = @transform_0, window_bounds = array<i64: 1, 32, 256>}, {transform_indices = @transform_1, window_bounds = array<i64: 32, 288>}, {transform_indices = @transform_2, window_bounds = array<i64: 1, 32, 128>}]} {
    %cst = arith.constant 0.000000e+00 : f32
    %0 = vector.broadcast %cst : f32 to vector<32x1xf32>
    %c0_i32 = arith.constant 0 : i32
    %c128_i32 = arith.constant 128 : i32
    %1 = arith.muli %c0_i32, %c128_i32 : i32
    %c0_i32_0 = arith.constant 0 : i32
    %2 = arith.addi %c0_i32_0, %1 : i32
    %c0 = arith.constant 0 : index
    %c0_1 = arith.constant 0 : index
    %3 = arith.index_cast %2 : i32 to index
    %4 = vector.load %arg2[%c0, %c0_1, %3] : memref<1x32x256xbf16, #tpu.memory_space<vmem>>, vector<1x32x128xbf16>
    %5 = vector.shape_cast %4 : vector<1x32x128xbf16> to vector<32x128xbf16>
    %c0_2 = arith.constant 0 : index
    %c0_3 = arith.constant 0 : index
    %6 = vector.load %arg5[%c0_2, %c0_3] : memref<288x128xbf16, #tpu.memory_space<vmem>>, vector<32x128xbf16>
    tpu.vector_store %arg5[%c0_2, %c0_3], %5 {strides = array<i32>} : memref<288x128xbf16, #tpu.memory_space<vmem>>, vector<32x128xbf16>,
    %c128_i32_4 = arith.constant 128 : i32
    %7 = arith.muli %c0_i32, %c128_i32_4 : i32
    %c1_i32 = arith.constant 1 : i32
    %8 = arith.addi %c1_i32, %7 : i32
    %c0_5 = arith.constant 0 : index
    %c0_6 = arith.constant 0 : index
    %9 = arith.index_cast %8 : i32 to index
    %10 = vector.load %arg2[%c0_5, %c0_6, %9] : memref<1x32x256xbf16, #tpu.memory_space<vmem>>, vector<1x32x128xbf16>
    %11 = vector.shape_cast %10 : vector<1x32x128xbf16> to vector<32x128xbf16>
    %c32 = arith.constant 32 : index
    %c0_7 = arith.constant 0 : index
    %12 = vector.load %arg5[%c32, %c0_7] : memref<288x128xbf16, #tpu.memory_space<vmem>>, vector<32x128xbf16>
    tpu.vector_store %arg5[%c32, %c0_7], %11 {strides = array<i32>} : memref<288x128xbf16, #tpu.memory_space<vmem>>, vector<32x128xbf16>,
    %c128_i32_8 = arith.constant 128 : i32
    %13 = arith.muli %c0_i32, %c128_i32_8 : i32
    %c2_i32 = arith.constant 2 : i32
    %14 = arith.addi %c2_i32, %13 : i32
    %c0_9 = arith.constant 0 : index
    %c0_10 = arith.constant 0 : index
    %15 = arith.index_cast %14 : i32 to index
    %16 = vector.load %arg2[%c0_9, %c0_10, %15] : memref<1x32x256xbf16, #tpu.memory_space<vmem>>, vector<1x32x128xbf16>
    %17 = vector.shape_cast %16 : vector<1x32x128xbf16> to vector<32x128xbf16>
    %c64 = arith.constant 64 : index
    %c0_11 = arith.constant 0 : index
    %18 = vector.load %arg5[%c64, %c0_11] : memref<288x128xbf16, #tpu.memory_space<vmem>>, vector<32x128xbf16>
    tpu.vector_store %arg5[%c64, %c0_11], %17 {strides = array<i32>} : memref<288x128xbf16, #tpu.memory_space<vmem>>, vector<32x128xbf16>,
    %c128_i32_12 = arith.constant 128 : i32
    %19 = arith.muli %c0_i32, %c128_i32_12 : i32
    %c6_i32 = arith.constant 6 : i32
    %20 = arith.addi %c6_i32, %19 : i32
    %c0_13 = arith.constant 0 : index
    %c0_14 = arith.constant 0 : index
    %21 = arith.index_cast %20 : i32 to index
    %22 = vector.load %arg2[%c0_13, %c0_14, %21] : memref<1x32x256xbf16, #tpu.memory_space<vmem>>, vector<1x32x128xbf16>
    %23 = vector.shape_cast %22 : vector<1x32x128xbf16> to vector<32x128xbf16>
    %c96 = arith.constant 96 : index
    %c0_15 = arith.constant 0 : index
    %24 = vector.load %arg5[%c96, %c0_15] : memref<288x128xbf16, #tpu.memory_space<vmem>>, vector<32x128xbf16>
    tpu.vector_store %arg5[%c96, %c0_15], %23 {strides = array<i32>} : memref<288x128xbf16, #tpu.memory_space<vmem>>, vector<32x128xbf16>,
    %c128_i32_16 = arith.constant 128 : i32
    %25 = arith.muli %c0_i32, %c128_i32_16 : i32
    %c7_i32 = arith.constant 7 : i32
    %26 = arith.addi %c7_i32, %25 : i32
    %c0_17 = arith.constant 0 : index
    %c0_18 = arith.constant 0 : index
    %27 = arith.index_cast %26 : i32 to index
    %28 = vector.load %arg2[%c0_17, %c0_18, %27] : memref<1x32x256xbf16, #tpu.memory_space<vmem>>, vector<1x32x128xbf16>
    %29 = vector.shape_cast %28 : vector<1x32x128xbf16> to vector<32x128xbf16>
    %c128 = arith.constant 128 : index
    %c0_19 = arith.constant 0 : index
    %30 = vector.load %arg5[%c128, %c0_19] : memref<288x128xbf16, #tpu.memory_space<vmem>>, vector<32x128xbf16>
    tpu.vector_store %arg5[%c128, %c0_19], %29 {strides = array<i32>} : memref<288x128xbf16, #tpu.memory_space<vmem>>, vector<32x128xbf16>,
    %c128_i32_20 = arith.constant 128 : i32
    %31 = arith.muli %c0_i32, %c128_i32_20 : i32
    %c8_i32 = arith.constant 8 : i32
    %32 = arith.addi %c8_i32, %31 : i32
    %c0_21 = arith.constant 0 : index
    %c0_22 = arith.constant 0 : index
    %33 = arith.index_cast %32 : i32 to index
    %34 = vector.load %arg2[%c0_21, %c0_22, %33] : memref<1x32x256xbf16, #tpu.memory_space<vmem>>, vector<1x32x128xbf16>
    %35 = vector.shape_cast %34 : vector<1x32x128xbf16> to vector<32x128xbf16>
    %c160 = arith.constant 160 : index
    %c0_23 = arith.constant 0 : index
    %36 = vector.load %arg5[%c160, %c0_23] : memref<288x128xbf16, #tpu.memory_space<vmem>>, vector<32x128xbf16>
    tpu.vector_store %arg5[%c160, %c0_23], %35 {strides = array<i32>} : memref<288x128xbf16, #tpu.memory_space<vmem>>, vector<32x128xbf16>,
    %c128_i32_24 = arith.constant 128 : i32
    %37 = arith.muli %c0_i32, %c128_i32_24 : i32
    %c12_i32 = arith.constant 12 : i32
    %38 = arith.addi %c12_i32, %37 : i32
    %c0_25 = arith.constant 0 : index
    %c0_26 = arith.constant 0 : index
    %39 = arith.index_cast %38 : i32 to index
    %40 = vector.load %arg2[%c0_25, %c0_26, %39] : memref<1x32x256xbf16, #tpu.memory_space<vmem>>, vector<1x32x128xbf16>
    %41 = vector.shape_cast %40 : vector<1x32x128xbf16> to vector<32x128xbf16>
    %c192 = arith.constant 192 : index
    %c0_27 = arith.constant 0 : index
    %42 = vector.load %arg5[%c192, %c0_27] : memref<288x128xbf16, #tpu.memory_space<vmem>>, vector<32x128xbf16>
    tpu.vector_store %arg5[%c192, %c0_27], %41 {strides = array<i32>} : memref<288x128xbf16, #tpu.memory_space<vmem>>, vector<32x128xbf16>,
    %c128_i32_28 = arith.constant 128 : i32
    %43 = arith.muli %c0_i32, %c128_i32_28 : i32
    %c13_i32 = arith.constant 13 : i32
    %44 = arith.addi %c13_i32, %43 : i32
    %c0_29 = arith.constant 0 : index
    %c0_30 = arith.constant 0 : index
    %45 = arith.index_cast %44 : i32 to index
    %46 = vector.load %arg2[%c0_29, %c0_30, %45] : memref<1x32x256xbf16, #tpu.memory_space<vmem>>, vector<1x32x128xbf16>
    %47 = vector.shape_cast %46 : vector<1x32x128xbf16> to vector<32x128xbf16>
    %c224 = arith.constant 224 : index
    %c0_31 = arith.constant 0 : index
    %48 = vector.load %arg5[%c224, %c0_31] : memref<288x128xbf16, #tpu.memory_space<vmem>>, vector<32x128xbf16>
    tpu.vector_store %arg5[%c224, %c0_31], %47 {strides = array<i32>} : memref<288x128xbf16, #tpu.memory_space<vmem>>, vector<32x128xbf16>,
    %c128_i32_32 = arith.constant 128 : i32
    %49 = arith.muli %c0_i32, %c128_i32_32 : i32
    %c14_i32 = arith.constant 14 : i32
    %50 = arith.addi %c14_i32, %49 : i32
    %c0_33 = arith.constant 0 : index
    %c0_34 = arith.constant 0 : index
    %51 = arith.index_cast %50 : i32 to index
    %52 = vector.load %arg2[%c0_33, %c0_34, %51] : memref<1x32x256xbf16, #tpu.memory_space<vmem>>, vector<1x32x128xbf16>
    %53 = vector.shape_cast %52 : vector<1x32x128xbf16> to vector<32x128xbf16>
    %c256 = arith.constant 256 : index
    %c0_35 = arith.constant 0 : index
    %54 = vector.load %arg5[%c256, %c0_35] : memref<288x128xbf16, #tpu.memory_space<vmem>>, vector<32x128xbf16>
    tpu.vector_store %arg5[%c256, %c0_35], %53 {strides = array<i32>} : memref<288x128xbf16, #tpu.memory_space<vmem>>, vector<32x128xbf16>,
    %c0_36 = arith.constant 0 : index
    %c0_37 = arith.constant 0 : index
    %55 = vector.load %arg3[%c0_36, %c0_37] : memref<32x288xbf16, #tpu.memory_space<vmem>>, vector<32x288xbf16>
    %c0_38 = arith.constant 0 : index
    %c0_39 = arith.constant 0 : index
    %56 = vector.load %arg5[%c0_38, %c0_39] : memref<288x128xbf16, #tpu.memory_space<vmem>>, vector<288x128xbf16>
    %cst_40 = arith.constant dense<0.000000e+00> : vector<32x128xf32>
    %57 = tpu.matmul %55, %56, %cst_40 {dimension_numbers = #tpu.dot_dimension_numbers<[1], [0], [0], [1], [0, 0, 1, 1], [], []>} : vector<32x288xbf16>, vector<288x128xbf16>, vector<32x128xf32> -> vector<32x128xf32>
    %c128_i32_41 = arith.constant 128 : i32
    %58 = arith.muli %c0_i32, %c128_i32_41 : i32
    %59 = tpu.assume_multiple %58, 128 : i32
    %60 = tpu.iota {dimensions = array<i32: 1>} : vector<1x128xi32>
    %61 = vector.broadcast %59 : i32 to vector<1x128xi32>
    %62 = arith.addi %61, %60 : vector<1x128xi32>
    %c6_i32_42 = arith.constant 6 : i32
    %c0_i32_43 = arith.constant 0 : i32
    %63 = arith.cmpi eq, %c6_i32_42, %c0_i32_43 : i32
    %c1_i32_44 = arith.constant 1 : i32
    %64 = arith.select %63, %c1_i32_44, %c6_i32_42 : i32
    %65 = vector.broadcast %64 : i32 to vector<1x128xi32>
    %66 = arith.remsi %62, %65 : vector<1x128xi32>
    %c0_i32_45 = arith.constant 0 : i32
    %67 = vector.broadcast %c0_i32_45 : i32 to vector<1x128xi32>
    %68 = arith.cmpi ne, %66, %67 : vector<1x128xi32>
    %c0_i32_46 = arith.constant 0 : i32
    %69 = vector.broadcast %c0_i32_46 : i32 to vector<1x128xi32>
    %70 = arith.cmpi slt, %66, %69 : vector<1x128xi32>
    %c0_i32_47 = arith.constant 0 : i32
    %71 = arith.cmpi slt, %64, %c0_i32_47 : i32
    %72 = vector.broadcast %71 : i1 to vector<1x128xi1>
    %73 = vector.broadcast %72 : vector<1x128xi1> to vector<1x128xi1>
    %74 = arith.xori %70, %73 : vector<1x128xi1>
    %75 = arith.andi %74, %68 : vector<1x128xi1>
    %76 = vector.broadcast %64 : i32 to vector<1x128xi32>
    %77 = arith.addi %66, %76 : vector<1x128xi32>
    %78 = arith.select %75, %77, %66 : vector<1x128xi1>, vector<1x128xi32>
    %c4_i32 = arith.constant 4 : i32
    %79 = vector.broadcast %c4_i32 : i32 to vector<1x128xi32>
    %80 = arith.cmpi slt, %78, %79 : vector<1x128xi32>
    %c24_i32 = arith.constant 24 : i32
    %81 = vector.broadcast %c24_i32 : i32 to vector<1x128xi32>
    %82 = arith.cmpi slt, %62, %81 : vector<1x128xi32>
    %83 = arith.andi %80, %82 : vector<1x128xi1>
    %84 = arith.extui %83 : vector<1x128xi1> to vector<1x128xi32>
    %85 = arith.sitofp %84 : vector<1x128xi32> to vector<1x128xf32>
    %86 = vector.broadcast %85 : vector<1x128xf32> to vector<32x128xf32>
    %87 = arith.mulf %57, %86 : vector<32x128xf32>
    %cst_48 = arith.constant dense<0.000000e+00> : vector<32xf32>
    %88 = vector.multi_reduction <add>, %87, %cst_48 [1] : vector<32x128xf32> to vector<32xf32>
    %89 = vector.shape_cast %88 : vector<32xf32> to vector<32x1xf32>
    %90 = arith.addf %0, %89 : vector<32x1xf32>
    %91 = arith.mulf %57, %87 : vector<32x128xf32>
    %cst_49 = arith.constant dense<0.000000e+00> : vector<32xf32>
    %92 = vector.multi_reduction <add>, %91, %cst_49 [1] : vector<32x128xf32> to vector<32xf32>
    %93 = vector.shape_cast %92 : vector<32xf32> to vector<32x1xf32>
    %94 = arith.addf %0, %93 : vector<32x1xf32>
    %c0_50 = arith.constant 0 : index
    %95 = arith.index_cast %59 : i32 to index
    %96 = vector.load %arg6[%c0_50, %95] : memref<32x128xf32, #tpu.memory_space<vmem>>, vector<32x128xf32>
    tpu.vector_store %arg6[%c0_50, %95], %57 {strides = array<i32>} : memref<32x128xf32, #tpu.memory_space<vmem>>, vector<32x128xf32>,
    %c1_i32_51 = arith.constant 1 : i32
    %cst_52 = arith.constant 6.250000e-02 : f32
    %97 = vector.broadcast %cst_52 : f32 to vector<32x1xf32>
    %98 = arith.mulf %90, %97 : vector<32x1xf32>
    %cst_53 = arith.constant 6.250000e-02 : f32
    %99 = vector.broadcast %cst_53 : f32 to vector<32x1xf32>
    %100 = arith.mulf %94, %99 : vector<32x1xf32>
    %101 = arith.mulf %98, %98 : vector<32x1xf32>
    %102 = arith.subf %100, %101 : vector<32x1xf32>
    %cst_54 = arith.constant 0.000000e+00 : f32
    %103 = vector.broadcast %cst_54 : f32 to vector<32x1xf32>
    %104 = arith.maximumf %102, %103 : vector<32x1xf32>
    %cst_55 = arith.constant 9.99999974E-6 : f32
    %105 = vector.broadcast %cst_55 : f32 to vector<32x1xf32>
    %106 = arith.addf %104, %105 : vector<32x1xf32>
    %107 = math.rsqrt %106 : vector<32x1xf32>
    %c0_i32_56 = arith.constant 0 : i32
    %c128_i32_57 = arith.constant 128 : i32
    %108 = arith.muli %c0_i32_56, %c128_i32_57 : i32
    %109 = tpu.assume_multiple %108, 128 : i32
    %c0_58 = arith.constant 0 : index
    %110 = arith.index_cast %109 : i32 to index
    %111 = vector.load %arg6[%c0_58, %110] : memref<32x128xf32, #tpu.memory_space<vmem>>, vector<32x128xf32>
    %112 = vector.broadcast %98 : vector<32x1xf32> to vector<32x128xf32>
    %113 = arith.subf %111, %112 : vector<32x128xf32>
    %114 = vector.broadcast %107 : vector<32x1xf32> to vector<32x128xf32>
    %115 = arith.mulf %113, %114 : vector<32x128xf32>
    %cst_59 = arith.constant 0.000000e+00 : f32
    %116 = vector.broadcast %cst_59 : f32 to vector<32x128xf32>
    %117 = arith.maximumf %115, %116 : vector<32x128xf32>
    %118 = arith.truncf %117 : vector<32x128xf32> to vector<32x128xbf16>
    %c0_60 = arith.constant 0 : index
    %c0_61 = arith.constant 0 : index
    %119 = arith.index_cast %109 : i32 to index
    %120 = vector.load %arg4[%c0_60, %c0_61, %119] : memref<1x32x128xbf16, #tpu.memory_space<vmem>>, vector<1x32x128xbf16>
    %121 = vector.shape_cast %120 : vector<1x32x128xbf16> to vector<32x128xbf16>
    %122 = vector.shape_cast %118 : vector<32x128xbf16> to vector<1x32x128xbf16>
    tpu.vector_store %arg4[%c0_60, %c0_61, %119], %122 {strides = array<i32>} : memref<1x32x128xbf16, #tpu.memory_space<vmem>>, vector<1x32x128xbf16>,
    %c1_i32_62 = arith.constant 1 : i32
    return
  }
  func.func @transform_0(%arg0: i32, %arg1: i32) -> (i32, i32, i32) {
    %c0_i32 = arith.constant 0 : i32
    %c0_i32_0 = arith.constant 0 : i32
    %c0_i32_1 = arith.constant 0 : i32
    return %arg0, %c0_i32, %c0_i32_0 : i32, i32, i32
  }
  func.func @transform_1(%arg0: i32, %arg1: i32) -> (i32, i32) {
    %c0_i32 = arith.constant 0 : i32
    %c0_i32_0 = arith.constant 0 : i32
    return %arg1, %c0_i32 : i32, i32
  }
  func.func @transform_2(%arg0: i32, %arg1: i32) -> (i32, i32, i32) {
    %c0_i32 = arith.constant 0 : i32
    %c0_i32_0 = arith.constant 0 : i32
    return %arg0, %arg1, %c0_i32 : i32, i32, i32
  }
}

module attributes {stable_mosaic.version = 11 : i64} {
  func.func @_conv_kernel(%arg0: i32, %arg1: i32, %arg2: memref<1x32x256xbf16, #tpu.memory_space<vmem>>, %arg3: memref<32x288xbf16, #tpu.memory_space<vmem>>, %arg4: memref<1x32x128xbf16, #tpu.memory_space<vmem>>, %arg5: memref<1x32x128xbf16, #tpu.memory_space<vmem>>, %arg6: memref<288x128xbf16, #tpu.memory_space<vmem>>, %arg7: memref<32x128xf32, #tpu.memory_space<vmem>>) attributes {dimension_semantics = [#tpu.dimension_semantics<parallel>, #tpu.dimension_semantics<parallel>], iteration_bounds = array<i64: 2, 1>, scalar_prefetch = 0 : i64, scratch_operands = 2 : i64, tpu.core_type = #tpu.core_type<tc>, window_params = [{transform_indices = @transform_0, window_bounds = array<i64: 1, 32, 256>}, {transform_indices = @transform_1, window_bounds = array<i64: 32, 288>}, {transform_indices = @transform_2, window_bounds = array<i64: 1, 32, 128>}, {transform_indices = @transform_3, window_bounds = array<i64: 1, 32, 128>}]} {
    %cst = arith.constant 0.000000e+00 : f32
    %0 = vector.broadcast %cst : f32 to vector<32x1xf32>
    %c0_i32 = arith.constant 0 : i32
    %c128_i32 = arith.constant 128 : i32
    %1 = arith.muli %c0_i32, %c128_i32 : i32
    %c0_i32_0 = arith.constant 0 : i32
    %2 = arith.addi %c0_i32_0, %1 : i32
    %c0 = arith.constant 0 : index
    %c0_1 = arith.constant 0 : index
    %3 = arith.index_cast %2 : i32 to index
    %4 = vector.load %arg2[%c0, %c0_1, %3] : memref<1x32x256xbf16, #tpu.memory_space<vmem>>, vector<1x32x128xbf16>
    %5 = vector.shape_cast %4 : vector<1x32x128xbf16> to vector<32x128xbf16>
    %c0_2 = arith.constant 0 : index
    %c0_3 = arith.constant 0 : index
    %6 = vector.load %arg6[%c0_2, %c0_3] : memref<288x128xbf16, #tpu.memory_space<vmem>>, vector<32x128xbf16>
    tpu.vector_store %arg6[%c0_2, %c0_3], %5 {strides = array<i32>} : memref<288x128xbf16, #tpu.memory_space<vmem>>, vector<32x128xbf16>,
    %c128_i32_4 = arith.constant 128 : i32
    %7 = arith.muli %c0_i32, %c128_i32_4 : i32
    %c1_i32 = arith.constant 1 : i32
    %8 = arith.addi %c1_i32, %7 : i32
    %c0_5 = arith.constant 0 : index
    %c0_6 = arith.constant 0 : index
    %9 = arith.index_cast %8 : i32 to index
    %10 = vector.load %arg2[%c0_5, %c0_6, %9] : memref<1x32x256xbf16, #tpu.memory_space<vmem>>, vector<1x32x128xbf16>
    %11 = vector.shape_cast %10 : vector<1x32x128xbf16> to vector<32x128xbf16>
    %c32 = arith.constant 32 : index
    %c0_7 = arith.constant 0 : index
    %12 = vector.load %arg6[%c32, %c0_7] : memref<288x128xbf16, #tpu.memory_space<vmem>>, vector<32x128xbf16>
    tpu.vector_store %arg6[%c32, %c0_7], %11 {strides = array<i32>} : memref<288x128xbf16, #tpu.memory_space<vmem>>, vector<32x128xbf16>,
    %c128_i32_8 = arith.constant 128 : i32
    %13 = arith.muli %c0_i32, %c128_i32_8 : i32
    %c2_i32 = arith.constant 2 : i32
    %14 = arith.addi %c2_i32, %13 : i32
    %c0_9 = arith.constant 0 : index
    %c0_10 = arith.constant 0 : index
    %15 = arith.index_cast %14 : i32 to index
    %16 = vector.load %arg2[%c0_9, %c0_10, %15] : memref<1x32x256xbf16, #tpu.memory_space<vmem>>, vector<1x32x128xbf16>
    %17 = vector.shape_cast %16 : vector<1x32x128xbf16> to vector<32x128xbf16>
    %c64 = arith.constant 64 : index
    %c0_11 = arith.constant 0 : index
    %18 = vector.load %arg6[%c64, %c0_11] : memref<288x128xbf16, #tpu.memory_space<vmem>>, vector<32x128xbf16>
    tpu.vector_store %arg6[%c64, %c0_11], %17 {strides = array<i32>} : memref<288x128xbf16, #tpu.memory_space<vmem>>, vector<32x128xbf16>,
    %c128_i32_12 = arith.constant 128 : i32
    %19 = arith.muli %c0_i32, %c128_i32_12 : i32
    %c6_i32 = arith.constant 6 : i32
    %20 = arith.addi %c6_i32, %19 : i32
    %c0_13 = arith.constant 0 : index
    %c0_14 = arith.constant 0 : index
    %21 = arith.index_cast %20 : i32 to index
    %22 = vector.load %arg2[%c0_13, %c0_14, %21] : memref<1x32x256xbf16, #tpu.memory_space<vmem>>, vector<1x32x128xbf16>
    %23 = vector.shape_cast %22 : vector<1x32x128xbf16> to vector<32x128xbf16>
    %c96 = arith.constant 96 : index
    %c0_15 = arith.constant 0 : index
    %24 = vector.load %arg6[%c96, %c0_15] : memref<288x128xbf16, #tpu.memory_space<vmem>>, vector<32x128xbf16>
    tpu.vector_store %arg6[%c96, %c0_15], %23 {strides = array<i32>} : memref<288x128xbf16, #tpu.memory_space<vmem>>, vector<32x128xbf16>,
    %c128_i32_16 = arith.constant 128 : i32
    %25 = arith.muli %c0_i32, %c128_i32_16 : i32
    %c7_i32 = arith.constant 7 : i32
    %26 = arith.addi %c7_i32, %25 : i32
    %c0_17 = arith.constant 0 : index
    %c0_18 = arith.constant 0 : index
    %27 = arith.index_cast %26 : i32 to index
    %28 = vector.load %arg2[%c0_17, %c0_18, %27] : memref<1x32x256xbf16, #tpu.memory_space<vmem>>, vector<1x32x128xbf16>
    %29 = vector.shape_cast %28 : vector<1x32x128xbf16> to vector<32x128xbf16>
    %c128 = arith.constant 128 : index
    %c0_19 = arith.constant 0 : index
    %30 = vector.load %arg6[%c128, %c0_19] : memref<288x128xbf16, #tpu.memory_space<vmem>>, vector<32x128xbf16>
    tpu.vector_store %arg6[%c128, %c0_19], %29 {strides = array<i32>} : memref<288x128xbf16, #tpu.memory_space<vmem>>, vector<32x128xbf16>,
    %c128_i32_20 = arith.constant 128 : i32
    %31 = arith.muli %c0_i32, %c128_i32_20 : i32
    %c8_i32 = arith.constant 8 : i32
    %32 = arith.addi %c8_i32, %31 : i32
    %c0_21 = arith.constant 0 : index
    %c0_22 = arith.constant 0 : index
    %33 = arith.index_cast %32 : i32 to index
    %34 = vector.load %arg2[%c0_21, %c0_22, %33] : memref<1x32x256xbf16, #tpu.memory_space<vmem>>, vector<1x32x128xbf16>
    %35 = vector.shape_cast %34 : vector<1x32x128xbf16> to vector<32x128xbf16>
    %c160 = arith.constant 160 : index
    %c0_23 = arith.constant 0 : index
    %36 = vector.load %arg6[%c160, %c0_23] : memref<288x128xbf16, #tpu.memory_space<vmem>>, vector<32x128xbf16>
    tpu.vector_store %arg6[%c160, %c0_23], %35 {strides = array<i32>} : memref<288x128xbf16, #tpu.memory_space<vmem>>, vector<32x128xbf16>,
    %c128_i32_24 = arith.constant 128 : i32
    %37 = arith.muli %c0_i32, %c128_i32_24 : i32
    %c12_i32 = arith.constant 12 : i32
    %38 = arith.addi %c12_i32, %37 : i32
    %c0_25 = arith.constant 0 : index
    %c0_26 = arith.constant 0 : index
    %39 = arith.index_cast %38 : i32 to index
    %40 = vector.load %arg2[%c0_25, %c0_26, %39] : memref<1x32x256xbf16, #tpu.memory_space<vmem>>, vector<1x32x128xbf16>
    %41 = vector.shape_cast %40 : vector<1x32x128xbf16> to vector<32x128xbf16>
    %c192 = arith.constant 192 : index
    %c0_27 = arith.constant 0 : index
    %42 = vector.load %arg6[%c192, %c0_27] : memref<288x128xbf16, #tpu.memory_space<vmem>>, vector<32x128xbf16>
    tpu.vector_store %arg6[%c192, %c0_27], %41 {strides = array<i32>} : memref<288x128xbf16, #tpu.memory_space<vmem>>, vector<32x128xbf16>,
    %c128_i32_28 = arith.constant 128 : i32
    %43 = arith.muli %c0_i32, %c128_i32_28 : i32
    %c13_i32 = arith.constant 13 : i32
    %44 = arith.addi %c13_i32, %43 : i32
    %c0_29 = arith.constant 0 : index
    %c0_30 = arith.constant 0 : index
    %45 = arith.index_cast %44 : i32 to index
    %46 = vector.load %arg2[%c0_29, %c0_30, %45] : memref<1x32x256xbf16, #tpu.memory_space<vmem>>, vector<1x32x128xbf16>
    %47 = vector.shape_cast %46 : vector<1x32x128xbf16> to vector<32x128xbf16>
    %c224 = arith.constant 224 : index
    %c0_31 = arith.constant 0 : index
    %48 = vector.load %arg6[%c224, %c0_31] : memref<288x128xbf16, #tpu.memory_space<vmem>>, vector<32x128xbf16>
    tpu.vector_store %arg6[%c224, %c0_31], %47 {strides = array<i32>} : memref<288x128xbf16, #tpu.memory_space<vmem>>, vector<32x128xbf16>,
    %c128_i32_32 = arith.constant 128 : i32
    %49 = arith.muli %c0_i32, %c128_i32_32 : i32
    %c14_i32 = arith.constant 14 : i32
    %50 = arith.addi %c14_i32, %49 : i32
    %c0_33 = arith.constant 0 : index
    %c0_34 = arith.constant 0 : index
    %51 = arith.index_cast %50 : i32 to index
    %52 = vector.load %arg2[%c0_33, %c0_34, %51] : memref<1x32x256xbf16, #tpu.memory_space<vmem>>, vector<1x32x128xbf16>
    %53 = vector.shape_cast %52 : vector<1x32x128xbf16> to vector<32x128xbf16>
    %c256 = arith.constant 256 : index
    %c0_35 = arith.constant 0 : index
    %54 = vector.load %arg6[%c256, %c0_35] : memref<288x128xbf16, #tpu.memory_space<vmem>>, vector<32x128xbf16>
    tpu.vector_store %arg6[%c256, %c0_35], %53 {strides = array<i32>} : memref<288x128xbf16, #tpu.memory_space<vmem>>, vector<32x128xbf16>,
    %c0_36 = arith.constant 0 : index
    %c0_37 = arith.constant 0 : index
    %55 = vector.load %arg3[%c0_36, %c0_37] : memref<32x288xbf16, #tpu.memory_space<vmem>>, vector<32x288xbf16>
    %c0_38 = arith.constant 0 : index
    %c0_39 = arith.constant 0 : index
    %56 = vector.load %arg6[%c0_38, %c0_39] : memref<288x128xbf16, #tpu.memory_space<vmem>>, vector<288x128xbf16>
    %cst_40 = arith.constant dense<0.000000e+00> : vector<32x128xf32>
    %57 = tpu.matmul %55, %56, %cst_40 {dimension_numbers = #tpu.dot_dimension_numbers<[1], [0], [0], [1], [0, 0, 1, 1], [], []>} : vector<32x288xbf16>, vector<288x128xbf16>, vector<32x128xf32> -> vector<32x128xf32>
    %c128_i32_41 = arith.constant 128 : i32
    %58 = arith.muli %c0_i32, %c128_i32_41 : i32
    %59 = tpu.assume_multiple %58, 128 : i32
    %60 = tpu.iota {dimensions = array<i32: 1>} : vector<1x128xi32>
    %61 = vector.broadcast %59 : i32 to vector<1x128xi32>
    %62 = arith.addi %61, %60 : vector<1x128xi32>
    %c6_i32_42 = arith.constant 6 : i32
    %c0_i32_43 = arith.constant 0 : i32
    %63 = arith.cmpi eq, %c6_i32_42, %c0_i32_43 : i32
    %c1_i32_44 = arith.constant 1 : i32
    %64 = arith.select %63, %c1_i32_44, %c6_i32_42 : i32
    %65 = vector.broadcast %64 : i32 to vector<1x128xi32>
    %66 = arith.remsi %62, %65 : vector<1x128xi32>
    %c0_i32_45 = arith.constant 0 : i32
    %67 = vector.broadcast %c0_i32_45 : i32 to vector<1x128xi32>
    %68 = arith.cmpi ne, %66, %67 : vector<1x128xi32>
    %c0_i32_46 = arith.constant 0 : i32
    %69 = vector.broadcast %c0_i32_46 : i32 to vector<1x128xi32>
    %70 = arith.cmpi slt, %66, %69 : vector<1x128xi32>
    %c0_i32_47 = arith.constant 0 : i32
    %71 = arith.cmpi slt, %64, %c0_i32_47 : i32
    %72 = vector.broadcast %71 : i1 to vector<1x128xi1>
    %73 = vector.broadcast %72 : vector<1x128xi1> to vector<1x128xi1>
    %74 = arith.xori %70, %73 : vector<1x128xi1>
    %75 = arith.andi %74, %68 : vector<1x128xi1>
    %76 = vector.broadcast %64 : i32 to vector<1x128xi32>
    %77 = arith.addi %66, %76 : vector<1x128xi32>
    %78 = arith.select %75, %77, %66 : vector<1x128xi1>, vector<1x128xi32>
    %c4_i32 = arith.constant 4 : i32
    %79 = vector.broadcast %c4_i32 : i32 to vector<1x128xi32>
    %80 = arith.cmpi slt, %78, %79 : vector<1x128xi32>
    %c24_i32 = arith.constant 24 : i32
    %81 = vector.broadcast %c24_i32 : i32 to vector<1x128xi32>
    %82 = arith.cmpi slt, %62, %81 : vector<1x128xi32>
    %83 = arith.andi %80, %82 : vector<1x128xi1>
    %84 = arith.extui %83 : vector<1x128xi1> to vector<1x128xi32>
    %85 = arith.sitofp %84 : vector<1x128xi32> to vector<1x128xf32>
    %86 = vector.broadcast %85 : vector<1x128xf32> to vector<32x128xf32>
    %87 = arith.mulf %57, %86 : vector<32x128xf32>
    %cst_48 = arith.constant dense<0.000000e+00> : vector<32xf32>
    %88 = vector.multi_reduction <add>, %87, %cst_48 [1] : vector<32x128xf32> to vector<32xf32>
    %89 = vector.shape_cast %88 : vector<32xf32> to vector<32x1xf32>
    %90 = arith.addf %0, %89 : vector<32x1xf32>
    %91 = arith.mulf %57, %87 : vector<32x128xf32>
    %cst_49 = arith.constant dense<0.000000e+00> : vector<32xf32>
    %92 = vector.multi_reduction <add>, %91, %cst_49 [1] : vector<32x128xf32> to vector<32xf32>
    %93 = vector.shape_cast %92 : vector<32xf32> to vector<32x1xf32>
    %94 = arith.addf %0, %93 : vector<32x1xf32>
    %c0_50 = arith.constant 0 : index
    %95 = arith.index_cast %59 : i32 to index
    %96 = vector.load %arg7[%c0_50, %95] : memref<32x128xf32, #tpu.memory_space<vmem>>, vector<32x128xf32>
    tpu.vector_store %arg7[%c0_50, %95], %57 {strides = array<i32>} : memref<32x128xf32, #tpu.memory_space<vmem>>, vector<32x128xf32>,
    %c1_i32_51 = arith.constant 1 : i32
    %cst_52 = arith.constant 6.250000e-02 : f32
    %97 = vector.broadcast %cst_52 : f32 to vector<32x1xf32>
    %98 = arith.mulf %90, %97 : vector<32x1xf32>
    %cst_53 = arith.constant 6.250000e-02 : f32
    %99 = vector.broadcast %cst_53 : f32 to vector<32x1xf32>
    %100 = arith.mulf %94, %99 : vector<32x1xf32>
    %101 = arith.mulf %98, %98 : vector<32x1xf32>
    %102 = arith.subf %100, %101 : vector<32x1xf32>
    %cst_54 = arith.constant 0.000000e+00 : f32
    %103 = vector.broadcast %cst_54 : f32 to vector<32x1xf32>
    %104 = arith.maximumf %102, %103 : vector<32x1xf32>
    %cst_55 = arith.constant 9.99999974E-6 : f32
    %105 = vector.broadcast %cst_55 : f32 to vector<32x1xf32>
    %106 = arith.addf %104, %105 : vector<32x1xf32>
    %107 = math.rsqrt %106 : vector<32x1xf32>
    %c0_i32_56 = arith.constant 0 : i32
    %c128_i32_57 = arith.constant 128 : i32
    %108 = arith.muli %c0_i32_56, %c128_i32_57 : i32
    %109 = tpu.assume_multiple %108, 128 : i32
    %c0_58 = arith.constant 0 : index
    %110 = arith.index_cast %109 : i32 to index
    %111 = vector.load %arg7[%c0_58, %110] : memref<32x128xf32, #tpu.memory_space<vmem>>, vector<32x128xf32>
    %112 = vector.broadcast %98 : vector<32x1xf32> to vector<32x128xf32>
    %113 = arith.subf %111, %112 : vector<32x128xf32>
    %114 = vector.broadcast %107 : vector<32x1xf32> to vector<32x128xf32>
    %115 = arith.mulf %113, %114 : vector<32x128xf32>
    %c0_59 = arith.constant 0 : index
    %c0_60 = arith.constant 0 : index
    %116 = arith.index_cast %109 : i32 to index
    %117 = vector.load %arg4[%c0_59, %c0_60, %116] : memref<1x32x128xbf16, #tpu.memory_space<vmem>>, vector<1x32x128xbf16>
    %118 = vector.shape_cast %117 : vector<1x32x128xbf16> to vector<32x128xbf16>
    %119 = arith.extf %118 : vector<32x128xbf16> to vector<32x128xf32>
    %120 = arith.addf %115, %119 : vector<32x128xf32>
    %121 = arith.truncf %120 : vector<32x128xf32> to vector<32x128xbf16>
    %c0_61 = arith.constant 0 : index
    %c0_62 = arith.constant 0 : index
    %122 = arith.index_cast %109 : i32 to index
    %123 = vector.load %arg5[%c0_61, %c0_62, %122] : memref<1x32x128xbf16, #tpu.memory_space<vmem>>, vector<1x32x128xbf16>
    %124 = vector.shape_cast %123 : vector<1x32x128xbf16> to vector<32x128xbf16>
    %125 = vector.shape_cast %121 : vector<32x128xbf16> to vector<1x32x128xbf16>
    tpu.vector_store %arg5[%c0_61, %c0_62, %122], %125 {strides = array<i32>} : memref<1x32x128xbf16, #tpu.memory_space<vmem>>, vector<1x32x128xbf16>,
    %c1_i32_63 = arith.constant 1 : i32
    return
  }
  func.func @transform_0(%arg0: i32, %arg1: i32) -> (i32, i32, i32) {
    %c0_i32 = arith.constant 0 : i32
    %c0_i32_0 = arith.constant 0 : i32
    %c0_i32_1 = arith.constant 0 : i32
    return %arg0, %c0_i32, %c0_i32_0 : i32, i32, i32
  }
  func.func @transform_1(%arg0: i32, %arg1: i32) -> (i32, i32) {
    %c0_i32 = arith.constant 0 : i32
    %c0_i32_0 = arith.constant 0 : i32
    return %arg1, %c0_i32 : i32, i32
  }
  func.func @transform_2(%arg0: i32, %arg1: i32) -> (i32, i32, i32) {
    %c0_i32 = arith.constant 0 : i32
    %c0_i32_0 = arith.constant 0 : i32
    return %arg0, %arg1, %c0_i32 : i32, i32, i32
  }
  func.func @transform_3(%arg0: i32, %arg1: i32) -> (i32, i32, i32) {
    %c0_i32 = arith.constant 0 : i32
    %c0_i32_0 = arith.constant 0 : i32
    return %arg0, %arg1, %c0_i32 : i32, i32, i32
  }
}

module attributes {stable_mosaic.version = 11 : i64} {
  func.func @_conv_kernel(%arg0: i32, %arg1: i32, %arg2: memref<1x32x256xbf16, #tpu.memory_space<vmem>>, %arg3: memref<64x128xbf16, #tpu.memory_space<vmem>>, %arg4: memref<1x64x128xbf16, #tpu.memory_space<vmem>>, %arg5: memref<128x128xbf16, #tpu.memory_space<vmem>>, %arg6: memref<64x128xf32, #tpu.memory_space<vmem>>) attributes {dimension_semantics = [#tpu.dimension_semantics<parallel>, #tpu.dimension_semantics<parallel>], iteration_bounds = array<i64: 2, 1>, scalar_prefetch = 0 : i64, scratch_operands = 2 : i64, tpu.core_type = #tpu.core_type<tc>, window_params = [{transform_indices = @transform_0, window_bounds = array<i64: 1, 32, 256>}, {transform_indices = @transform_1, window_bounds = array<i64: 64, 128>}, {transform_indices = @transform_2, window_bounds = array<i64: 1, 64, 128>}]} {
    %cst = arith.constant 0.000000e+00 : f32
    %0 = vector.broadcast %cst : f32 to vector<64x1xf32>
    %c0_i32 = arith.constant 0 : i32
    %c128_i32 = arith.constant 128 : i32
    %1 = arith.muli %c0_i32, %c128_i32 : i32
    %c0_i32_0 = arith.constant 0 : i32
    %2 = arith.addi %c0_i32_0, %1 : i32
    %c0 = arith.constant 0 : index
    %c0_1 = arith.constant 0 : index
    %3 = arith.index_cast %2 : i32 to index
    %4 = vector.load %arg2[%c0, %c0_1, %3] : memref<1x32x256xbf16, #tpu.memory_space<vmem>>, vector<1x32x128xbf16>
    %5 = vector.shape_cast %4 : vector<1x32x128xbf16> to vector<32x128xbf16>
    %c0_2 = arith.constant 0 : index
    %c0_3 = arith.constant 0 : index
    %6 = vector.load %arg5[%c0_2, %c0_3] : memref<128x128xbf16, #tpu.memory_space<vmem>>, vector<32x128xbf16>
    tpu.vector_store %arg5[%c0_2, %c0_3], %5 {strides = array<i32>} : memref<128x128xbf16, #tpu.memory_space<vmem>>, vector<32x128xbf16>,
    %c128_i32_4 = arith.constant 128 : i32
    %7 = arith.muli %c0_i32, %c128_i32_4 : i32
    %c1_i32 = arith.constant 1 : i32
    %8 = arith.addi %c1_i32, %7 : i32
    %c0_5 = arith.constant 0 : index
    %c0_6 = arith.constant 0 : index
    %9 = arith.index_cast %8 : i32 to index
    %10 = vector.load %arg2[%c0_5, %c0_6, %9] : memref<1x32x256xbf16, #tpu.memory_space<vmem>>, vector<1x32x128xbf16>
    %11 = vector.shape_cast %10 : vector<1x32x128xbf16> to vector<32x128xbf16>
    %c32 = arith.constant 32 : index
    %c0_7 = arith.constant 0 : index
    %12 = vector.load %arg5[%c32, %c0_7] : memref<128x128xbf16, #tpu.memory_space<vmem>>, vector<32x128xbf16>
    tpu.vector_store %arg5[%c32, %c0_7], %11 {strides = array<i32>} : memref<128x128xbf16, #tpu.memory_space<vmem>>, vector<32x128xbf16>,
    %c128_i32_8 = arith.constant 128 : i32
    %13 = arith.muli %c0_i32, %c128_i32_8 : i32
    %c5_i32 = arith.constant 5 : i32
    %14 = arith.addi %c5_i32, %13 : i32
    %c0_9 = arith.constant 0 : index
    %c0_10 = arith.constant 0 : index
    %15 = arith.index_cast %14 : i32 to index
    %16 = vector.load %arg2[%c0_9, %c0_10, %15] : memref<1x32x256xbf16, #tpu.memory_space<vmem>>, vector<1x32x128xbf16>
    %17 = vector.shape_cast %16 : vector<1x32x128xbf16> to vector<32x128xbf16>
    %c64 = arith.constant 64 : index
    %c0_11 = arith.constant 0 : index
    %18 = vector.load %arg5[%c64, %c0_11] : memref<128x128xbf16, #tpu.memory_space<vmem>>, vector<32x128xbf16>
    tpu.vector_store %arg5[%c64, %c0_11], %17 {strides = array<i32>} : memref<128x128xbf16, #tpu.memory_space<vmem>>, vector<32x128xbf16>,
    %c128_i32_12 = arith.constant 128 : i32
    %19 = arith.muli %c0_i32, %c128_i32_12 : i32
    %c6_i32 = arith.constant 6 : i32
    %20 = arith.addi %c6_i32, %19 : i32
    %c0_13 = arith.constant 0 : index
    %c0_14 = arith.constant 0 : index
    %21 = arith.index_cast %20 : i32 to index
    %22 = vector.load %arg2[%c0_13, %c0_14, %21] : memref<1x32x256xbf16, #tpu.memory_space<vmem>>, vector<1x32x128xbf16>
    %23 = vector.shape_cast %22 : vector<1x32x128xbf16> to vector<32x128xbf16>
    %c96 = arith.constant 96 : index
    %c0_15 = arith.constant 0 : index
    %24 = vector.load %arg5[%c96, %c0_15] : memref<128x128xbf16, #tpu.memory_space<vmem>>, vector<32x128xbf16>
    tpu.vector_store %arg5[%c96, %c0_15], %23 {strides = array<i32>} : memref<128x128xbf16, #tpu.memory_space<vmem>>, vector<32x128xbf16>,
    %c0_16 = arith.constant 0 : index
    %c0_17 = arith.constant 0 : index
    %25 = vector.load %arg3[%c0_16, %c0_17] : memref<64x128xbf16, #tpu.memory_space<vmem>>, vector<64x128xbf16>
    %c0_18 = arith.constant 0 : index
    %c0_19 = arith.constant 0 : index
    %26 = vector.load %arg5[%c0_18, %c0_19] : memref<128x128xbf16, #tpu.memory_space<vmem>>, vector<128x128xbf16>
    %cst_20 = arith.constant dense<0.000000e+00> : vector<64x128xf32>
    %27 = tpu.matmul %25, %26, %cst_20 {dimension_numbers = #tpu.dot_dimension_numbers<[1], [0], [0], [1], [0, 0, 1, 1], [], []>} : vector<64x128xbf16>, vector<128x128xbf16>, vector<64x128xf32> -> vector<64x128xf32>
    %c128_i32_21 = arith.constant 128 : i32
    %28 = arith.muli %c0_i32, %c128_i32_21 : i32
    %29 = tpu.assume_multiple %28, 128 : i32
    %30 = tpu.iota {dimensions = array<i32: 1>} : vector<1x128xi32>
    %31 = vector.broadcast %29 : i32 to vector<1x128xi32>
    %32 = arith.addi %31, %30 : vector<1x128xi32>
    %c5_i32_22 = arith.constant 5 : i32
    %c0_i32_23 = arith.constant 0 : i32
    %33 = arith.cmpi eq, %c5_i32_22, %c0_i32_23 : i32
    %c1_i32_24 = arith.constant 1 : i32
    %34 = arith.select %33, %c1_i32_24, %c5_i32_22 : i32
    %35 = vector.broadcast %34 : i32 to vector<1x128xi32>
    %36 = arith.remsi %32, %35 : vector<1x128xi32>
    %c0_i32_25 = arith.constant 0 : i32
    %37 = vector.broadcast %c0_i32_25 : i32 to vector<1x128xi32>
    %38 = arith.cmpi ne, %36, %37 : vector<1x128xi32>
    %c0_i32_26 = arith.constant 0 : i32
    %39 = vector.broadcast %c0_i32_26 : i32 to vector<1x128xi32>
    %40 = arith.cmpi slt, %36, %39 : vector<1x128xi32>
    %c0_i32_27 = arith.constant 0 : i32
    %41 = arith.cmpi slt, %34, %c0_i32_27 : i32
    %42 = vector.broadcast %41 : i1 to vector<1x128xi1>
    %43 = vector.broadcast %42 : vector<1x128xi1> to vector<1x128xi1>
    %44 = arith.xori %40, %43 : vector<1x128xi1>
    %45 = arith.andi %44, %38 : vector<1x128xi1>
    %46 = vector.broadcast %34 : i32 to vector<1x128xi32>
    %47 = arith.addi %36, %46 : vector<1x128xi32>
    %48 = arith.select %45, %47, %36 : vector<1x128xi1>, vector<1x128xi32>
    %c4_i32 = arith.constant 4 : i32
    %49 = vector.broadcast %c4_i32 : i32 to vector<1x128xi32>
    %50 = arith.cmpi slt, %48, %49 : vector<1x128xi32>
    %c20_i32 = arith.constant 20 : i32
    %51 = vector.broadcast %c20_i32 : i32 to vector<1x128xi32>
    %52 = arith.cmpi slt, %32, %51 : vector<1x128xi32>
    %53 = arith.andi %50, %52 : vector<1x128xi1>
    %54 = arith.extui %53 : vector<1x128xi1> to vector<1x128xi32>
    %55 = arith.sitofp %54 : vector<1x128xi32> to vector<1x128xf32>
    %56 = vector.broadcast %55 : vector<1x128xf32> to vector<64x128xf32>
    %57 = arith.mulf %27, %56 : vector<64x128xf32>
    %cst_28 = arith.constant dense<0.000000e+00> : vector<64xf32>
    %58 = vector.multi_reduction <add>, %57, %cst_28 [1] : vector<64x128xf32> to vector<64xf32>
    %59 = vector.shape_cast %58 : vector<64xf32> to vector<64x1xf32>
    %60 = arith.addf %0, %59 : vector<64x1xf32>
    %61 = arith.mulf %27, %57 : vector<64x128xf32>
    %cst_29 = arith.constant dense<0.000000e+00> : vector<64xf32>
    %62 = vector.multi_reduction <add>, %61, %cst_29 [1] : vector<64x128xf32> to vector<64xf32>
    %63 = vector.shape_cast %62 : vector<64xf32> to vector<64x1xf32>
    %64 = arith.addf %0, %63 : vector<64x1xf32>
    %c0_30 = arith.constant 0 : index
    %65 = arith.index_cast %29 : i32 to index
    %66 = vector.load %arg6[%c0_30, %65] : memref<64x128xf32, #tpu.memory_space<vmem>>, vector<64x128xf32>
    tpu.vector_store %arg6[%c0_30, %65], %27 {strides = array<i32>} : memref<64x128xf32, #tpu.memory_space<vmem>>, vector<64x128xf32>,
    %c1_i32_31 = arith.constant 1 : i32
    %67 = vector.extract_strided_slice %60 {offsets = [0, 0], sizes = [16, 1], strides = [1, 1]} : vector<64x1xf32> to vector<16x1xf32>
    %68 = vector.extract_strided_slice %64 {offsets = [0, 0], sizes = [16, 1], strides = [1, 1]} : vector<64x1xf32> to vector<16x1xf32>
    %69 = vector.extract_strided_slice %60 {offsets = [16, 0], sizes = [16, 1], strides = [1, 1]} : vector<64x1xf32> to vector<16x1xf32>
    %70 = arith.addf %67, %69 : vector<16x1xf32>
    %71 = vector.extract_strided_slice %64 {offsets = [16, 0], sizes = [16, 1], strides = [1, 1]} : vector<64x1xf32> to vector<16x1xf32>
    %72 = arith.addf %68, %71 : vector<16x1xf32>
    %73 = vector.extract_strided_slice %60 {offsets = [32, 0], sizes = [16, 1], strides = [1, 1]} : vector<64x1xf32> to vector<16x1xf32>
    %74 = arith.addf %70, %73 : vector<16x1xf32>
    %75 = vector.extract_strided_slice %64 {offsets = [32, 0], sizes = [16, 1], strides = [1, 1]} : vector<64x1xf32> to vector<16x1xf32>
    %76 = arith.addf %72, %75 : vector<16x1xf32>
    %77 = vector.extract_strided_slice %60 {offsets = [48, 0], sizes = [16, 1], strides = [1, 1]} : vector<64x1xf32> to vector<16x1xf32>
    %78 = arith.addf %74, %77 : vector<16x1xf32>
    %79 = vector.extract_strided_slice %64 {offsets = [48, 0], sizes = [16, 1], strides = [1, 1]} : vector<64x1xf32> to vector<16x1xf32>
    %80 = arith.addf %76, %79 : vector<16x1xf32>
    %81 = tpu.concatenate %78, %78, %78, %78 in 0 : vector<16x1xf32>, vector<16x1xf32>, vector<16x1xf32>, vector<16x1xf32> -> vector<64x1xf32>
    %82 = tpu.concatenate %80, %80, %80, %80 in 0 : vector<16x1xf32>, vector<16x1xf32>, vector<16x1xf32>, vector<16x1xf32> -> vector<64x1xf32>
    %cst_32 = arith.constant 1.562500e-02 : f32
    %83 = vector.broadcast %cst_32 : f32 to vector<64x1xf32>
    %84 = arith.mulf %81, %83 : vector<64x1xf32>
    %cst_33 = arith.constant 1.562500e-02 : f32
    %85 = vector.broadcast %cst_33 : f32 to vector<64x1xf32>
    %86 = arith.mulf %82, %85 : vector<64x1xf32>
    %87 = arith.mulf %84, %84 : vector<64x1xf32>
    %88 = arith.subf %86, %87 : vector<64x1xf32>
    %cst_34 = arith.constant 0.000000e+00 : f32
    %89 = vector.broadcast %cst_34 : f32 to vector<64x1xf32>
    %90 = arith.maximumf %88, %89 : vector<64x1xf32>
    %cst_35 = arith.constant 9.99999974E-6 : f32
    %91 = vector.broadcast %cst_35 : f32 to vector<64x1xf32>
    %92 = arith.addf %90, %91 : vector<64x1xf32>
    %93 = math.rsqrt %92 : vector<64x1xf32>
    %c0_i32_36 = arith.constant 0 : i32
    %c128_i32_37 = arith.constant 128 : i32
    %94 = arith.muli %c0_i32_36, %c128_i32_37 : i32
    %95 = tpu.assume_multiple %94, 128 : i32
    %c0_38 = arith.constant 0 : index
    %96 = arith.index_cast %95 : i32 to index
    %97 = vector.load %arg6[%c0_38, %96] : memref<64x128xf32, #tpu.memory_space<vmem>>, vector<64x128xf32>
    %98 = vector.broadcast %84 : vector<64x1xf32> to vector<64x128xf32>
    %99 = arith.subf %97, %98 : vector<64x128xf32>
    %100 = vector.broadcast %93 : vector<64x1xf32> to vector<64x128xf32>
    %101 = arith.mulf %99, %100 : vector<64x128xf32>
    %cst_39 = arith.constant 0.000000e+00 : f32
    %102 = vector.broadcast %cst_39 : f32 to vector<64x128xf32>
    %103 = arith.maximumf %101, %102 : vector<64x128xf32>
    %104 = arith.truncf %103 : vector<64x128xf32> to vector<64x128xbf16>
    %c0_40 = arith.constant 0 : index
    %c0_41 = arith.constant 0 : index
    %105 = arith.index_cast %95 : i32 to index
    %106 = vector.load %arg4[%c0_40, %c0_41, %105] : memref<1x64x128xbf16, #tpu.memory_space<vmem>>, vector<1x64x128xbf16>
    %107 = vector.shape_cast %106 : vector<1x64x128xbf16> to vector<64x128xbf16>
    %108 = vector.shape_cast %104 : vector<64x128xbf16> to vector<1x64x128xbf16>
    tpu.vector_store %arg4[%c0_40, %c0_41, %105], %108 {strides = array<i32>} : memref<1x64x128xbf16, #tpu.memory_space<vmem>>, vector<1x64x128xbf16>,
    %c1_i32_42 = arith.constant 1 : i32
    return
  }
  func.func @transform_0(%arg0: i32, %arg1: i32) -> (i32, i32, i32) {
    %c0_i32 = arith.constant 0 : i32
    %c0_i32_0 = arith.constant 0 : i32
    %c0_i32_1 = arith.constant 0 : i32
    return %arg0, %c0_i32, %c0_i32_0 : i32, i32, i32
  }
  func.func @transform_1(%arg0: i32, %arg1: i32) -> (i32, i32) {
    %c0_i32 = arith.constant 0 : i32
    %c0_i32_0 = arith.constant 0 : i32
    return %arg1, %c0_i32 : i32, i32
  }
  func.func @transform_2(%arg0: i32, %arg1: i32) -> (i32, i32, i32) {
    %c0_i32 = arith.constant 0 : i32
    %c0_i32_0 = arith.constant 0 : i32
    return %arg0, %arg1, %c0_i32 : i32, i32, i32
  }
}

module attributes {stable_mosaic.version = 11 : i64} {
  func.func @_conv_kernel(%arg0: i32, %arg1: i32, %arg2: memref<1x16x256xbf16, #tpu.memory_space<vmem>>, %arg3: memref<32x64xbf16, #tpu.memory_space<vmem>>, %arg4: memref<1x32x128xbf16, #tpu.memory_space<vmem>>, %arg5: memref<64x128xbf16, #tpu.memory_space<vmem>>, %arg6: memref<32x128xf32, #tpu.memory_space<vmem>>) attributes {dimension_semantics = [#tpu.dimension_semantics<parallel>, #tpu.dimension_semantics<parallel>], iteration_bounds = array<i64: 2, 1>, scalar_prefetch = 0 : i64, scratch_operands = 2 : i64, tpu.core_type = #tpu.core_type<tc>, window_params = [{transform_indices = @transform_0, window_bounds = array<i64: 1, 16, 256>}, {transform_indices = @transform_1, window_bounds = array<i64: 32, 64>}, {transform_indices = @transform_2, window_bounds = array<i64: 1, 32, 128>}]} {
    %cst = arith.constant 0.000000e+00 : f32
    %0 = vector.broadcast %cst : f32 to vector<32x1xf32>
    %c0_i32 = arith.constant 0 : i32
    %c128_i32 = arith.constant 128 : i32
    %1 = arith.muli %c0_i32, %c128_i32 : i32
    %c0_i32_0 = arith.constant 0 : i32
    %2 = arith.addi %c0_i32_0, %1 : i32
    %c0 = arith.constant 0 : index
    %c0_1 = arith.constant 0 : index
    %3 = arith.index_cast %2 : i32 to index
    %4 = vector.load %arg2[%c0, %c0_1, %3] : memref<1x16x256xbf16, #tpu.memory_space<vmem>>, vector<1x16x128xbf16>
    %5 = vector.shape_cast %4 : vector<1x16x128xbf16> to vector<16x128xbf16>
    %c0_2 = arith.constant 0 : index
    %c0_3 = arith.constant 0 : index
    %6 = vector.load %arg5[%c0_2, %c0_3] : memref<64x128xbf16, #tpu.memory_space<vmem>>, vector<16x128xbf16>
    tpu.vector_store %arg5[%c0_2, %c0_3], %5 {strides = array<i32>} : memref<64x128xbf16, #tpu.memory_space<vmem>>, vector<16x128xbf16>,
    %c128_i32_4 = arith.constant 128 : i32
    %7 = arith.muli %c0_i32, %c128_i32_4 : i32
    %c1_i32 = arith.constant 1 : i32
    %8 = arith.addi %c1_i32, %7 : i32
    %c0_5 = arith.constant 0 : index
    %c0_6 = arith.constant 0 : index
    %9 = arith.index_cast %8 : i32 to index
    %10 = vector.load %arg2[%c0_5, %c0_6, %9] : memref<1x16x256xbf16, #tpu.memory_space<vmem>>, vector<1x16x128xbf16>
    %11 = vector.shape_cast %10 : vector<1x16x128xbf16> to vector<16x128xbf16>
    %c16 = arith.constant 16 : index
    %c0_7 = arith.constant 0 : index
    %12 = vector.load %arg5[%c16, %c0_7] : memref<64x128xbf16, #tpu.memory_space<vmem>>, vector<16x128xbf16>
    tpu.vector_store %arg5[%c16, %c0_7], %11 {strides = array<i32>} : memref<64x128xbf16, #tpu.memory_space<vmem>>, vector<16x128xbf16>,
    %c128_i32_8 = arith.constant 128 : i32
    %13 = arith.muli %c0_i32, %c128_i32_8 : i32
    %c9_i32 = arith.constant 9 : i32
    %14 = arith.addi %c9_i32, %13 : i32
    %c0_9 = arith.constant 0 : index
    %c0_10 = arith.constant 0 : index
    %15 = arith.index_cast %14 : i32 to index
    %16 = vector.load %arg2[%c0_9, %c0_10, %15] : memref<1x16x256xbf16, #tpu.memory_space<vmem>>, vector<1x16x128xbf16>
    %17 = vector.shape_cast %16 : vector<1x16x128xbf16> to vector<16x128xbf16>
    %c32 = arith.constant 32 : index
    %c0_11 = arith.constant 0 : index
    %18 = vector.load %arg5[%c32, %c0_11] : memref<64x128xbf16, #tpu.memory_space<vmem>>, vector<16x128xbf16>
    tpu.vector_store %arg5[%c32, %c0_11], %17 {strides = array<i32>} : memref<64x128xbf16, #tpu.memory_space<vmem>>, vector<16x128xbf16>,
    %c128_i32_12 = arith.constant 128 : i32
    %19 = arith.muli %c0_i32, %c128_i32_12 : i32
    %c10_i32 = arith.constant 10 : i32
    %20 = arith.addi %c10_i32, %19 : i32
    %c0_13 = arith.constant 0 : index
    %c0_14 = arith.constant 0 : index
    %21 = arith.index_cast %20 : i32 to index
    %22 = vector.load %arg2[%c0_13, %c0_14, %21] : memref<1x16x256xbf16, #tpu.memory_space<vmem>>, vector<1x16x128xbf16>
    %23 = vector.shape_cast %22 : vector<1x16x128xbf16> to vector<16x128xbf16>
    %c48 = arith.constant 48 : index
    %c0_15 = arith.constant 0 : index
    %24 = vector.load %arg5[%c48, %c0_15] : memref<64x128xbf16, #tpu.memory_space<vmem>>, vector<16x128xbf16>
    tpu.vector_store %arg5[%c48, %c0_15], %23 {strides = array<i32>} : memref<64x128xbf16, #tpu.memory_space<vmem>>, vector<16x128xbf16>,
    %c0_16 = arith.constant 0 : index
    %c0_17 = arith.constant 0 : index
    %25 = vector.load %arg3[%c0_16, %c0_17] : memref<32x64xbf16, #tpu.memory_space<vmem>>, vector<32x64xbf16>
    %c0_18 = arith.constant 0 : index
    %c0_19 = arith.constant 0 : index
    %26 = vector.load %arg5[%c0_18, %c0_19] : memref<64x128xbf16, #tpu.memory_space<vmem>>, vector<64x128xbf16>
    %cst_20 = arith.constant dense<0.000000e+00> : vector<32x128xf32>
    %27 = tpu.matmul %25, %26, %cst_20 {dimension_numbers = #tpu.dot_dimension_numbers<[1], [0], [0], [1], [0, 0, 1, 1], [], []>} : vector<32x64xbf16>, vector<64x128xbf16>, vector<32x128xf32> -> vector<32x128xf32>
    %c128_i32_21 = arith.constant 128 : i32
    %28 = arith.muli %c0_i32, %c128_i32_21 : i32
    %29 = tpu.assume_multiple %28, 128 : i32
    %30 = tpu.iota {dimensions = array<i32: 1>} : vector<1x128xi32>
    %31 = vector.broadcast %29 : i32 to vector<1x128xi32>
    %32 = arith.addi %31, %30 : vector<1x128xi32>
    %c9_i32_22 = arith.constant 9 : i32
    %c0_i32_23 = arith.constant 0 : i32
    %33 = arith.cmpi eq, %c9_i32_22, %c0_i32_23 : i32
    %c1_i32_24 = arith.constant 1 : i32
    %34 = arith.select %33, %c1_i32_24, %c9_i32_22 : i32
    %35 = vector.broadcast %34 : i32 to vector<1x128xi32>
    %36 = arith.remsi %32, %35 : vector<1x128xi32>
    %c0_i32_25 = arith.constant 0 : i32
    %37 = vector.broadcast %c0_i32_25 : i32 to vector<1x128xi32>
    %38 = arith.cmpi ne, %36, %37 : vector<1x128xi32>
    %c0_i32_26 = arith.constant 0 : i32
    %39 = vector.broadcast %c0_i32_26 : i32 to vector<1x128xi32>
    %40 = arith.cmpi slt, %36, %39 : vector<1x128xi32>
    %c0_i32_27 = arith.constant 0 : i32
    %41 = arith.cmpi slt, %34, %c0_i32_27 : i32
    %42 = vector.broadcast %41 : i1 to vector<1x128xi1>
    %43 = vector.broadcast %42 : vector<1x128xi1> to vector<1x128xi1>
    %44 = arith.xori %40, %43 : vector<1x128xi1>
    %45 = arith.andi %44, %38 : vector<1x128xi1>
    %46 = vector.broadcast %34 : i32 to vector<1x128xi32>
    %47 = arith.addi %36, %46 : vector<1x128xi32>
    %48 = arith.select %45, %47, %36 : vector<1x128xi1>, vector<1x128xi32>
    %c8_i32 = arith.constant 8 : i32
    %49 = vector.broadcast %c8_i32 : i32 to vector<1x128xi32>
    %50 = arith.cmpi slt, %48, %49 : vector<1x128xi32>
    %c72_i32 = arith.constant 72 : i32
    %51 = vector.broadcast %c72_i32 : i32 to vector<1x128xi32>
    %52 = arith.cmpi slt, %32, %51 : vector<1x128xi32>
    %53 = arith.andi %50, %52 : vector<1x128xi1>
    %54 = arith.extui %53 : vector<1x128xi1> to vector<1x128xi32>
    %55 = arith.sitofp %54 : vector<1x128xi32> to vector<1x128xf32>
    %56 = vector.broadcast %55 : vector<1x128xf32> to vector<32x128xf32>
    %57 = arith.mulf %27, %56 : vector<32x128xf32>
    %cst_28 = arith.constant dense<0.000000e+00> : vector<32xf32>
    %58 = vector.multi_reduction <add>, %57, %cst_28 [1] : vector<32x128xf32> to vector<32xf32>
    %59 = vector.shape_cast %58 : vector<32xf32> to vector<32x1xf32>
    %60 = arith.addf %0, %59 : vector<32x1xf32>
    %61 = arith.mulf %27, %57 : vector<32x128xf32>
    %cst_29 = arith.constant dense<0.000000e+00> : vector<32xf32>
    %62 = vector.multi_reduction <add>, %61, %cst_29 [1] : vector<32x128xf32> to vector<32xf32>
    %63 = vector.shape_cast %62 : vector<32xf32> to vector<32x1xf32>
    %64 = arith.addf %0, %63 : vector<32x1xf32>
    %c0_30 = arith.constant 0 : index
    %65 = arith.index_cast %29 : i32 to index
    %66 = vector.load %arg6[%c0_30, %65] : memref<32x128xf32, #tpu.memory_space<vmem>>, vector<32x128xf32>
    tpu.vector_store %arg6[%c0_30, %65], %27 {strides = array<i32>} : memref<32x128xf32, #tpu.memory_space<vmem>>, vector<32x128xf32>,
    %c1_i32_31 = arith.constant 1 : i32
    %67 = vector.extract_strided_slice %60 {offsets = [0, 0], sizes = [8, 1], strides = [1, 1]} : vector<32x1xf32> to vector<8x1xf32>
    %68 = vector.extract_strided_slice %64 {offsets = [0, 0], sizes = [8, 1], strides = [1, 1]} : vector<32x1xf32> to vector<8x1xf32>
    %69 = vector.extract_strided_slice %60 {offsets = [8, 0], sizes = [8, 1], strides = [1, 1]} : vector<32x1xf32> to vector<8x1xf32>
    %70 = arith.addf %67, %69 : vector<8x1xf32>
    %71 = vector.extract_strided_slice %64 {offsets = [8, 0], sizes = [8, 1], strides = [1, 1]} : vector<32x1xf32> to vector<8x1xf32>
    %72 = arith.addf %68, %71 : vector<8x1xf32>
    %73 = vector.extract_strided_slice %60 {offsets = [16, 0], sizes = [8, 1], strides = [1, 1]} : vector<32x1xf32> to vector<8x1xf32>
    %74 = arith.addf %70, %73 : vector<8x1xf32>
    %75 = vector.extract_strided_slice %64 {offsets = [16, 0], sizes = [8, 1], strides = [1, 1]} : vector<32x1xf32> to vector<8x1xf32>
    %76 = arith.addf %72, %75 : vector<8x1xf32>
    %77 = vector.extract_strided_slice %60 {offsets = [24, 0], sizes = [8, 1], strides = [1, 1]} : vector<32x1xf32> to vector<8x1xf32>
    %78 = arith.addf %74, %77 : vector<8x1xf32>
    %79 = vector.extract_strided_slice %64 {offsets = [24, 0], sizes = [8, 1], strides = [1, 1]} : vector<32x1xf32> to vector<8x1xf32>
    %80 = arith.addf %76, %79 : vector<8x1xf32>
    %81 = tpu.concatenate %78, %78, %78, %78 in 0 : vector<8x1xf32>, vector<8x1xf32>, vector<8x1xf32>, vector<8x1xf32> -> vector<32x1xf32>
    %82 = tpu.concatenate %80, %80, %80, %80 in 0 : vector<8x1xf32>, vector<8x1xf32>, vector<8x1xf32>, vector<8x1xf32> -> vector<32x1xf32>
    %cst_32 = arith.constant 3.906250e-03 : f32
    %83 = vector.broadcast %cst_32 : f32 to vector<32x1xf32>
    %84 = arith.mulf %81, %83 : vector<32x1xf32>
    %cst_33 = arith.constant 3.906250e-03 : f32
    %85 = vector.broadcast %cst_33 : f32 to vector<32x1xf32>
    %86 = arith.mulf %82, %85 : vector<32x1xf32>
    %87 = arith.mulf %84, %84 : vector<32x1xf32>
    %88 = arith.subf %86, %87 : vector<32x1xf32>
    %cst_34 = arith.constant 0.000000e+00 : f32
    %89 = vector.broadcast %cst_34 : f32 to vector<32x1xf32>
    %90 = arith.maximumf %88, %89 : vector<32x1xf32>
    %cst_35 = arith.constant 9.99999974E-6 : f32
    %91 = vector.broadcast %cst_35 : f32 to vector<32x1xf32>
    %92 = arith.addf %90, %91 : vector<32x1xf32>
    %93 = math.rsqrt %92 : vector<32x1xf32>
    %c0_i32_36 = arith.constant 0 : i32
    %c128_i32_37 = arith.constant 128 : i32
    %94 = arith.muli %c0_i32_36, %c128_i32_37 : i32
    %95 = tpu.assume_multiple %94, 128 : i32
    %c0_38 = arith.constant 0 : index
    %96 = arith.index_cast %95 : i32 to index
    %97 = vector.load %arg6[%c0_38, %96] : memref<32x128xf32, #tpu.memory_space<vmem>>, vector<32x128xf32>
    %98 = vector.broadcast %84 : vector<32x1xf32> to vector<32x128xf32>
    %99 = arith.subf %97, %98 : vector<32x128xf32>
    %100 = vector.broadcast %93 : vector<32x1xf32> to vector<32x128xf32>
    %101 = arith.mulf %99, %100 : vector<32x128xf32>
    %cst_39 = arith.constant 0.000000e+00 : f32
    %102 = vector.broadcast %cst_39 : f32 to vector<32x128xf32>
    %103 = arith.maximumf %101, %102 : vector<32x128xf32>
    %104 = arith.truncf %103 : vector<32x128xf32> to vector<32x128xbf16>
    %c0_40 = arith.constant 0 : index
    %c0_41 = arith.constant 0 : index
    %105 = arith.index_cast %95 : i32 to index
    %106 = vector.load %arg4[%c0_40, %c0_41, %105] : memref<1x32x128xbf16, #tpu.memory_space<vmem>>, vector<1x32x128xbf16>
    %107 = vector.shape_cast %106 : vector<1x32x128xbf16> to vector<32x128xbf16>
    %108 = vector.shape_cast %104 : vector<32x128xbf16> to vector<1x32x128xbf16>
    tpu.vector_store %arg4[%c0_40, %c0_41, %105], %108 {strides = array<i32>} : memref<1x32x128xbf16, #tpu.memory_space<vmem>>, vector<1x32x128xbf16>,
    %c1_i32_42 = arith.constant 1 : i32
    return
  }
  func.func @transform_0(%arg0: i32, %arg1: i32) -> (i32, i32, i32) {
    %c0_i32 = arith.constant 0 : i32
    %c0_i32_0 = arith.constant 0 : i32
    %c0_i32_1 = arith.constant 0 : i32
    return %arg0, %c0_i32, %c0_i32_0 : i32, i32, i32
  }
  func.func @transform_1(%arg0: i32, %arg1: i32) -> (i32, i32) {
    %c0_i32 = arith.constant 0 : i32
    %c0_i32_0 = arith.constant 0 : i32
    return %arg1, %c0_i32 : i32, i32
  }
  func.func @transform_2(%arg0: i32, %arg1: i32) -> (i32, i32, i32) {
    %c0_i32 = arith.constant 0 : i32
    %c0_i32_0 = arith.constant 0 : i32
    return %arg0, %arg1, %c0_i32 : i32, i32, i32
  }
}

module attributes {stable_mosaic.version = 11 : i64} {
  func.func @_conv_kernel(%arg0: i32, %arg1: i32, %arg2: memref<1x8x640xbf16, #tpu.memory_space<vmem>>, %arg3: memref<3x393xbf16, #tpu.memory_space<vmem>>, %arg4: memref<1x3x384xf32, #tpu.memory_space<vmem>>, %arg5: memref<393x384xbf16, #tpu.memory_space<vmem>>) attributes {dimension_semantics = [#tpu.dimension_semantics<parallel>, #tpu.dimension_semantics<parallel>], iteration_bounds = array<i64: 2, 1>, scalar_prefetch = 0 : i64, scratch_operands = 1 : i64, tpu.core_type = #tpu.core_type<tc>, window_params = [{transform_indices = @transform_0, window_bounds = array<i64: 1, 8, 640>}, {transform_indices = @transform_1, window_bounds = array<i64: 3, 393>}, {transform_indices = @transform_2, window_bounds = array<i64: 1, 3, 384>}]} {
    %cst = arith.constant 1.000000e+00 : bf16
    %0 = vector.broadcast %cst : bf16 to vector<1x384xbf16>
    %c392 = arith.constant 392 : index
    %c0 = arith.constant 0 : index
    %1 = vector.load %arg5[%c392, %c0] : memref<393x384xbf16, #tpu.memory_space<vmem>>, vector<1x384xbf16>
    tpu.vector_store %arg5[%c392, %c0], %0 {strides = array<i32>} : memref<393x384xbf16, #tpu.memory_space<vmem>>, vector<1x384xbf16>,
    %c0_i32 = arith.constant 0 : i32
    %c384_i32 = arith.constant 384 : i32
    %2 = arith.muli %c0_i32, %c384_i32 : i32
    %c0_i32_0 = arith.constant 0 : i32
    %3 = arith.addi %c0_i32_0, %2 : i32
    %c0_1 = arith.constant 0 : index
    %c0_2 = arith.constant 0 : index
    %4 = arith.index_cast %3 : i32 to index
    %5 = vector.load %arg2[%c0_1, %c0_2, %4] : memref<1x8x640xbf16, #tpu.memory_space<vmem>>, vector<1x8x384xbf16>
    %6 = vector.shape_cast %5 : vector<1x8x384xbf16> to vector<8x384xbf16>
    %c0_3 = arith.constant 0 : index
    %c0_4 = arith.constant 0 : index
    %7 = vector.load %arg5[%c0_3, %c0_4] : memref<393x384xbf16, #tpu.memory_space<vmem>>, vector<8x384xbf16>
    tpu.vector_store %arg5[%c0_3, %c0_4], %6 {strides = array<i32>} : memref<393x384xbf16, #tpu.memory_space<vmem>>, vector<8x384xbf16>,
    %c384_i32_5 = arith.constant 384 : i32
    %8 = arith.muli %c0_i32, %c384_i32_5 : i32
    %c1_i32 = arith.constant 1 : i32
    %9 = arith.addi %c1_i32, %8 : i32
    %c0_6 = arith.constant 0 : index
    %c0_7 = arith.constant 0 : index
    %10 = arith.index_cast %9 : i32 to index
    %11 = vector.load %arg2[%c0_6, %c0_7, %10] : memref<1x8x640xbf16, #tpu.memory_space<vmem>>, vector<1x8x384xbf16>
    %12 = vector.shape_cast %11 : vector<1x8x384xbf16> to vector<8x384xbf16>
    %c8 = arith.constant 8 : index
    %c0_8 = arith.constant 0 : index
    %13 = vector.load %arg5[%c8, %c0_8] : memref<393x384xbf16, #tpu.memory_space<vmem>>, vector<8x384xbf16>
    tpu.vector_store %arg5[%c8, %c0_8], %12 {strides = array<i32>} : memref<393x384xbf16, #tpu.memory_space<vmem>>, vector<8x384xbf16>,
    %c384_i32_9 = arith.constant 384 : i32
    %14 = arith.muli %c0_i32, %c384_i32_9 : i32
    %c2_i32 = arith.constant 2 : i32
    %15 = arith.addi %c2_i32, %14 : i32
    %c0_10 = arith.constant 0 : index
    %c0_11 = arith.constant 0 : index
    %16 = arith.index_cast %15 : i32 to index
    %17 = vector.load %arg2[%c0_10, %c0_11, %16] : memref<1x8x640xbf16, #tpu.memory_space<vmem>>, vector<1x8x384xbf16>
    %18 = vector.shape_cast %17 : vector<1x8x384xbf16> to vector<8x384xbf16>
    %c16 = arith.constant 16 : index
    %c0_12 = arith.constant 0 : index
    %19 = vector.load %arg5[%c16, %c0_12] : memref<393x384xbf16, #tpu.memory_space<vmem>>, vector<8x384xbf16>
    tpu.vector_store %arg5[%c16, %c0_12], %18 {strides = array<i32>} : memref<393x384xbf16, #tpu.memory_space<vmem>>, vector<8x384xbf16>,
    %c384_i32_13 = arith.constant 384 : i32
    %20 = arith.muli %c0_i32, %c384_i32_13 : i32
    %c3_i32 = arith.constant 3 : i32
    %21 = arith.addi %c3_i32, %20 : i32
    %c0_14 = arith.constant 0 : index
    %c0_15 = arith.constant 0 : index
    %22 = arith.index_cast %21 : i32 to index
    %23 = vector.load %arg2[%c0_14, %c0_15, %22] : memref<1x8x640xbf16, #tpu.memory_space<vmem>>, vector<1x8x384xbf16>
    %24 = vector.shape_cast %23 : vector<1x8x384xbf16> to vector<8x384xbf16>
    %c24 = arith.constant 24 : index
    %c0_16 = arith.constant 0 : index
    %25 = vector.load %arg5[%c24, %c0_16] : memref<393x384xbf16, #tpu.memory_space<vmem>>, vector<8x384xbf16>
    tpu.vector_store %arg5[%c24, %c0_16], %24 {strides = array<i32>} : memref<393x384xbf16, #tpu.memory_space<vmem>>, vector<8x384xbf16>,
    %c384_i32_17 = arith.constant 384 : i32
    %26 = arith.muli %c0_i32, %c384_i32_17 : i32
    %c4_i32 = arith.constant 4 : i32
    %27 = arith.addi %c4_i32, %26 : i32
    %c0_18 = arith.constant 0 : index
    %c0_19 = arith.constant 0 : index
    %28 = arith.index_cast %27 : i32 to index
    %29 = vector.load %arg2[%c0_18, %c0_19, %28] : memref<1x8x640xbf16, #tpu.memory_space<vmem>>, vector<1x8x384xbf16>
    %30 = vector.shape_cast %29 : vector<1x8x384xbf16> to vector<8x384xbf16>
    %c32 = arith.constant 32 : index
    %c0_20 = arith.constant 0 : index
    %31 = vector.load %arg5[%c32, %c0_20] : memref<393x384xbf16, #tpu.memory_space<vmem>>, vector<8x384xbf16>
    tpu.vector_store %arg5[%c32, %c0_20], %30 {strides = array<i32>} : memref<393x384xbf16, #tpu.memory_space<vmem>>, vector<8x384xbf16>,
    %c384_i32_21 = arith.constant 384 : i32
    %32 = arith.muli %c0_i32, %c384_i32_21 : i32
    %c5_i32 = arith.constant 5 : i32
    %33 = arith.addi %c5_i32, %32 : i32
    %c0_22 = arith.constant 0 : index
    %c0_23 = arith.constant 0 : index
    %34 = arith.index_cast %33 : i32 to index
    %35 = vector.load %arg2[%c0_22, %c0_23, %34] : memref<1x8x640xbf16, #tpu.memory_space<vmem>>, vector<1x8x384xbf16>
    %36 = vector.shape_cast %35 : vector<1x8x384xbf16> to vector<8x384xbf16>
    %c40 = arith.constant 40 : index
    %c0_24 = arith.constant 0 : index
    %37 = vector.load %arg5[%c40, %c0_24] : memref<393x384xbf16, #tpu.memory_space<vmem>>, vector<8x384xbf16>
    tpu.vector_store %arg5[%c40, %c0_24], %36 {strides = array<i32>} : memref<393x384xbf16, #tpu.memory_space<vmem>>, vector<8x384xbf16>,
    %c384_i32_25 = arith.constant 384 : i32
    %38 = arith.muli %c0_i32, %c384_i32_25 : i32
    %c6_i32 = arith.constant 6 : i32
    %39 = arith.addi %c6_i32, %38 : i32
    %c0_26 = arith.constant 0 : index
    %c0_27 = arith.constant 0 : index
    %40 = arith.index_cast %39 : i32 to index
    %41 = vector.load %arg2[%c0_26, %c0_27, %40] : memref<1x8x640xbf16, #tpu.memory_space<vmem>>, vector<1x8x384xbf16>
    %42 = vector.shape_cast %41 : vector<1x8x384xbf16> to vector<8x384xbf16>
    %c48 = arith.constant 48 : index
    %c0_28 = arith.constant 0 : index
    %43 = vector.load %arg5[%c48, %c0_28] : memref<393x384xbf16, #tpu.memory_space<vmem>>, vector<8x384xbf16>
    tpu.vector_store %arg5[%c48, %c0_28], %42 {strides = array<i32>} : memref<393x384xbf16, #tpu.memory_space<vmem>>, vector<8x384xbf16>,
    %c384_i32_29 = arith.constant 384 : i32
    %44 = arith.muli %c0_i32, %c384_i32_29 : i32
    %c22_i32 = arith.constant 22 : i32
    %45 = arith.addi %c22_i32, %44 : i32
    %c0_30 = arith.constant 0 : index
    %c0_31 = arith.constant 0 : index
    %46 = arith.index_cast %45 : i32 to index
    %47 = vector.load %arg2[%c0_30, %c0_31, %46] : memref<1x8x640xbf16, #tpu.memory_space<vmem>>, vector<1x8x384xbf16>
    %48 = vector.shape_cast %47 : vector<1x8x384xbf16> to vector<8x384xbf16>
    %c56 = arith.constant 56 : index
    %c0_32 = arith.constant 0 : index
    %49 = vector.load %arg5[%c56, %c0_32] : memref<393x384xbf16, #tpu.memory_space<vmem>>, vector<8x384xbf16>
    tpu.vector_store %arg5[%c56, %c0_32], %48 {strides = array<i32>} : memref<393x384xbf16, #tpu.memory_space<vmem>>, vector<8x384xbf16>,
    %c384_i32_33 = arith.constant 384 : i32
    %50 = arith.muli %c0_i32, %c384_i32_33 : i32
    %c23_i32 = arith.constant 23 : i32
    %51 = arith.addi %c23_i32, %50 : i32
    %c0_34 = arith.constant 0 : index
    %c0_35 = arith.constant 0 : index
    %52 = arith.index_cast %51 : i32 to index
    %53 = vector.load %arg2[%c0_34, %c0_35, %52] : memref<1x8x640xbf16, #tpu.memory_space<vmem>>, vector<1x8x384xbf16>
    %54 = vector.shape_cast %53 : vector<1x8x384xbf16> to vector<8x384xbf16>
    %c64 = arith.constant 64 : index
    %c0_36 = arith.constant 0 : index
    %55 = vector.load %arg5[%c64, %c0_36] : memref<393x384xbf16, #tpu.memory_space<vmem>>, vector<8x384xbf16>
    tpu.vector_store %arg5[%c64, %c0_36], %54 {strides = array<i32>} : memref<393x384xbf16, #tpu.memory_space<vmem>>, vector<8x384xbf16>,
    %c384_i32_37 = arith.constant 384 : i32
    %56 = arith.muli %c0_i32, %c384_i32_37 : i32
    %c24_i32 = arith.constant 24 : i32
    %57 = arith.addi %c24_i32, %56 : i32
    %c0_38 = arith.constant 0 : index
    %c0_39 = arith.constant 0 : index
    %58 = arith.index_cast %57 : i32 to index
    %59 = vector.load %arg2[%c0_38, %c0_39, %58] : memref<1x8x640xbf16, #tpu.memory_space<vmem>>, vector<1x8x384xbf16>
    %60 = vector.shape_cast %59 : vector<1x8x384xbf16> to vector<8x384xbf16>
    %c72 = arith.constant 72 : index
    %c0_40 = arith.constant 0 : index
    %61 = vector.load %arg5[%c72, %c0_40] : memref<393x384xbf16, #tpu.memory_space<vmem>>, vector<8x384xbf16>
    tpu.vector_store %arg5[%c72, %c0_40], %60 {strides = array<i32>} : memref<393x384xbf16, #tpu.memory_space<vmem>>, vector<8x384xbf16>,
    %c384_i32_41 = arith.constant 384 : i32
    %62 = arith.muli %c0_i32, %c384_i32_41 : i32
    %c25_i32 = arith.constant 25 : i32
    %63 = arith.addi %c25_i32, %62 : i32
    %c0_42 = arith.constant 0 : index
    %c0_43 = arith.constant 0 : index
    %64 = arith.index_cast %63 : i32 to index
    %65 = vector.load %arg2[%c0_42, %c0_43, %64] : memref<1x8x640xbf16, #tpu.memory_space<vmem>>, vector<1x8x384xbf16>
    %66 = vector.shape_cast %65 : vector<1x8x384xbf16> to vector<8x384xbf16>
    %c80 = arith.constant 80 : index
    %c0_44 = arith.constant 0 : index
    %67 = vector.load %arg5[%c80, %c0_44] : memref<393x384xbf16, #tpu.memory_space<vmem>>, vector<8x384xbf16>
    tpu.vector_store %arg5[%c80, %c0_44], %66 {strides = array<i32>} : memref<393x384xbf16, #tpu.memory_space<vmem>>, vector<8x384xbf16>,
    %c384_i32_45 = arith.constant 384 : i32
    %68 = arith.muli %c0_i32, %c384_i32_45 : i32
    %c26_i32 = arith.constant 26 : i32
    %69 = arith.addi %c26_i32, %68 : i32
    %c0_46 = arith.constant 0 : index
    %c0_47 = arith.constant 0 : index
    %70 = arith.index_cast %69 : i32 to index
    %71 = vector.load %arg2[%c0_46, %c0_47, %70] : memref<1x8x640xbf16, #tpu.memory_space<vmem>>, vector<1x8x384xbf16>
    %72 = vector.shape_cast %71 : vector<1x8x384xbf16> to vector<8x384xbf16>
    %c88 = arith.constant 88 : index
    %c0_48 = arith.constant 0 : index
    %73 = vector.load %arg5[%c88, %c0_48] : memref<393x384xbf16, #tpu.memory_space<vmem>>, vector<8x384xbf16>
    tpu.vector_store %arg5[%c88, %c0_48], %72 {strides = array<i32>} : memref<393x384xbf16, #tpu.memory_space<vmem>>, vector<8x384xbf16>,
    %c384_i32_49 = arith.constant 384 : i32
    %74 = arith.muli %c0_i32, %c384_i32_49 : i32
    %c27_i32 = arith.constant 27 : i32
    %75 = arith.addi %c27_i32, %74 : i32
    %c0_50 = arith.constant 0 : index
    %c0_51 = arith.constant 0 : index
    %76 = arith.index_cast %75 : i32 to index
    %77 = vector.load %arg2[%c0_50, %c0_51, %76] : memref<1x8x640xbf16, #tpu.memory_space<vmem>>, vector<1x8x384xbf16>
    %78 = vector.shape_cast %77 : vector<1x8x384xbf16> to vector<8x384xbf16>
    %c96 = arith.constant 96 : index
    %c0_52 = arith.constant 0 : index
    %79 = vector.load %arg5[%c96, %c0_52] : memref<393x384xbf16, #tpu.memory_space<vmem>>, vector<8x384xbf16>
    tpu.vector_store %arg5[%c96, %c0_52], %78 {strides = array<i32>} : memref<393x384xbf16, #tpu.memory_space<vmem>>, vector<8x384xbf16>,
    %c384_i32_53 = arith.constant 384 : i32
    %80 = arith.muli %c0_i32, %c384_i32_53 : i32
    %c28_i32 = arith.constant 28 : i32
    %81 = arith.addi %c28_i32, %80 : i32
    %c0_54 = arith.constant 0 : index
    %c0_55 = arith.constant 0 : index
    %82 = arith.index_cast %81 : i32 to index
    %83 = vector.load %arg2[%c0_54, %c0_55, %82] : memref<1x8x640xbf16, #tpu.memory_space<vmem>>, vector<1x8x384xbf16>
    %84 = vector.shape_cast %83 : vector<1x8x384xbf16> to vector<8x384xbf16>
    %c104 = arith.constant 104 : index
    %c0_56 = arith.constant 0 : index
    %85 = vector.load %arg5[%c104, %c0_56] : memref<393x384xbf16, #tpu.memory_space<vmem>>, vector<8x384xbf16>
    tpu.vector_store %arg5[%c104, %c0_56], %84 {strides = array<i32>} : memref<393x384xbf16, #tpu.memory_space<vmem>>, vector<8x384xbf16>,
    %c384_i32_57 = arith.constant 384 : i32
    %86 = arith.muli %c0_i32, %c384_i32_57 : i32
    %c44_i32 = arith.constant 44 : i32
    %87 = arith.addi %c44_i32, %86 : i32
    %c0_58 = arith.constant 0 : index
    %c0_59 = arith.constant 0 : index
    %88 = arith.index_cast %87 : i32 to index
    %89 = vector.load %arg2[%c0_58, %c0_59, %88] : memref<1x8x640xbf16, #tpu.memory_space<vmem>>, vector<1x8x384xbf16>
    %90 = vector.shape_cast %89 : vector<1x8x384xbf16> to vector<8x384xbf16>
    %c112 = arith.constant 112 : index
    %c0_60 = arith.constant 0 : index
    %91 = vector.load %arg5[%c112, %c0_60] : memref<393x384xbf16, #tpu.memory_space<vmem>>, vector<8x384xbf16>
    tpu.vector_store %arg5[%c112, %c0_60], %90 {strides = array<i32>} : memref<393x384xbf16, #tpu.memory_space<vmem>>, vector<8x384xbf16>,
    %c384_i32_61 = arith.constant 384 : i32
    %92 = arith.muli %c0_i32, %c384_i32_61 : i32
    %c45_i32 = arith.constant 45 : i32
    %93 = arith.addi %c45_i32, %92 : i32
    %c0_62 = arith.constant 0 : index
    %c0_63 = arith.constant 0 : index
    %94 = arith.index_cast %93 : i32 to index
    %95 = vector.load %arg2[%c0_62, %c0_63, %94] : memref<1x8x640xbf16, #tpu.memory_space<vmem>>, vector<1x8x384xbf16>
    %96 = vector.shape_cast %95 : vector<1x8x384xbf16> to vector<8x384xbf16>
    %c120 = arith.constant 120 : index
    %c0_64 = arith.constant 0 : index
    %97 = vector.load %arg5[%c120, %c0_64] : memref<393x384xbf16, #tpu.memory_space<vmem>>, vector<8x384xbf16>
    tpu.vector_store %arg5[%c120, %c0_64], %96 {strides = array<i32>} : memref<393x384xbf16, #tpu.memory_space<vmem>>, vector<8x384xbf16>,
    %c384_i32_65 = arith.constant 384 : i32
    %98 = arith.muli %c0_i32, %c384_i32_65 : i32
    %c46_i32 = arith.constant 46 : i32
    %99 = arith.addi %c46_i32, %98 : i32
    %c0_66 = arith.constant 0 : index
    %c0_67 = arith.constant 0 : index
    %100 = arith.index_cast %99 : i32 to index
    %101 = vector.load %arg2[%c0_66, %c0_67, %100] : memref<1x8x640xbf16, #tpu.memory_space<vmem>>, vector<1x8x384xbf16>
    %102 = vector.shape_cast %101 : vector<1x8x384xbf16> to vector<8x384xbf16>
    %c128 = arith.constant 128 : index
    %c0_68 = arith.constant 0 : index
    %103 = vector.load %arg5[%c128, %c0_68] : memref<393x384xbf16, #tpu.memory_space<vmem>>, vector<8x384xbf16>
    tpu.vector_store %arg5[%c128, %c0_68], %102 {strides = array<i32>} : memref<393x384xbf16, #tpu.memory_space<vmem>>, vector<8x384xbf16>,
    %c384_i32_69 = arith.constant 384 : i32
    %104 = arith.muli %c0_i32, %c384_i32_69 : i32
    %c47_i32 = arith.constant 47 : i32
    %105 = arith.addi %c47_i32, %104 : i32
    %c0_70 = arith.constant 0 : index
    %c0_71 = arith.constant 0 : index
    %106 = arith.index_cast %105 : i32 to index
    %107 = vector.load %arg2[%c0_70, %c0_71, %106] : memref<1x8x640xbf16, #tpu.memory_space<vmem>>, vector<1x8x384xbf16>
    %108 = vector.shape_cast %107 : vector<1x8x384xbf16> to vector<8x384xbf16>
    %c136 = arith.constant 136 : index
    %c0_72 = arith.constant 0 : index
    %109 = vector.load %arg5[%c136, %c0_72] : memref<393x384xbf16, #tpu.memory_space<vmem>>, vector<8x384xbf16>
    tpu.vector_store %arg5[%c136, %c0_72], %108 {strides = array<i32>} : memref<393x384xbf16, #tpu.memory_space<vmem>>, vector<8x384xbf16>,
    %c384_i32_73 = arith.constant 384 : i32
    %110 = arith.muli %c0_i32, %c384_i32_73 : i32
    %c48_i32 = arith.constant 48 : i32
    %111 = arith.addi %c48_i32, %110 : i32
    %c0_74 = arith.constant 0 : index
    %c0_75 = arith.constant 0 : index
    %112 = arith.index_cast %111 : i32 to index
    %113 = vector.load %arg2[%c0_74, %c0_75, %112] : memref<1x8x640xbf16, #tpu.memory_space<vmem>>, vector<1x8x384xbf16>
    %114 = vector.shape_cast %113 : vector<1x8x384xbf16> to vector<8x384xbf16>
    %c144 = arith.constant 144 : index
    %c0_76 = arith.constant 0 : index
    %115 = vector.load %arg5[%c144, %c0_76] : memref<393x384xbf16, #tpu.memory_space<vmem>>, vector<8x384xbf16>
    tpu.vector_store %arg5[%c144, %c0_76], %114 {strides = array<i32>} : memref<393x384xbf16, #tpu.memory_space<vmem>>, vector<8x384xbf16>,
    %c384_i32_77 = arith.constant 384 : i32
    %116 = arith.muli %c0_i32, %c384_i32_77 : i32
    %c49_i32 = arith.constant 49 : i32
    %117 = arith.addi %c49_i32, %116 : i32
    %c0_78 = arith.constant 0 : index
    %c0_79 = arith.constant 0 : index
    %118 = arith.index_cast %117 : i32 to index
    %119 = vector.load %arg2[%c0_78, %c0_79, %118] : memref<1x8x640xbf16, #tpu.memory_space<vmem>>, vector<1x8x384xbf16>
    %120 = vector.shape_cast %119 : vector<1x8x384xbf16> to vector<8x384xbf16>
    %c152 = arith.constant 152 : index
    %c0_80 = arith.constant 0 : index
    %121 = vector.load %arg5[%c152, %c0_80] : memref<393x384xbf16, #tpu.memory_space<vmem>>, vector<8x384xbf16>
    tpu.vector_store %arg5[%c152, %c0_80], %120 {strides = array<i32>} : memref<393x384xbf16, #tpu.memory_space<vmem>>, vector<8x384xbf16>,
    %c384_i32_81 = arith.constant 384 : i32
    %122 = arith.muli %c0_i32, %c384_i32_81 : i32
    %c50_i32 = arith.constant 50 : i32
    %123 = arith.addi %c50_i32, %122 : i32
    %c0_82 = arith.constant 0 : index
    %c0_83 = arith.constant 0 : index
    %124 = arith.index_cast %123 : i32 to index
    %125 = vector.load %arg2[%c0_82, %c0_83, %124] : memref<1x8x640xbf16, #tpu.memory_space<vmem>>, vector<1x8x384xbf16>
    %126 = vector.shape_cast %125 : vector<1x8x384xbf16> to vector<8x384xbf16>
    %c160 = arith.constant 160 : index
    %c0_84 = arith.constant 0 : index
    %127 = vector.load %arg5[%c160, %c0_84] : memref<393x384xbf16, #tpu.memory_space<vmem>>, vector<8x384xbf16>
    tpu.vector_store %arg5[%c160, %c0_84], %126 {strides = array<i32>} : memref<393x384xbf16, #tpu.memory_space<vmem>>, vector<8x384xbf16>,
    %c384_i32_85 = arith.constant 384 : i32
    %128 = arith.muli %c0_i32, %c384_i32_85 : i32
    %c66_i32 = arith.constant 66 : i32
    %129 = arith.addi %c66_i32, %128 : i32
    %c0_86 = arith.constant 0 : index
    %c0_87 = arith.constant 0 : index
    %130 = arith.index_cast %129 : i32 to index
    %131 = vector.load %arg2[%c0_86, %c0_87, %130] : memref<1x8x640xbf16, #tpu.memory_space<vmem>>, vector<1x8x384xbf16>
    %132 = vector.shape_cast %131 : vector<1x8x384xbf16> to vector<8x384xbf16>
    %c168 = arith.constant 168 : index
    %c0_88 = arith.constant 0 : index
    %133 = vector.load %arg5[%c168, %c0_88] : memref<393x384xbf16, #tpu.memory_space<vmem>>, vector<8x384xbf16>
    tpu.vector_store %arg5[%c168, %c0_88], %132 {strides = array<i32>} : memref<393x384xbf16, #tpu.memory_space<vmem>>, vector<8x384xbf16>,
    %c384_i32_89 = arith.constant 384 : i32
    %134 = arith.muli %c0_i32, %c384_i32_89 : i32
    %c67_i32 = arith.constant 67 : i32
    %135 = arith.addi %c67_i32, %134 : i32
    %c0_90 = arith.constant 0 : index
    %c0_91 = arith.constant 0 : index
    %136 = arith.index_cast %135 : i32 to index
    %137 = vector.load %arg2[%c0_90, %c0_91, %136] : memref<1x8x640xbf16, #tpu.memory_space<vmem>>, vector<1x8x384xbf16>
    %138 = vector.shape_cast %137 : vector<1x8x384xbf16> to vector<8x384xbf16>
    %c176 = arith.constant 176 : index
    %c0_92 = arith.constant 0 : index
    %139 = vector.load %arg5[%c176, %c0_92] : memref<393x384xbf16, #tpu.memory_space<vmem>>, vector<8x384xbf16>
    tpu.vector_store %arg5[%c176, %c0_92], %138 {strides = array<i32>} : memref<393x384xbf16, #tpu.memory_space<vmem>>, vector<8x384xbf16>,
    %c384_i32_93 = arith.constant 384 : i32
    %140 = arith.muli %c0_i32, %c384_i32_93 : i32
    %c68_i32 = arith.constant 68 : i32
    %141 = arith.addi %c68_i32, %140 : i32
    %c0_94 = arith.constant 0 : index
    %c0_95 = arith.constant 0 : index
    %142 = arith.index_cast %141 : i32 to index
    %143 = vector.load %arg2[%c0_94, %c0_95, %142] : memref<1x8x640xbf16, #tpu.memory_space<vmem>>, vector<1x8x384xbf16>
    %144 = vector.shape_cast %143 : vector<1x8x384xbf16> to vector<8x384xbf16>
    %c184 = arith.constant 184 : index
    %c0_96 = arith.constant 0 : index
    %145 = vector.load %arg5[%c184, %c0_96] : memref<393x384xbf16, #tpu.memory_space<vmem>>, vector<8x384xbf16>
    tpu.vector_store %arg5[%c184, %c0_96], %144 {strides = array<i32>} : memref<393x384xbf16, #tpu.memory_space<vmem>>, vector<8x384xbf16>,
    %c384_i32_97 = arith.constant 384 : i32
    %146 = arith.muli %c0_i32, %c384_i32_97 : i32
    %c69_i32 = arith.constant 69 : i32
    %147 = arith.addi %c69_i32, %146 : i32
    %c0_98 = arith.constant 0 : index
    %c0_99 = arith.constant 0 : index
    %148 = arith.index_cast %147 : i32 to index
    %149 = vector.load %arg2[%c0_98, %c0_99, %148] : memref<1x8x640xbf16, #tpu.memory_space<vmem>>, vector<1x8x384xbf16>
    %150 = vector.shape_cast %149 : vector<1x8x384xbf16> to vector<8x384xbf16>
    %c192 = arith.constant 192 : index
    %c0_100 = arith.constant 0 : index
    %151 = vector.load %arg5[%c192, %c0_100] : memref<393x384xbf16, #tpu.memory_space<vmem>>, vector<8x384xbf16>
    tpu.vector_store %arg5[%c192, %c0_100], %150 {strides = array<i32>} : memref<393x384xbf16, #tpu.memory_space<vmem>>, vector<8x384xbf16>,
    %c384_i32_101 = arith.constant 384 : i32
    %152 = arith.muli %c0_i32, %c384_i32_101 : i32
    %c70_i32 = arith.constant 70 : i32
    %153 = arith.addi %c70_i32, %152 : i32
    %c0_102 = arith.constant 0 : index
    %c0_103 = arith.constant 0 : index
    %154 = arith.index_cast %153 : i32 to index
    %155 = vector.load %arg2[%c0_102, %c0_103, %154] : memref<1x8x640xbf16, #tpu.memory_space<vmem>>, vector<1x8x384xbf16>
    %156 = vector.shape_cast %155 : vector<1x8x384xbf16> to vector<8x384xbf16>
    %c200 = arith.constant 200 : index
    %c0_104 = arith.constant 0 : index
    %157 = vector.load %arg5[%c200, %c0_104] : memref<393x384xbf16, #tpu.memory_space<vmem>>, vector<8x384xbf16>
    tpu.vector_store %arg5[%c200, %c0_104], %156 {strides = array<i32>} : memref<393x384xbf16, #tpu.memory_space<vmem>>, vector<8x384xbf16>,
    %c384_i32_105 = arith.constant 384 : i32
    %158 = arith.muli %c0_i32, %c384_i32_105 : i32
    %c71_i32 = arith.constant 71 : i32
    %159 = arith.addi %c71_i32, %158 : i32
    %c0_106 = arith.constant 0 : index
    %c0_107 = arith.constant 0 : index
    %160 = arith.index_cast %159 : i32 to index
    %161 = vector.load %arg2[%c0_106, %c0_107, %160] : memref<1x8x640xbf16, #tpu.memory_space<vmem>>, vector<1x8x384xbf16>
    %162 = vector.shape_cast %161 : vector<1x8x384xbf16> to vector<8x384xbf16>
    %c208 = arith.constant 208 : index
    %c0_108 = arith.constant 0 : index
    %163 = vector.load %arg5[%c208, %c0_108] : memref<393x384xbf16, #tpu.memory_space<vmem>>, vector<8x384xbf16>
    tpu.vector_store %arg5[%c208, %c0_108], %162 {strides = array<i32>} : memref<393x384xbf16, #tpu.memory_space<vmem>>, vector<8x384xbf16>,
    %c384_i32_109 = arith.constant 384 : i32
    %164 = arith.muli %c0_i32, %c384_i32_109 : i32
    %c72_i32 = arith.constant 72 : i32
    %165 = arith.addi %c72_i32, %164 : i32
    %c0_110 = arith.constant 0 : index
    %c0_111 = arith.constant 0 : index
    %166 = arith.index_cast %165 : i32 to index
    %167 = vector.load %arg2[%c0_110, %c0_111, %166] : memref<1x8x640xbf16, #tpu.memory_space<vmem>>, vector<1x8x384xbf16>
    %168 = vector.shape_cast %167 : vector<1x8x384xbf16> to vector<8x384xbf16>
    %c216 = arith.constant 216 : index
    %c0_112 = arith.constant 0 : index
    %169 = vector.load %arg5[%c216, %c0_112] : memref<393x384xbf16, #tpu.memory_space<vmem>>, vector<8x384xbf16>
    tpu.vector_store %arg5[%c216, %c0_112], %168 {strides = array<i32>} : memref<393x384xbf16, #tpu.memory_space<vmem>>, vector<8x384xbf16>,
    %c384_i32_113 = arith.constant 384 : i32
    %170 = arith.muli %c0_i32, %c384_i32_113 : i32
    %c88_i32 = arith.constant 88 : i32
    %171 = arith.addi %c88_i32, %170 : i32
    %c0_114 = arith.constant 0 : index
    %c0_115 = arith.constant 0 : index
    %172 = arith.index_cast %171 : i32 to index
    %173 = vector.load %arg2[%c0_114, %c0_115, %172] : memref<1x8x640xbf16, #tpu.memory_space<vmem>>, vector<1x8x384xbf16>
    %174 = vector.shape_cast %173 : vector<1x8x384xbf16> to vector<8x384xbf16>
    %c224 = arith.constant 224 : index
    %c0_116 = arith.constant 0 : index
    %175 = vector.load %arg5[%c224, %c0_116] : memref<393x384xbf16, #tpu.memory_space<vmem>>, vector<8x384xbf16>
    tpu.vector_store %arg5[%c224, %c0_116], %174 {strides = array<i32>} : memref<393x384xbf16, #tpu.memory_space<vmem>>, vector<8x384xbf16>,
    %c384_i32_117 = arith.constant 384 : i32
    %176 = arith.muli %c0_i32, %c384_i32_117 : i32
    %c89_i32 = arith.constant 89 : i32
    %177 = arith.addi %c89_i32, %176 : i32
    %c0_118 = arith.constant 0 : index
    %c0_119 = arith.constant 0 : index
    %178 = arith.index_cast %177 : i32 to index
    %179 = vector.load %arg2[%c0_118, %c0_119, %178] : memref<1x8x640xbf16, #tpu.memory_space<vmem>>, vector<1x8x384xbf16>
    %180 = vector.shape_cast %179 : vector<1x8x384xbf16> to vector<8x384xbf16>
    %c232 = arith.constant 232 : index
    %c0_120 = arith.constant 0 : index
    %181 = vector.load %arg5[%c232, %c0_120] : memref<393x384xbf16, #tpu.memory_space<vmem>>, vector<8x384xbf16>
    tpu.vector_store %arg5[%c232, %c0_120], %180 {strides = array<i32>} : memref<393x384xbf16, #tpu.memory_space<vmem>>, vector<8x384xbf16>,
    %c384_i32_121 = arith.constant 384 : i32
    %182 = arith.muli %c0_i32, %c384_i32_121 : i32
    %c90_i32 = arith.constant 90 : i32
    %183 = arith.addi %c90_i32, %182 : i32
    %c0_122 = arith.constant 0 : index
    %c0_123 = arith.constant 0 : index
    %184 = arith.index_cast %183 : i32 to index
    %185 = vector.load %arg2[%c0_122, %c0_123, %184] : memref<1x8x640xbf16, #tpu.memory_space<vmem>>, vector<1x8x384xbf16>
    %186 = vector.shape_cast %185 : vector<1x8x384xbf16> to vector<8x384xbf16>
    %c240 = arith.constant 240 : index
    %c0_124 = arith.constant 0 : index
    %187 = vector.load %arg5[%c240, %c0_124] : memref<393x384xbf16, #tpu.memory_space<vmem>>, vector<8x384xbf16>
    tpu.vector_store %arg5[%c240, %c0_124], %186 {strides = array<i32>} : memref<393x384xbf16, #tpu.memory_space<vmem>>, vector<8x384xbf16>,
    %c384_i32_125 = arith.constant 384 : i32
    %188 = arith.muli %c0_i32, %c384_i32_125 : i32
    %c91_i32 = arith.constant 91 : i32
    %189 = arith.addi %c91_i32, %188 : i32
    %c0_126 = arith.constant 0 : index
    %c0_127 = arith.constant 0 : index
    %190 = arith.index_cast %189 : i32 to index
    %191 = vector.load %arg2[%c0_126, %c0_127, %190] : memref<1x8x640xbf16, #tpu.memory_space<vmem>>, vector<1x8x384xbf16>
    %192 = vector.shape_cast %191 : vector<1x8x384xbf16> to vector<8x384xbf16>
    %c248 = arith.constant 248 : index
    %c0_128 = arith.constant 0 : index
    %193 = vector.load %arg5[%c248, %c0_128] : memref<393x384xbf16, #tpu.memory_space<vmem>>, vector<8x384xbf16>
    tpu.vector_store %arg5[%c248, %c0_128], %192 {strides = array<i32>} : memref<393x384xbf16, #tpu.memory_space<vmem>>, vector<8x384xbf16>,
    %c384_i32_129 = arith.constant 384 : i32
    %194 = arith.muli %c0_i32, %c384_i32_129 : i32
    %c92_i32 = arith.constant 92 : i32
    %195 = arith.addi %c92_i32, %194 : i32
    %c0_130 = arith.constant 0 : index
    %c0_131 = arith.constant 0 : index
    %196 = arith.index_cast %195 : i32 to index
    %197 = vector.load %arg2[%c0_130, %c0_131, %196] : memref<1x8x640xbf16, #tpu.memory_space<vmem>>, vector<1x8x384xbf16>
    %198 = vector.shape_cast %197 : vector<1x8x384xbf16> to vector<8x384xbf16>
    %c256 = arith.constant 256 : index
    %c0_132 = arith.constant 0 : index
    %199 = vector.load %arg5[%c256, %c0_132] : memref<393x384xbf16, #tpu.memory_space<vmem>>, vector<8x384xbf16>
    tpu.vector_store %arg5[%c256, %c0_132], %198 {strides = array<i32>} : memref<393x384xbf16, #tpu.memory_space<vmem>>, vector<8x384xbf16>,
    %c384_i32_133 = arith.constant 384 : i32
    %200 = arith.muli %c0_i32, %c384_i32_133 : i32
    %c93_i32 = arith.constant 93 : i32
    %201 = arith.addi %c93_i32, %200 : i32
    %c0_134 = arith.constant 0 : index
    %c0_135 = arith.constant 0 : index
    %202 = arith.index_cast %201 : i32 to index
    %203 = vector.load %arg2[%c0_134, %c0_135, %202] : memref<1x8x640xbf16, #tpu.memory_space<vmem>>, vector<1x8x384xbf16>
    %204 = vector.shape_cast %203 : vector<1x8x384xbf16> to vector<8x384xbf16>
    %c264 = arith.constant 264 : index
    %c0_136 = arith.constant 0 : index
    %205 = vector.load %arg5[%c264, %c0_136] : memref<393x384xbf16, #tpu.memory_space<vmem>>, vector<8x384xbf16>
    tpu.vector_store %arg5[%c264, %c0_136], %204 {strides = array<i32>} : memref<393x384xbf16, #tpu.memory_space<vmem>>, vector<8x384xbf16>,
    %c384_i32_137 = arith.constant 384 : i32
    %206 = arith.muli %c0_i32, %c384_i32_137 : i32
    %c94_i32 = arith.constant 94 : i32
    %207 = arith.addi %c94_i32, %206 : i32
    %c0_138 = arith.constant 0 : index
    %c0_139 = arith.constant 0 : index
    %208 = arith.index_cast %207 : i32 to index
    %209 = vector.load %arg2[%c0_138, %c0_139, %208] : memref<1x8x640xbf16, #tpu.memory_space<vmem>>, vector<1x8x384xbf16>
    %210 = vector.shape_cast %209 : vector<1x8x384xbf16> to vector<8x384xbf16>
    %c272 = arith.constant 272 : index
    %c0_140 = arith.constant 0 : index
    %211 = vector.load %arg5[%c272, %c0_140] : memref<393x384xbf16, #tpu.memory_space<vmem>>, vector<8x384xbf16>
    tpu.vector_store %arg5[%c272, %c0_140], %210 {strides = array<i32>} : memref<393x384xbf16, #tpu.memory_space<vmem>>, vector<8x384xbf16>,
    %c384_i32_141 = arith.constant 384 : i32
    %212 = arith.muli %c0_i32, %c384_i32_141 : i32
    %c110_i32 = arith.constant 110 : i32
    %213 = arith.addi %c110_i32, %212 : i32
    %c0_142 = arith.constant 0 : index
    %c0_143 = arith.constant 0 : index
    %214 = arith.index_cast %213 : i32 to index
    %215 = vector.load %arg2[%c0_142, %c0_143, %214] : memref<1x8x640xbf16, #tpu.memory_space<vmem>>, vector<1x8x384xbf16>
    %216 = vector.shape_cast %215 : vector<1x8x384xbf16> to vector<8x384xbf16>
    %c280 = arith.constant 280 : index
    %c0_144 = arith.constant 0 : index
    %217 = vector.load %arg5[%c280, %c0_144] : memref<393x384xbf16, #tpu.memory_space<vmem>>, vector<8x384xbf16>
    tpu.vector_store %arg5[%c280, %c0_144], %216 {strides = array<i32>} : memref<393x384xbf16, #tpu.memory_space<vmem>>, vector<8x384xbf16>,
    %c384_i32_145 = arith.constant 384 : i32
    %218 = arith.muli %c0_i32, %c384_i32_145 : i32
    %c111_i32 = arith.constant 111 : i32
    %219 = arith.addi %c111_i32, %218 : i32
    %c0_146 = arith.constant 0 : index
    %c0_147 = arith.constant 0 : index
    %220 = arith.index_cast %219 : i32 to index
    %221 = vector.load %arg2[%c0_146, %c0_147, %220] : memref<1x8x640xbf16, #tpu.memory_space<vmem>>, vector<1x8x384xbf16>
    %222 = vector.shape_cast %221 : vector<1x8x384xbf16> to vector<8x384xbf16>
    %c288 = arith.constant 288 : index
    %c0_148 = arith.constant 0 : index
    %223 = vector.load %arg5[%c288, %c0_148] : memref<393x384xbf16, #tpu.memory_space<vmem>>, vector<8x384xbf16>
    tpu.vector_store %arg5[%c288, %c0_148], %222 {strides = array<i32>} : memref<393x384xbf16, #tpu.memory_space<vmem>>, vector<8x384xbf16>,
    %c384_i32_149 = arith.constant 384 : i32
    %224 = arith.muli %c0_i32, %c384_i32_149 : i32
    %c112_i32 = arith.constant 112 : i32
    %225 = arith.addi %c112_i32, %224 : i32
    %c0_150 = arith.constant 0 : index
    %c0_151 = arith.constant 0 : index
    %226 = arith.index_cast %225 : i32 to index
    %227 = vector.load %arg2[%c0_150, %c0_151, %226] : memref<1x8x640xbf16, #tpu.memory_space<vmem>>, vector<1x8x384xbf16>
    %228 = vector.shape_cast %227 : vector<1x8x384xbf16> to vector<8x384xbf16>
    %c296 = arith.constant 296 : index
    %c0_152 = arith.constant 0 : index
    %229 = vector.load %arg5[%c296, %c0_152] : memref<393x384xbf16, #tpu.memory_space<vmem>>, vector<8x384xbf16>
    tpu.vector_store %arg5[%c296, %c0_152], %228 {strides = array<i32>} : memref<393x384xbf16, #tpu.memory_space<vmem>>, vector<8x384xbf16>,
    %c384_i32_153 = arith.constant 384 : i32
    %230 = arith.muli %c0_i32, %c384_i32_153 : i32
    %c113_i32 = arith.constant 113 : i32
    %231 = arith.addi %c113_i32, %230 : i32
    %c0_154 = arith.constant 0 : index
    %c0_155 = arith.constant 0 : index
    %232 = arith.index_cast %231 : i32 to index
    %233 = vector.load %arg2[%c0_154, %c0_155, %232] : memref<1x8x640xbf16, #tpu.memory_space<vmem>>, vector<1x8x384xbf16>
    %234 = vector.shape_cast %233 : vector<1x8x384xbf16> to vector<8x384xbf16>
    %c304 = arith.constant 304 : index
    %c0_156 = arith.constant 0 : index
    %235 = vector.load %arg5[%c304, %c0_156] : memref<393x384xbf16, #tpu.memory_space<vmem>>, vector<8x384xbf16>
    tpu.vector_store %arg5[%c304, %c0_156], %234 {strides = array<i32>} : memref<393x384xbf16, #tpu.memory_space<vmem>>, vector<8x384xbf16>,
    %c384_i32_157 = arith.constant 384 : i32
    %236 = arith.muli %c0_i32, %c384_i32_157 : i32
    %c114_i32 = arith.constant 114 : i32
    %237 = arith.addi %c114_i32, %236 : i32
    %c0_158 = arith.constant 0 : index
    %c0_159 = arith.constant 0 : index
    %238 = arith.index_cast %237 : i32 to index
    %239 = vector.load %arg2[%c0_158, %c0_159, %238] : memref<1x8x640xbf16, #tpu.memory_space<vmem>>, vector<1x8x384xbf16>
    %240 = vector.shape_cast %239 : vector<1x8x384xbf16> to vector<8x384xbf16>
    %c312 = arith.constant 312 : index
    %c0_160 = arith.constant 0 : index
    %241 = vector.load %arg5[%c312, %c0_160] : memref<393x384xbf16, #tpu.memory_space<vmem>>, vector<8x384xbf16>
    tpu.vector_store %arg5[%c312, %c0_160], %240 {strides = array<i32>} : memref<393x384xbf16, #tpu.memory_space<vmem>>, vector<8x384xbf16>,
    %c384_i32_161 = arith.constant 384 : i32
    %242 = arith.muli %c0_i32, %c384_i32_161 : i32
    %c115_i32 = arith.constant 115 : i32
    %243 = arith.addi %c115_i32, %242 : i32
    %c0_162 = arith.constant 0 : index
    %c0_163 = arith.constant 0 : index
    %244 = arith.index_cast %243 : i32 to index
    %245 = vector.load %arg2[%c0_162, %c0_163, %244] : memref<1x8x640xbf16, #tpu.memory_space<vmem>>, vector<1x8x384xbf16>
    %246 = vector.shape_cast %245 : vector<1x8x384xbf16> to vector<8x384xbf16>
    %c320 = arith.constant 320 : index
    %c0_164 = arith.constant 0 : index
    %247 = vector.load %arg5[%c320, %c0_164] : memref<393x384xbf16, #tpu.memory_space<vmem>>, vector<8x384xbf16>
    tpu.vector_store %arg5[%c320, %c0_164], %246 {strides = array<i32>} : memref<393x384xbf16, #tpu.memory_space<vmem>>, vector<8x384xbf16>,
    %c384_i32_165 = arith.constant 384 : i32
    %248 = arith.muli %c0_i32, %c384_i32_165 : i32
    %c116_i32 = arith.constant 116 : i32
    %249 = arith.addi %c116_i32, %248 : i32
    %c0_166 = arith.constant 0 : index
    %c0_167 = arith.constant 0 : index
    %250 = arith.index_cast %249 : i32 to index
    %251 = vector.load %arg2[%c0_166, %c0_167, %250] : memref<1x8x640xbf16, #tpu.memory_space<vmem>>, vector<1x8x384xbf16>
    %252 = vector.shape_cast %251 : vector<1x8x384xbf16> to vector<8x384xbf16>
    %c328 = arith.constant 328 : index
    %c0_168 = arith.constant 0 : index
    %253 = vector.load %arg5[%c328, %c0_168] : memref<393x384xbf16, #tpu.memory_space<vmem>>, vector<8x384xbf16>
    tpu.vector_store %arg5[%c328, %c0_168], %252 {strides = array<i32>} : memref<393x384xbf16, #tpu.memory_space<vmem>>, vector<8x384xbf16>,
    %c384_i32_169 = arith.constant 384 : i32
    %254 = arith.muli %c0_i32, %c384_i32_169 : i32
    %c132_i32 = arith.constant 132 : i32
    %255 = arith.addi %c132_i32, %254 : i32
    %c0_170 = arith.constant 0 : index
    %c0_171 = arith.constant 0 : index
    %256 = arith.index_cast %255 : i32 to index
    %257 = vector.load %arg2[%c0_170, %c0_171, %256] : memref<1x8x640xbf16, #tpu.memory_space<vmem>>, vector<1x8x384xbf16>
    %258 = vector.shape_cast %257 : vector<1x8x384xbf16> to vector<8x384xbf16>
    %c336 = arith.constant 336 : index
    %c0_172 = arith.constant 0 : index
    %259 = vector.load %arg5[%c336, %c0_172] : memref<393x384xbf16, #tpu.memory_space<vmem>>, vector<8x384xbf16>
    tpu.vector_store %arg5[%c336, %c0_172], %258 {strides = array<i32>} : memref<393x384xbf16, #tpu.memory_space<vmem>>, vector<8x384xbf16>,
    %c384_i32_173 = arith.constant 384 : i32
    %260 = arith.muli %c0_i32, %c384_i32_173 : i32
    %c133_i32 = arith.constant 133 : i32
    %261 = arith.addi %c133_i32, %260 : i32
    %c0_174 = arith.constant 0 : index
    %c0_175 = arith.constant 0 : index
    %262 = arith.index_cast %261 : i32 to index
    %263 = vector.load %arg2[%c0_174, %c0_175, %262] : memref<1x8x640xbf16, #tpu.memory_space<vmem>>, vector<1x8x384xbf16>
    %264 = vector.shape_cast %263 : vector<1x8x384xbf16> to vector<8x384xbf16>
    %c344 = arith.constant 344 : index
    %c0_176 = arith.constant 0 : index
    %265 = vector.load %arg5[%c344, %c0_176] : memref<393x384xbf16, #tpu.memory_space<vmem>>, vector<8x384xbf16>
    tpu.vector_store %arg5[%c344, %c0_176], %264 {strides = array<i32>} : memref<393x384xbf16, #tpu.memory_space<vmem>>, vector<8x384xbf16>,
    %c384_i32_177 = arith.constant 384 : i32
    %266 = arith.muli %c0_i32, %c384_i32_177 : i32
    %c134_i32 = arith.constant 134 : i32
    %267 = arith.addi %c134_i32, %266 : i32
    %c0_178 = arith.constant 0 : index
    %c0_179 = arith.constant 0 : index
    %268 = arith.index_cast %267 : i32 to index
    %269 = vector.load %arg2[%c0_178, %c0_179, %268] : memref<1x8x640xbf16, #tpu.memory_space<vmem>>, vector<1x8x384xbf16>
    %270 = vector.shape_cast %269 : vector<1x8x384xbf16> to vector<8x384xbf16>
    %c352 = arith.constant 352 : index
    %c0_180 = arith.constant 0 : index
    %271 = vector.load %arg5[%c352, %c0_180] : memref<393x384xbf16, #tpu.memory_space<vmem>>, vector<8x384xbf16>
    tpu.vector_store %arg5[%c352, %c0_180], %270 {strides = array<i32>} : memref<393x384xbf16, #tpu.memory_space<vmem>>, vector<8x384xbf16>,
    %c384_i32_181 = arith.constant 384 : i32
    %272 = arith.muli %c0_i32, %c384_i32_181 : i32
    %c135_i32 = arith.constant 135 : i32
    %273 = arith.addi %c135_i32, %272 : i32
    %c0_182 = arith.constant 0 : index
    %c0_183 = arith.constant 0 : index
    %274 = arith.index_cast %273 : i32 to index
    %275 = vector.load %arg2[%c0_182, %c0_183, %274] : memref<1x8x640xbf16, #tpu.memory_space<vmem>>, vector<1x8x384xbf16>
    %276 = vector.shape_cast %275 : vector<1x8x384xbf16> to vector<8x384xbf16>
    %c360 = arith.constant 360 : index
    %c0_184 = arith.constant 0 : index
    %277 = vector.load %arg5[%c360, %c0_184] : memref<393x384xbf16, #tpu.memory_space<vmem>>, vector<8x384xbf16>
    tpu.vector_store %arg5[%c360, %c0_184], %276 {strides = array<i32>} : memref<393x384xbf16, #tpu.memory_space<vmem>>, vector<8x384xbf16>,
    %c384_i32_185 = arith.constant 384 : i32
    %278 = arith.muli %c0_i32, %c384_i32_185 : i32
    %c136_i32 = arith.constant 136 : i32
    %279 = arith.addi %c136_i32, %278 : i32
    %c0_186 = arith.constant 0 : index
    %c0_187 = arith.constant 0 : index
    %280 = arith.index_cast %279 : i32 to index
    %281 = vector.load %arg2[%c0_186, %c0_187, %280] : memref<1x8x640xbf16, #tpu.memory_space<vmem>>, vector<1x8x384xbf16>
    %282 = vector.shape_cast %281 : vector<1x8x384xbf16> to vector<8x384xbf16>
    %c368 = arith.constant 368 : index
    %c0_188 = arith.constant 0 : index
    %283 = vector.load %arg5[%c368, %c0_188] : memref<393x384xbf16, #tpu.memory_space<vmem>>, vector<8x384xbf16>
    tpu.vector_store %arg5[%c368, %c0_188], %282 {strides = array<i32>} : memref<393x384xbf16, #tpu.memory_space<vmem>>, vector<8x384xbf16>,
    %c384_i32_189 = arith.constant 384 : i32
    %284 = arith.muli %c0_i32, %c384_i32_189 : i32
    %c137_i32 = arith.constant 137 : i32
    %285 = arith.addi %c137_i32, %284 : i32
    %c0_190 = arith.constant 0 : index
    %c0_191 = arith.constant 0 : index
    %286 = arith.index_cast %285 : i32 to index
    %287 = vector.load %arg2[%c0_190, %c0_191, %286] : memref<1x8x640xbf16, #tpu.memory_space<vmem>>, vector<1x8x384xbf16>
    %288 = vector.shape_cast %287 : vector<1x8x384xbf16> to vector<8x384xbf16>
    %c376 = arith.constant 376 : index
    %c0_192 = arith.constant 0 : index
    %289 = vector.load %arg5[%c376, %c0_192] : memref<393x384xbf16, #tpu.memory_space<vmem>>, vector<8x384xbf16>
    tpu.vector_store %arg5[%c376, %c0_192], %288 {strides = array<i32>} : memref<393x384xbf16, #tpu.memory_space<vmem>>, vector<8x384xbf16>,
    %c384_i32_193 = arith.constant 384 : i32
    %290 = arith.muli %c0_i32, %c384_i32_193 : i32
    %c138_i32 = arith.constant 138 : i32
    %291 = arith.addi %c138_i32, %290 : i32
    %c0_194 = arith.constant 0 : index
    %c0_195 = arith.constant 0 : index
    %292 = arith.index_cast %291 : i32 to index
    %293 = vector.load %arg2[%c0_194, %c0_195, %292] : memref<1x8x640xbf16, #tpu.memory_space<vmem>>, vector<1x8x384xbf16>
    %294 = vector.shape_cast %293 : vector<1x8x384xbf16> to vector<8x384xbf16>
    %c384 = arith.constant 384 : index
    %c0_196 = arith.constant 0 : index
    %295 = vector.load %arg5[%c384, %c0_196] : memref<393x384xbf16, #tpu.memory_space<vmem>>, vector<8x384xbf16>
    tpu.vector_store %arg5[%c384, %c0_196], %294 {strides = array<i32>} : memref<393x384xbf16, #tpu.memory_space<vmem>>, vector<8x384xbf16>,
    %c0_197 = arith.constant 0 : index
    %c0_198 = arith.constant 0 : index
    %296 = vector.load %arg3[%c0_197, %c0_198] : memref<3x393xbf16, #tpu.memory_space<vmem>>, vector<3x393xbf16>
    %c0_199 = arith.constant 0 : index
    %c0_200 = arith.constant 0 : index
    %297 = vector.load %arg5[%c0_199, %c0_200] : memref<393x384xbf16, #tpu.memory_space<vmem>>, vector<393x384xbf16>
    %cst_201 = arith.constant dense<0.000000e+00> : vector<3x384xf32>
    %298 = tpu.matmul %296, %297, %cst_201 {dimension_numbers = #tpu.dot_dimension_numbers<[1], [0], [0], [1], [0, 0, 1, 1], [], []>} : vector<3x393xbf16>, vector<393x384xbf16>, vector<3x384xf32> -> vector<3x384xf32>
    %c384_i32_202 = arith.constant 384 : i32
    %299 = arith.muli %c0_i32, %c384_i32_202 : i32
    %300 = tpu.assume_multiple %299, 128 : i32
    %301 = math.tanh %298 : vector<3x384xf32>
    %c0_203 = arith.constant 0 : index
    %c0_204 = arith.constant 0 : index
    %302 = arith.index_cast %300 : i32 to index
    %303 = vector.load %arg4[%c0_203, %c0_204, %302] : memref<1x3x384xf32, #tpu.memory_space<vmem>>, vector<1x3x384xf32>
    %304 = vector.shape_cast %303 : vector<1x3x384xf32> to vector<3x384xf32>
    %305 = vector.shape_cast %301 : vector<3x384xf32> to vector<1x3x384xf32>
    tpu.vector_store %arg4[%c0_203, %c0_204, %302], %305 {strides = array<i32>} : memref<1x3x384xf32, #tpu.memory_space<vmem>>, vector<1x3x384xf32>,
    %c1_i32_205 = arith.constant 1 : i32
    return
  }
  func.func @transform_0(%arg0: i32, %arg1: i32) -> (i32, i32, i32) {
    %c0_i32 = arith.constant 0 : i32
    %c0_i32_0 = arith.constant 0 : i32
    %c0_i32_1 = arith.constant 0 : i32
    return %arg0, %c0_i32, %c0_i32_0 : i32, i32, i32
  }
  func.func @transform_1(%arg0: i32, %arg1: i32) -> (i32, i32) {
    %c0_i32 = arith.constant 0 : i32
    %c0_i32_0 = arith.constant 0 : i32
    return %arg1, %c0_i32 : i32, i32
  }
  func.func @transform_2(%arg0: i32, %arg1: i32) -> (i32, i32, i32) {
    %c0_i32 = arith.constant 0 : i32
    %c0_i32_0 = arith.constant 0 : i32
    return %arg0, %arg1, %c0_i32 : i32, i32, i32
  }
}

</mosaic_0001>

<llo_original>
// kernel: resnet_generator_forward.10
$region0: #{resnet_generator_forward.10}
  #allocation0 [shape = 'u32[]', space=smem, size = 0x4, offset = 0x4, fixed_abs, tag = 'smem constant byte address 0x4 - core index']
  #allocation1 [shape = 'u32[72,128]{1,0:T(1,128)}', space=vmem, size = 0x9000, scoped, tag = 'internal scratch']
  #allocation2 [shape = 'bf16[392,384]{1,0:T(8,128)(2,1)}', space=vmem, size = 0x49800, scoped, tag = 'scratch operand']
  #allocation3 [shape = 'f32[8,384]{1,0:T(8,128)}', space=vmem, size = 0x3000, scoped, tag = 'scratch operand']
  %s0 = inlined_call_operand.vmem [shape: bf16[2,8,640], index: 0, kind: input, shape index: {}]
  %s1 = inlined_call_operand.vmem [shape: bf16[8,392], index: 1, kind: input, shape index: {}]
  %s2 = inlined_call_operand.vmem [shape: bf16[2,8,384], index: 2, kind: output, shape index: {}]
  %s3 = sld [smem:[#allocation0]]
  $region41: #{resnet_generator_forward.10} parent=0
    _
  %s5 = ssub.s32 1, %s3
  %s6 = scalar_select 0, %s5, %s3
  loop: start=0, step=1, limit=4
  $region2: #{resnet_generator_forward.10} parent=0 // loop_pre_header
    _
  $region3: #{resnet_generator_forward.10} parent=0 // loop_header
    %s8 = sphi 0, %s12
    %p9 = scmp.ge.s32.totalorder %s8, 4
    %s15 = sphi 0, %s27
    %s16 = sphi 0, %s23
    %s17 = sphi 0, %s15
    %s18 = sphi 0, %s16
    %s19 = sphi 0, %s17
    %s20 = sphi 0, %s18
    %s30 = sphi 0, %s32
    %s33 = sphi 0, %s30
    %s34 = sphi 0, %s33
    %s50 = sphi 0, %s34
    %s56 = sphi 0, %s58
    %s59 = sphi 0, %s56
    %s60 = sphi 0, %s59
    %s76 = sphi 0, %s60
    %s84 = sphi 0, %s86
    %s87 = sphi 0, %s84
    %s88 = sphi 0, %s87
    %s104 = sphi 0, %s88
  $region4: #{resnet_generator_forward.10} parent=0 // loop_header_branch
    %11 = sbr.rel (%p9) target = $region8
  $region5: #{resnet_generator_forward.10} parent=0 // loop_body
    %s13 = ssub.s32 %s8, 1
    %s14 = ssub.s32 %s8, 2
    %s21 = sadd.s32 1, %s16
    %p22 = scmp.ge.s32.totalorder %s21, 1
    %s23 = scalar_select %p22, 0, %s21
    %s24 = sadd.s32 1, %s15
    %s25 = scalar_select %p22, %s24, %s15
    %p26 = scmp.ge.s32.totalorder %s25, 2
    %s27 = scalar_select %p26, 0, %s25
    %s28 = ssub.s32 %s15, %s27
    %p29 = scmp.eq.s32.totalorder %s28, 0
    %s31 = sadd.s32 %s30, 1
    %s32 = scalar_select %p29, %s30, %s31
    %p35 = pneg %p29
    %p36 = scmp.eq.s32.totalorder %s8, 1
    %p37 = por %p35, %p36
    %p38 = scmp.ne.s32.totalorder %s30, %s33
    %p39 = scmp.eq.s32.totalorder %s8, 0
    %p40 = por %p38, %p39
    %p41 = scmp.ne.s32.totalorder %s30, %s33
    %p42 = scmp.eq.s32.totalorder %s13, 1
    %p43 = por %p41, %p42
    %p44 = scmp.ne.s32.totalorder %s33, %s34
    %p45 = scmp.eq.s32.totalorder %s13, 0
    %p46 = por %p44, %p45
    %p47 = scmp.ne.s32.totalorder %s33, %s34
    %p48 = scmp.eq.s32.totalorder %s14, 1
    %p49 = por %p47, %p48
    %p51 = scmp.ne.s32.totalorder %s34, %s50
    %p52 = scmp.eq.s32.totalorder %s14, 0
    %p53 = por %p51, %p52
    %s54 = ssub.s32 %s16, %s23
    %p55 = scmp.eq.s32.totalorder %s54, 0
    %s57 = sadd.s32 %s56, 1
    %s58 = scalar_select %p55, %s56, %s57
    %p61 = pneg %p55
    %p62 = scmp.eq.s32.totalorder %s8, 1
    %p63 = por %p61, %p62
    %p64 = scmp.ne.s32.totalorder %s56, %s59
    %p65 = scmp.eq.s32.totalorder %s8, 0
    %p66 = por %p64, %p65
    %p67 = scmp.ne.s32.totalorder %s56, %s59
    %p68 = scmp.eq.s32.totalorder %s13, 1
    %p69 = por %p67, %p68
    %p70 = scmp.ne.s32.totalorder %s59, %s60
    %p71 = scmp.eq.s32.totalorder %s13, 0
    %p72 = por %p70, %p71
    %p73 = scmp.ne.s32.totalorder %s59, %s60
    %p74 = scmp.eq.s32.totalorder %s14, 1
    %p75 = por %p73, %p74
    %p77 = scmp.ne.s32.totalorder %s60, %s76
    %p78 = scmp.eq.s32.totalorder %s14, 0
    %p79 = por %p77, %p78
    %s80 = ssub.s32 %s15, %s27
    %s81 = ssub.s32 %s16, %s23
    %s82 = sor.u32 %s80, %s81
    %p83 = scmp.eq.s32.totalorder %s82, 0
    %s85 = sadd.s32 %s84, 1
    %s86 = scalar_select %p83, %s84, %s85
    %p89 = pneg %p83
    %p90 = scmp.eq.s32.totalorder %s8, 1
    %p91 = por %p89, %p90
    %p92 = scmp.ne.s32.totalorder %s84, %s87
    %p93 = scmp.eq.s32.totalorder %s8, 0
    %p94 = por %p92, %p93
    %p95 = scmp.ne.s32.totalorder %s84, %s87
    %p96 = scmp.eq.s32.totalorder %s13, 1
    %p97 = por %p95, %p96
    %p98 = scmp.ne.s32.totalorder %s87, %s88
    %p99 = scmp.eq.s32.totalorder %s13, 0
    %p100 = por %p98, %p99
    %p101 = scmp.ne.s32.totalorder %s87, %s88
    %p102 = scmp.eq.s32.totalorder %s14, 1
    %p103 = por %p101, %p102
    %p105 = scmp.ne.s32.totalorder %s88, %s104
    %p106 = scmp.eq.s32.totalorder %s14, 0
    %p107 = por %p105, %p106
    %p108 = scmp.le.s32.totalorder 1, %s8
    %p109 = scmp.lt.s32.totalorder %s8, 3
    %p110 = pnand %p108, %p109
    %p111 = pneg %p110
    // Predicated region
    $region9: #{resnet_generator_forward.10} parent=5 // pred_check
      _
    $region10: #{resnet_generator_forward.10} parent=5 // pred_check_branch
      %113 = sbr.rel (%p110) target = $region12
    $region11: #{resnet_generator_forward.10} parent=5 // pred_region
      %s114 = ssub.s32 %s8, 1
      // Predicated region
      $region13: #{resnet_generator_forward.10} parent=11 // pred_check
        %p115 = pneg %p72
      $region14: #{resnet_generator_forward.10} parent=11 // pred_check_branch
        %117 = sbr.rel (%p115) target = $region16
      $region15: #{resnet_generator_forward.10} parent=11 // pred_region
        %p118 = scmp.lt.s32.totalorder %s18, 0
        %s119 = scalar_select %p118, %s18, 0
        %s120 = smul.addr %s119, 4
        %s121 = smul.addr %s120, 4
        %s122 = scalar_lea.vmem %s1, %s121
      $region16: #{resnet_generator_forward.10} parent=11 // pred_fallthru
        _
    $region12: #{resnet_generator_forward.10} parent=5 // pred_fallthru
      _
    %p123 = scmp.lt.s32.totalorder %s8, 2
    // Predicated region
    $region17: #{resnet_generator_forward.10} parent=5 // pred_check
      %p124 = pneg %p123
    $region18: #{resnet_generator_forward.10} parent=5 // pred_check_branch
      %126 = sbr.rel (%p124) target = $region20
    $region19: #{resnet_generator_forward.10} parent=5 // pred_region
      // Predicated region
      $region21: #{resnet_generator_forward.10} parent=19 // pred_check
        %p127 = pneg %p40
      $region22: #{resnet_generator_forward.10} parent=19 // pred_check_branch
        %129 = sbr.rel (%p127) target = $region24
      $region23: #{resnet_generator_forward.10} parent=19 // pred_region
        %p130 = scmp.lt.s32.totalorder %s15, 1
        %s131 = scalar_select %p130, %s15, 1
        %s132 = smul.addr %s131, 5
        %s133 = smul.addr %s132, 4
        %s134 = scalar_lea.vmem %s0, %s133
      $region24: #{resnet_generator_forward.10} parent=19 // pred_fallthru
        _
    $region20: #{resnet_generator_forward.10} parent=5 // pred_fallthru
      _
    %p135 = scmp.le.s32.totalorder 1, %s8
    %p136 = scmp.lt.s32.totalorder %s8, 3
    %p137 = pnand %p135, %p136
    %p138 = pneg %p137
    // Predicated region
    $region25: #{resnet_generator_forward.10} parent=5 // pred_check
      _
    $region26: #{resnet_generator_forward.10} parent=5 // pred_check_branch
      %140 = sbr.rel (%p137) target = $region28
    $region27: #{resnet_generator_forward.10} parent=5 // pred_region
      %s141 = ssub.s32 %s8, 1
      %p142 = scmp.lt.s32.totalorder %s17, 1
      %s143 = scalar_select %p142, %s17, 1
      %s144 = smul.addr %s143, 5
      %s145 = smul.addr %s144, 4
      %s146 = scalar_lea.vmem %s0, %s145
      %p147 = pneg %p46
      %p148 = pneg %p43
      %p149 = scmp.lt.s32.totalorder %s18, 0
      %s150 = scalar_select %p149, %s18, 0
      %s151 = smul.addr %s150, 4
      %s152 = smul.addr %s151, 4
      %s153 = scalar_lea.vmem %s1, %s152
      %p154 = pneg %p72
      %p155 = pneg %p69
      %p156 = pneg %p100
      %p157 = pneg %p97
      %p158 = scmp.lt.s32.totalorder %s17, 1
      %s159 = scalar_select %p158, %s17, 1
      %p160 = scmp.lt.s32.totalorder %s18, 0
      %s161 = scalar_select %p160, %s18, 0
      %s162 = smul.addr %s161, 3
      %s163 = smul.addr %s159, 3
      %s164 = sadd.s32 %s162, %s163
      %s165 = smul.addr %s164, 4
      %s166 = scalar_lea.vmem %s2, %s165
      %p167 = scmp.lt.s32.totalorder %s17, 1
      %s168 = scalar_select %p167, %s17, 1
      %s169 = smul.addr %s168, 5
      %s170 = smul.addr %s169, 4
      %s171 = scalar_lea.vmem %s0, %s170
      %p172 = scmp.lt.s32.totalorder %s18, 0
      %s173 = scalar_select %p172, %s18, 0
      %s174 = smul.addr %s173, 4
      %s175 = smul.addr %s174, 4
      %s176 = scalar_lea.vmem %s1, %s175
      %p177 = scmp.lt.s32.totalorder %s17, 1
      %s178 = scalar_select %p177, %s17, 1
      %p179 = scmp.lt.s32.totalorder %s18, 0
      %s180 = scalar_select %p179, %s18, 0
      %s181 = smul.addr %s180, 3
      %s182 = smul.addr %s178, 3
      %s183 = sadd.s32 %s181, %s182
      %s184 = smul.addr %s183, 4
      %s185 = scalar_lea.vmem %s2, %s184
      %v187 = vld [vmem:[%s171] sm:$0xff]
      %v188 = vld [vmem:[%s171 + $0x8] sm:$0xf]
      %189 = vst [vmem:[#allocation2] sm:$0xff] %v187
      %190 = vst [vmem:[#allocation2 + $0x8] sm:$0xf] %v188
      %v191 = vld [vmem:[%s171] sm:$0xff]
      %v192 = vld [vmem:[%s171 + $0x8] sm:$0xff]
      %195 = vrot.lane.b32.xlu0 %v191, 127
      %v196 = vpop.permute.xlu0 %195
      %197 = vrot.lane.b32.xlu0 %v192, 127
      %v198 = vpop.permute.xlu0 %197
      %v199 = vrot.slane %v196, 4
      %v200 = vrot.slane %v198, 4
      %vm201 = vcmask 1043456
      %v202 = vsel %vm201, %v199, %v200
      %vm203 = vcmask 1039360
      %v204 = vsel %vm203, %v196, %v202
      %v205 = vsel %vm203, %v198, %v200
      %208 = vst [vmem:[#allocation2 + $0xc] sm:$0xff] %v204
      %209 = vst [vmem:[#allocation2 + $0x14] sm:$0xf] %v205
      %v210 = vld [vmem:[%s171] sm:$0xff]
      %v211 = vld [vmem:[%s171 + $0x8] sm:$0xff]
      %214 = vrot.lane.b32.xlu0 %v210, 126
      %v215 = vpop.permute.xlu0 %214
      %216 = vrot.lane.b32.xlu0 %v211, 126
      %v217 = vpop.permute.xlu0 %216
      %v218 = vrot.slane %v215, 4
      %v219 = vrot.slane %v217, 4
      %v220 = vsel %vm201, %v218, %v219
      %vm221 = vcmask 1031168
      %v222 = vsel %vm221, %v215, %v220
      %v223 = vsel %vm221, %v217, %v219
      %226 = vst [vmem:[#allocation2 + $0x18] sm:$0xff] %v222
      %227 = vst [vmem:[#allocation2 + $0x20] sm:$0xf] %v223
      %v228 = vld [vmem:[%s171] sm:$0xff]
      %v229 = vld [vmem:[%s171 + $0x8] sm:$0xff]
      %232 = vrot.lane.b32.xlu0 %v228, 125
      %v233 = vpop.permute.xlu0 %232
      %234 = vrot.lane.b32.xlu0 %v229, 125
      %v235 = vpop.permute.xlu0 %234
      %v236 = vrot.slane %v233, 4
      %v237 = vrot.slane %v235, 4
      %v238 = vsel %vm201, %v236, %v237
      %vm239 = vcmask 1022976
      %v240 = vsel %vm239, %v233, %v238
      %v241 = vsel %vm239, %v235, %v237
      %244 = vst [vmem:[#allocation2 + $0x24] sm:$0xff] %v240
      %245 = vst [vmem:[#allocation2 + $0x2c] sm:$0xf] %v241
      %v246 = vld [vmem:[%s171] sm:$0xff]
      %v247 = vld [vmem:[%s171 + $0x8] sm:$0xff]
      %250 = vrot.lane.b32.xlu0 %v246, 124
      %v251 = vpop.permute.xlu0 %250
      %252 = vrot.lane.b32.xlu0 %v247, 124
      %v253 = vpop.permute.xlu0 %252
      %v254 = vrot.slane %v251, 4
      %v255 = vrot.slane %v253, 4
      %v256 = vsel %vm201, %v254, %v255
      %vm257 = vcmask 1014784
      %v258 = vsel %vm257, %v251, %v256
      %v259 = vsel %vm257, %v253, %v255
      %262 = vst [vmem:[#allocation2 + $0x30] sm:$0xff] %v258
      %263 = vst [vmem:[#allocation2 + $0x38] sm:$0xf] %v259
      %v264 = vld [vmem:[%s171] sm:$0xff]
      %v265 = vld [vmem:[%s171 + $0x8] sm:$0xff]
      %268 = vrot.lane.b32.xlu0 %v264, 123
      %v269 = vpop.permute.xlu0 %268
      %270 = vrot.lane.b32.xlu0 %v265, 123
      %v271 = vpop.permute.xlu0 %270
      %v272 = vrot.slane %v269, 4
      %v273 = vrot.slane %v271, 4
      %v274 = vsel %vm201, %v272, %v273
      %vm275 = vcmask 1006592
      %v276 = vsel %vm275, %v269, %v274
      %v277 = vsel %vm275, %v271, %v273
      %280 = vst [vmem:[#allocation2 + $0x3c] sm:$0xff] %v276
      %281 = vst [vmem:[#allocation2 + $0x44] sm:$0xf] %v277
      %v282 = vld [vmem:[%s171] sm:$0xff]
      %v283 = vld [vmem:[%s171 + $0x8] sm:$0xff]
      %286 = vrot.lane.b32.xlu0 %v282, 122
      %v287 = vpop.permute.xlu0 %286
      %288 = vrot.lane.b32.xlu0 %v283, 122
      %v289 = vpop.permute.xlu0 %288
      %v290 = vrot.slane %v287, 4
      %v291 = vrot.slane %v289, 4
      %v292 = vsel %vm201, %v290, %v291
      %vm293 = vcmask 998400
      %v294 = vsel %vm293, %v287, %v292
      %v295 = vsel %vm293, %v289, %v291
      %298 = vst [vmem:[#allocation2 + $0x48] sm:$0xff] %v294
      %299 = vst [vmem:[#allocation2 + $0x50] sm:$0xf] %v295
      %v300 = vld [vmem:[%s171] sm:$0xff]
      %v301 = vld [vmem:[%s171 + $0x8] sm:$0xff]
      %304 = vrot.lane.b32.xlu0 %v300, 106
      %v305 = vpop.permute.xlu0 %304
      %306 = vrot.lane.b32.xlu0 %v301, 106
      %v307 = vpop.permute.xlu0 %306
      %v308 = vrot.slane %v305, 4
      %v309 = vrot.slane %v307, 4
      %v310 = vsel %vm201, %v308, %v309
      %vm311 = vcmask 867328
      %v312 = vsel %vm311, %v305, %v310
      %v313 = vsel %vm311, %v307, %v309
      %316 = vst [vmem:[#allocation2 + $0x54] sm:$0xff] %v312
      %317 = vst [vmem:[#allocation2 + $0x5c] sm:$0xf] %v313
      %v318 = vld [vmem:[%s171] sm:$0xff]
      %v319 = vld [vmem:[%s171 + $0x8] sm:$0xff]
      %322 = vrot.lane.b32.xlu0 %v318, 105
      %v323 = vpop.permute.xlu0 %322
      %324 = vrot.lane.b32.xlu0 %v319, 105
      %v325 = vpop.permute.xlu0 %324
      %v326 = vrot.slane %v323, 4
      %v327 = vrot.slane %v325, 4
      %v328 = vsel %vm201, %v326, %v327
      %vm329 = vcmask 859136
      %v330 = vsel %vm329, %v323, %v328
      %v331 = vsel %vm329, %v325, %v327
      %334 = vst [vmem:[#allocation2 + $0x60] sm:$0xff] %v330
      %335 = vst [vmem:[#allocation2 + $0x68] sm:$0xf] %v331
      %v336 = vld [vmem:[%s171] sm:$0xff]
      %v337 = vld [vmem:[%s171 + $0x8] sm:$0xff]
      %340 = vrot.lane.b32.xlu0 %v336, 104
      %v341 = vpop.permute.xlu0 %340
      %342 = vrot.lane.b32.xlu0 %v337, 104
      %v343 = vpop.permute.xlu0 %342
      %v344 = vrot.slane %v341, 4
      %v345 = vrot.slane %v343, 4
      %v346 = vsel %vm201, %v344, %v345
      %vm347 = vcmask 850944
      %v348 = vsel %vm347, %v341, %v346
      %v349 = vsel %vm347, %v343, %v345
      %352 = vst [vmem:[#allocation2 + $0x6c] sm:$0xff] %v348
      %353 = vst [vmem:[#allocation2 + $0x74] sm:$0xf] %v349
      %v354 = vld [vmem:[%s171] sm:$0xff]
      %v355 = vld [vmem:[%s171 + $0x8] sm:$0xff]
      %358 = vrot.lane.b32.xlu0 %v354, 103
      %v359 = vpop.permute.xlu0 %358
      %360 = vrot.lane.b32.xlu0 %v355, 103
      %v361 = vpop.permute.xlu0 %360
      %v362 = vrot.slane %v359, 4
      %v363 = vrot.slane %v361, 4
      %v364 = vsel %vm201, %v362, %v363
      %vm365 = vcmask 842752
      %v366 = vsel %vm365, %v359, %v364
      %v367 = vsel %vm365, %v361, %v363
      %370 = vst [vmem:[#allocation2 + $0x78] sm:$0xff] %v366
      %371 = vst [vmem:[#allocation2 + $0x80] sm:$0xf] %v367
      %v372 = vld [vmem:[%s171] sm:$0xff]
      %v373 = vld [vmem:[%s171 + $0x8] sm:$0xff]
      %376 = vrot.lane.b32.xlu0 %v372, 102
      %v377 = vpop.permute.xlu0 %376
      %378 = vrot.lane.b32.xlu0 %v373, 102
      %v379 = vpop.permute.xlu0 %378
      %v380 = vrot.slane %v377, 4
      %v381 = vrot.slane %v379, 4
      %v382 = vsel %vm201, %v380, %v381
      %vm383 = vcmask 834560
      %v384 = vsel %vm383, %v377, %v382
      %v385 = vsel %vm383, %v379, %v381
      %388 = vst [vmem:[#allocation2 + $0x84] sm:$0xff] %v384
      %389 = vst [vmem:[#allocation2 + $0x8c] sm:$0xf] %v385
      %v390 = vld [vmem:[%s171] sm:$0xff]
      %v391 = vld [vmem:[%s171 + $0x8] sm:$0xff]
      %394 = vrot.lane.b32.xlu0 %v390, 101
      %v395 = vpop.permute.xlu0 %394
      %396 = vrot.lane.b32.xlu0 %v391, 101
      %v397 = vpop.permute.xlu0 %396
      %v398 = vrot.slane %v395, 4
      %v399 = vrot.slane %v397, 4
      %v400 = vsel %vm201, %v398, %v399
      %vm401 = vcmask 826368
      %v402 = vsel %vm401, %v395, %v400
      %v403 = vsel %vm401, %v397, %v399
      %406 = vst [vmem:[#allocation2 + $0x90] sm:$0xff] %v402
      %407 = vst [vmem:[#allocation2 + $0x98] sm:$0xf] %v403
      %v408 = vld [vmem:[%s171] sm:$0xff]
      %v409 = vld [vmem:[%s171 + $0x8] sm:$0xff]
      %412 = vrot.lane.b32.xlu0 %v408, 100
      %v413 = vpop.permute.xlu0 %412
      %414 = vrot.lane.b32.xlu0 %v409, 100
      %v415 = vpop.permute.xlu0 %414
      %v416 = vrot.slane %v413, 4
      %v417 = vrot.slane %v415, 4
      %v418 = vsel %vm201, %v416, %v417
      %vm419 = vcmask 818176
      %v420 = vsel %vm419, %v413, %v418
      %v421 = vsel %vm419, %v415, %v417
      %424 = vst [vmem:[#allocation2 + $0x9c] sm:$0xff] %v420
      %425 = vst [vmem:[#allocation2 + $0xa4] sm:$0xf] %v421
      %v426 = vld [vmem:[%s171] sm:$0xff]
      %v427 = vld [vmem:[%s171 + $0x8] sm:$0xff]
      %430 = vrot.lane.b32.xlu0 %v426, 84
      %v431 = vpop.permute.xlu0 %430
      %432 = vrot.lane.b32.xlu0 %v427, 84
      %v433 = vpop.permute.xlu0 %432
      %v434 = vrot.slane %v431, 4
      %v435 = vrot.slane %v433, 4
      %v436 = vsel %vm201, %v434, %v435
      %vm437 = vcmask 687104
      %v438 = vsel %vm437, %v431, %v436
      %v439 = vsel %vm437, %v433, %v435
      %442 = vst [vmem:[#allocation2 + $0xa8] sm:$0xff] %v438
      %443 = vst [vmem:[#allocation2 + $0xb0] sm:$0xf] %v439
      %v444 = vld [vmem:[%s171] sm:$0xff]
      %v445 = vld [vmem:[%s171 + $0x8] sm:$0xff]
      %448 = vrot.lane.b32.xlu0 %v444, 83
      %v449 = vpop.permute.xlu0 %448
      %450 = vrot.lane.b32.xlu0 %v445, 83
      %v451 = vpop.permute.xlu0 %450
      %v452 = vrot.slane %v449, 4
      %v453 = vrot.slane %v451, 4
      %v454 = vsel %vm201, %v452, %v453
      %vm455 = vcmask 678912
      %v456 = vsel %vm455, %v449, %v454
      %v457 = vsel %vm455, %v451, %v453
      %460 = vst [vmem:[#allocation2 + $0xb4] sm:$0xff] %v456
      %461 = vst [vmem:[#allocation2 + $0xbc] sm:$0xf] %v457
      %v462 = vld [vmem:[%s171] sm:$0xff]
      %v463 = vld [vmem:[%s171 + $0x8] sm:$0xff]
      %466 = vrot.lane.b32.xlu0 %v462, 82
      %v467 = vpop.permute.xlu0 %466
      %468 = vrot.lane.b32.xlu0 %v463, 82
      %v469 = vpop.permute.xlu0 %468
      %v470 = vrot.slane %v467, 4
      %v471 = vrot.slane %v469, 4
      %v472 = vsel %vm201, %v470, %v471
      %vm473 = vcmask 670720
      %v474 = vsel %vm473, %v467, %v472
      %v475 = vsel %vm473, %v469, %v471
      %478 = vst [vmem:[#allocation2 + $0xc0] sm:$0xff] %v474
      %479 = vst [vmem:[#allocation2 + $0xc8] sm:$0xf] %v475
      %v480 = vld [vmem:[%s171] sm:$0xff]
      %v481 = vld [vmem:[%s171 + $0x8] sm:$0xff]
      %484 = vrot.lane.b32.xlu0 %v480, 81
      %v485 = vpop.permute.xlu0 %484
      %486 = vrot.lane.b32.xlu0 %v481, 81
      %v487 = vpop.permute.xlu0 %486
      %v488 = vrot.slane %v485, 4
      %v489 = vrot.slane %v487, 4
      %v490 = vsel %vm201, %v488, %v489
      %vm491 = vcmask 662528
      %v492 = vsel %vm491, %v485, %v490
      %v493 = vsel %vm491, %v487, %v489
      %496 = vst [vmem:[#allocation2 + $0xcc] sm:$0xff] %v492
      %497 = vst [vmem:[#allocation2 + $0xd4] sm:$0xf] %v493
      %v498 = vld [vmem:[%s171] sm:$0xff]
      %v499 = vld [vmem:[%s171 + $0x8] sm:$0xff]
      %502 = vrot.lane.b32.xlu0 %v498, 80
      %v503 = vpop.permute.xlu0 %502
      %504 = vrot.lane.b32.xlu0 %v499, 80
      %v505 = vpop.permute.xlu0 %504
      %v506 = vrot.slane %v503, 4
      %v507 = vrot.slane %v505, 4
      %v508 = vsel %vm201, %v506, %v507
      %vm509 = vcmask 654336
      %v510 = vsel %vm509, %v503, %v508
      %v511 = vsel %vm509, %v505, %v507
      %514 = vst [vmem:[#allocation2 + $0xd8] sm:$0xff] %v510
      %515 = vst [vmem:[#allocation2 + $0xe0] sm:$0xf] %v511
      %v516 = vld [vmem:[%s171] sm:$0xff]
      %v517 = vld [vmem:[%s171 + $0x8] sm:$0xff]
      %520 = vrot.lane.b32.xlu0 %v516, 79
      %v521 = vpop.permute.xlu0 %520
      %522 = vrot.lane.b32.xlu0 %v517, 79
      %v523 = vpop.permute.xlu0 %522
      %v524 = vrot.slane %v521, 4
      %v525 = vrot.slane %v523, 4
      %v526 = vsel %vm201, %v524, %v525
      %vm527 = vcmask 646144
      %v528 = vsel %vm527, %v521, %v526
      %v529 = vsel %vm527, %v523, %v525
      %532 = vst [vmem:[#allocation2 + $0xe4] sm:$0xff] %v528
      %533 = vst [vmem:[#allocation2 + $0xec] sm:$0xf] %v529
      %v534 = vld [vmem:[%s171] sm:$0xff]
      %v535 = vld [vmem:[%s171 + $0x8] sm:$0xff]
      %538 = vrot.lane.b32.xlu0 %v534, 78
      %v539 = vpop.permute.xlu0 %538
      %540 = vrot.lane.b32.xlu0 %v535, 78
      %v541 = vpop.permute.xlu0 %540
      %v542 = vrot.slane %v539, 4
      %v543 = vrot.slane %v541, 4
      %v544 = vsel %vm201, %v542, %v543
      %vm545 = vcmask 637952
      %v546 = vsel %vm545, %v539, %v544
      %v547 = vsel %vm545, %v541, %v543
      %550 = vst [vmem:[#allocation2 + $0xf0] sm:$0xff] %v546
      %551 = vst [vmem:[#allocation2 + $0xf8] sm:$0xf] %v547
      %v552 = vld [vmem:[%s171] sm:$0xff]
      %v553 = vld [vmem:[%s171 + $0x8] sm:$0xff]
      %556 = vrot.lane.b32.xlu0 %v552, 62
      %v557 = vpop.permute.xlu0 %556
      %558 = vrot.lane.b32.xlu0 %v553, 62
      %v559 = vpop.permute.xlu0 %558
      %v560 = vrot.slane %v557, 4
      %v561 = vrot.slane %v559, 4
      %v562 = vsel %vm201, %v560, %v561
      %vm563 = vcmask 506880
      %v564 = vsel %vm563, %v557, %v562
      %v565 = vsel %vm563, %v559, %v561
      %568 = vst [vmem:[#allocation2 + $0xfc] sm:$0xff] %v564
      %569 = vst [vmem:[#allocation2 + $0x104] sm:$0xf] %v565
      %v570 = vld [vmem:[%s171] sm:$0xff]
      %v571 = vld [vmem:[%s171 + $0x8] sm:$0xff]
      %574 = vrot.lane.b32.xlu0 %v570, 61
      %v575 = vpop.permute.xlu0 %574
      %576 = vrot.lane.b32.xlu0 %v571, 61
      %v577 = vpop.permute.xlu0 %576
      %v578 = vrot.slane %v575, 4
      %v579 = vrot.slane %v577, 4
      %v580 = vsel %vm201, %v578, %v579
      %vm581 = vcmask 498688
      %v582 = vsel %vm581, %v575, %v580
      %v583 = vsel %vm581, %v577, %v579
      %586 = vst [vmem:[#allocation2 + $0x108] sm:$0xff] %v582
      %587 = vst [vmem:[#allocation2 + $0x110] sm:$0xf] %v583
      %v588 = vld [vmem:[%s171] sm:$0xff]
      %v589 = vld [vmem:[%s171 + $0x8] sm:$0xff]
      %592 = vrot.lane.b32.xlu0 %v588, 60
      %v593 = vpop.permute.xlu0 %592
      %594 = vrot.lane.b32.xlu0 %v589, 60
      %v595 = vpop.permute.xlu0 %594
      %v596 = vrot.slane %v593, 4
      %v597 = vrot.slane %v595, 4
      %v598 = vsel %vm201, %v596, %v597
      %vm599 = vcmask 490496
      %v600 = vsel %vm599, %v593, %v598
      %v601 = vsel %vm599, %v595, %v597
      %604 = vst [vmem:[#allocation2 + $0x114] sm:$0xff] %v600
      %605 = vst [vmem:[#allocation2 + $0x11c] sm:$0xf] %v601
      %v606 = vld [vmem:[%s171] sm:$0xff]
      %v607 = vld [vmem:[%s171 + $0x8] sm:$0xff]
      %610 = vrot.lane.b32.xlu0 %v606, 59
      %v611 = vpop.permute.xlu0 %610
      %612 = vrot.lane.b32.xlu0 %v607, 59
      %v613 = vpop.permute.xlu0 %612
      %v614 = vrot.slane %v611, 4
      %v615 = vrot.slane %v613, 4
      %v616 = vsel %vm201, %v614, %v615
      %vm617 = vcmask 482304
      %v618 = vsel %vm617, %v611, %v616
      %v619 = vsel %vm617, %v613, %v615
      %622 = vst [vmem:[#allocation2 + $0x120] sm:$0xff] %v618
      %623 = vst [vmem:[#allocation2 + $0x128] sm:$0xf] %v619
      %v624 = vld [vmem:[%s171] sm:$0xff]
      %v625 = vld [vmem:[%s171 + $0x8] sm:$0xff]
      %628 = vrot.lane.b32.xlu0 %v624, 58
      %v629 = vpop.permute.xlu0 %628
      %630 = vrot.lane.b32.xlu0 %v625, 58
      %v631 = vpop.permute.xlu0 %630
      %v632 = vrot.slane %v629, 4
      %v633 = vrot.slane %v631, 4
      %v634 = vsel %vm201, %v632, %v633
      %vm635 = vcmask 474112
      %v636 = vsel %vm635, %v629, %v634
      %v637 = vsel %vm635, %v631, %v633
      %640 = vst [vmem:[#allocation2 + $0x12c] sm:$0xff] %v636
      %641 = vst [vmem:[#allocation2 + $0x134] sm:$0xf] %v637
      %v642 = vld [vmem:[%s171] sm:$0xff]
      %v643 = vld [vmem:[%s171 + $0x8] sm:$0xff]
      %646 = vrot.lane.b32.xlu0 %v642, 57
      %v647 = vpop.permute.xlu0 %646
      %648 = vrot.lane.b32.xlu0 %v643, 57
      %v649 = vpop.permute.xlu0 %648
      %v650 = vrot.slane %v647, 4
      %v651 = vrot.slane %v649, 4
      %v652 = vsel %vm201, %v650, %v651
      %vm653 = vcmask 465920
      %v654 = vsel %vm653, %v647, %v652
      %v655 = vsel %vm653, %v649, %v651
      %658 = vst [vmem:[#allocation2 + $0x138] sm:$0xff] %v654
      %659 = vst [vmem:[#allocation2 + $0x140] sm:$0xf] %v655
      %v660 = vld [vmem:[%s171] sm:$0xff]
      %v661 = vld [vmem:[%s171 + $0x8] sm:$0xff]
      %664 = vrot.lane.b32.xlu0 %v660, 56
      %v665 = vpop.permute.xlu0 %664
      %666 = vrot.lane.b32.xlu0 %v661, 56
      %v667 = vpop.permute.xlu0 %666
      %v668 = vrot.slane %v665, 4
      %v669 = vrot.slane %v667, 4
      %v670 = vsel %vm201, %v668, %v669
      %vm671 = vcmask 457728
      %v672 = vsel %vm671, %v665, %v670
      %v673 = vsel %vm671, %v667, %v669
      %676 = vst [vmem:[#allocation2 + $0x144] sm:$0xff] %v672
      %677 = vst [vmem:[#allocation2 + $0x14c] sm:$0xf] %v673
      %v678 = vld [vmem:[%s171] sm:$0xff]
      %v679 = vld [vmem:[%s171 + $0x8] sm:$0xff]
      %682 = vrot.lane.b32.xlu0 %v678, 40
      %v683 = vpop.permute.xlu0 %682
      %684 = vrot.lane.b32.xlu0 %v679, 40
      %v685 = vpop.permute.xlu0 %684
      %v686 = vrot.slane %v683, 4
      %v687 = vrot.slane %v685, 4
      %v688 = vsel %vm201, %v686, %v687
      %vm689 = vcmask 326656
      %v690 = vsel %vm689, %v683, %v688
      %v691 = vsel %vm689, %v685, %v687
      %694 = vst [vmem:[#allocation2 + $0x150] sm:$0xff] %v690
      %695 = vst [vmem:[#allocation2 + $0x158] sm:$0xf] %v691
      %v696 = vld [vmem:[%s171] sm:$0xff]
      %v697 = vld [vmem:[%s171 + $0x8] sm:$0xff]
      %700 = vrot.lane.b32.xlu0 %v696, 39
      %v701 = vpop.permute.xlu0 %700
      %702 = vrot.lane.b32.xlu0 %v697, 39
      %v703 = vpop.permute.xlu0 %702
      %v704 = vrot.slane %v701, 4
      %v705 = vrot.slane %v703, 4
      %v706 = vsel %vm201, %v704, %v705
      %vm707 = vcmask 318464
      %v708 = vsel %vm707, %v701, %v706
      %v709 = vsel %vm707, %v703, %v705
      %712 = vst [vmem:[#allocation2 + $0x15c] sm:$0xff] %v708
      %713 = vst [vmem:[#allocation2 + $0x164] sm:$0xf] %v709
      %v714 = vld [vmem:[%s171] sm:$0xff]
      %v715 = vld [vmem:[%s171 + $0x8] sm:$0xff]
      %718 = vrot.lane.b32.xlu0 %v714, 38
      %v719 = vpop.permute.xlu0 %718
      %720 = vrot.lane.b32.xlu0 %v715, 38
      %v721 = vpop.permute.xlu0 %720
      %v722 = vrot.slane %v719, 4
      %v723 = vrot.slane %v721, 4
      %v724 = vsel %vm201, %v722, %v723
      %vm725 = vcmask 310272
      %v726 = vsel %vm725, %v719, %v724
      %v727 = vsel %vm725, %v721, %v723
      %730 = vst [vmem:[#allocation2 + $0x168] sm:$0xff] %v726
      %731 = vst [vmem:[#allocation2 + $0x170] sm:$0xf] %v727
      %v732 = vld [vmem:[%s171] sm:$0xff]
      %v733 = vld [vmem:[%s171 + $0x8] sm:$0xff]
      %736 = vrot.lane.b32.xlu0 %v732, 37
      %v737 = vpop.permute.xlu0 %736
      %738 = vrot.lane.b32.xlu0 %v733, 37
      %v739 = vpop.permute.xlu0 %738
      %v740 = vrot.slane %v737, 4
      %v741 = vrot.slane %v739, 4
      %v742 = vsel %vm201, %v740, %v741
      %vm743 = vcmask 302080
      %v744 = vsel %vm743, %v737, %v742
      %v745 = vsel %vm743, %v739, %v741
      %748 = vst [vmem:[#allocation2 + $0x174] sm:$0xff] %v744
      %749 = vst [vmem:[#allocation2 + $0x17c] sm:$0xf] %v745
      %v750 = vld [vmem:[%s171] sm:$0xff]
      %v751 = vld [vmem:[%s171 + $0x8] sm:$0xff]
      %754 = vrot.lane.b32.xlu0 %v750, 36
      %v755 = vpop.permute.xlu0 %754
      %756 = vrot.lane.b32.xlu0 %v751, 36
      %v757 = vpop.permute.xlu0 %756
      %v758 = vrot.slane %v755, 4
      %v759 = vrot.slane %v757, 4
      %v760 = vsel %vm201, %v758, %v759
      %vm761 = vcmask 293888
      %v762 = vsel %vm761, %v755, %v760
      %v763 = vsel %vm761, %v757, %v759
      %766 = vst [vmem:[#allocation2 + $0x180] sm:$0xff] %v762
      %767 = vst [vmem:[#allocation2 + $0x188] sm:$0xf] %v763
      %v768 = vld [vmem:[%s171] sm:$0xff]
      %v769 = vld [vmem:[%s171 + $0x8] sm:$0xff]
      %772 = vrot.lane.b32.xlu0 %v768, 35
      %v773 = vpop.permute.xlu0 %772
      %774 = vrot.lane.b32.xlu0 %v769, 35
      %v775 = vpop.permute.xlu0 %774
      %v776 = vrot.slane %v773, 4
      %v777 = vrot.slane %v775, 4
      %v778 = vsel %vm201, %v776, %v777
      %vm779 = vcmask 285696
      %v780 = vsel %vm779, %v773, %v778
      %v781 = vsel %vm779, %v775, %v777
      %784 = vst [vmem:[#allocation2 + $0x18c] sm:$0xff] %v780
      %785 = vst [vmem:[#allocation2 + $0x194] sm:$0xf] %v781
      %v786 = vld [vmem:[%s171] sm:$0xff]
      %v787 = vld [vmem:[%s171 + $0x8] sm:$0xff]
      %790 = vrot.lane.b32.xlu0 %v786, 34
      %v791 = vpop.permute.xlu0 %790
      %792 = vrot.lane.b32.xlu0 %v787, 34
      %v793 = vpop.permute.xlu0 %792
      %v794 = vrot.slane %v791, 4
      %v795 = vrot.slane %v793, 4
      %v796 = vsel %vm201, %v794, %v795
      %vm797 = vcmask 277504
      %v798 = vsel %vm797, %v791, %v796
      %v799 = vsel %vm797, %v793, %v795
      %802 = vst [vmem:[#allocation2 + $0x198] sm:$0xff] %v798
      %803 = vst [vmem:[#allocation2 + $0x1a0] sm:$0xf] %v799
      %v804 = vld [vmem:[%s171] sm:$0xff]
      %v805 = vld [vmem:[%s171 + $0x8] sm:$0xff]
      %808 = vrot.lane.b32.xlu0 %v804, 18
      %v809 = vpop.permute.xlu0 %808
      %810 = vrot.lane.b32.xlu0 %v805, 18
      %v811 = vpop.permute.xlu0 %810
      %v812 = vrot.slane %v809, 4
      %v813 = vrot.slane %v811, 4
      %v814 = vsel %vm201, %v812, %v813
      %vm815 = vcmask 146432
      %v816 = vsel %vm815, %v809, %v814
      %v817 = vsel %vm815, %v811, %v813
      %820 = vst [vmem:[#allocation2 + $0x1a4] sm:$0xff] %v816
      %821 = vst [vmem:[#allocation2 + $0x1ac] sm:$0xf] %v817
      %v822 = vld [vmem:[%s171] sm:$0xff]
      %v823 = vld [vmem:[%s171 + $0x8] sm:$0xff]
      %826 = vrot.lane.b32.xlu0 %v822, 17
      %v827 = vpop.permute.xlu0 %826
      %828 = vrot.lane.b32.xlu0 %v823, 17
      %v829 = vpop.permute.xlu0 %828
      %v830 = vrot.slane %v827, 4
      %v831 = vrot.slane %v829, 4
      %v832 = vsel %vm201, %v830, %v831
      %vm833 = vcmask 138240
      %v834 = vsel %vm833, %v827, %v832
      %v835 = vsel %vm833, %v829, %v831
      %838 = vst [vmem:[#allocation2 + $0x1b0] sm:$0xff] %v834
      %839 = vst [vmem:[#allocation2 + $0x1b8] sm:$0xf] %v835
      %v840 = vld [vmem:[%s171] sm:$0xff]
      %v841 = vld [vmem:[%s171 + $0x8] sm:$0xff]
      %844 = vrot.lane.b32.xlu0 %v840, 16
      %v845 = vpop.permute.xlu0 %844
      %846 = vrot.lane.b32.xlu0 %v841, 16
      %v847 = vpop.permute.xlu0 %846
      %v848 = vrot.slane %v845, 4
      %v849 = vrot.slane %v847, 4
      %v850 = vsel %vm201, %v848, %v849
      %vm851 = vcmask 130048
      %v852 = vsel %vm851, %v845, %v850
      %v853 = vsel %vm851, %v847, %v849
      %856 = vst [vmem:[#allocation2 + $0x1bc] sm:$0xff] %v852
      %857 = vst [vmem:[#allocation2 + $0x1c4] sm:$0xf] %v853
      %v858 = vld [vmem:[%s171] sm:$0xff]
      %v859 = vld [vmem:[%s171 + $0x8] sm:$0xff]
      %862 = vrot.lane.b32.xlu0 %v858, 15
      %v863 = vpop.permute.xlu0 %862
      %864 = vrot.lane.b32.xlu0 %v859, 15
      %v865 = vpop.permute.xlu0 %864
      %v866 = vrot.slane %v863, 4
      %v867 = vrot.slane %v865, 4
      %v868 = vsel %vm201, %v866, %v867
      %vm869 = vcmask 121856
      %v870 = vsel %vm869, %v863, %v868
      %v871 = vsel %vm869, %v865, %v867
      %874 = vst [vmem:[#allocation2 + $0x1c8] sm:$0xff] %v870
      %875 = vst [vmem:[#allocation2 + $0x1d0] sm:$0xf] %v871
      %v876 = vld [vmem:[%s171] sm:$0xff]
      %v877 = vld [vmem:[%s171 + $0x8] sm:$0xff]
      %880 = vrot.lane.b32.xlu0 %v876, 14
      %v881 = vpop.permute.xlu0 %880
      %882 = vrot.lane.b32.xlu0 %v877, 14
      %v883 = vpop.permute.xlu0 %882
      %v884 = vrot.slane %v881, 4
      %v885 = vrot.slane %v883, 4
      %v886 = vsel %vm201, %v884, %v885
      %vm887 = vcmask 113664
      %v888 = vsel %vm887, %v881, %v886
      %v889 = vsel %vm887, %v883, %v885
      %892 = vst [vmem:[#allocation2 + $0x1d4] sm:$0xff] %v888
      %893 = vst [vmem:[#allocation2 + $0x1dc] sm:$0xf] %v889
      %v894 = vld [vmem:[%s171] sm:$0xff]
      %v895 = vld [vmem:[%s171 + $0x8] sm:$0xff]
      %898 = vrot.lane.b32.xlu0 %v894, 13
      %v899 = vpop.permute.xlu0 %898
      %900 = vrot.lane.b32.xlu0 %v895, 13
      %v901 = vpop.permute.xlu0 %900
      %v902 = vrot.slane %v899, 4
      %v903 = vrot.slane %v901, 4
      %v904 = vsel %vm201, %v902, %v903
      %vm905 = vcmask 105472
      %v906 = vsel %vm905, %v899, %v904
      %v907 = vsel %vm905, %v901, %v903
      %910 = vst [vmem:[#allocation2 + $0x1e0] sm:$0xff] %v906
      %911 = vst [vmem:[#allocation2 + $0x1e8] sm:$0xf] %v907
      %v912 = vld [vmem:[%s171] sm:$0xff]
      %v913 = vld [vmem:[%s171 + $0x8] sm:$0xff]
      %916 = vrot.lane.b32.xlu0 %v912, 12
      %v917 = vpop.permute.xlu0 %916
      %918 = vrot.lane.b32.xlu0 %v913, 12
      %v919 = vpop.permute.xlu0 %918
      %v920 = vrot.slane %v917, 4
      %v921 = vrot.slane %v919, 4
      %v922 = vsel %vm201, %v920, %v921
      %vm923 = vcmask 97280
      %v924 = vsel %vm923, %v917, %v922
      %v925 = vsel %vm923, %v919, %v921
      %928 = vst [vmem:[#allocation2 + $0x1ec] sm:$0xff] %v924
      %929 = vst [vmem:[#allocation2 + $0x1f4] sm:$0xf] %v925
      %v930 = vld [vmem:[%s171 + $0x4] sm:$0xff]
      %v931 = vld [vmem:[%s171 + $0xc] sm:$0xff]
      %934 = vrot.lane.b32.xlu0 %v930, 124
      %v935 = vpop.permute.xlu0 %934
      %936 = vrot.lane.b32.xlu0 %v931, 124
      %v937 = vpop.permute.xlu0 %936
      %v938 = vrot.slane %v935, 4
      %v939 = vrot.slane %v937, 4
      %v940 = vsel %vm201, %v938, %v939
      %v941 = vsel %vm257, %v935, %v940
      %v942 = vsel %vm257, %v937, %v939
      %945 = vst [vmem:[#allocation2 + $0x1f8] sm:$0xff] %v941
      %946 = vst [vmem:[#allocation2 + $0x200] sm:$0xf] %v942
      %v947 = vld [vmem:[%s171 + $0x4] sm:$0xff]
      %v948 = vld [vmem:[%s171 + $0xc] sm:$0xff]
      %951 = vrot.lane.b32.xlu0 %v947, 123
      %v952 = vpop.permute.xlu0 %951
      %953 = vrot.lane.b32.xlu0 %v948, 123
      %v954 = vpop.permute.xlu0 %953
      %v955 = vrot.slane %v952, 4
      %v956 = vrot.slane %v954, 4
      %v957 = vsel %vm201, %v955, %v956
      %v958 = vsel %vm275, %v952, %v957
      %v959 = vsel %vm275, %v954, %v956
      %962 = vst [vmem:[#allocation2 + $0x204] sm:$0xff] %v958
      %963 = vst [vmem:[#allocation2 + $0x20c] sm:$0xf] %v959
      %v964 = vld [vmem:[%s171 + $0x4] sm:$0xff]
      %v965 = vld [vmem:[%s171 + $0xc] sm:$0xff]
      %968 = vrot.lane.b32.xlu0 %v964, 122
      %v969 = vpop.permute.xlu0 %968
      %970 = vrot.lane.b32.xlu0 %v965, 122
      %v971 = vpop.permute.xlu0 %970
      %v972 = vrot.slane %v969, 4
      %v973 = vrot.slane %v971, 4
      %v974 = vsel %vm201, %v972, %v973
      %v975 = vsel %vm293, %v969, %v974
      %v976 = vsel %vm293, %v971, %v973
      %979 = vst [vmem:[#allocation2 + $0x210] sm:$0xff] %v975
      %980 = vst [vmem:[#allocation2 + $0x218] sm:$0xf] %v976
      %v981 = vld [vmem:[%s171 + $0x4] sm:$0xff]
      %v982 = vld [vmem:[%s171 + $0xc] sm:$0xff]
      %985 = vrot.lane.b32.xlu0 %v981, 121
      %v986 = vpop.permute.xlu0 %985
      %987 = vrot.lane.b32.xlu0 %v982, 121
      %v988 = vpop.permute.xlu0 %987
      %v989 = vrot.slane %v986, 4
      %v990 = vrot.slane %v988, 4
      %v991 = vsel %vm201, %v989, %v990
      %vm992 = vcmask 990208
      %v993 = vsel %vm992, %v986, %v991
      %v994 = vsel %vm992, %v988, %v990
      %997 = vst [vmem:[#allocation2 + $0x21c] sm:$0xff] %v993
      %998 = vst [vmem:[#allocation2 + $0x224] sm:$0xf] %v994
      %v999 = vld [vmem:[%s171 + $0x4] sm:$0xff]
      %v1000 = vld [vmem:[%s171 + $0xc] sm:$0xff]
      %1003 = vrot.lane.b32.xlu0 %v999, 120
      %v1004 = vpop.permute.xlu0 %1003
      %1005 = vrot.lane.b32.xlu0 %v1000, 120
      %v1006 = vpop.permute.xlu0 %1005
      %v1007 = vrot.slane %v1004, 4
      %v1008 = vrot.slane %v1006, 4
      %v1009 = vsel %vm201, %v1007, %v1008
      %vm1010 = vcmask 982016
      %v1011 = vsel %vm1010, %v1004, %v1009
      %v1012 = vsel %vm1010, %v1006, %v1008
      %1015 = vst [vmem:[#allocation2 + $0x228] sm:$0xff] %v1011
      %1016 = vst [vmem:[#allocation2 + $0x230] sm:$0xf] %v1012
      %v1017 = vld [vmem:[%s171 + $0x4] sm:$0xff]
      %v1018 = vld [vmem:[%s171 + $0xc] sm:$0xff]
      %1021 = vrot.lane.b32.xlu0 %v1017, 119
      %v1022 = vpop.permute.xlu0 %1021
      %1023 = vrot.lane.b32.xlu0 %v1018, 119
      %v1024 = vpop.permute.xlu0 %1023
      %v1025 = vrot.slane %v1022, 4
      %v1026 = vrot.slane %v1024, 4
      %v1027 = vsel %vm201, %v1025, %v1026
      %vm1028 = vcmask 973824
      %v1029 = vsel %vm1028, %v1022, %v1027
      %v1030 = vsel %vm1028, %v1024, %v1026
      %1033 = vst [vmem:[#allocation2 + $0x234] sm:$0xff] %v1029
      %1034 = vst [vmem:[#allocation2 + $0x23c] sm:$0xf] %v1030
      %v1035 = vld [vmem:[%s171 + $0x4] sm:$0xff]
      %v1036 = vld [vmem:[%s171 + $0xc] sm:$0xff]
      %1039 = vrot.lane.b32.xlu0 %v1035, 118
      %v1040 = vpop.permute.xlu0 %1039
      %1041 = vrot.lane.b32.xlu0 %v1036, 118
      %v1042 = vpop.permute.xlu0 %1041
      %v1043 = vrot.slane %v1040, 4
      %v1044 = vrot.slane %v1042, 4
      %v1045 = vsel %vm201, %v1043, %v1044
      %vm1046 = vcmask 965632
      %v1047 = vsel %vm1046, %v1040, %v1045
      %v1048 = vsel %vm1046, %v1042, %v1044
      %1051 = vst [vmem:[#allocation2 + $0x240] sm:$0xff] %v1047
      %1052 = vst [vmem:[#allocation2 + $0x248] sm:$0xf] %v1048
      %v1053 = vld [vmem:[%s176] sm:$0xff]
      %v1054 = vld [vmem:[%s176 + $0x8] sm:$0xff]
      %v1055 = vld [vmem:[#allocation2] sm:$0xff]
      %v1056 = vld [vmem:[#allocation2 + $0x8] sm:$0xf]
      %v1057 = vld [vmem:[#allocation2 + $0xc] sm:$0xff]
      %v1058 = vld [vmem:[#allocation2 + $0x14] sm:$0xf]
      %v1059 = vld [vmem:[#allocation2 + $0x18] sm:$0xff]
      %v1060 = vld [vmem:[#allocation2 + $0x20] sm:$0xf]
      %v1061 = vld [vmem:[#allocation2 + $0x24] sm:$0xff]
      %v1062 = vld [vmem:[#allocation2 + $0x2c] sm:$0xf]
      %v1063 = vld [vmem:[#allocation2 + $0x30] sm:$0xff]
      %v1064 = vld [vmem:[#allocation2 + $0x38] sm:$0xf]
      %v1065 = vld [vmem:[#allocation2 + $0x3c] sm:$0xff]
      %v1066 = vld [vmem:[#allocation2 + $0x44] sm:$0xf]
      %v1067 = vld [vmem:[#allocation2 + $0x48] sm:$0xff]
      %v1068 = vld [vmem:[#allocation2 + $0x50] sm:$0xf]
      %v1069 = vld [vmem:[#allocation2 + $0x54] sm:$0xff]
      %v1070 = vld [vmem:[#allocation2 + $0x5c] sm:$0xf]
      %v1071 = vld [vmem:[#allocation2 + $0x60] sm:$0xff]
      %v1072 = vld [vmem:[#allocation2 + $0x68] sm:$0xf]
      %v1073 = vld [vmem:[#allocation2 + $0x6c] sm:$0xff]
      %v1074 = vld [vmem:[#allocation2 + $0x74] sm:$0xf]
      %v1075 = vld [vmem:[#allocation2 + $0x78] sm:$0xff]
      %v1076 = vld [vmem:[#allocation2 + $0x80] sm:$0xf]
      %v1077 = vld [vmem:[#allocation2 + $0x84] sm:$0xff]
      %v1078 = vld [vmem:[#allocation2 + $0x8c] sm:$0xf]
      %v1079 = vld [vmem:[#allocation2 + $0x90] sm:$0xff]
      %v1080 = vld [vmem:[#allocation2 + $0x98] sm:$0xf]
      %v1081 = vld [vmem:[#allocation2 + $0x9c] sm:$0xff]
      %v1082 = vld [vmem:[#allocation2 + $0xa4] sm:$0xf]
      %v1083 = vld [vmem:[#allocation2 + $0xa8] sm:$0xff]
      %v1084 = vld [vmem:[#allocation2 + $0xb0] sm:$0xf]
      %v1085 = vld [vmem:[#allocation2 + $0xb4] sm:$0xff]
      %v1086 = vld [vmem:[#allocation2 + $0xbc] sm:$0xf]
      %v1087 = vld [vmem:[#allocation2 + $0xc0] sm:$0xff]
      %v1088 = vld [vmem:[#allocation2 + $0xc8] sm:$0xf]
      %v1089 = vld [vmem:[#allocation2 + $0xcc] sm:$0xff]
      %v1090 = vld [vmem:[#allocation2 + $0xd4] sm:$0xf]
      %v1091 = vld [vmem:[#allocation2 + $0xd8] sm:$0xff]
      %v1092 = vld [vmem:[#allocation2 + $0xe0] sm:$0xf]
      %v1093 = vld [vmem:[#allocation2 + $0xe4] sm:$0xff]
      %v1094 = vld [vmem:[#allocation2 + $0xec] sm:$0xf]
      %v1095 = vld [vmem:[#allocation2 + $0xf0] sm:$0xff]
      %v1096 = vld [vmem:[#allocation2 + $0xf8] sm:$0xf]
      %v1097 = vld [vmem:[#allocation2 + $0xfc] sm:$0xff]
      %v1098 = vld [vmem:[#allocation2 + $0x104] sm:$0xf]
      %v1099 = vld [vmem:[#allocation2 + $0x108] sm:$0xff]
      %v1100 = vld [vmem:[#allocation2 + $0x110] sm:$0xf]
      %v1101 = vld [vmem:[#allocation2 + $0x114] sm:$0xff]
      %v1102 = vld [vmem:[#allocation2 + $0x11c] sm:$0xf]
      %v1103 = vld [vmem:[#allocation2 + $0x120] sm:$0xff]
      %v1104 = vld [vmem:[#allocation2 + $0x128] sm:$0xf]
      %v1105 = vld [vmem:[#allocation2 + $0x12c] sm:$0xff]
      %v1106 = vld [vmem:[#allocation2 + $0x134] sm:$0xf]
      %v1107 = vld [vmem:[#allocation2 + $0x138] sm:$0xff]
      %v1108 = vld [vmem:[#allocation2 + $0x140] sm:$0xf]
      %v1109 = vld [vmem:[#allocation2 + $0x144] sm:$0xff]
      %v1110 = vld [vmem:[#allocation2 + $0x14c] sm:$0xf]
      %v1111 = vld [vmem:[#allocation2 + $0x150] sm:$0xff]
      %v1112 = vld [vmem:[#allocation2 + $0x158] sm:$0xf]
      %v1113 = vld [vmem:[#allocation2 + $0x15c] sm:$0xff]
      %v1114 = vld [vmem:[#allocation2 + $0x164] sm:$0xf]
      %v1115 = vld [vmem:[#allocation2 + $0x168] sm:$0xff]
      %v1116 = vld [vmem:[#allocation2 + $0x170] sm:$0xf]
      %v1117 = vld [vmem:[#allocation2 + $0x174] sm:$0xff]
      %v1118 = vld [vmem:[#allocation2 + $0x17c] sm:$0xf]
      %v1119 = vld [vmem:[#allocation2 + $0x180] sm:$0xff]
      %v1120 = vld [vmem:[#allocation2 + $0x188] sm:$0xf]
      %v1121 = vld [vmem:[#allocation2 + $0x18c] sm:$0xff]
      %v1122 = vld [vmem:[#allocation2 + $0x194] sm:$0xf]
      %v1123 = vld [vmem:[#allocation2 + $0x198] sm:$0xff]
      %v1124 = vld [vmem:[#allocation2 + $0x1a0] sm:$0xf]
      %v1125 = vld [vmem:[#allocation2 + $0x1a4] sm:$0xff]
      %v1126 = vld [vmem:[#allocation2 + $0x1ac] sm:$0xf]
      %v1127 = vld [vmem:[#allocation2 + $0x1b0] sm:$0xff]
      %v1128 = vld [vmem:[#allocation2 + $0x1b8] sm:$0xf]
      %v1129 = vld [vmem:[#allocation2 + $0x1bc] sm:$0xff]
      %v1130 = vld [vmem:[#allocation2 + $0x1c4] sm:$0xf]
      %v1131 = vld [vmem:[#allocation2 + $0x1c8] sm:$0xff]
      %v1132 = vld [vmem:[#allocation2 + $0x1d0] sm:$0xf]
      %v1133 = vld [vmem:[#allocation2 + $0x1d4] sm:$0xff]
      %v1134 = vld [vmem:[#allocation2 + $0x1dc] sm:$0xf]
      %v1135 = vld [vmem:[#allocation2 + $0x1e0] sm:$0xff]
      %v1136 = vld [vmem:[#allocation2 + $0x1e8] sm:$0xf]
      %v1137 = vld [vmem:[#allocation2 + $0x1ec] sm:$0xff]
      %v1138 = vld [vmem:[#allocation2 + $0x1f4] sm:$0xf]
      %v1139 = vld [vmem:[#allocation2 + $0x1f8] sm:$0xff]
      %v1140 = vld [vmem:[#allocation2 + $0x200] sm:$0xf]
      %v1141 = vld [vmem:[#allocation2 + $0x204] sm:$0xff]
      %v1142 = vld [vmem:[#allocation2 + $0x20c] sm:$0xf]
      %v1143 = vld [vmem:[#allocation2 + $0x210] sm:$0xff]
      %v1144 = vld [vmem:[#allocation2 + $0x218] sm:$0xf]
      %v1145 = vld [vmem:[#allocation2 + $0x21c] sm:$0xff]
      %v1146 = vld [vmem:[#allocation2 + $0x224] sm:$0xf]
      %v1147 = vld [vmem:[#allocation2 + $0x228] sm:$0xff]
      %v1148 = vld [vmem:[#allocation2 + $0x230] sm:$0xf]
      %v1149 = vld [vmem:[#allocation2 + $0x234] sm:$0xff]
      %v1150 = vld [vmem:[#allocation2 + $0x23c] sm:$0xf]
      %v1151 = vld [vmem:[#allocation2 + $0x240] sm:$0xff]
      %v1152 = vld [vmem:[#allocation2 + $0x248] sm:$0xf]
      %v1155 = vunpack.c.l.b16 %v1053
      %v1156 = vunpack.c.h.b16 %v1053
      %v1157 = vunpack.c.l.b16 %v1054
      %v1158 = vunpack.c.h.b16 %v1054
      %v1159 = vpack.c.b16 %v1155, %v1155
      %v1160 = vpack.c.b16 %v1156, %v1156
      %v1161 = vpack.c.b16 %v1157, %v1157
      %v1162 = vpack.c.b16 %v1158, %v1158
      %v1264 = vunpack.c.l.b16 %v1055
      %v1265 = vunpack.c.h.b16 %v1055
      %v1266 = vunpack.c.l.b16 %v1056
      %v1267 = vunpack.c.l.b16 %v1057
      %v1268 = vunpack.c.h.b16 %v1057
      %v1269 = vunpack.c.l.b16 %v1058
      %v1270 = vunpack.c.l.b16 %v1059
      %v1271 = vunpack.c.h.b16 %v1059
      %v1272 = vunpack.c.l.b16 %v1060
      %v1273 = vunpack.c.l.b16 %v1061
      %v1274 = vunpack.c.h.b16 %v1061
      %v1275 = vunpack.c.l.b16 %v1062
      %v1276 = vunpack.c.l.b16 %v1063
      %v1277 = vunpack.c.h.b16 %v1063
      %v1278 = vunpack.c.l.b16 %v1064
      %v1279 = vunpack.c.l.b16 %v1065
      %v1280 = vunpack.c.h.b16 %v1065
      %v1281 = vunpack.c.l.b16 %v1066
      %v1282 = vunpack.c.l.b16 %v1067
      %v1283 = vunpack.c.h.b16 %v1067
      %v1284 = vunpack.c.l.b16 %v1068
      %v1285 = vunpack.c.l.b16 %v1069
      %v1286 = vunpack.c.h.b16 %v1069
      %v1287 = vunpack.c.l.b16 %v1070
      %v1288 = vunpack.c.l.b16 %v1071
      %v1289 = vunpack.c.h.b16 %v1071
      %v1290 = vunpack.c.l.b16 %v1072
      %v1291 = vunpack.c.l.b16 %v1073
      %v1292 = vunpack.c.h.b16 %v1073
      %v1293 = vunpack.c.l.b16 %v1074
      %v1294 = vunpack.c.l.b16 %v1075
      %v1295 = vunpack.c.h.b16 %v1075
      %v1296 = vunpack.c.l.b16 %v1076
      %v1297 = vunpack.c.l.b16 %v1077
      %v1298 = vunpack.c.h.b16 %v1077
      %v1299 = vunpack.c.l.b16 %v1078
      %v1300 = vunpack.c.l.b16 %v1079
      %v1301 = vunpack.c.h.b16 %v1079
      %v1302 = vunpack.c.l.b16 %v1080
      %v1303 = vunpack.c.l.b16 %v1081
      %v1304 = vunpack.c.h.b16 %v1081
      %v1305 = vunpack.c.l.b16 %v1082
      %v1306 = vunpack.c.l.b16 %v1083
      %v1307 = vunpack.c.h.b16 %v1083
      %v1308 = vunpack.c.l.b16 %v1084
      %v1309 = vunpack.c.l.b16 %v1085
      %v1310 = vunpack.c.h.b16 %v1085
      %v1311 = vunpack.c.l.b16 %v1086
      %v1312 = vunpack.c.l.b16 %v1087
      %v1313 = vunpack.c.h.b16 %v1087
      %v1314 = vunpack.c.l.b16 %v1088
      %v1315 = vunpack.c.l.b16 %v1089
      %v1316 = vunpack.c.h.b16 %v1089
      %v1317 = vunpack.c.l.b16 %v1090
      %v1318 = vunpack.c.l.b16 %v1091
      %v1319 = vunpack.c.h.b16 %v1091
      %v1320 = vunpack.c.l.b16 %v1092
      %v1321 = vunpack.c.l.b16 %v1093
      %v1322 = vunpack.c.h.b16 %v1093
      %v1323 = vunpack.c.l.b16 %v1094
      %v1324 = vunpack.c.l.b16 %v1095
      %v1325 = vunpack.c.h.b16 %v1095
      %v1326 = vunpack.c.l.b16 %v1096
      %v1327 = vunpack.c.l.b16 %v1097
      %v1328 = vunpack.c.h.b16 %v1097
      %v1329 = vunpack.c.l.b16 %v1098
      %v1330 = vunpack.c.l.b16 %v1099
      %v1331 = vunpack.c.h.b16 %v1099
      %v1332 = vunpack.c.l.b16 %v1100
      %v1333 = vunpack.c.l.b16 %v1101
      %v1334 = vunpack.c.h.b16 %v1101
      %v1335 = vunpack.c.l.b16 %v1102
      %v1336 = vunpack.c.l.b16 %v1103
      %v1337 = vunpack.c.h.b16 %v1103
      %v1338 = vunpack.c.l.b16 %v1104
      %v1339 = vunpack.c.l.b16 %v1105
      %v1340 = vunpack.c.h.b16 %v1105
      %v1341 = vunpack.c.l.b16 %v1106
      %v1342 = vunpack.c.l.b16 %v1107
      %v1343 = vunpack.c.h.b16 %v1107
      %v1344 = vunpack.c.l.b16 %v1108
      %v1345 = vunpack.c.l.b16 %v1109
      %v1346 = vunpack.c.h.b16 %v1109
      %v1347 = vunpack.c.l.b16 %v1110
      %v1348 = vunpack.c.l.b16 %v1111
      %v1349 = vunpack.c.h.b16 %v1111
      %v1350 = vunpack.c.l.b16 %v1112
      %v1351 = vunpack.c.l.b16 %v1113
      %v1352 = vunpack.c.h.b16 %v1113
      %v1353 = vunpack.c.l.b16 %v1114
      %v1354 = vunpack.c.l.b16 %v1115
      %v1355 = vunpack.c.h.b16 %v1115
      %v1356 = vunpack.c.l.b16 %v1116
      %v1357 = vunpack.c.l.b16 %v1117
      %v1358 = vunpack.c.h.b16 %v1117
      %v1359 = vunpack.c.l.b16 %v1118
      %v1360 = vunpack.c.l.b16 %v1119
      %v1361 = vunpack.c.h.b16 %v1119
      %v1362 = vunpack.c.l.b16 %v1120
      %v1363 = vunpack.c.l.b16 %v1121
      %v1364 = vunpack.c.h.b16 %v1121
      %v1365 = vunpack.c.l.b16 %v1122
      %v1366 = vunpack.c.l.b16 %v1123
      %v1367 = vunpack.c.h.b16 %v1123
      %v1368 = vunpack.c.l.b16 %v1124
      %v1369 = vunpack.c.l.b16 %v1125
      %v1370 = vunpack.c.h.b16 %v1125
      %v1371 = vunpack.c.l.b16 %v1126
      %v1372 = vunpack.c.l.b16 %v1127
      %v1373 = vunpack.c.h.b16 %v1127
      %v1374 = vunpack.c.l.b16 %v1128
      %v1375 = vunpack.c.l.b16 %v1129
      %v1376 = vunpack.c.h.b16 %v1129
      %v1377 = vunpack.c.l.b16 %v1130
      %v1378 = vunpack.c.l.b16 %v1131
      %v1379 = vunpack.c.h.b16 %v1131
      %v1380 = vunpack.c.l.b16 %v1132
      %v1381 = vunpack.c.l.b16 %v1133
      %v1382 = vunpack.c.h.b16 %v1133
      %v1383 = vunpack.c.l.b16 %v1134
      %v1384 = vunpack.c.l.b16 %v1135
      %v1385 = vunpack.c.h.b16 %v1135
      %v1386 = vunpack.c.l.b16 %v1136
      %v1387 = vunpack.c.l.b16 %v1137
      %v1388 = vunpack.c.h.b16 %v1137
      %v1389 = vunpack.c.l.b16 %v1138
      %v1390 = vunpack.c.l.b16 %v1139
      %v1391 = vunpack.c.h.b16 %v1139
      %v1392 = vunpack.c.l.b16 %v1140
      %v1393 = vunpack.c.l.b16 %v1141
      %v1394 = vunpack.c.h.b16 %v1141
      %v1395 = vunpack.c.l.b16 %v1142
      %v1396 = vunpack.c.l.b16 %v1143
      %v1397 = vunpack.c.h.b16 %v1143
      %v1398 = vunpack.c.l.b16 %v1144
      %v1399 = vunpack.c.l.b16 %v1145
      %v1400 = vunpack.c.h.b16 %v1145
      %v1401 = vunpack.c.l.b16 %v1146
      %v1402 = vunpack.c.l.b16 %v1147
      %v1403 = vunpack.c.h.b16 %v1147
      %v1404 = vunpack.c.l.b16 %v1148
      %v1405 = vunpack.c.l.b16 %v1149
      %v1406 = vunpack.c.h.b16 %v1149
      %v1407 = vunpack.c.l.b16 %v1150
      %v1408 = vunpack.c.l.b16 %v1151
      %v1409 = vunpack.c.h.b16 %v1151
      %v1410 = vunpack.c.l.b16 %v1152
      %v1411 = vpack.c.b16 %v1267, %v1264
      %v1412 = vpack.c.b16 %v1268, %v1265
      %v1413 = vpack.c.b16 %v1269, %v1266
      %v1414 = vpack.c.b16 %v1273, %v1270
      %v1415 = vpack.c.b16 %v1274, %v1271
      %v1416 = vpack.c.b16 %v1275, %v1272
      %v1417 = vpack.c.b16 %v1279, %v1276
      %v1418 = vpack.c.b16 %v1280, %v1277
      %v1419 = vpack.c.b16 %v1281, %v1278
      %v1420 = vpack.c.b16 %v1285, %v1282
      %v1421 = vpack.c.b16 %v1286, %v1283
      %v1422 = vpack.c.b16 %v1287, %v1284
      %v1423 = vpack.c.b16 %v1291, %v1288
      %v1424 = vpack.c.b16 %v1292, %v1289
      %v1425 = vpack.c.b16 %v1293, %v1290
      %v1426 = vpack.c.b16 %v1297, %v1294
      %v1427 = vpack.c.b16 %v1298, %v1295
      %v1428 = vpack.c.b16 %v1299, %v1296
      %v1429 = vpack.c.b16 %v1303, %v1300
      %v1430 = vpack.c.b16 %v1304, %v1301
      %v1431 = vpack.c.b16 %v1305, %v1302
      %v1432 = vpack.c.b16 %v1309, %v1306
      %v1433 = vpack.c.b16 %v1310, %v1307
      %v1434 = vpack.c.b16 %v1311, %v1308
      %v1435 = vpack.c.b16 %v1315, %v1312
      %v1436 = vpack.c.b16 %v1316, %v1313
      %v1437 = vpack.c.b16 %v1317, %v1314
      %v1438 = vpack.c.b16 %v1321, %v1318
      %v1439 = vpack.c.b16 %v1322, %v1319
      %v1440 = vpack.c.b16 %v1323, %v1320
      %v1441 = vpack.c.b16 %v1327, %v1324
      %v1442 = vpack.c.b16 %v1328, %v1325
      %v1443 = vpack.c.b16 %v1329, %v1326
      %v1444 = vpack.c.b16 %v1333, %v1330
      %v1445 = vpack.c.b16 %v1334, %v1331
      %v1446 = vpack.c.b16 %v1335, %v1332
      %v1447 = vpack.c.b16 %v1339, %v1336
      %v1448 = vpack.c.b16 %v1340, %v1337
      %v1449 = vpack.c.b16 %v1341, %v1338
      %v1450 = vpack.c.b16 %v1345, %v1342
      %v1451 = vpack.c.b16 %v1346, %v1343
      %v1452 = vpack.c.b16 %v1347, %v1344
      %v1453 = vpack.c.b16 %v1351, %v1348
      %v1454 = vpack.c.b16 %v1352, %v1349
      %v1455 = vpack.c.b16 %v1353, %v1350
      %v1456 = vpack.c.b16 %v1357, %v1354
      %v1457 = vpack.c.b16 %v1358, %v1355
      %v1458 = vpack.c.b16 %v1359, %v1356
      %v1459 = vpack.c.b16 %v1363, %v1360
      %v1460 = vpack.c.b16 %v1364, %v1361
      %v1461 = vpack.c.b16 %v1365, %v1362
      %v1462 = vpack.c.b16 %v1369, %v1366
      %v1463 = vpack.c.b16 %v1370, %v1367
      %v1464 = vpack.c.b16 %v1371, %v1368
      %v1465 = vpack.c.b16 %v1375, %v1372
      %v1466 = vpack.c.b16 %v1376, %v1373
      %v1467 = vpack.c.b16 %v1377, %v1374
      %v1468 = vpack.c.b16 %v1381, %v1378
      %v1469 = vpack.c.b16 %v1382, %v1379
      %v1470 = vpack.c.b16 %v1383, %v1380
      %v1471 = vpack.c.b16 %v1387, %v1384
      %v1472 = vpack.c.b16 %v1388, %v1385
      %v1473 = vpack.c.b16 %v1389, %v1386
      %v1474 = vpack.c.b16 %v1393, %v1390
      %v1475 = vpack.c.b16 %v1394, %v1391
      %v1476 = vpack.c.b16 %v1395, %v1392
      %v1477 = vpack.c.b16 %v1399, %v1396
      %v1478 = vpack.c.b16 %v1400, %v1397
      %v1479 = vpack.c.b16 %v1401, %v1398
      %v1480 = vpack.c.b16 %v1405, %v1402
      %v1481 = vpack.c.b16 %v1406, %v1403
      %v1482 = vpack.c.b16 %v1407, %v1404
      %v1483 = vpack.c.b16 %v1408, %v1408
      %v1484 = vpack.c.b16 %v1409, %v1409
      %v1485 = vpack.c.b16 %v1410, %v1410
      %vm1558 = vcmask 64512
      %v1560 = vsel %vm1558, %v1162, 0
      %vm1562 = vcmask 1043456
      %v1564 = vsel %vm1562, %v1483, 0
      %v1567 = vsel %vm1562, %v1484, 0
      %v1570 = vsel %vm1562, %v1485, 0
      %1572 = vmatpush.bf16.msra.mxu0 %v1432
      %1573 = vmatpush.bf16.msra.mxu0 %v1429
      %1574 = vmatpush.bf16.msra.mxu0 %v1426
      %1575 = vmatpush.bf16.msra.mxu0 %v1423
      %1576 = vmatpush.bf16.msra.mxu0 %v1420
      %1577 = vmatpush.bf16.msra.mxu0 %v1417
      %1578 = vmatpush.bf16.msra.mxu0 %v1414
      %1579 = vmatpush.bf16.msra.mxu0 %v1411
      %1580 = vmatmul.bf16.gmra.mxu0 %v1159
      %v1581 = vpop.f32.mrf.mxu0
      %v1582 = vadd.f32 0.0, %v1581
      %v1583 = vpop.f32.mrf.mxu0
      %1584 = vdwg.mxu0
      %1585 = vmatpush.bf16.msra.mxu0 %v1456
      %1586 = vmatpush.bf16.msra.mxu0 %v1453
      %1587 = vmatpush.bf16.msra.mxu0 %v1450
      %1588 = vmatpush.bf16.msra.mxu0 %v1447
      %1589 = vmatpush.bf16.msra.mxu0 %v1444
      %1590 = vmatpush.bf16.msra.mxu0 %v1441
      %1591 = vmatpush.bf16.msra.mxu0 %v1438
      %1592 = vmatpush.bf16.msra.mxu0 %v1435
      %1593 = vmatmul.bf16.gmra.mxu0 %v1160
      %v1594 = vpop.f32.mrf.mxu0
      %v1595 = vadd.f32 %v1582, %v1594
      %v1596 = vpop.f32.mrf.mxu0
      %1597 = vdwg.mxu0
      %1598 = vmatpush.bf16.msra.mxu0 %v1480
      %1599 = vmatpush.bf16.msra.mxu0 %v1477
      %1600 = vmatpush.bf16.msra.mxu0 %v1474
      %1601 = vmatpush.bf16.msra.mxu0 %v1471
      %1602 = vmatpush.bf16.msra.mxu0 %v1468
      %1603 = vmatpush.bf16.msra.mxu0 %v1465
      %1604 = vmatpush.bf16.msra.mxu0 %v1462
      %1605 = vmatpush.bf16.msra.mxu0 %v1459
      %1606 = vmatmul.bf16.gmra.mxu0 %v1161
      %v1607 = vpop.f32.mrf.mxu0
      %v1608 = vadd.f32 %v1595, %v1607
      %v1609 = vpop.f32.mrf.mxu0
      %1610 = vdwg.mxu0
      %1611 = vmatpush.bf16.msra.mxu0 0
      %1612 = vmatpush.bf16.msra.mxu0 0
      %1613 = vmatpush.bf16.msra.mxu0 0
      %1614 = vmatpush.bf16.msra.mxu0 0
      %1615 = vmatpush.bf16.msra.mxu0 0
      %1616 = vmatpush.bf16.msra.mxu0 0
      %1617 = vmatpush.bf16.msra.mxu0 0
      %1618 = vmatpush.bf16.msra.mxu0 %v1564
      %1619 = vmatmul.bf16.gmra.mxu0 %v1560
      %v1620 = vpop.f32.mrf.mxu0
      %v1621 = vadd.f32 %v1608, %v1620
      %v1622 = vpop.f32.mrf.mxu0
      %1623 = vdwg.mxu0
      %1624 = vmatpush.bf16.msra.mxu0 %v1433
      %1625 = vmatpush.bf16.msra.mxu0 %v1430
      %1626 = vmatpush.bf16.msra.mxu0 %v1427
      %1627 = vmatpush.bf16.msra.mxu0 %v1424
      %1628 = vmatpush.bf16.msra.mxu0 %v1421
      %1629 = vmatpush.bf16.msra.mxu0 %v1418
      %1630 = vmatpush.bf16.msra.mxu0 %v1415
      %1631 = vmatpush.bf16.msra.mxu0 %v1412
      %1632 = vmatmul.bf16.gmra.mxu0 %v1159
      %v1633 = vpop.f32.mrf.mxu0
      %v1634 = vadd.f32 0.0, %v1633
      %v1635 = vpop.f32.mrf.mxu0
      %1636 = vdwg.mxu0
      %1637 = vmatpush.bf16.msra.mxu0 %v1457
      %1638 = vmatpush.bf16.msra.mxu0 %v1454
      %1639 = vmatpush.bf16.msra.mxu0 %v1451
      %1640 = vmatpush.bf16.msra.mxu0 %v1448
      %1641 = vmatpush.bf16.msra.mxu0 %v1445
      %1642 = vmatpush.bf16.msra.mxu0 %v1442
      %1643 = vmatpush.bf16.msra.mxu0 %v1439
      %1644 = vmatpush.bf16.msra.mxu0 %v1436
      %1645 = vmatmul.bf16.gmra.mxu0 %v1160
      %v1646 = vpop.f32.mrf.mxu0
      %v1647 = vadd.f32 %v1634, %v1646
      %v1648 = vpop.f32.mrf.mxu0
      %1649 = vdwg.mxu0
      %1650 = vmatpush.bf16.msra.mxu0 %v1481
      %1651 = vmatpush.bf16.msra.mxu0 %v1478
      %1652 = vmatpush.bf16.msra.mxu0 %v1475
      %1653 = vmatpush.bf16.msra.mxu0 %v1472
      %1654 = vmatpush.bf16.msra.mxu0 %v1469
      %1655 = vmatpush.bf16.msra.mxu0 %v1466
      %1656 = vmatpush.bf16.msra.mxu0 %v1463
      %1657 = vmatpush.bf16.msra.mxu0 %v1460
      %1658 = vmatmul.bf16.gmra.mxu0 %v1161
      %v1659 = vpop.f32.mrf.mxu0
      %v1660 = vadd.f32 %v1647, %v1659
      %v1661 = vpop.f32.mrf.mxu0
      %1662 = vdwg.mxu0
      %1663 = vmatpush.bf16.msra.mxu0 0
      %1664 = vmatpush.bf16.msra.mxu0 0
      %1665 = vmatpush.bf16.msra.mxu0 0
      %1666 = vmatpush.bf16.msra.mxu0 0
      %1667 = vmatpush.bf16.msra.mxu0 0
      %1668 = vmatpush.bf16.msra.mxu0 0
      %1669 = vmatpush.bf16.msra.mxu0 0
      %1670 = vmatpush.bf16.msra.mxu0 %v1567
      %1671 = vmatmul.bf16.gmra.mxu0 %v1560
      %v1672 = vpop.f32.mrf.mxu0
      %v1673 = vadd.f32 %v1660, %v1672
      %v1674 = vpop.f32.mrf.mxu0
      %1675 = vdwg.mxu0
      %1676 = vmatpush.bf16.msra.mxu0 %v1434
      %1677 = vmatpush.bf16.msra.mxu0 %v1431
      %1678 = vmatpush.bf16.msra.mxu0 %v1428
      %1679 = vmatpush.bf16.msra.mxu0 %v1425
      %1680 = vmatpush.bf16.msra.mxu0 %v1422
      %1681 = vmatpush.bf16.msra.mxu0 %v1419
      %1682 = vmatpush.bf16.msra.mxu0 %v1416
      %1683 = vmatpush.bf16.msra.mxu0 %v1413
      %1684 = vmatmul.bf16.gmra.mxu0 %v1159
      %v1685 = vpop.f32.mrf.mxu0
      %v1686 = vadd.f32 0.0, %v1685
      %v1687 = vpop.f32.mrf.mxu0
      %1688 = vdwg.mxu0
      %1689 = vmatpush.bf16.msra.mxu0 %v1458
      %1690 = vmatpush.bf16.msra.mxu0 %v1455
      %1691 = vmatpush.bf16.msra.mxu0 %v1452
      %1692 = vmatpush.bf16.msra.mxu0 %v1449
      %1693 = vmatpush.bf16.msra.mxu0 %v1446
      %1694 = vmatpush.bf16.msra.mxu0 %v1443
      %1695 = vmatpush.bf16.msra.mxu0 %v1440
      %1696 = vmatpush.bf16.msra.mxu0 %v1437
      %1697 = vmatmul.bf16.gmra.mxu0 %v1160
      %v1698 = vpop.f32.mrf.mxu0
      %v1699 = vadd.f32 %v1686, %v1698
      %v1700 = vpop.f32.mrf.mxu0
      %1701 = vdwg.mxu0
      %1702 = vmatpush.bf16.msra.mxu0 %v1482
      %1703 = vmatpush.bf16.msra.mxu0 %v1479
      %1704 = vmatpush.bf16.msra.mxu0 %v1476
      %1705 = vmatpush.bf16.msra.mxu0 %v1473
      %1706 = vmatpush.bf16.msra.mxu0 %v1470
      %1707 = vmatpush.bf16.msra.mxu0 %v1467
      %1708 = vmatpush.bf16.msra.mxu0 %v1464
      %1709 = vmatpush.bf16.msra.mxu0 %v1461
      %1710 = vmatmul.bf16.gmra.mxu0 %v1161
      %v1711 = vpop.f32.mrf.mxu0
      %v1712 = vadd.f32 %v1699, %v1711
      %v1713 = vpop.f32.mrf.mxu0
      %1714 = vdwg.mxu0
      %1715 = vmatpush.bf16.msra.mxu0 0
      %1716 = vmatpush.bf16.msra.mxu0 0
      %1717 = vmatpush.bf16.msra.mxu0 0
      %1718 = vmatpush.bf16.msra.mxu0 0
      %1719 = vmatpush.bf16.msra.mxu0 0
      %1720 = vmatpush.bf16.msra.mxu0 0
      %1721 = vmatpush.bf16.msra.mxu0 0
      %1722 = vmatpush.bf16.msra.mxu0 %v1570
      %1723 = vmatmul.bf16.gmra.mxu0 %v1560
      %v1724 = vpop.f32.mrf.mxu0
      %v1725 = vadd.f32 %v1712, %v1724
      %v1726 = vpop.f32.mrf.mxu0
      %1727 = vdwg.mxu0
      %v1728 = vlaneseq
      %v1729 = vand.u32 %v1728, 127
      %v1730 = vadd.s32 %v1729, 128
      %v1731 = vadd.s32 %v1729, 256
      %v1732 = vstv 0
      %v1733 = vadd.s32 %v1732, %v1729
      %v1734 = vadd.s32 %v1732, %v1730
      %v1735 = vadd.s32 %v1732, %v1731
      %vm1736 = vcmp.lt.s32.totalorder %v1733, 0
      %v1737 = vsub.s32 0, %v1733
      %v1738 = vsel %vm1736, %v1737, %v1733
      %v1739 = vand.u32 %v1738, 65535
      %v1740 = vshrl.u32 %v1738, 16
      %v1742 = vmul.u32 %v1739, 35747
      %v1743 = vmul.u32 %v1739, 47662
      %v1744 = vmul.u32 %v1740, 35747
      %v1745 = vmul.u32 %v1740, 47662
      %v1746 = vshll.u32 %v1743, 16
      %v1747 = vshrl.u32 %v1743, 16
      %v1748 = vshll.u32 %v1744, 16
      %v1749 = vshrl.u32 %v1744, 16
      %vm1750 = vc.u32 %v1742, %v1746
      %v1751 = vsel %vm1750, 1, 0
      %v1752 = vadd.s32 %v1742, %v1746
      %v1753 = vadd.s32 %v1745, %v1751
      %vm1754 = vc.u32 %v1752, %v1748
      %v1755 = vsel %vm1754, 1, 0
      %v1756 = vadd.s32 %v1752, %v1748
      %v1757 = vadd.s32 %v1753, %v1755
      %v1758 = vadd.s32 %v1757, %v1747
      %v1759 = vadd.s32 %v1758, %v1749
      %v1760 = vshrl.u32 %v1759, 4
      %v1761 = vmul.u32 %v1760, 22
      %v1762 = vsub.s32 %v1738, %v1761
      %v1763 = vsub.s32 0, %v1762
      %v1764 = vsel %vm1736, %v1763, %v1762
      %vm1765 = vcmp.lt.s32.totalorder %v1734, 0
      %v1766 = vsub.s32 0, %v1734
      %v1767 = vsel %vm1765, %v1766, %v1734
      %v1768 = vand.u32 %v1767, 65535
      %v1769 = vshrl.u32 %v1767, 16
      %v1771 = vmul.u32 %v1768, 35747
      %v1772 = vmul.u32 %v1768, 47662
      %v1773 = vmul.u32 %v1769, 35747
      %v1774 = vmul.u32 %v1769, 47662
      %v1775 = vshll.u32 %v1772, 16
      %v1776 = vshrl.u32 %v1772, 16
      %v1777 = vshll.u32 %v1773, 16
      %v1778 = vshrl.u32 %v1773, 16
      %vm1779 = vc.u32 %v1771, %v1775
      %v1780 = vsel %vm1779, 1, 0
      %v1781 = vadd.s32 %v1771, %v1775
      %v1782 = vadd.s32 %v1774, %v1780
      %vm1783 = vc.u32 %v1781, %v1777
      %v1784 = vsel %vm1783, 1, 0
      %v1785 = vadd.s32 %v1781, %v1777
      %v1786 = vadd.s32 %v1782, %v1784
      %v1787 = vadd.s32 %v1786, %v1776
      %v1788 = vadd.s32 %v1787, %v1778
      %v1789 = vshrl.u32 %v1788, 4
      %v1790 = vmul.u32 %v1789, 22
      %v1791 = vsub.s32 %v1767, %v1790
      %v1792 = vsub.s32 0, %v1791
      %v1793 = vsel %vm1765, %v1792, %v1791
      %vm1794 = vcmp.lt.s32.totalorder %v1735, 0
      %v1795 = vsub.s32 0, %v1735
      %v1796 = vsel %vm1794, %v1795, %v1735
      %v1797 = vand.u32 %v1796, 65535
      %v1798 = vshrl.u32 %v1796, 16
      %v1800 = vmul.u32 %v1797, 35747
      %v1801 = vmul.u32 %v1797, 47662
      %v1802 = vmul.u32 %v1798, 35747
      %v1803 = vmul.u32 %v1798, 47662
      %v1804 = vshll.u32 %v1801, 16
      %v1805 = vshrl.u32 %v1801, 16
      %v1806 = vshll.u32 %v1802, 16
      %v1807 = vshrl.u32 %v1802, 16
      %vm1808 = vc.u32 %v1800, %v1804
      %v1809 = vsel %vm1808, 1, 0
      %v1810 = vadd.s32 %v1800, %v1804
      %v1811 = vadd.s32 %v1803, %v1809
      %vm1812 = vc.u32 %v1810, %v1806
      %v1813 = vsel %vm1812, 1, 0
      %v1814 = vadd.s32 %v1810, %v1806
      %v1815 = vadd.s32 %v1811, %v1813
      %v1816 = vadd.s32 %v1815, %v1805
      %v1817 = vadd.s32 %v1816, %v1807
      %v1818 = vshrl.u32 %v1817, 4
      %v1819 = vmul.u32 %v1818, 22
      %v1820 = vsub.s32 %v1796, %v1819
      %v1821 = vsub.s32 0, %v1820
      %v1822 = vsel %vm1794, %v1821, %v1820
      %vm1823 = vcmp.ne.s32.totalorder %v1764, 0
      %vm1824 = vcmp.ne.s32.totalorder %v1793, 0
      %vm1825 = vcmp.ne.s32.totalorder %v1822, 0
      %vm1826 = vcmp.lt.s32.totalorder %v1764, 0
      %vm1827 = vcmp.lt.s32.totalorder %v1793, 0
      %vm1828 = vcmp.lt.s32.totalorder %v1822, 0
      %vm1829 = vmand %vm1826, %vm1823
      %vm1830 = vmand %vm1827, %vm1824
      %vm1831 = vmand %vm1828, %vm1825
      %v1832 = vadd.s32 %v1764, 22
      %v1833 = vadd.s32 %v1793, 22
      %v1834 = vadd.s32 %v1822, 22
      %v1835 = vsel %vm1829, %v1832, %v1764
      %v1836 = vsel %vm1830, %v1833, %v1793
      %v1837 = vsel %vm1831, %v1834, %v1822
      %vm1838 = vcmp.lt.s32.totalorder %v1835, 16
      %vm1839 = vcmp.lt.s32.totalorder %v1836, 16
      %vm1840 = vcmp.lt.s32.totalorder %v1837, 16
      %vm1841 = vcmp.lt.s32.totalorder %v1733, 352
      %vm1842 = vcmp.lt.s32.totalorder %v1734, 352
      %vm1843 = vcmp.lt.s32.totalorder %v1735, 352
      %vm1844 = vmand %vm1838, %vm1841
      %vm1845 = vmand %vm1839, %vm1842
      %vm1846 = vmand %vm1840, %vm1843
      %v1847 = vsel %vm1844, 1, 0
      %v1848 = vsel %vm1845, 1, 0
      %v1849 = vsel %vm1846, 1, 0
      %v1850 = vcvt.s32.f32 %v1847
      %v1851 = vcvt.s32.f32 %v1848
      %v1852 = vcvt.s32.f32 %v1849
      %v1853 = vmul.f32 %v1621, %v1850
      %v1854 = vmul.f32 %v1673, %v1851
      %v1855 = vmul.f32 %v1725, %v1852
      %v1856 = vadd.f32 %v1853, %v1854
      %v1857 = vadd.f32 %v1856, %v1855
      %1858 = vadd.xlane.f32.xlu0 %v1857
      %v1859 = vpop.xlane.xlu0 %1858
      %v1860 = vadd.f32 %v1859, 0.0
      %v1861 = vmul.f32 %v1621, %v1853
      %v1862 = vmul.f32 %v1673, %v1854
      %v1863 = vmul.f32 %v1725, %v1855
      %v1864 = vadd.f32 %v1861, %v1862
      %v1865 = vadd.f32 %v1864, %v1863
      %1866 = vadd.xlane.f32.xlu0 %v1865
      %v1867 = vpop.xlane.xlu0 %1866
      %v1868 = vadd.f32 %v1867, 0.0
      %1869 = vst [vmem:[#allocation3] sm:$0xff] %v1621
      %1870 = vst [vmem:[#allocation3 + $0x8] sm:$0xff] %v1673
      %1871 = vst [vmem:[#allocation3 + $0x10] sm:$0xff] %v1725
      %v1872 = vmul.f32 %v1860, 0.00390625
      %v1873 = vmul.f32 %v1868, 0.00390625
      %v1874 = vmul.f32 %v1872, %v1872
      %v1875 = vsub.f32 %v1873, %v1874
      %v1876 = vmax.f32 %v1875, 0.0
      %v1877 = vadd.f32 %v1876, 1e-05
      %v1878 = vrsqrt.pop %v1877
      %v1879 = vmul.f32 %v1878, %v1877
      %v1880 = vmul.f32 %v1879, %v1878
      %v1881 = vmul.f32 0.5, %v1880
      %v1882 = vsub.f32 1.5, %v1881
      %v1883 = vmul.f32 %v1878, %v1882
      %vm1884 = vweird.f32 %v1877
      %vm1885 = vweird.f32 %v1878
      %vm1886 = vmor %vm1884, %vm1885
      %v1887 = vsel %vm1886, %v1878, %v1883
      %v1888 = vld [vmem:[#allocation3] sm:$0xff]
      %v1889 = vld [vmem:[#allocation3 + $0x8] sm:$0xff]
      %v1890 = vld [vmem:[#allocation3 + $0x10] sm:$0xff]
      %v1891 = vsub.f32 %v1888, %v1872
      %v1892 = vsub.f32 %v1889, %v1872
      %v1893 = vsub.f32 %v1890, %v1872
      %v1894 = vmul.f32 %v1891, %v1887
      %v1895 = vmul.f32 %v1892, %v1887
      %v1896 = vmul.f32 %v1893, %v1887
      %v1897 = vmax.f32 %v1894, 0.0
      %v1898 = vmax.f32 %v1895, 0.0
      %v1899 = vmax.f32 %v1896, 0.0
      %v1900 = vpack.c.bf16 %v1898, %v1897
      %v1901 = vpack.c.bf16 %v1899, %v1899
      %1902 = vst [vmem:[%s185] sm:$0xff] %v1900
      %1903 = vst [vmem:[%s185 + $0x8] sm:$0xf] %v1901
      %p1904 = scmp.lt.s32.totalorder %s17, 1
      %s1905 = scalar_select %p1904, %s17, 1
      %p1906 = scmp.lt.s32.totalorder %s18, 0
      %s1907 = scalar_select %p1906, %s18, 0
      %s1908 = smul.addr %s1907, 3
      %s1909 = smul.addr %s1905, 3
      %s1910 = sadd.s32 %s1908, %s1909
      %s1911 = smul.addr %s1910, 4
      %s1912 = scalar_lea.vmem %s2, %s1911
      // Predicated region
      $region29: #{resnet_generator_forward.10} parent=27 // pred_check
        %p1913 = pneg %p97
      $region30: #{resnet_generator_forward.10} parent=27 // pred_check_branch
        %1915 = sbr.rel (%p1913) target = $region32
      $region31: #{resnet_generator_forward.10} parent=27 // pred_region
        _
      $region32: #{resnet_generator_forward.10} parent=27 // pred_fallthru
        _
    $region28: #{resnet_generator_forward.10} parent=5 // pred_fallthru
      _
    %p1916 = scmp.le.s32.totalorder 2, %s8
    // Predicated region
    $region33: #{resnet_generator_forward.10} parent=5 // pred_check
      %p1917 = pneg %p1916
    $region34: #{resnet_generator_forward.10} parent=5 // pred_check_branch
      %1919 = sbr.rel (%p1917) target = $region36
    $region35: #{resnet_generator_forward.10} parent=5 // pred_region
      %s1920 = ssub.s32 %s8, 2
      // Predicated region
      $region37: #{resnet_generator_forward.10} parent=35 // pred_check
        %p1921 = pneg %p103
      $region38: #{resnet_generator_forward.10} parent=35 // pred_check_branch
        %1923 = sbr.rel (%p1921) target = $region40
      $region39: #{resnet_generator_forward.10} parent=35 // pred_region
        %p1924 = scmp.lt.s32.totalorder %s19, 1
        %s1925 = scalar_select %p1924, %s19, 1
        %p1926 = scmp.lt.s32.totalorder %s20, 0
        %s1927 = scalar_select %p1926, %s20, 0
        %s1928 = smul.addr %s1927, 3
        %s1929 = smul.addr %s1925, 3
        %s1930 = sadd.s32 %s1928, %s1929
        %s1931 = smul.addr %s1930, 4
        %s1932 = scalar_lea.vmem %s2, %s1931
      $region40: #{resnet_generator_forward.10} parent=35 // pred_fallthru
        _
    $region36: #{resnet_generator_forward.10} parent=5 // pred_fallthru
      _
  $region6: #{resnet_generator_forward.10} parent=0 // loop_footer
    %s12 = sadd.s32 1, %s8
  $region7: #{resnet_generator_forward.10} parent=0 // loop_footer_branch
    %7 = sbr.rel target = $region3
  $region8: #{resnet_generator_forward.10} parent=0 // loop_exit
    _

// kernel: resnet_generator_forward.11
$region0: #{resnet_generator_forward.11}
  #allocation0 [shape = 'u32[]', space=smem, size = 0x4, offset = 0x4, fixed_abs, tag = 'smem constant byte address 0x4 - core index']
  #allocation1 [shape = 'u32[72,128]{1,0:T(1,128)}', space=vmem, size = 0x9000, scoped, tag = 'internal scratch']
  #allocation2 [shape = 'bf16[72,128]{1,0:T(8,128)(2,1)}', space=vmem, size = 0x4800, scoped, tag = 'scratch operand']
  #allocation3 [shape = 'f32[16,128]{1,0:T(8,128)}', space=vmem, size = 0x2000, scoped, tag = 'scratch operand']
  %s0 = inlined_call_operand.vmem [shape: bf16[2,32,256], index: 0, kind: input, shape index: {}]
  %s1 = inlined_call_operand.vmem [shape: bf16[16,72], index: 1, kind: input, shape index: {}]
  %s2 = inlined_call_operand.vmem [shape: bf16[2,16,128], index: 2, kind: output, shape index: {}]
  %s3 = sld [smem:[#allocation0]]
  $region41: #{resnet_generator_forward.11} parent=0
    _
  %s5 = ssub.s32 1, %s3
  %s6 = scalar_select 0, %s5, %s3
  loop: start=0, step=1, limit=4
  $region2: #{resnet_generator_forward.11} parent=0 // loop_pre_header
    _
  $region3: #{resnet_generator_forward.11} parent=0 // loop_header
    %s8 = sphi 0, %s12
    %p9 = scmp.ge.s32.totalorder %s8, 4
    %s15 = sphi 0, %s27
    %s16 = sphi 0, %s23
    %s17 = sphi 0, %s15
    %s18 = sphi 0, %s16
    %s19 = sphi 0, %s17
    %s20 = sphi 0, %s18
    %s30 = sphi 0, %s32
    %s33 = sphi 0, %s30
    %s34 = sphi 0, %s33
    %s50 = sphi 0, %s34
    %s56 = sphi 0, %s58
    %s59 = sphi 0, %s56
    %s60 = sphi 0, %s59
    %s76 = sphi 0, %s60
    %s84 = sphi 0, %s86
    %s87 = sphi 0, %s84
    %s88 = sphi 0, %s87
    %s104 = sphi 0, %s88
  $region4: #{resnet_generator_forward.11} parent=0 // loop_header_branch
    %11 = sbr.rel (%p9) target = $region8
  $region5: #{resnet_generator_forward.11} parent=0 // loop_body
    %s13 = ssub.s32 %s8, 1
    %s14 = ssub.s32 %s8, 2
    %s21 = sadd.s32 1, %s16
    %p22 = scmp.ge.s32.totalorder %s21, 1
    %s23 = scalar_select %p22, 0, %s21
    %s24 = sadd.s32 1, %s15
    %s25 = scalar_select %p22, %s24, %s15
    %p26 = scmp.ge.s32.totalorder %s25, 2
    %s27 = scalar_select %p26, 0, %s25
    %s28 = ssub.s32 %s15, %s27
    %p29 = scmp.eq.s32.totalorder %s28, 0
    %s31 = sadd.s32 %s30, 1
    %s32 = scalar_select %p29, %s30, %s31
    %p35 = pneg %p29
    %p36 = scmp.eq.s32.totalorder %s8, 1
    %p37 = por %p35, %p36
    %p38 = scmp.ne.s32.totalorder %s30, %s33
    %p39 = scmp.eq.s32.totalorder %s8, 0
    %p40 = por %p38, %p39
    %p41 = scmp.ne.s32.totalorder %s30, %s33
    %p42 = scmp.eq.s32.totalorder %s13, 1
    %p43 = por %p41, %p42
    %p44 = scmp.ne.s32.totalorder %s33, %s34
    %p45 = scmp.eq.s32.totalorder %s13, 0
    %p46 = por %p44, %p45
    %p47 = scmp.ne.s32.totalorder %s33, %s34
    %p48 = scmp.eq.s32.totalorder %s14, 1
    %p49 = por %p47, %p48
    %p51 = scmp.ne.s32.totalorder %s34, %s50
    %p52 = scmp.eq.s32.totalorder %s14, 0
    %p53 = por %p51, %p52
    %s54 = ssub.s32 %s16, %s23
    %p55 = scmp.eq.s32.totalorder %s54, 0
    %s57 = sadd.s32 %s56, 1
    %s58 = scalar_select %p55, %s56, %s57
    %p61 = pneg %p55
    %p62 = scmp.eq.s32.totalorder %s8, 1
    %p63 = por %p61, %p62
    %p64 = scmp.ne.s32.totalorder %s56, %s59
    %p65 = scmp.eq.s32.totalorder %s8, 0
    %p66 = por %p64, %p65
    %p67 = scmp.ne.s32.totalorder %s56, %s59
    %p68 = scmp.eq.s32.totalorder %s13, 1
    %p69 = por %p67, %p68
    %p70 = scmp.ne.s32.totalorder %s59, %s60
    %p71 = scmp.eq.s32.totalorder %s13, 0
    %p72 = por %p70, %p71
    %p73 = scmp.ne.s32.totalorder %s59, %s60
    %p74 = scmp.eq.s32.totalorder %s14, 1
    %p75 = por %p73, %p74
    %p77 = scmp.ne.s32.totalorder %s60, %s76
    %p78 = scmp.eq.s32.totalorder %s14, 0
    %p79 = por %p77, %p78
    %s80 = ssub.s32 %s15, %s27
    %s81 = ssub.s32 %s16, %s23
    %s82 = sor.u32 %s80, %s81
    %p83 = scmp.eq.s32.totalorder %s82, 0
    %s85 = sadd.s32 %s84, 1
    %s86 = scalar_select %p83, %s84, %s85
    %p89 = pneg %p83
    %p90 = scmp.eq.s32.totalorder %s8, 1
    %p91 = por %p89, %p90
    %p92 = scmp.ne.s32.totalorder %s84, %s87
    %p93 = scmp.eq.s32.totalorder %s8, 0
    %p94 = por %p92, %p93
    %p95 = scmp.ne.s32.totalorder %s84, %s87
    %p96 = scmp.eq.s32.totalorder %s13, 1
    %p97 = por %p95, %p96
    %p98 = scmp.ne.s32.totalorder %s87, %s88
    %p99 = scmp.eq.s32.totalorder %s13, 0
    %p100 = por %p98, %p99
    %p101 = scmp.ne.s32.totalorder %s87, %s88
    %p102 = scmp.eq.s32.totalorder %s14, 1
    %p103 = por %p101, %p102
    %p105 = scmp.ne.s32.totalorder %s88, %s104
    %p106 = scmp.eq.s32.totalorder %s14, 0
    %p107 = por %p105, %p106
    %p108 = scmp.le.s32.totalorder 1, %s8
    %p109 = scmp.lt.s32.totalorder %s8, 3
    %p110 = pnand %p108, %p109
    %p111 = pneg %p110
    // Predicated region
    $region9: #{resnet_generator_forward.11} parent=5 // pred_check
      _
    $region10: #{resnet_generator_forward.11} parent=5 // pred_check_branch
      %113 = sbr.rel (%p110) target = $region12
    $region11: #{resnet_generator_forward.11} parent=5 // pred_region
      %s114 = ssub.s32 %s8, 1
      // Predicated region
      $region13: #{resnet_generator_forward.11} parent=11 // pred_check
        %p115 = pneg %p72
      $region14: #{resnet_generator_forward.11} parent=11 // pred_check_branch
        %117 = sbr.rel (%p115) target = $region16
      $region15: #{resnet_generator_forward.11} parent=11 // pred_region
        %s118 = smul.u32 2, %s18
        %p119 = scmp.lt.s32.totalorder %s118, 1
        %s120 = scalar_select %p119, %s118, 1
        %s121 = smul.addr %s120, 4
        %s122 = scalar_lea.vmem %s1, %s121
        %s123 = smul.u32 2, %s18
      $region16: #{resnet_generator_forward.11} parent=11 // pred_fallthru
        _
    $region12: #{resnet_generator_forward.11} parent=5 // pred_fallthru
      _
    %p124 = scmp.lt.s32.totalorder %s8, 2
    // Predicated region
    $region17: #{resnet_generator_forward.11} parent=5 // pred_check
      %p125 = pneg %p124
    $region18: #{resnet_generator_forward.11} parent=5 // pred_check_branch
      %127 = sbr.rel (%p125) target = $region20
    $region19: #{resnet_generator_forward.11} parent=5 // pred_region
      // Predicated region
      $region21: #{resnet_generator_forward.11} parent=19 // pred_check
        %p128 = pneg %p40
      $region22: #{resnet_generator_forward.11} parent=19 // pred_check_branch
        %130 = sbr.rel (%p128) target = $region24
      $region23: #{resnet_generator_forward.11} parent=19 // pred_region
        %p131 = scmp.lt.s32.totalorder %s15, 1
        %s132 = scalar_select %p131, %s15, 1
        %s133 = smul.addr %s132, 8
        %s134 = smul.addr %s133, 4
        %s135 = scalar_lea.vmem %s0, %s134
      $region24: #{resnet_generator_forward.11} parent=19 // pred_fallthru
        _
    $region20: #{resnet_generator_forward.11} parent=5 // pred_fallthru
      _
    %p136 = scmp.le.s32.totalorder 1, %s8
    %p137 = scmp.lt.s32.totalorder %s8, 3
    %p138 = pnand %p136, %p137
    %p139 = pneg %p138
    // Predicated region
    $region25: #{resnet_generator_forward.11} parent=5 // pred_check
      _
    $region26: #{resnet_generator_forward.11} parent=5 // pred_check_branch
      %141 = sbr.rel (%p138) target = $region28
    $region27: #{resnet_generator_forward.11} parent=5 // pred_region
      %s142 = ssub.s32 %s8, 1
      %p143 = scmp.lt.s32.totalorder %s17, 1
      %s144 = scalar_select %p143, %s17, 1
      %s145 = smul.addr %s144, 8
      %s146 = smul.addr %s145, 4
      %s147 = scalar_lea.vmem %s0, %s146
      %p148 = pneg %p46
      %p149 = pneg %p43
      %s150 = smul.u32 2, %s18
      %p151 = scmp.lt.s32.totalorder %s150, 1
      %s152 = scalar_select %p151, %s150, 1
      %s153 = smul.addr %s152, 4
      %s154 = scalar_lea.vmem %s1, %s153
      %p155 = pneg %p72
      %p156 = pneg %p69
      %p157 = pneg %p100
      %p158 = pneg %p97
      %s159 = smul.u32 2, %s18
      %p160 = scmp.lt.s32.totalorder %s17, 1
      %s161 = scalar_select %p160, %s17, 1
      %p162 = scmp.lt.s32.totalorder %s159, 1
      %s163 = scalar_select %p162, %s159, 1
      %s164 = smul.addr %s161, 2
      %s165 = sadd.s32 %s163, %s164
      %s166 = smul.addr %s165, 4
      %s167 = scalar_lea.vmem %s2, %s166
      %p168 = scmp.lt.s32.totalorder %s17, 1
      %s169 = scalar_select %p168, %s17, 1
      %s170 = smul.addr %s169, 8
      %s171 = smul.addr %s170, 4
      %s172 = scalar_lea.vmem %s0, %s171
      %s173 = smul.u32 2, %s18
      %p174 = scmp.lt.s32.totalorder %s173, 1
      %s175 = scalar_select %p174, %s173, 1
      %s176 = smul.addr %s175, 4
      %s177 = scalar_lea.vmem %s1, %s176
      %s178 = smul.u32 2, %s18
      %s179 = smul.u32 2, %s18
      %p180 = scmp.lt.s32.totalorder %s17, 1
      %s181 = scalar_select %p180, %s17, 1
      %p182 = scmp.lt.s32.totalorder %s179, 1
      %s183 = scalar_select %p182, %s179, 1
      %s184 = smul.addr %s181, 2
      %s185 = sadd.s32 %s183, %s184
      %s186 = smul.addr %s185, 4
      %s187 = scalar_lea.vmem %s2, %s186
      %s188 = smul.u32 2, %s18
      %v190 = vld [vmem:[%s172] sm:$0xf]
      %191 = vst [vmem:[#allocation2] sm:$0xf] %v190
      %v192 = vld [vmem:[%s172 + $0x8] sm:$0xf]
      %193 = vst [vmem:[#allocation2 + $0x4] sm:$0xf] %v192
      %v194 = vld [vmem:[%s172] sm:$0xff]
      %196 = vrot.lane.b32.xlu0 %v194, 127
      %v197 = vpop.permute.xlu0 %196
      %v198 = vrot.slane %v197, 4
      %vm199 = vcmask 1039360
      %v200 = vsel %vm199, %v197, %v198
      %202 = vst [vmem:[#allocation2 + $0x8] sm:$0xf] %v200
      %v203 = vld [vmem:[%s172 + $0x10] sm:$0xf]
      %204 = vst [vmem:[#allocation2 + $0xc] sm:$0xf] %v203
      %v205 = vld [vmem:[%s172 + $0x18] sm:$0xf]
      %206 = vst [vmem:[#allocation2 + $0x10] sm:$0xf] %v205
      %v207 = vld [vmem:[%s172 + $0x10] sm:$0xff]
      %209 = vrot.lane.b32.xlu0 %v207, 127
      %v210 = vpop.permute.xlu0 %209
      %v211 = vrot.slane %v210, 4
      %v212 = vsel %vm199, %v210, %v211
      %214 = vst [vmem:[#allocation2 + $0x14] sm:$0xf] %v212
      %v215 = vld [vmem:[%s172] sm:$0xff]
      %217 = vrot.lane.b32.xlu0 %v215, 119
      %v218 = vpop.permute.xlu0 %217
      %v219 = vrot.slane %v218, 4
      %vm220 = vcmask 973824
      %v221 = vsel %vm220, %v218, %v219
      %223 = vst [vmem:[#allocation2 + $0x18] sm:$0xf] %v221
      %v224 = vld [vmem:[%s172 + $0x8] sm:$0xff]
      %226 = vrot.lane.b32.xlu0 %v224, 119
      %v227 = vpop.permute.xlu0 %226
      %v228 = vrot.slane %v227, 4
      %v229 = vsel %vm220, %v227, %v228
      %231 = vst [vmem:[#allocation2 + $0x1c] sm:$0xf] %v229
      %v232 = vld [vmem:[%s172] sm:$0xff]
      %234 = vrot.lane.b32.xlu0 %v232, 118
      %v235 = vpop.permute.xlu0 %234
      %v236 = vrot.slane %v235, 4
      %vm237 = vcmask 965632
      %v238 = vsel %vm237, %v235, %v236
      %240 = vst [vmem:[#allocation2 + $0x20] sm:$0xf] %v238
      %v241 = vld [vmem:[%s177] sm:$0xf]
      %v242 = vld [vmem:[%s177 + $0x4] sm:$0xf]
      %v243 = vld [vmem:[#allocation2] sm:$0xf]
      %v244 = vld [vmem:[#allocation2 + $0x4] sm:$0xf]
      %v245 = vld [vmem:[#allocation2 + $0x8] sm:$0xf]
      %v246 = vld [vmem:[#allocation2 + $0xc] sm:$0xf]
      %v247 = vld [vmem:[#allocation2 + $0x10] sm:$0xf]
      %v248 = vld [vmem:[#allocation2 + $0x14] sm:$0xf]
      %v249 = vld [vmem:[#allocation2 + $0x18] sm:$0xf]
      %v250 = vld [vmem:[#allocation2 + $0x1c] sm:$0xf]
      %v251 = vld [vmem:[#allocation2 + $0x20] sm:$0xf]
      %v254 = vunpack.c.l.b16 %v241
      %v255 = vunpack.c.l.b16 %v242
      %v256 = vpack.c.b16 %v255, %v254
      %v266 = vunpack.c.l.b16 %v243
      %v267 = vunpack.c.l.b16 %v244
      %v268 = vunpack.c.l.b16 %v245
      %v269 = vunpack.c.l.b16 %v246
      %v270 = vunpack.c.l.b16 %v247
      %v271 = vunpack.c.l.b16 %v248
      %v272 = vunpack.c.l.b16 %v249
      %v273 = vunpack.c.l.b16 %v250
      %v274 = vunpack.c.l.b16 %v251
      %v275 = vpack.c.b16 %v267, %v266
      %v276 = vpack.c.b16 %v269, %v268
      %v277 = vpack.c.b16 %v271, %v270
      %v278 = vpack.c.b16 %v273, %v272
      %v279 = vpack.c.b16 %v274, %v274
      %vm284 = vcmask 588800
      %v286 = vsel %vm284, %v256, 0
      %vm288 = vcmask 1043456
      %v290 = vsel %vm288, %v279, 0
      %292 = vmatpush.bf16.msra.mxu0 0
      %293 = vmatpush.bf16.msra.mxu0 0
      %294 = vmatpush.bf16.msra.mxu0 0
      %295 = vmatpush.bf16.msra.mxu0 %v290
      %296 = vmatpush.bf16.msra.mxu0 %v278
      %297 = vmatpush.bf16.msra.mxu0 %v277
      %298 = vmatpush.bf16.msra.mxu0 %v276
      %299 = vmatpush.bf16.msra.mxu0 %v275
      %300 = vmatmul.bf16.gmra.mxu0 %v286
      %v301 = vpop.f32.mrf.mxu0
      %v302 = vadd.f32 0.0, %v301
      %v303 = vpop.f32.mrf.mxu0
      %v304 = vadd.f32 0.0, %v303
      %305 = vdwg.mxu0
      %v306 = vlaneseq
      %v307 = vand.u32 %v306, 127
      %v308 = vstv 0
      %v309 = vadd.s32 %v308, %v307
      %vm310 = vcmp.lt.s32.totalorder %v309, 0
      %v311 = vsub.s32 0, %v309
      %v312 = vsel %vm310, %v311, %v309
      %v313 = vand.u32 %v312, 65535
      %v314 = vshrl.u32 %v312, 16
      %v316 = vmul.u32 %v313, 14564
      %v317 = vmul.u32 %v313, 58254
      %v318 = vmul.u32 %v314, 14564
      %v319 = vmul.u32 %v314, 58254
      %v320 = vshll.u32 %v317, 16
      %v321 = vshrl.u32 %v317, 16
      %v322 = vshll.u32 %v318, 16
      %v323 = vshrl.u32 %v318, 16
      %vm324 = vc.u32 %v316, %v320
      %v325 = vsel %vm324, 1, 0
      %v326 = vadd.s32 %v316, %v320
      %v327 = vadd.s32 %v319, %v325
      %vm328 = vc.u32 %v326, %v322
      %v329 = vsel %vm328, 1, 0
      %v330 = vadd.s32 %v326, %v322
      %v331 = vadd.s32 %v327, %v329
      %v332 = vadd.s32 %v331, %v321
      %v333 = vadd.s32 %v332, %v323
      %v334 = vshrl.u32 %v333, 3
      %v335 = vmul.u32 %v334, 9
      %v336 = vsub.s32 %v312, %v335
      %v337 = vsub.s32 0, %v336
      %v338 = vsel %vm310, %v337, %v336
      %vm339 = vcmp.ne.s32.totalorder %v338, 0
      %vm340 = vcmp.lt.s32.totalorder %v338, 0
      %vm341 = vmand %vm340, %vm339
      %v342 = vadd.s32 %v338, 9
      %v343 = vsel %vm341, %v342, %v338
      %vm344 = vcmp.lt.s32.totalorder %v343, 8
      %vm345 = vcmp.lt.s32.totalorder %v309, 72
      %vm346 = vmand %vm344, %vm345
      %v347 = vsel %vm346, 1, 0
      %v348 = vcvt.s32.f32 %v347
      %v349 = vmul.f32 %v302, %v348
      %v350 = vmul.f32 %v304, %v348
      %351 = vadd.xlane.f32.xlu0 %v349
      %v352 = vpop.xlane.xlu0 %351
      %353 = vadd.xlane.f32.xlu0 %v350
      %v354 = vpop.xlane.xlu0 %353
      %v355 = vadd.f32 %v352, 0.0
      %v356 = vadd.f32 %v354, 0.0
      %v357 = vmul.f32 %v302, %v349
      %v358 = vmul.f32 %v304, %v350
      %359 = vadd.xlane.f32.xlu0 %v357
      %v360 = vpop.xlane.xlu0 %359
      %361 = vadd.xlane.f32.xlu0 %v358
      %v362 = vpop.xlane.xlu0 %361
      %v363 = vadd.f32 %v360, 0.0
      %v364 = vadd.f32 %v362, 0.0
      %365 = vst [vmem:[#allocation3] sm:$0xff] %v302
      %366 = vst [vmem:[#allocation3 + $0x8] sm:$0xff] %v304
      %v367 = vmul.f32 %v355, 0.015625
      %v368 = vmul.f32 %v356, 0.015625
      %v369 = vmul.f32 %v363, 0.015625
      %v370 = vmul.f32 %v364, 0.015625
      %v371 = vmul.f32 %v367, %v367
      %v372 = vmul.f32 %v368, %v368
      %v373 = vsub.f32 %v369, %v371
      %v374 = vsub.f32 %v370, %v372
      %v375 = vmax.f32 %v373, 0.0
      %v376 = vmax.f32 %v374, 0.0
      %v377 = vadd.f32 %v375, 1e-05
      %v378 = vadd.f32 %v376, 1e-05
      %v379 = vrsqrt.pop %v377
      %v380 = vmul.f32 %v379, %v377
      %v381 = vmul.f32 %v380, %v379
      %v382 = vmul.f32 0.5, %v381
      %v383 = vsub.f32 1.5, %v382
      %v384 = vmul.f32 %v379, %v383
      %vm385 = vweird.f32 %v377
      %vm386 = vweird.f32 %v379
      %vm387 = vmor %vm385, %vm386
      %v388 = vsel %vm387, %v379, %v384
      %v389 = vrsqrt.pop %v378
      %v390 = vmul.f32 %v389, %v378
      %v391 = vmul.f32 %v390, %v389
      %v392 = vmul.f32 0.5, %v391
      %v393 = vsub.f32 1.5, %v392
      %v394 = vmul.f32 %v389, %v393
      %vm395 = vweird.f32 %v378
      %vm396 = vweird.f32 %v389
      %vm397 = vmor %vm395, %vm396
      %v398 = vsel %vm397, %v389, %v394
      %v399 = vld [vmem:[#allocation3] sm:$0xff]
      %v400 = vld [vmem:[#allocation3 + $0x8] sm:$0xff]
      %v401 = vsub.f32 %v399, %v367
      %v402 = vsub.f32 %v400, %v368
      %v403 = vmul.f32 %v401, %v388
      %v404 = vmul.f32 %v402, %v398
      %v405 = vmax.f32 %v403, 0.0
      %v406 = vmax.f32 %v404, 0.0
      %v407 = vpack.c.bf16 %v405, %v405
      %v408 = vpack.c.bf16 %v406, %v406
      %409 = vst [vmem:[%s187] sm:$0xf] %v407
      %410 = vst [vmem:[%s187 + $0x4] sm:$0xf] %v408
      %s411 = smul.u32 2, %s18
      %p412 = scmp.lt.s32.totalorder %s17, 1
      %s413 = scalar_select %p412, %s17, 1
      %p414 = scmp.lt.s32.totalorder %s411, 1
      %s415 = scalar_select %p414, %s411, 1
      %s416 = smul.addr %s413, 2
      %s417 = sadd.s32 %s415, %s416
      %s418 = smul.addr %s417, 4
      %s419 = scalar_lea.vmem %s2, %s418
      // Predicated region
      $region29: #{resnet_generator_forward.11} parent=27 // pred_check
        %p420 = pneg %p97
      $region30: #{resnet_generator_forward.11} parent=27 // pred_check_branch
        %422 = sbr.rel (%p420) target = $region32
      $region31: #{resnet_generator_forward.11} parent=27 // pred_region
        %s423 = smul.u32 2, %s18
      $region32: #{resnet_generator_forward.11} parent=27 // pred_fallthru
        _
    $region28: #{resnet_generator_forward.11} parent=5 // pred_fallthru
      _
    %p424 = scmp.le.s32.totalorder 2, %s8
    // Predicated region
    $region33: #{resnet_generator_forward.11} parent=5 // pred_check
      %p425 = pneg %p424
    $region34: #{resnet_generator_forward.11} parent=5 // pred_check_branch
      %427 = sbr.rel (%p425) target = $region36
    $region35: #{resnet_generator_forward.11} parent=5 // pred_region
      %s428 = ssub.s32 %s8, 2
      // Predicated region
      $region37: #{resnet_generator_forward.11} parent=35 // pred_check
        %p429 = pneg %p103
      $region38: #{resnet_generator_forward.11} parent=35 // pred_check_branch
        %431 = sbr.rel (%p429) target = $region40
      $region39: #{resnet_generator_forward.11} parent=35 // pred_region
        %s432 = smul.u32 2, %s20
        %p433 = scmp.lt.s32.totalorder %s19, 1
        %s434 = scalar_select %p433, %s19, 1
        %p435 = scmp.lt.s32.totalorder %s432, 1
        %s436 = scalar_select %p435, %s432, 1
        %s437 = smul.addr %s434, 2
        %s438 = sadd.s32 %s436, %s437
        %s439 = smul.addr %s438, 4
        %s440 = scalar_lea.vmem %s2, %s439
      $region40: #{resnet_generator_forward.11} parent=35 // pred_fallthru
        _
    $region36: #{resnet_generator_forward.11} parent=5 // pred_fallthru
      _
  $region6: #{resnet_generator_forward.11} parent=0 // loop_footer
    %s12 = sadd.s32 1, %s8
  $region7: #{resnet_generator_forward.11} parent=0 // loop_footer_branch
    %7 = sbr.rel target = $region3
  $region8: #{resnet_generator_forward.11} parent=0 // loop_exit
    _

// kernel: resnet_generator_forward.12
$region0: #{resnet_generator_forward.12}
  #allocation0 [shape = 'u32[]', space=smem, size = 0x4, offset = 0x4, fixed_abs, tag = 'smem constant byte address 0x4 - core index']
  #allocation1 [shape = 'u32[72,128]{1,0:T(1,128)}', space=vmem, size = 0x9000, scoped, tag = 'internal scratch']
  #allocation2 [shape = 'bf16[144,128]{1,0:T(8,128)(2,1)}', space=vmem, size = 0x9000, scoped, tag = 'scratch operand']
  #allocation3 [shape = 'f32[32,128]{1,0:T(8,128)}', space=vmem, size = 0x4000, scoped, tag = 'scratch operand']
  %s0 = inlined_call_operand.vmem [shape: bf16[2,64,256], index: 0, kind: input, shape index: {}]
  %s1 = inlined_call_operand.vmem [shape: bf16[32,144], index: 1, kind: input, shape index: {}]
  %s2 = inlined_call_operand.vmem [shape: bf16[2,32,128], index: 2, kind: output, shape index: {}]
  %s3 = sld [smem:[#allocation0]]
  $region41: #{resnet_generator_forward.12} parent=0
    _
  %s5 = ssub.s32 1, %s3
  %s6 = scalar_select 0, %s5, %s3
  loop: start=0, step=1, limit=4
  $region2: #{resnet_generator_forward.12} parent=0 // loop_pre_header
    _
  $region3: #{resnet_generator_forward.12} parent=0 // loop_header
    %s8 = sphi 0, %s12
    %p9 = scmp.ge.s32.totalorder %s8, 4
    %s15 = sphi 0, %s27
    %s16 = sphi 0, %s23
    %s17 = sphi 0, %s15
    %s18 = sphi 0, %s16
    %s19 = sphi 0, %s17
    %s20 = sphi 0, %s18
    %s30 = sphi 0, %s32
    %s33 = sphi 0, %s30
    %s34 = sphi 0, %s33
    %s50 = sphi 0, %s34
    %s56 = sphi 0, %s58
    %s59 = sphi 0, %s56
    %s60 = sphi 0, %s59
    %s76 = sphi 0, %s60
    %s84 = sphi 0, %s86
    %s87 = sphi 0, %s84
    %s88 = sphi 0, %s87
    %s104 = sphi 0, %s88
  $region4: #{resnet_generator_forward.12} parent=0 // loop_header_branch
    %11 = sbr.rel (%p9) target = $region8
  $region5: #{resnet_generator_forward.12} parent=0 // loop_body
    %s13 = ssub.s32 %s8, 1
    %s14 = ssub.s32 %s8, 2
    %s21 = sadd.s32 1, %s16
    %p22 = scmp.ge.s32.totalorder %s21, 1
    %s23 = scalar_select %p22, 0, %s21
    %s24 = sadd.s32 1, %s15
    %s25 = scalar_select %p22, %s24, %s15
    %p26 = scmp.ge.s32.totalorder %s25, 2
    %s27 = scalar_select %p26, 0, %s25
    %s28 = ssub.s32 %s15, %s27
    %p29 = scmp.eq.s32.totalorder %s28, 0
    %s31 = sadd.s32 %s30, 1
    %s32 = scalar_select %p29, %s30, %s31
    %p35 = pneg %p29
    %p36 = scmp.eq.s32.totalorder %s8, 1
    %p37 = por %p35, %p36
    %p38 = scmp.ne.s32.totalorder %s30, %s33
    %p39 = scmp.eq.s32.totalorder %s8, 0
    %p40 = por %p38, %p39
    %p41 = scmp.ne.s32.totalorder %s30, %s33
    %p42 = scmp.eq.s32.totalorder %s13, 1
    %p43 = por %p41, %p42
    %p44 = scmp.ne.s32.totalorder %s33, %s34
    %p45 = scmp.eq.s32.totalorder %s13, 0
    %p46 = por %p44, %p45
    %p47 = scmp.ne.s32.totalorder %s33, %s34
    %p48 = scmp.eq.s32.totalorder %s14, 1
    %p49 = por %p47, %p48
    %p51 = scmp.ne.s32.totalorder %s34, %s50
    %p52 = scmp.eq.s32.totalorder %s14, 0
    %p53 = por %p51, %p52
    %s54 = ssub.s32 %s16, %s23
    %p55 = scmp.eq.s32.totalorder %s54, 0
    %s57 = sadd.s32 %s56, 1
    %s58 = scalar_select %p55, %s56, %s57
    %p61 = pneg %p55
    %p62 = scmp.eq.s32.totalorder %s8, 1
    %p63 = por %p61, %p62
    %p64 = scmp.ne.s32.totalorder %s56, %s59
    %p65 = scmp.eq.s32.totalorder %s8, 0
    %p66 = por %p64, %p65
    %p67 = scmp.ne.s32.totalorder %s56, %s59
    %p68 = scmp.eq.s32.totalorder %s13, 1
    %p69 = por %p67, %p68
    %p70 = scmp.ne.s32.totalorder %s59, %s60
    %p71 = scmp.eq.s32.totalorder %s13, 0
    %p72 = por %p70, %p71
    %p73 = scmp.ne.s32.totalorder %s59, %s60
    %p74 = scmp.eq.s32.totalorder %s14, 1
    %p75 = por %p73, %p74
    %p77 = scmp.ne.s32.totalorder %s60, %s76
    %p78 = scmp.eq.s32.totalorder %s14, 0
    %p79 = por %p77, %p78
    %s80 = ssub.s32 %s15, %s27
    %s81 = ssub.s32 %s16, %s23
    %s82 = sor.u32 %s80, %s81
    %p83 = scmp.eq.s32.totalorder %s82, 0
    %s85 = sadd.s32 %s84, 1
    %s86 = scalar_select %p83, %s84, %s85
    %p89 = pneg %p83
    %p90 = scmp.eq.s32.totalorder %s8, 1
    %p91 = por %p89, %p90
    %p92 = scmp.ne.s32.totalorder %s84, %s87
    %p93 = scmp.eq.s32.totalorder %s8, 0
    %p94 = por %p92, %p93
    %p95 = scmp.ne.s32.totalorder %s84, %s87
    %p96 = scmp.eq.s32.totalorder %s13, 1
    %p97 = por %p95, %p96
    %p98 = scmp.ne.s32.totalorder %s87, %s88
    %p99 = scmp.eq.s32.totalorder %s13, 0
    %p100 = por %p98, %p99
    %p101 = scmp.ne.s32.totalorder %s87, %s88
    %p102 = scmp.eq.s32.totalorder %s14, 1
    %p103 = por %p101, %p102
    %p105 = scmp.ne.s32.totalorder %s88, %s104
    %p106 = scmp.eq.s32.totalorder %s14, 0
    %p107 = por %p105, %p106
    %p108 = scmp.le.s32.totalorder 1, %s8
    %p109 = scmp.lt.s32.totalorder %s8, 3
    %p110 = pnand %p108, %p109
    %p111 = pneg %p110
    // Predicated region
    $region9: #{resnet_generator_forward.12} parent=5 // pred_check
      _
    $region10: #{resnet_generator_forward.12} parent=5 // pred_check_branch
      %113 = sbr.rel (%p110) target = $region12
    $region11: #{resnet_generator_forward.12} parent=5 // pred_region
      %s114 = ssub.s32 %s8, 1
      // Predicated region
      $region13: #{resnet_generator_forward.12} parent=11 // pred_check
        %p115 = pneg %p72
      $region14: #{resnet_generator_forward.12} parent=11 // pred_check_branch
        %117 = sbr.rel (%p115) target = $region16
      $region15: #{resnet_generator_forward.12} parent=11 // pred_region
        %s118 = smul.u32 4, %s18
        %p119 = scmp.lt.s32.totalorder %s118, 3
        %s120 = scalar_select %p119, %s118, 3
        %s121 = smul.addr %s120, 2
        %s122 = smul.addr %s121, 4
        %s123 = scalar_lea.vmem %s1, %s122
        %s124 = smul.u32 4, %s18
      $region16: #{resnet_generator_forward.12} parent=11 // pred_fallthru
        _
    $region12: #{resnet_generator_forward.12} parent=5 // pred_fallthru
      _
    %p125 = scmp.lt.s32.totalorder %s8, 2
    // Predicated region
    $region17: #{resnet_generator_forward.12} parent=5 // pred_check
      %p126 = pneg %p125
    $region18: #{resnet_generator_forward.12} parent=5 // pred_check_branch
      %128 = sbr.rel (%p126) target = $region20
    $region19: #{resnet_generator_forward.12} parent=5 // pred_region
      // Predicated region
      $region21: #{resnet_generator_forward.12} parent=19 // pred_check
        %p129 = pneg %p40
      $region22: #{resnet_generator_forward.12} parent=19 // pred_check_branch
        %131 = sbr.rel (%p129) target = $region24
      $region23: #{resnet_generator_forward.12} parent=19 // pred_region
        %p132 = scmp.lt.s32.totalorder %s15, 1
        %s133 = scalar_select %p132, %s15, 1
        %s134 = smul.addr %s133, 16
        %s135 = smul.addr %s134, 4
        %s136 = scalar_lea.vmem %s0, %s135
      $region24: #{resnet_generator_forward.12} parent=19 // pred_fallthru
        _
    $region20: #{resnet_generator_forward.12} parent=5 // pred_fallthru
      _
    %p137 = scmp.le.s32.totalorder 1, %s8
    %p138 = scmp.lt.s32.totalorder %s8, 3
    %p139 = pnand %p137, %p138
    %p140 = pneg %p139
    // Predicated region
    $region25: #{resnet_generator_forward.12} parent=5 // pred_check
      _
    $region26: #{resnet_generator_forward.12} parent=5 // pred_check_branch
      %142 = sbr.rel (%p139) target = $region28
    $region27: #{resnet_generator_forward.12} parent=5 // pred_region
      %s143 = ssub.s32 %s8, 1
      %p144 = scmp.lt.s32.totalorder %s17, 1
      %s145 = scalar_select %p144, %s17, 1
      %s146 = smul.addr %s145, 16
      %s147 = smul.addr %s146, 4
      %s148 = scalar_lea.vmem %s0, %s147
      %p149 = pneg %p46
      %p150 = pneg %p43
      %s151 = smul.u32 4, %s18
      %p152 = scmp.lt.s32.totalorder %s151, 3
      %s153 = scalar_select %p152, %s151, 3
      %s154 = smul.addr %s153, 2
      %s155 = smul.addr %s154, 4
      %s156 = scalar_lea.vmem %s1, %s155
      %p157 = pneg %p72
      %p158 = pneg %p69
      %p159 = pneg %p100
      %p160 = pneg %p97
      %s161 = smul.u32 4, %s18
      %p162 = scmp.lt.s32.totalorder %s17, 1
      %s163 = scalar_select %p162, %s17, 1
      %p164 = scmp.lt.s32.totalorder %s161, 3
      %s165 = scalar_select %p164, %s161, 3
      %s166 = smul.addr %s163, 4
      %s167 = sadd.s32 %s165, %s166
      %s168 = smul.addr %s167, 4
      %s169 = scalar_lea.vmem %s2, %s168
      %p170 = scmp.lt.s32.totalorder %s17, 1
      %s171 = scalar_select %p170, %s17, 1
      %s172 = smul.addr %s171, 16
      %s173 = smul.addr %s172, 4
      %s174 = scalar_lea.vmem %s0, %s173
      %s175 = smul.u32 4, %s18
      %p176 = scmp.lt.s32.totalorder %s175, 3
      %s177 = scalar_select %p176, %s175, 3
      %s178 = smul.addr %s177, 2
      %s179 = smul.addr %s178, 4
      %s180 = scalar_lea.vmem %s1, %s179
      %s181 = smul.u32 4, %s18
      %s182 = smul.u32 4, %s18
      %p183 = scmp.lt.s32.totalorder %s17, 1
      %s184 = scalar_select %p183, %s17, 1
      %p185 = scmp.lt.s32.totalorder %s182, 3
      %s186 = scalar_select %p185, %s182, 3
      %s187 = smul.addr %s184, 4
      %s188 = sadd.s32 %s186, %s187
      %s189 = smul.addr %s188, 4
      %s190 = scalar_lea.vmem %s2, %s189
      %s191 = smul.u32 4, %s18
      %v193 = vld [vmem:[%s174] sm:$0xf]
      %v194 = vld [vmem:[%s174 + $0x8] sm:$0xf]
      %195 = vst [vmem:[#allocation2] sm:$0xf] %v193
      %196 = vst [vmem:[#allocation2 + $0x4] sm:$0xf] %v194
      %v197 = vld [vmem:[%s174 + $0x10] sm:$0xf]
      %v198 = vld [vmem:[%s174 + $0x18] sm:$0xf]
      %199 = vst [vmem:[#allocation2 + $0x8] sm:$0xf] %v197
      %200 = vst [vmem:[#allocation2 + $0xc] sm:$0xf] %v198
      %v201 = vld [vmem:[%s174] sm:$0xff]
      %v202 = vld [vmem:[%s174 + $0x8] sm:$0xff]
      %205 = vrot.lane.b32.xlu0 %v201, 127
      %v206 = vpop.permute.xlu0 %205
      %207 = vrot.lane.b32.xlu0 %v202, 127
      %v208 = vpop.permute.xlu0 %207
      %v209 = vrot.slane %v206, 4
      %v210 = vrot.slane %v208, 4
      %vm211 = vcmask 1039360
      %v212 = vsel %vm211, %v206, %v209
      %v213 = vsel %vm211, %v208, %v210
      %216 = vst [vmem:[#allocation2 + $0x10] sm:$0xf] %v212
      %217 = vst [vmem:[#allocation2 + $0x14] sm:$0xf] %v213
      %v218 = vld [vmem:[%s174 + $0x20] sm:$0xf]
      %v219 = vld [vmem:[%s174 + $0x28] sm:$0xf]
      %220 = vst [vmem:[#allocation2 + $0x18] sm:$0xf] %v218
      %221 = vst [vmem:[#allocation2 + $0x1c] sm:$0xf] %v219
      %v222 = vld [vmem:[%s174 + $0x30] sm:$0xf]
      %v223 = vld [vmem:[%s174 + $0x38] sm:$0xf]
      %224 = vst [vmem:[#allocation2 + $0x20] sm:$0xf] %v222
      %225 = vst [vmem:[#allocation2 + $0x24] sm:$0xf] %v223
      %v226 = vld [vmem:[%s174 + $0x20] sm:$0xff]
      %v227 = vld [vmem:[%s174 + $0x28] sm:$0xff]
      %230 = vrot.lane.b32.xlu0 %v226, 127
      %v231 = vpop.permute.xlu0 %230
      %232 = vrot.lane.b32.xlu0 %v227, 127
      %v233 = vpop.permute.xlu0 %232
      %v234 = vrot.slane %v231, 4
      %v235 = vrot.slane %v233, 4
      %v236 = vsel %vm211, %v231, %v234
      %v237 = vsel %vm211, %v233, %v235
      %240 = vst [vmem:[#allocation2 + $0x28] sm:$0xf] %v236
      %241 = vst [vmem:[#allocation2 + $0x2c] sm:$0xf] %v237
      %v242 = vld [vmem:[%s174] sm:$0xff]
      %v243 = vld [vmem:[%s174 + $0x8] sm:$0xff]
      %246 = vrot.lane.b32.xlu0 %v242, 123
      %v247 = vpop.permute.xlu0 %246
      %248 = vrot.lane.b32.xlu0 %v243, 123
      %v249 = vpop.permute.xlu0 %248
      %v250 = vrot.slane %v247, 4
      %v251 = vrot.slane %v249, 4
      %vm252 = vcmask 1006592
      %v253 = vsel %vm252, %v247, %v250
      %v254 = vsel %vm252, %v249, %v251
      %257 = vst [vmem:[#allocation2 + $0x30] sm:$0xf] %v253
      %258 = vst [vmem:[#allocation2 + $0x34] sm:$0xf] %v254
      %v259 = vld [vmem:[%s174 + $0x10] sm:$0xff]
      %v260 = vld [vmem:[%s174 + $0x18] sm:$0xff]
      %263 = vrot.lane.b32.xlu0 %v259, 123
      %v264 = vpop.permute.xlu0 %263
      %265 = vrot.lane.b32.xlu0 %v260, 123
      %v266 = vpop.permute.xlu0 %265
      %v267 = vrot.slane %v264, 4
      %v268 = vrot.slane %v266, 4
      %v269 = vsel %vm252, %v264, %v267
      %v270 = vsel %vm252, %v266, %v268
      %273 = vst [vmem:[#allocation2 + $0x38] sm:$0xf] %v269
      %274 = vst [vmem:[#allocation2 + $0x3c] sm:$0xf] %v270
      %v275 = vld [vmem:[%s174] sm:$0xff]
      %v276 = vld [vmem:[%s174 + $0x8] sm:$0xff]
      %279 = vrot.lane.b32.xlu0 %v275, 122
      %v280 = vpop.permute.xlu0 %279
      %281 = vrot.lane.b32.xlu0 %v276, 122
      %v282 = vpop.permute.xlu0 %281
      %v283 = vrot.slane %v280, 4
      %v284 = vrot.slane %v282, 4
      %vm285 = vcmask 998400
      %v286 = vsel %vm285, %v280, %v283
      %v287 = vsel %vm285, %v282, %v284
      %290 = vst [vmem:[#allocation2 + $0x40] sm:$0xf] %v286
      %291 = vst [vmem:[#allocation2 + $0x44] sm:$0xf] %v287
      %v292 = vld [vmem:[%s180] sm:$0xff]
      %v293 = vld [vmem:[%s180 + $0x8] sm:$0xff]
      %v294 = vld [vmem:[%s180 + $0x10] sm:$0xff]
      %v295 = vld [vmem:[%s180 + $0x18] sm:$0xff]
      %v296 = vld [vmem:[#allocation2] sm:$0xf]
      %v297 = vld [vmem:[#allocation2 + $0x4] sm:$0xf]
      %v298 = vld [vmem:[#allocation2 + $0x8] sm:$0xf]
      %v299 = vld [vmem:[#allocation2 + $0xc] sm:$0xf]
      %v300 = vld [vmem:[#allocation2 + $0x10] sm:$0xf]
      %v301 = vld [vmem:[#allocation2 + $0x14] sm:$0xf]
      %v302 = vld [vmem:[#allocation2 + $0x18] sm:$0xf]
      %v303 = vld [vmem:[#allocation2 + $0x1c] sm:$0xf]
      %v304 = vld [vmem:[#allocation2 + $0x20] sm:$0xf]
      %v305 = vld [vmem:[#allocation2 + $0x24] sm:$0xf]
      %v306 = vld [vmem:[#allocation2 + $0x28] sm:$0xf]
      %v307 = vld [vmem:[#allocation2 + $0x2c] sm:$0xf]
      %v308 = vld [vmem:[#allocation2 + $0x30] sm:$0xf]
      %v309 = vld [vmem:[#allocation2 + $0x34] sm:$0xf]
      %v310 = vld [vmem:[#allocation2 + $0x38] sm:$0xf]
      %v311 = vld [vmem:[#allocation2 + $0x3c] sm:$0xf]
      %v312 = vld [vmem:[#allocation2 + $0x40] sm:$0xf]
      %v313 = vld [vmem:[#allocation2 + $0x44] sm:$0xf]
      %v318 = vunpack.c.l.b16 %v292
      %v319 = vunpack.c.h.b16 %v292
      %v320 = vunpack.c.l.b16 %v293
      %v321 = vunpack.c.h.b16 %v293
      %v322 = vunpack.c.l.b16 %v294
      %v323 = vunpack.c.h.b16 %v294
      %v324 = vunpack.c.l.b16 %v295
      %v325 = vunpack.c.h.b16 %v295
      %v326 = vpack.c.b16 %v320, %v318
      %v327 = vpack.c.b16 %v321, %v319
      %v328 = vpack.c.b16 %v324, %v322
      %v329 = vpack.c.b16 %v325, %v323
      %v350 = vunpack.c.l.b16 %v296
      %v351 = vunpack.c.l.b16 %v297
      %v352 = vunpack.c.l.b16 %v298
      %v353 = vunpack.c.l.b16 %v299
      %v354 = vunpack.c.l.b16 %v300
      %v355 = vunpack.c.l.b16 %v301
      %v356 = vunpack.c.l.b16 %v302
      %v357 = vunpack.c.l.b16 %v303
      %v358 = vunpack.c.l.b16 %v304
      %v359 = vunpack.c.l.b16 %v305
      %v360 = vunpack.c.l.b16 %v306
      %v361 = vunpack.c.l.b16 %v307
      %v362 = vunpack.c.l.b16 %v308
      %v363 = vunpack.c.l.b16 %v309
      %v364 = vunpack.c.l.b16 %v310
      %v365 = vunpack.c.l.b16 %v311
      %v366 = vunpack.c.l.b16 %v312
      %v367 = vunpack.c.l.b16 %v313
      %v368 = vpack.c.b16 %v351, %v350
      %v369 = vpack.c.b16 %v353, %v352
      %v370 = vpack.c.b16 %v355, %v354
      %v371 = vpack.c.b16 %v357, %v356
      %v372 = vpack.c.b16 %v359, %v358
      %v373 = vpack.c.b16 %v361, %v360
      %v374 = vpack.c.b16 %v363, %v362
      %v375 = vpack.c.b16 %v365, %v364
      %v376 = vpack.c.b16 %v367, %v366
      %vm386 = vcmask 130048
      %v388 = vsel %vm386, %v327, 0
      %v391 = vsel %vm386, %v329, 0
      %393 = vmatpush.bf16.msra.mxu0 %v375
      %394 = vmatpush.bf16.msra.mxu0 %v374
      %395 = vmatpush.bf16.msra.mxu0 %v373
      %396 = vmatpush.bf16.msra.mxu0 %v372
      %397 = vmatpush.bf16.msra.mxu0 %v371
      %398 = vmatpush.bf16.msra.mxu0 %v370
      %399 = vmatpush.bf16.msra.mxu0 %v369
      %400 = vmatpush.bf16.msra.mxu0 %v368
      %401 = vmatmul.bf16.gmra.mxu0 %v326
      %v402 = vpop.f32.mrf.mxu0
      %v403 = vadd.f32 0.0, %v402
      %v404 = vpop.f32.mrf.mxu0
      %v405 = vadd.f32 0.0, %v404
      %406 = vmatmul.bf16.gmra.mxu0 %v328
      %v407 = vpop.f32.mrf.mxu0
      %v408 = vadd.f32 0.0, %v407
      %v409 = vpop.f32.mrf.mxu0
      %v410 = vadd.f32 0.0, %v409
      %411 = vdwg.mxu0
      %412 = vmatpush.bf16.msra.mxu0 0
      %413 = vmatpush.bf16.msra.mxu0 0
      %414 = vmatpush.bf16.msra.mxu0 0
      %415 = vmatpush.bf16.msra.mxu0 0
      %416 = vmatpush.bf16.msra.mxu0 0
      %417 = vmatpush.bf16.msra.mxu0 0
      %418 = vmatpush.bf16.msra.mxu0 0
      %419 = vmatpush.bf16.msra.mxu0 %v376
      %420 = vmatmul.bf16.gmra.mxu0 %v388
      %v421 = vpop.f32.mrf.mxu0
      %v422 = vadd.f32 %v403, %v421
      %v423 = vpop.f32.mrf.mxu0
      %v424 = vadd.f32 %v405, %v423
      %425 = vmatmul.bf16.gmra.mxu0 %v391
      %v426 = vpop.f32.mrf.mxu0
      %v427 = vadd.f32 %v408, %v426
      %v428 = vpop.f32.mrf.mxu0
      %v429 = vadd.f32 %v410, %v428
      %430 = vdwg.mxu0
      %v431 = vlaneseq
      %v432 = vand.u32 %v431, 127
      %v433 = vstv 0
      %v434 = vadd.s32 %v433, %v432
      %vm435 = vcmp.lt.s32.totalorder %v434, 0
      %v436 = vsub.s32 0, %v434
      %v437 = vsel %vm435, %v436, %v434
      %v438 = vand.u32 %v437, 65535
      %v439 = vshrl.u32 %v437, 16
      %v441 = vmul.u32 %v438, 52429
      %v442 = vmul.u32 %v438, 52428
      %v443 = vmul.u32 %v439, 52429
      %v444 = vmul.u32 %v439, 52428
      %v445 = vshll.u32 %v442, 16
      %v446 = vshrl.u32 %v442, 16
      %v447 = vshll.u32 %v443, 16
      %v448 = vshrl.u32 %v443, 16
      %vm449 = vc.u32 %v441, %v445
      %v450 = vsel %vm449, 1, 0
      %v451 = vadd.s32 %v441, %v445
      %v452 = vadd.s32 %v444, %v450
      %vm453 = vc.u32 %v451, %v447
      %v454 = vsel %vm453, 1, 0
      %v455 = vadd.s32 %v451, %v447
      %v456 = vadd.s32 %v452, %v454
      %v457 = vadd.s32 %v456, %v446
      %v458 = vadd.s32 %v457, %v448
      %v459 = vshrl.u32 %v458, 2
      %v460 = vmul.u32 %v459, 5
      %v461 = vsub.s32 %v437, %v460
      %v462 = vsub.s32 0, %v461
      %v463 = vsel %vm435, %v462, %v461
      %vm464 = vcmp.ne.s32.totalorder %v463, 0
      %vm465 = vcmp.lt.s32.totalorder %v463, 0
      %vm466 = vmand %vm465, %vm464
      %v467 = vadd.s32 %v463, 5
      %v468 = vsel %vm466, %v467, %v463
      %vm469 = vcmp.lt.s32.totalorder %v468, 4
      %vm470 = vcmp.lt.s32.totalorder %v434, 20
      %vm471 = vmand %vm469, %vm470
      %v472 = vsel %vm471, 1, 0
      %v473 = vcvt.s32.f32 %v472
      %v474 = vmul.f32 %v422, %v473
      %v475 = vmul.f32 %v424, %v473
      %v476 = vmul.f32 %v427, %v473
      %v477 = vmul.f32 %v429, %v473
      %478 = vadd.xlane.f32.xlu0 %v474
      %v479 = vpop.xlane.xlu0 %478
      %480 = vadd.xlane.f32.xlu0 %v475
      %v481 = vpop.xlane.xlu0 %480
      %482 = vadd.xlane.f32.xlu0 %v476
      %v483 = vpop.xlane.xlu0 %482
      %484 = vadd.xlane.f32.xlu0 %v477
      %v485 = vpop.xlane.xlu0 %484
      %v486 = vadd.f32 %v479, 0.0
      %v487 = vadd.f32 %v481, 0.0
      %v488 = vadd.f32 %v483, 0.0
      %v489 = vadd.f32 %v485, 0.0
      %v490 = vmul.f32 %v422, %v474
      %v491 = vmul.f32 %v424, %v475
      %v492 = vmul.f32 %v427, %v476
      %v493 = vmul.f32 %v429, %v477
      %494 = vadd.xlane.f32.xlu0 %v490
      %v495 = vpop.xlane.xlu0 %494
      %496 = vadd.xlane.f32.xlu0 %v491
      %v497 = vpop.xlane.xlu0 %496
      %498 = vadd.xlane.f32.xlu0 %v492
      %v499 = vpop.xlane.xlu0 %498
      %500 = vadd.xlane.f32.xlu0 %v493
      %v501 = vpop.xlane.xlu0 %500
      %v502 = vadd.f32 %v495, 0.0
      %v503 = vadd.f32 %v497, 0.0
      %v504 = vadd.f32 %v499, 0.0
      %v505 = vadd.f32 %v501, 0.0
      %506 = vst [vmem:[#allocation3] sm:$0xff] %v422
      %507 = vst [vmem:[#allocation3 + $0x8] sm:$0xff] %v424
      %508 = vst [vmem:[#allocation3 + $0x10] sm:$0xff] %v427
      %509 = vst [vmem:[#allocation3 + $0x18] sm:$0xff] %v429
      %v510 = vmul.f32 %v486, 0.0625
      %v511 = vmul.f32 %v487, 0.0625
      %v512 = vmul.f32 %v488, 0.0625
      %v513 = vmul.f32 %v489, 0.0625
      %v514 = vmul.f32 %v502, 0.0625
      %v515 = vmul.f32 %v503, 0.0625
      %v516 = vmul.f32 %v504, 0.0625
      %v517 = vmul.f32 %v505, 0.0625
      %v518 = vmul.f32 %v510, %v510
      %v519 = vmul.f32 %v511, %v511
      %v520 = vmul.f32 %v512, %v512
      %v521 = vmul.f32 %v513, %v513
      %v522 = vsub.f32 %v514, %v518
      %v523 = vsub.f32 %v515, %v519
      %v524 = vsub.f32 %v516, %v520
      %v525 = vsub.f32 %v517, %v521
      %v526 = vmax.f32 %v522, 0.0
      %v527 = vmax.f32 %v523, 0.0
      %v528 = vmax.f32 %v524, 0.0
      %v529 = vmax.f32 %v525, 0.0
      %v530 = vadd.f32 %v526, 1e-05
      %v531 = vadd.f32 %v527, 1e-05
      %v532 = vadd.f32 %v528, 1e-05
      %v533 = vadd.f32 %v529, 1e-05
      %v534 = vrsqrt.pop %v530
      %v535 = vmul.f32 %v534, %v530
      %v536 = vmul.f32 %v535, %v534
      %v537 = vmul.f32 0.5, %v536
      %v538 = vsub.f32 1.5, %v537
      %v539 = vmul.f32 %v534, %v538
      %vm540 = vweird.f32 %v530
      %vm541 = vweird.f32 %v534
      %vm542 = vmor %vm540, %vm541
      %v543 = vsel %vm542, %v534, %v539
      %v544 = vrsqrt.pop %v531
      %v545 = vmul.f32 %v544, %v531
      %v546 = vmul.f32 %v545, %v544
      %v547 = vmul.f32 0.5, %v546
      %v548 = vsub.f32 1.5, %v547
      %v549 = vmul.f32 %v544, %v548
      %vm550 = vweird.f32 %v531
      %vm551 = vweird.f32 %v544
      %vm552 = vmor %vm550, %vm551
      %v553 = vsel %vm552, %v544, %v549
      %v554 = vrsqrt.pop %v532
      %v555 = vmul.f32 %v554, %v532
      %v556 = vmul.f32 %v555, %v554
      %v557 = vmul.f32 0.5, %v556
      %v558 = vsub.f32 1.5, %v557
      %v559 = vmul.f32 %v554, %v558
      %vm560 = vweird.f32 %v532
      %vm561 = vweird.f32 %v554
      %vm562 = vmor %vm560, %vm561
      %v563 = vsel %vm562, %v554, %v559
      %v564 = vrsqrt.pop %v533
      %v565 = vmul.f32 %v564, %v533
      %v566 = vmul.f32 %v565, %v564
      %v567 = vmul.f32 0.5, %v566
      %v568 = vsub.f32 1.5, %v567
      %v569 = vmul.f32 %v564, %v568
      %vm570 = vweird.f32 %v533
      %vm571 = vweird.f32 %v564
      %vm572 = vmor %vm570, %vm571
      %v573 = vsel %vm572, %v564, %v569
      %v574 = vld [vmem:[#allocation3] sm:$0xff]
      %v575 = vld [vmem:[#allocation3 + $0x8] sm:$0xff]
      %v576 = vld [vmem:[#allocation3 + $0x10] sm:$0xff]
      %v577 = vld [vmem:[#allocation3 + $0x18] sm:$0xff]
      %v578 = vsub.f32 %v574, %v510
      %v579 = vsub.f32 %v575, %v511
      %v580 = vsub.f32 %v576, %v512
      %v581 = vsub.f32 %v577, %v513
      %v582 = vmul.f32 %v578, %v543
      %v583 = vmul.f32 %v579, %v553
      %v584 = vmul.f32 %v580, %v563
      %v585 = vmul.f32 %v581, %v573
      %v586 = vmax.f32 %v582, 0.0
      %v587 = vmax.f32 %v583, 0.0
      %v588 = vmax.f32 %v584, 0.0
      %v589 = vmax.f32 %v585, 0.0
      %v590 = vpack.c.bf16 %v586, %v586
      %v591 = vpack.c.bf16 %v587, %v587
      %v592 = vpack.c.bf16 %v588, %v588
      %v593 = vpack.c.bf16 %v589, %v589
      %594 = vst [vmem:[%s190] sm:$0xf] %v590
      %595 = vst [vmem:[%s190 + $0x4] sm:$0xf] %v591
      %596 = vst [vmem:[%s190 + $0x8] sm:$0xf] %v592
      %597 = vst [vmem:[%s190 + $0xc] sm:$0xf] %v593
      %s598 = smul.u32 4, %s18
      %p599 = scmp.lt.s32.totalorder %s17, 1
      %s600 = scalar_select %p599, %s17, 1
      %p601 = scmp.lt.s32.totalorder %s598, 3
      %s602 = scalar_select %p601, %s598, 3
      %s603 = smul.addr %s600, 4
      %s604 = sadd.s32 %s602, %s603
      %s605 = smul.addr %s604, 4
      %s606 = scalar_lea.vmem %s2, %s605
      // Predicated region
      $region29: #{resnet_generator_forward.12} parent=27 // pred_check
        %p607 = pneg %p97
      $region30: #{resnet_generator_forward.12} parent=27 // pred_check_branch
        %609 = sbr.rel (%p607) target = $region32
      $region31: #{resnet_generator_forward.12} parent=27 // pred_region
        %s610 = smul.u32 4, %s18
      $region32: #{resnet_generator_forward.12} parent=27 // pred_fallthru
        _
    $region28: #{resnet_generator_forward.12} parent=5 // pred_fallthru
      _
    %p611 = scmp.le.s32.totalorder 2, %s8
    // Predicated region
    $region33: #{resnet_generator_forward.12} parent=5 // pred_check
      %p612 = pneg %p611
    $region34: #{resnet_generator_forward.12} parent=5 // pred_check_branch
      %614 = sbr.rel (%p612) target = $region36
    $region35: #{resnet_generator_forward.12} parent=5 // pred_region
      %s615 = ssub.s32 %s8, 2
      // Predicated region
      $region37: #{resnet_generator_forward.12} parent=35 // pred_check
        %p616 = pneg %p103
      $region38: #{resnet_generator_forward.12} parent=35 // pred_check_branch
        %618 = sbr.rel (%p616) target = $region40
      $region39: #{resnet_generator_forward.12} parent=35 // pred_region
        %s619 = smul.u32 4, %s20
        %p620 = scmp.lt.s32.totalorder %s19, 1
        %s621 = scalar_select %p620, %s19, 1
        %p622 = scmp.lt.s32.totalorder %s619, 3
        %s623 = scalar_select %p622, %s619, 3
        %s624 = smul.addr %s621, 4
        %s625 = sadd.s32 %s623, %s624
        %s626 = smul.addr %s625, 4
        %s627 = scalar_lea.vmem %s2, %s626
      $region40: #{resnet_generator_forward.12} parent=35 // pred_fallthru
        _
    $region36: #{resnet_generator_forward.12} parent=5 // pred_fallthru
      _
  $region6: #{resnet_generator_forward.12} parent=0 // loop_footer
    %s12 = sadd.s32 1, %s8
  $region7: #{resnet_generator_forward.12} parent=0 // loop_footer_branch
    %7 = sbr.rel target = $region3
  $region8: #{resnet_generator_forward.12} parent=0 // loop_exit
    _

// kernel: resnet_generator_forward.13
$region0: #{resnet_generator_forward.13}
  #allocation0 [shape = 'u32[]', space=smem, size = 0x4, offset = 0x4, fixed_abs, tag = 'smem constant byte address 0x4 - core index']
  #allocation1 [shape = 'u32[72,128]{1,0:T(1,128)}', space=vmem, size = 0x9000, scoped, tag = 'internal scratch']
  #allocation2 [shape = 'bf16[288,128]{1,0:T(8,128)(2,1)}', space=vmem, size = 0x12000, scoped, tag = 'scratch operand']
  #allocation3 [shape = 'f32[32,128]{1,0:T(8,128)}', space=vmem, size = 0x4000, scoped, tag = 'scratch operand']
  %s0 = inlined_call_operand.vmem [shape: bf16[2,32,256], index: 0, kind: input, shape index: {}]
  %s1 = inlined_call_operand.vmem [shape: bf16[32,288], index: 1, kind: input, shape index: {}]
  %s2 = inlined_call_operand.vmem [shape: bf16[2,32,128], index: 2, kind: output, shape index: {}]
  %s3 = sld [smem:[#allocation0]]
  $region41: #{resnet_generator_forward.13} parent=0
    _
  %s5 = ssub.s32 1, %s3
  %s6 = scalar_select 0, %s5, %s3
  loop: start=0, step=1, limit=4
  $region2: #{resnet_generator_forward.13} parent=0 // loop_pre_header
    _
  $region3: #{resnet_generator_forward.13} parent=0 // loop_header
    %s8 = sphi 0, %s12
    %p9 = scmp.ge.s32.totalorder %s8, 4
    %s15 = sphi 0, %s27
    %s16 = sphi 0, %s23
    %s17 = sphi 0, %s15
    %s18 = sphi 0, %s16
    %s19 = sphi 0, %s17
    %s20 = sphi 0, %s18
    %s30 = sphi 0, %s32
    %s33 = sphi 0, %s30
    %s34 = sphi 0, %s33
    %s50 = sphi 0, %s34
    %s56 = sphi 0, %s58
    %s59 = sphi 0, %s56
    %s60 = sphi 0, %s59
    %s76 = sphi 0, %s60
    %s84 = sphi 0, %s86
    %s87 = sphi 0, %s84
    %s88 = sphi 0, %s87
    %s104 = sphi 0, %s88
  $region4: #{resnet_generator_forward.13} parent=0 // loop_header_branch
    %11 = sbr.rel (%p9) target = $region8
  $region5: #{resnet_generator_forward.13} parent=0 // loop_body
    %s13 = ssub.s32 %s8, 1
    %s14 = ssub.s32 %s8, 2
    %s21 = sadd.s32 1, %s16
    %p22 = scmp.ge.s32.totalorder %s21, 1
    %s23 = scalar_select %p22, 0, %s21
    %s24 = sadd.s32 1, %s15
    %s25 = scalar_select %p22, %s24, %s15
    %p26 = scmp.ge.s32.totalorder %s25, 2
    %s27 = scalar_select %p26, 0, %s25
    %s28 = ssub.s32 %s15, %s27
    %p29 = scmp.eq.s32.totalorder %s28, 0
    %s31 = sadd.s32 %s30, 1
    %s32 = scalar_select %p29, %s30, %s31
    %p35 = pneg %p29
    %p36 = scmp.eq.s32.totalorder %s8, 1
    %p37 = por %p35, %p36
    %p38 = scmp.ne.s32.totalorder %s30, %s33
    %p39 = scmp.eq.s32.totalorder %s8, 0
    %p40 = por %p38, %p39
    %p41 = scmp.ne.s32.totalorder %s30, %s33
    %p42 = scmp.eq.s32.totalorder %s13, 1
    %p43 = por %p41, %p42
    %p44 = scmp.ne.s32.totalorder %s33, %s34
    %p45 = scmp.eq.s32.totalorder %s13, 0
    %p46 = por %p44, %p45
    %p47 = scmp.ne.s32.totalorder %s33, %s34
    %p48 = scmp.eq.s32.totalorder %s14, 1
    %p49 = por %p47, %p48
    %p51 = scmp.ne.s32.totalorder %s34, %s50
    %p52 = scmp.eq.s32.totalorder %s14, 0
    %p53 = por %p51, %p52
    %s54 = ssub.s32 %s16, %s23
    %p55 = scmp.eq.s32.totalorder %s54, 0
    %s57 = sadd.s32 %s56, 1
    %s58 = scalar_select %p55, %s56, %s57
    %p61 = pneg %p55
    %p62 = scmp.eq.s32.totalorder %s8, 1
    %p63 = por %p61, %p62
    %p64 = scmp.ne.s32.totalorder %s56, %s59
    %p65 = scmp.eq.s32.totalorder %s8, 0
    %p66 = por %p64, %p65
    %p67 = scmp.ne.s32.totalorder %s56, %s59
    %p68 = scmp.eq.s32.totalorder %s13, 1
    %p69 = por %p67, %p68
    %p70 = scmp.ne.s32.totalorder %s59, %s60
    %p71 = scmp.eq.s32.totalorder %s13, 0
    %p72 = por %p70, %p71
    %p73 = scmp.ne.s32.totalorder %s59, %s60
    %p74 = scmp.eq.s32.totalorder %s14, 1
    %p75 = por %p73, %p74
    %p77 = scmp.ne.s32.totalorder %s60, %s76
    %p78 = scmp.eq.s32.totalorder %s14, 0
    %p79 = por %p77, %p78
    %s80 = ssub.s32 %s15, %s27
    %s81 = ssub.s32 %s16, %s23
    %s82 = sor.u32 %s80, %s81
    %p83 = scmp.eq.s32.totalorder %s82, 0
    %s85 = sadd.s32 %s84, 1
    %s86 = scalar_select %p83, %s84, %s85
    %p89 = pneg %p83
    %p90 = scmp.eq.s32.totalorder %s8, 1
    %p91 = por %p89, %p90
    %p92 = scmp.ne.s32.totalorder %s84, %s87
    %p93 = scmp.eq.s32.totalorder %s8, 0
    %p94 = por %p92, %p93
    %p95 = scmp.ne.s32.totalorder %s84, %s87
    %p96 = scmp.eq.s32.totalorder %s13, 1
    %p97 = por %p95, %p96
    %p98 = scmp.ne.s32.totalorder %s87, %s88
    %p99 = scmp.eq.s32.totalorder %s13, 0
    %p100 = por %p98, %p99
    %p101 = scmp.ne.s32.totalorder %s87, %s88
    %p102 = scmp.eq.s32.totalorder %s14, 1
    %p103 = por %p101, %p102
    %p105 = scmp.ne.s32.totalorder %s88, %s104
    %p106 = scmp.eq.s32.totalorder %s14, 0
    %p107 = por %p105, %p106
    %p108 = scmp.le.s32.totalorder 1, %s8
    %p109 = scmp.lt.s32.totalorder %s8, 3
    %p110 = pnand %p108, %p109
    %p111 = pneg %p110
    // Predicated region
    $region9: #{resnet_generator_forward.13} parent=5 // pred_check
      _
    $region10: #{resnet_generator_forward.13} parent=5 // pred_check_branch
      %113 = sbr.rel (%p110) target = $region12
    $region11: #{resnet_generator_forward.13} parent=5 // pred_region
      %s114 = ssub.s32 %s8, 1
      // Predicated region
      $region13: #{resnet_generator_forward.13} parent=11 // pred_check
        %p115 = pneg %p72
      $region14: #{resnet_generator_forward.13} parent=11 // pred_check_branch
        %117 = sbr.rel (%p115) target = $region16
      $region15: #{resnet_generator_forward.13} parent=11 // pred_region
        %s118 = smul.u32 4, %s18
        %p119 = scmp.lt.s32.totalorder %s118, 3
        %s120 = scalar_select %p119, %s118, 3
        %s121 = smul.addr %s120, 3
        %s122 = smul.addr %s121, 4
        %s123 = scalar_lea.vmem %s1, %s122
        %s124 = smul.u32 4, %s18
      $region16: #{resnet_generator_forward.13} parent=11 // pred_fallthru
        _
    $region12: #{resnet_generator_forward.13} parent=5 // pred_fallthru
      _
    %p125 = scmp.lt.s32.totalorder %s8, 2
    // Predicated region
    $region17: #{resnet_generator_forward.13} parent=5 // pred_check
      %p126 = pneg %p125
    $region18: #{resnet_generator_forward.13} parent=5 // pred_check_branch
      %128 = sbr.rel (%p126) target = $region20
    $region19: #{resnet_generator_forward.13} parent=5 // pred_region
      // Predicated region
      $region21: #{resnet_generator_forward.13} parent=19 // pred_check
        %p129 = pneg %p40
      $region22: #{resnet_generator_forward.13} parent=19 // pred_check_branch
        %131 = sbr.rel (%p129) target = $region24
      $region23: #{resnet_generator_forward.13} parent=19 // pred_region
        %p132 = scmp.lt.s32.totalorder %s15, 1
        %s133 = scalar_select %p132, %s15, 1
        %s134 = smul.addr %s133, 8
        %s135 = smul.addr %s134, 4
        %s136 = scalar_lea.vmem %s0, %s135
      $region24: #{resnet_generator_forward.13} parent=19 // pred_fallthru
        _
    $region20: #{resnet_generator_forward.13} parent=5 // pred_fallthru
      _
    %p137 = scmp.le.s32.totalorder 1, %s8
    %p138 = scmp.lt.s32.totalorder %s8, 3
    %p139 = pnand %p137, %p138
    %p140 = pneg %p139
    // Predicated region
    $region25: #{resnet_generator_forward.13} parent=5 // pred_check
      _
    $region26: #{resnet_generator_forward.13} parent=5 // pred_check_branch
      %142 = sbr.rel (%p139) target = $region28
    $region27: #{resnet_generator_forward.13} parent=5 // pred_region
      %s143 = ssub.s32 %s8, 1
      %p144 = scmp.lt.s32.totalorder %s17, 1
      %s145 = scalar_select %p144, %s17, 1
      %s146 = smul.addr %s145, 8
      %s147 = smul.addr %s146, 4
      %s148 = scalar_lea.vmem %s0, %s147
      %p149 = pneg %p46
      %p150 = pneg %p43
      %s151 = smul.u32 4, %s18
      %p152 = scmp.lt.s32.totalorder %s151, 3
      %s153 = scalar_select %p152, %s151, 3
      %s154 = smul.addr %s153, 3
      %s155 = smul.addr %s154, 4
      %s156 = scalar_lea.vmem %s1, %s155
      %p157 = pneg %p72
      %p158 = pneg %p69
      %p159 = pneg %p100
      %p160 = pneg %p97
      %s161 = smul.u32 4, %s18
      %p162 = scmp.lt.s32.totalorder %s17, 1
      %s163 = scalar_select %p162, %s17, 1
      %p164 = scmp.lt.s32.totalorder %s161, 3
      %s165 = scalar_select %p164, %s161, 3
      %s166 = smul.addr %s163, 4
      %s167 = sadd.s32 %s165, %s166
      %s168 = smul.addr %s167, 4
      %s169 = scalar_lea.vmem %s2, %s168
      %p170 = scmp.lt.s32.totalorder %s17, 1
      %s171 = scalar_select %p170, %s17, 1
      %s172 = smul.addr %s171, 8
      %s173 = smul.addr %s172, 4
      %s174 = scalar_lea.vmem %s0, %s173
      %s175 = smul.u32 4, %s18
      %p176 = scmp.lt.s32.totalorder %s175, 3
      %s177 = scalar_select %p176, %s175, 3
      %s178 = smul.addr %s177, 3
      %s179 = smul.addr %s178, 4
      %s180 = scalar_lea.vmem %s1, %s179
      %s181 = smul.u32 4, %s18
      %s182 = smul.u32 4, %s18
      %p183 = scmp.lt.s32.totalorder %s17, 1
      %s184 = scalar_select %p183, %s17, 1
      %p185 = scmp.lt.s32.totalorder %s182, 3
      %s186 = scalar_select %p185, %s182, 3
      %s187 = smul.addr %s184, 4
      %s188 = sadd.s32 %s186, %s187
      %s189 = smul.addr %s188, 4
      %s190 = scalar_lea.vmem %s2, %s189
      %s191 = smul.u32 4, %s18
      %v193 = vld [vmem:[%s174] sm:$0xf]
      %v194 = vld [vmem:[%s174 + $0x8] sm:$0xf]
      %v195 = vld [vmem:[%s174 + $0x10] sm:$0xf]
      %v196 = vld [vmem:[%s174 + $0x18] sm:$0xf]
      %197 = vst [vmem:[#allocation2] sm:$0xf] %v193
      %198 = vst [vmem:[#allocation2 + $0x4] sm:$0xf] %v194
      %199 = vst [vmem:[#allocation2 + $0x8] sm:$0xf] %v195
      %200 = vst [vmem:[#allocation2 + $0xc] sm:$0xf] %v196
      %v201 = vld [vmem:[%s174] sm:$0xff]
      %v202 = vld [vmem:[%s174 + $0x8] sm:$0xff]
      %v203 = vld [vmem:[%s174 + $0x10] sm:$0xff]
      %v204 = vld [vmem:[%s174 + $0x18] sm:$0xff]
      %209 = vrot.lane.b32.xlu0 %v201, 127
      %v210 = vpop.permute.xlu0 %209
      %211 = vrot.lane.b32.xlu0 %v202, 127
      %v212 = vpop.permute.xlu0 %211
      %213 = vrot.lane.b32.xlu0 %v203, 127
      %v214 = vpop.permute.xlu0 %213
      %215 = vrot.lane.b32.xlu0 %v204, 127
      %v216 = vpop.permute.xlu0 %215
      %v217 = vrot.slane %v210, 4
      %v218 = vrot.slane %v212, 4
      %v219 = vrot.slane %v214, 4
      %v220 = vrot.slane %v216, 4
      %vm221 = vcmask 1039360
      %v222 = vsel %vm221, %v210, %v217
      %v223 = vsel %vm221, %v212, %v218
      %v224 = vsel %vm221, %v214, %v219
      %v225 = vsel %vm221, %v216, %v220
      %230 = vst [vmem:[#allocation2 + $0x10] sm:$0xf] %v222
      %231 = vst [vmem:[#allocation2 + $0x14] sm:$0xf] %v223
      %232 = vst [vmem:[#allocation2 + $0x18] sm:$0xf] %v224
      %233 = vst [vmem:[#allocation2 + $0x1c] sm:$0xf] %v225
      %v234 = vld [vmem:[%s174] sm:$0xff]
      %v235 = vld [vmem:[%s174 + $0x8] sm:$0xff]
      %v236 = vld [vmem:[%s174 + $0x10] sm:$0xff]
      %v237 = vld [vmem:[%s174 + $0x18] sm:$0xff]
      %242 = vrot.lane.b32.xlu0 %v234, 126
      %v243 = vpop.permute.xlu0 %242
      %244 = vrot.lane.b32.xlu0 %v235, 126
      %v245 = vpop.permute.xlu0 %244
      %246 = vrot.lane.b32.xlu0 %v236, 126
      %v247 = vpop.permute.xlu0 %246
      %248 = vrot.lane.b32.xlu0 %v237, 126
      %v249 = vpop.permute.xlu0 %248
      %v250 = vrot.slane %v243, 4
      %v251 = vrot.slane %v245, 4
      %v252 = vrot.slane %v247, 4
      %v253 = vrot.slane %v249, 4
      %vm254 = vcmask 1031168
      %v255 = vsel %vm254, %v243, %v250
      %v256 = vsel %vm254, %v245, %v251
      %v257 = vsel %vm254, %v247, %v252
      %v258 = vsel %vm254, %v249, %v253
      %263 = vst [vmem:[#allocation2 + $0x20] sm:$0xf] %v255
      %264 = vst [vmem:[#allocation2 + $0x24] sm:$0xf] %v256
      %265 = vst [vmem:[#allocation2 + $0x28] sm:$0xf] %v257
      %266 = vst [vmem:[#allocation2 + $0x2c] sm:$0xf] %v258
      %v267 = vld [vmem:[%s174] sm:$0xff]
      %v268 = vld [vmem:[%s174 + $0x8] sm:$0xff]
      %v269 = vld [vmem:[%s174 + $0x10] sm:$0xff]
      %v270 = vld [vmem:[%s174 + $0x18] sm:$0xff]
      %275 = vrot.lane.b32.xlu0 %v267, 122
      %v276 = vpop.permute.xlu0 %275
      %277 = vrot.lane.b32.xlu0 %v268, 122
      %v278 = vpop.permute.xlu0 %277
      %279 = vrot.lane.b32.xlu0 %v269, 122
      %v280 = vpop.permute.xlu0 %279
      %281 = vrot.lane.b32.xlu0 %v270, 122
      %v282 = vpop.permute.xlu0 %281
      %v283 = vrot.slane %v276, 4
      %v284 = vrot.slane %v278, 4
      %v285 = vrot.slane %v280, 4
      %v286 = vrot.slane %v282, 4
      %vm287 = vcmask 998400
      %v288 = vsel %vm287, %v276, %v283
      %v289 = vsel %vm287, %v278, %v284
      %v290 = vsel %vm287, %v280, %v285
      %v291 = vsel %vm287, %v282, %v286
      %296 = vst [vmem:[#allocation2 + $0x30] sm:$0xf] %v288
      %297 = vst [vmem:[#allocation2 + $0x34] sm:$0xf] %v289
      %298 = vst [vmem:[#allocation2 + $0x38] sm:$0xf] %v290
      %299 = vst [vmem:[#allocation2 + $0x3c] sm:$0xf] %v291
      %v300 = vld [vmem:[%s174] sm:$0xff]
      %v301 = vld [vmem:[%s174 + $0x8] sm:$0xff]
      %v302 = vld [vmem:[%s174 + $0x10] sm:$0xff]
      %v303 = vld [vmem:[%s174 + $0x18] sm:$0xff]
      %308 = vrot.lane.b32.xlu0 %v300, 121
      %v309 = vpop.permute.xlu0 %308
      %310 = vrot.lane.b32.xlu0 %v301, 121
      %v311 = vpop.permute.xlu0 %310
      %312 = vrot.lane.b32.xlu0 %v302, 121
      %v313 = vpop.permute.xlu0 %312
      %314 = vrot.lane.b32.xlu0 %v303, 121
      %v315 = vpop.permute.xlu0 %314
      %v316 = vrot.slane %v309, 4
      %v317 = vrot.slane %v311, 4
      %v318 = vrot.slane %v313, 4
      %v319 = vrot.slane %v315, 4
      %vm320 = vcmask 990208
      %v321 = vsel %vm320, %v309, %v316
      %v322 = vsel %vm320, %v311, %v317
      %v323 = vsel %vm320, %v313, %v318
      %v324 = vsel %vm320, %v315, %v319
      %329 = vst [vmem:[#allocation2 + $0x40] sm:$0xf] %v321
      %330 = vst [vmem:[#allocation2 + $0x44] sm:$0xf] %v322
      %331 = vst [vmem:[#allocation2 + $0x48] sm:$0xf] %v323
      %332 = vst [vmem:[#allocation2 + $0x4c] sm:$0xf] %v324
      %v333 = vld [vmem:[%s174] sm:$0xff]
      %v334 = vld [vmem:[%s174 + $0x8] sm:$0xff]
      %v335 = vld [vmem:[%s174 + $0x10] sm:$0xff]
      %v336 = vld [vmem:[%s174 + $0x18] sm:$0xff]
      %341 = vrot.lane.b32.xlu0 %v333, 120
      %v342 = vpop.permute.xlu0 %341
      %343 = vrot.lane.b32.xlu0 %v334, 120
      %v344 = vpop.permute.xlu0 %343
      %345 = vrot.lane.b32.xlu0 %v335, 120
      %v346 = vpop.permute.xlu0 %345
      %347 = vrot.lane.b32.xlu0 %v336, 120
      %v348 = vpop.permute.xlu0 %347
      %v349 = vrot.slane %v342, 4
      %v350 = vrot.slane %v344, 4
      %v351 = vrot.slane %v346, 4
      %v352 = vrot.slane %v348, 4
      %vm353 = vcmask 982016
      %v354 = vsel %vm353, %v342, %v349
      %v355 = vsel %vm353, %v344, %v350
      %v356 = vsel %vm353, %v346, %v351
      %v357 = vsel %vm353, %v348, %v352
      %362 = vst [vmem:[#allocation2 + $0x50] sm:$0xf] %v354
      %363 = vst [vmem:[#allocation2 + $0x54] sm:$0xf] %v355
      %364 = vst [vmem:[#allocation2 + $0x58] sm:$0xf] %v356
      %365 = vst [vmem:[#allocation2 + $0x5c] sm:$0xf] %v357
      %v366 = vld [vmem:[%s174] sm:$0xff]
      %v367 = vld [vmem:[%s174 + $0x8] sm:$0xff]
      %v368 = vld [vmem:[%s174 + $0x10] sm:$0xff]
      %v369 = vld [vmem:[%s174 + $0x18] sm:$0xff]
      %374 = vrot.lane.b32.xlu0 %v366, 116
      %v375 = vpop.permute.xlu0 %374
      %376 = vrot.lane.b32.xlu0 %v367, 116
      %v377 = vpop.permute.xlu0 %376
      %378 = vrot.lane.b32.xlu0 %v368, 116
      %v379 = vpop.permute.xlu0 %378
      %380 = vrot.lane.b32.xlu0 %v369, 116
      %v381 = vpop.permute.xlu0 %380
      %v382 = vrot.slane %v375, 4
      %v383 = vrot.slane %v377, 4
      %v384 = vrot.slane %v379, 4
      %v385 = vrot.slane %v381, 4
      %vm386 = vcmask 949248
      %v387 = vsel %vm386, %v375, %v382
      %v388 = vsel %vm386, %v377, %v383
      %v389 = vsel %vm386, %v379, %v384
      %v390 = vsel %vm386, %v381, %v385
      %395 = vst [vmem:[#allocation2 + $0x60] sm:$0xf] %v387
      %396 = vst [vmem:[#allocation2 + $0x64] sm:$0xf] %v388
      %397 = vst [vmem:[#allocation2 + $0x68] sm:$0xf] %v389
      %398 = vst [vmem:[#allocation2 + $0x6c] sm:$0xf] %v390
      %v399 = vld [vmem:[%s174] sm:$0xff]
      %v400 = vld [vmem:[%s174 + $0x8] sm:$0xff]
      %v401 = vld [vmem:[%s174 + $0x10] sm:$0xff]
      %v402 = vld [vmem:[%s174 + $0x18] sm:$0xff]
      %407 = vrot.lane.b32.xlu0 %v399, 115
      %v408 = vpop.permute.xlu0 %407
      %409 = vrot.lane.b32.xlu0 %v400, 115
      %v410 = vpop.permute.xlu0 %409
      %411 = vrot.lane.b32.xlu0 %v401, 115
      %v412 = vpop.permute.xlu0 %411
      %413 = vrot.lane.b32.xlu0 %v402, 115
      %v414 = vpop.permute.xlu0 %413
      %v415 = vrot.slane %v408, 4
      %v416 = vrot.slane %v410, 4
      %v417 = vrot.slane %v412, 4
      %v418 = vrot.slane %v414, 4
      %vm419 = vcmask 941056
      %v420 = vsel %vm419, %v408, %v415
      %v421 = vsel %vm419, %v410, %v416
      %v422 = vsel %vm419, %v412, %v417
      %v423 = vsel %vm419, %v414, %v418
      %428 = vst [vmem:[#allocation2 + $0x70] sm:$0xf] %v420
      %429 = vst [vmem:[#allocation2 + $0x74] sm:$0xf] %v421
      %430 = vst [vmem:[#allocation2 + $0x78] sm:$0xf] %v422
      %431 = vst [vmem:[#allocation2 + $0x7c] sm:$0xf] %v423
      %v432 = vld [vmem:[%s174] sm:$0xff]
      %v433 = vld [vmem:[%s174 + $0x8] sm:$0xff]
      %v434 = vld [vmem:[%s174 + $0x10] sm:$0xff]
      %v435 = vld [vmem:[%s174 + $0x18] sm:$0xff]
      %440 = vrot.lane.b32.xlu0 %v432, 114
      %v441 = vpop.permute.xlu0 %440
      %442 = vrot.lane.b32.xlu0 %v433, 114
      %v443 = vpop.permute.xlu0 %442
      %444 = vrot.lane.b32.xlu0 %v434, 114
      %v445 = vpop.permute.xlu0 %444
      %446 = vrot.lane.b32.xlu0 %v435, 114
      %v447 = vpop.permute.xlu0 %446
      %v448 = vrot.slane %v441, 4
      %v449 = vrot.slane %v443, 4
      %v450 = vrot.slane %v445, 4
      %v451 = vrot.slane %v447, 4
      %vm452 = vcmask 932864
      %v453 = vsel %vm452, %v441, %v448
      %v454 = vsel %vm452, %v443, %v449
      %v455 = vsel %vm452, %v445, %v450
      %v456 = vsel %vm452, %v447, %v451
      %461 = vst [vmem:[#allocation2 + $0x80] sm:$0xf] %v453
      %462 = vst [vmem:[#allocation2 + $0x84] sm:$0xf] %v454
      %463 = vst [vmem:[#allocation2 + $0x88] sm:$0xf] %v455
      %464 = vst [vmem:[#allocation2 + $0x8c] sm:$0xf] %v456
      %v465 = vld [vmem:[%s180] sm:$0xff]
      %v466 = vld [vmem:[%s180 + $0x8] sm:$0xf]
      %v467 = vld [vmem:[%s180 + $0xc] sm:$0xff]
      %v468 = vld [vmem:[%s180 + $0x14] sm:$0xf]
      %v469 = vld [vmem:[%s180 + $0x18] sm:$0xff]
      %v470 = vld [vmem:[%s180 + $0x20] sm:$0xf]
      %v471 = vld [vmem:[%s180 + $0x24] sm:$0xff]
      %v472 = vld [vmem:[%s180 + $0x2c] sm:$0xf]
      %v473 = vld [vmem:[#allocation2] sm:$0xf]
      %v474 = vld [vmem:[#allocation2 + $0x4] sm:$0xf]
      %v475 = vld [vmem:[#allocation2 + $0x8] sm:$0xf]
      %v476 = vld [vmem:[#allocation2 + $0xc] sm:$0xf]
      %v477 = vld [vmem:[#allocation2 + $0x10] sm:$0xf]
      %v478 = vld [vmem:[#allocation2 + $0x14] sm:$0xf]
      %v479 = vld [vmem:[#allocation2 + $0x18] sm:$0xf]
      %v480 = vld [vmem:[#allocation2 + $0x1c] sm:$0xf]
      %v481 = vld [vmem:[#allocation2 + $0x20] sm:$0xf]
      %v482 = vld [vmem:[#allocation2 + $0x24] sm:$0xf]
      %v483 = vld [vmem:[#allocation2 + $0x28] sm:$0xf]
      %v484 = vld [vmem:[#allocation2 + $0x2c] sm:$0xf]
      %v485 = vld [vmem:[#allocation2 + $0x30] sm:$0xf]
      %v486 = vld [vmem:[#allocation2 + $0x34] sm:$0xf]
      %v487 = vld [vmem:[#allocation2 + $0x38] sm:$0xf]
      %v488 = vld [vmem:[#allocation2 + $0x3c] sm:$0xf]
      %v489 = vld [vmem:[#allocation2 + $0x40] sm:$0xf]
      %v490 = vld [vmem:[#allocation2 + $0x44] sm:$0xf]
      %v491 = vld [vmem:[#allocation2 + $0x48] sm:$0xf]
      %v492 = vld [vmem:[#allocation2 + $0x4c] sm:$0xf]
      %v493 = vld [vmem:[#allocation2 + $0x50] sm:$0xf]
      %v494 = vld [vmem:[#allocation2 + $0x54] sm:$0xf]
      %v495 = vld [vmem:[#allocation2 + $0x58] sm:$0xf]
      %v496 = vld [vmem:[#allocation2 + $0x5c] sm:$0xf]
      %v497 = vld [vmem:[#allocation2 + $0x60] sm:$0xf]
      %v498 = vld [vmem:[#allocation2 + $0x64] sm:$0xf]
      %v499 = vld [vmem:[#allocation2 + $0x68] sm:$0xf]
      %v500 = vld [vmem:[#allocation2 + $0x6c] sm:$0xf]
      %v501 = vld [vmem:[#allocation2 + $0x70] sm:$0xf]
      %v502 = vld [vmem:[#allocation2 + $0x74] sm:$0xf]
      %v503 = vld [vmem:[#allocation2 + $0x78] sm:$0xf]
      %v504 = vld [vmem:[#allocation2 + $0x7c] sm:$0xf]
      %v505 = vld [vmem:[#allocation2 + $0x80] sm:$0xf]
      %v506 = vld [vmem:[#allocation2 + $0x84] sm:$0xf]
      %v507 = vld [vmem:[#allocation2 + $0x88] sm:$0xf]
      %v508 = vld [vmem:[#allocation2 + $0x8c] sm:$0xf]
      %v517 = vunpack.c.l.b16 %v465
      %v518 = vunpack.c.h.b16 %v465
      %v519 = vunpack.c.l.b16 %v466
      %v520 = vunpack.c.l.b16 %v467
      %v521 = vunpack.c.h.b16 %v467
      %v522 = vunpack.c.l.b16 %v468
      %v523 = vunpack.c.l.b16 %v469
      %v524 = vunpack.c.h.b16 %v469
      %v525 = vunpack.c.l.b16 %v470
      %v526 = vunpack.c.l.b16 %v471
      %v527 = vunpack.c.h.b16 %v471
      %v528 = vunpack.c.l.b16 %v472
      %v529 = vpack.c.b16 %v520, %v517
      %v530 = vpack.c.b16 %v521, %v518
      %v531 = vpack.c.b16 %v522, %v519
      %v532 = vpack.c.b16 %v526, %v523
      %v533 = vpack.c.b16 %v527, %v524
      %v534 = vpack.c.b16 %v528, %v525
      %v575 = vunpack.c.l.b16 %v473
      %v576 = vunpack.c.l.b16 %v474
      %v577 = vunpack.c.l.b16 %v475
      %v578 = vunpack.c.l.b16 %v476
      %v579 = vunpack.c.l.b16 %v477
      %v580 = vunpack.c.l.b16 %v478
      %v581 = vunpack.c.l.b16 %v479
      %v582 = vunpack.c.l.b16 %v480
      %v583 = vunpack.c.l.b16 %v481
      %v584 = vunpack.c.l.b16 %v482
      %v585 = vunpack.c.l.b16 %v483
      %v586 = vunpack.c.l.b16 %v484
      %v587 = vunpack.c.l.b16 %v485
      %v588 = vunpack.c.l.b16 %v486
      %v589 = vunpack.c.l.b16 %v487
      %v590 = vunpack.c.l.b16 %v488
      %v591 = vunpack.c.l.b16 %v489
      %v592 = vunpack.c.l.b16 %v490
      %v593 = vunpack.c.l.b16 %v491
      %v594 = vunpack.c.l.b16 %v492
      %v595 = vunpack.c.l.b16 %v493
      %v596 = vunpack.c.l.b16 %v494
      %v597 = vunpack.c.l.b16 %v495
      %v598 = vunpack.c.l.b16 %v496
      %v599 = vunpack.c.l.b16 %v497
      %v600 = vunpack.c.l.b16 %v498
      %v601 = vunpack.c.l.b16 %v499
      %v602 = vunpack.c.l.b16 %v500
      %v603 = vunpack.c.l.b16 %v501
      %v604 = vunpack.c.l.b16 %v502
      %v605 = vunpack.c.l.b16 %v503
      %v606 = vunpack.c.l.b16 %v504
      %v607 = vunpack.c.l.b16 %v505
      %v608 = vunpack.c.l.b16 %v506
      %v609 = vunpack.c.l.b16 %v507
      %v610 = vunpack.c.l.b16 %v508
      %v611 = vpack.c.b16 %v576, %v575
      %v612 = vpack.c.b16 %v578, %v577
      %v613 = vpack.c.b16 %v580, %v579
      %v614 = vpack.c.b16 %v582, %v581
      %v615 = vpack.c.b16 %v584, %v583
      %v616 = vpack.c.b16 %v586, %v585
      %v617 = vpack.c.b16 %v588, %v587
      %v618 = vpack.c.b16 %v590, %v589
      %v619 = vpack.c.b16 %v592, %v591
      %v620 = vpack.c.b16 %v594, %v593
      %v621 = vpack.c.b16 %v596, %v595
      %v622 = vpack.c.b16 %v598, %v597
      %v623 = vpack.c.b16 %v600, %v599
      %v624 = vpack.c.b16 %v602, %v601
      %v625 = vpack.c.b16 %v604, %v603
      %v626 = vpack.c.b16 %v606, %v605
      %v627 = vpack.c.b16 %v608, %v607
      %v628 = vpack.c.b16 %v610, %v609
      %vm647 = vcmask 261120
      %v649 = vsel %vm647, %v531, 0
      %v652 = vsel %vm647, %v534, 0
      %654 = vmatpush.bf16.msra.mxu0 %v618
      %655 = vmatpush.bf16.msra.mxu0 %v617
      %656 = vmatpush.bf16.msra.mxu0 %v616
      %657 = vmatpush.bf16.msra.mxu0 %v615
      %658 = vmatpush.bf16.msra.mxu0 %v614
      %659 = vmatpush.bf16.msra.mxu0 %v613
      %660 = vmatpush.bf16.msra.mxu0 %v612
      %661 = vmatpush.bf16.msra.mxu0 %v611
      %662 = vmatmul.bf16.gmra.mxu0 %v529
      %v663 = vpop.f32.mrf.mxu0
      %v664 = vadd.f32 0.0, %v663
      %v665 = vpop.f32.mrf.mxu0
      %v666 = vadd.f32 0.0, %v665
      %667 = vmatmul.bf16.gmra.mxu0 %v532
      %v668 = vpop.f32.mrf.mxu0
      %v669 = vadd.f32 0.0, %v668
      %v670 = vpop.f32.mrf.mxu0
      %v671 = vadd.f32 0.0, %v670
      %672 = vdwg.mxu0
      %673 = vmatpush.bf16.msra.mxu0 %v626
      %674 = vmatpush.bf16.msra.mxu0 %v625
      %675 = vmatpush.bf16.msra.mxu0 %v624
      %676 = vmatpush.bf16.msra.mxu0 %v623
      %677 = vmatpush.bf16.msra.mxu0 %v622
      %678 = vmatpush.bf16.msra.mxu0 %v621
      %679 = vmatpush.bf16.msra.mxu0 %v620
      %680 = vmatpush.bf16.msra.mxu0 %v619
      %681 = vmatmul.bf16.gmra.mxu0 %v530
      %v682 = vpop.f32.mrf.mxu0
      %v683 = vadd.f32 %v664, %v682
      %v684 = vpop.f32.mrf.mxu0
      %v685 = vadd.f32 %v666, %v684
      %686 = vmatmul.bf16.gmra.mxu0 %v533
      %v687 = vpop.f32.mrf.mxu0
      %v688 = vadd.f32 %v669, %v687
      %v689 = vpop.f32.mrf.mxu0
      %v690 = vadd.f32 %v671, %v689
      %691 = vdwg.mxu0
      %692 = vmatpush.bf16.msra.mxu0 0
      %693 = vmatpush.bf16.msra.mxu0 0
      %694 = vmatpush.bf16.msra.mxu0 0
      %695 = vmatpush.bf16.msra.mxu0 0
      %696 = vmatpush.bf16.msra.mxu0 0
      %697 = vmatpush.bf16.msra.mxu0 0
      %698 = vmatpush.bf16.msra.mxu0 %v628
      %699 = vmatpush.bf16.msra.mxu0 %v627
      %700 = vmatmul.bf16.gmra.mxu0 %v649
      %v701 = vpop.f32.mrf.mxu0
      %v702 = vadd.f32 %v683, %v701
      %v703 = vpop.f32.mrf.mxu0
      %v704 = vadd.f32 %v685, %v703
      %705 = vmatmul.bf16.gmra.mxu0 %v652
      %v706 = vpop.f32.mrf.mxu0
      %v707 = vadd.f32 %v688, %v706
      %v708 = vpop.f32.mrf.mxu0
      %v709 = vadd.f32 %v690, %v708
      %710 = vdwg.mxu0
      %v711 = vlaneseq
      %v712 = vand.u32 %v711, 127
      %v713 = vstv 0
      %v714 = vadd.s32 %v713, %v712
      %vm715 = vcmp.lt.s32.totalorder %v714, 0
      %v716 = vsub.s32 0, %v714
      %v717 = vsel %vm715, %v716, %v714
      %v718 = vand.u32 %v717, 65535
      %v719 = vshrl.u32 %v717, 16
      %v721 = vmul.u32 %v718, 43691
      %v722 = vmul.u32 %v718, 43690
      %v723 = vmul.u32 %v719, 43691
      %v724 = vmul.u32 %v719, 43690
      %v725 = vshll.u32 %v722, 16
      %v726 = vshrl.u32 %v722, 16
      %v727 = vshll.u32 %v723, 16
      %v728 = vshrl.u32 %v723, 16
      %vm729 = vc.u32 %v721, %v725
      %v730 = vsel %vm729, 1, 0
      %v731 = vadd.s32 %v721, %v725
      %v732 = vadd.s32 %v724, %v730
      %vm733 = vc.u32 %v731, %v727
      %v734 = vsel %vm733, 1, 0
      %v735 = vadd.s32 %v731, %v727
      %v736 = vadd.s32 %v732, %v734
      %v737 = vadd.s32 %v736, %v726
      %v738 = vadd.s32 %v737, %v728
      %v739 = vshrl.u32 %v738, 2
      %v740 = vmul.u32 %v739, 6
      %v741 = vsub.s32 %v717, %v740
      %v742 = vsub.s32 0, %v741
      %v743 = vsel %vm715, %v742, %v741
      %vm744 = vcmp.ne.s32.totalorder %v743, 0
      %vm745 = vcmp.lt.s32.totalorder %v743, 0
      %vm746 = vmand %vm745, %vm744
      %v747 = vadd.s32 %v743, 6
      %v748 = vsel %vm746, %v747, %v743
      %vm749 = vcmp.lt.s32.totalorder %v748, 4
      %vm750 = vcmp.lt.s32.totalorder %v714, 24
      %vm751 = vmand %vm749, %vm750
      %v752 = vsel %vm751, 1, 0
      %v753 = vcvt.s32.f32 %v752
      %v754 = vmul.f32 %v702, %v753
      %v755 = vmul.f32 %v704, %v753
      %v756 = vmul.f32 %v707, %v753
      %v757 = vmul.f32 %v709, %v753
      %758 = vadd.xlane.f32.xlu0 %v754
      %v759 = vpop.xlane.xlu0 %758
      %760 = vadd.xlane.f32.xlu0 %v755
      %v761 = vpop.xlane.xlu0 %760
      %762 = vadd.xlane.f32.xlu0 %v756
      %v763 = vpop.xlane.xlu0 %762
      %764 = vadd.xlane.f32.xlu0 %v757
      %v765 = vpop.xlane.xlu0 %764
      %v766 = vadd.f32 %v759, 0.0
      %v767 = vadd.f32 %v761, 0.0
      %v768 = vadd.f32 %v763, 0.0
      %v769 = vadd.f32 %v765, 0.0
      %v770 = vmul.f32 %v702, %v754
      %v771 = vmul.f32 %v704, %v755
      %v772 = vmul.f32 %v707, %v756
      %v773 = vmul.f32 %v709, %v757
      %774 = vadd.xlane.f32.xlu0 %v770
      %v775 = vpop.xlane.xlu0 %774
      %776 = vadd.xlane.f32.xlu0 %v771
      %v777 = vpop.xlane.xlu0 %776
      %778 = vadd.xlane.f32.xlu0 %v772
      %v779 = vpop.xlane.xlu0 %778
      %780 = vadd.xlane.f32.xlu0 %v773
      %v781 = vpop.xlane.xlu0 %780
      %v782 = vadd.f32 %v775, 0.0
      %v783 = vadd.f32 %v777, 0.0
      %v784 = vadd.f32 %v779, 0.0
      %v785 = vadd.f32 %v781, 0.0
      %786 = vst [vmem:[#allocation3] sm:$0xff] %v702
      %787 = vst [vmem:[#allocation3 + $0x8] sm:$0xff] %v704
      %788 = vst [vmem:[#allocation3 + $0x10] sm:$0xff] %v707
      %789 = vst [vmem:[#allocation3 + $0x18] sm:$0xff] %v709
      %v790 = vmul.f32 %v766, 0.0625
      %v791 = vmul.f32 %v767, 0.0625
      %v792 = vmul.f32 %v768, 0.0625
      %v793 = vmul.f32 %v769, 0.0625
      %v794 = vmul.f32 %v782, 0.0625
      %v795 = vmul.f32 %v783, 0.0625
      %v796 = vmul.f32 %v784, 0.0625
      %v797 = vmul.f32 %v785, 0.0625
      %v798 = vmul.f32 %v790, %v790
      %v799 = vmul.f32 %v791, %v791
      %v800 = vmul.f32 %v792, %v792
      %v801 = vmul.f32 %v793, %v793
      %v802 = vsub.f32 %v794, %v798
      %v803 = vsub.f32 %v795, %v799
      %v804 = vsub.f32 %v796, %v800
      %v805 = vsub.f32 %v797, %v801
      %v806 = vmax.f32 %v802, 0.0
      %v807 = vmax.f32 %v803, 0.0
      %v808 = vmax.f32 %v804, 0.0
      %v809 = vmax.f32 %v805, 0.0
      %v810 = vadd.f32 %v806, 1e-05
      %v811 = vadd.f32 %v807, 1e-05
      %v812 = vadd.f32 %v808, 1e-05
      %v813 = vadd.f32 %v809, 1e-05
      %v814 = vrsqrt.pop %v810
      %v815 = vmul.f32 %v814, %v810
      %v816 = vmul.f32 %v815, %v814
      %v817 = vmul.f32 0.5, %v816
      %v818 = vsub.f32 1.5, %v817
      %v819 = vmul.f32 %v814, %v818
      %vm820 = vweird.f32 %v810
      %vm821 = vweird.f32 %v814
      %vm822 = vmor %vm820, %vm821
      %v823 = vsel %vm822, %v814, %v819
      %v824 = vrsqrt.pop %v811
      %v825 = vmul.f32 %v824, %v811
      %v826 = vmul.f32 %v825, %v824
      %v827 = vmul.f32 0.5, %v826
      %v828 = vsub.f32 1.5, %v827
      %v829 = vmul.f32 %v824, %v828
      %vm830 = vweird.f32 %v811
      %vm831 = vweird.f32 %v824
      %vm832 = vmor %vm830, %vm831
      %v833 = vsel %vm832, %v824, %v829
      %v834 = vrsqrt.pop %v812
      %v835 = vmul.f32 %v834, %v812
      %v836 = vmul.f32 %v835, %v834
      %v837 = vmul.f32 0.5, %v836
      %v838 = vsub.f32 1.5, %v837
      %v839 = vmul.f32 %v834, %v838
      %vm840 = vweird.f32 %v812
      %vm841 = vweird.f32 %v834
      %vm842 = vmor %vm840, %vm841
      %v843 = vsel %vm842, %v834, %v839
      %v844 = vrsqrt.pop %v813
      %v845 = vmul.f32 %v844, %v813
      %v846 = vmul.f32 %v845, %v844
      %v847 = vmul.f32 0.5, %v846
      %v848 = vsub.f32 1.5, %v847
      %v849 = vmul.f32 %v844, %v848
      %vm850 = vweird.f32 %v813
      %vm851 = vweird.f32 %v844
      %vm852 = vmor %vm850, %vm851
      %v853 = vsel %vm852, %v844, %v849
      %v854 = vld [vmem:[#allocation3] sm:$0xff]
      %v855 = vld [vmem:[#allocation3 + $0x8] sm:$0xff]
      %v856 = vld [vmem:[#allocation3 + $0x10] sm:$0xff]
      %v857 = vld [vmem:[#allocation3 + $0x18] sm:$0xff]
      %v858 = vsub.f32 %v854, %v790
      %v859 = vsub.f32 %v855, %v791
      %v860 = vsub.f32 %v856, %v792
      %v861 = vsub.f32 %v857, %v793
      %v862 = vmul.f32 %v858, %v823
      %v863 = vmul.f32 %v859, %v833
      %v864 = vmul.f32 %v860, %v843
      %v865 = vmul.f32 %v861, %v853
      %v866 = vmax.f32 %v862, 0.0
      %v867 = vmax.f32 %v863, 0.0
      %v868 = vmax.f32 %v864, 0.0
      %v869 = vmax.f32 %v865, 0.0
      %v870 = vpack.c.bf16 %v866, %v866
      %v871 = vpack.c.bf16 %v867, %v867
      %v872 = vpack.c.bf16 %v868, %v868
      %v873 = vpack.c.bf16 %v869, %v869
      %874 = vst [vmem:[%s190] sm:$0xf] %v870
      %875 = vst [vmem:[%s190 + $0x4] sm:$0xf] %v871
      %876 = vst [vmem:[%s190 + $0x8] sm:$0xf] %v872
      %877 = vst [vmem:[%s190 + $0xc] sm:$0xf] %v873
      %s878 = smul.u32 4, %s18
      %p879 = scmp.lt.s32.totalorder %s17, 1
      %s880 = scalar_select %p879, %s17, 1
      %p881 = scmp.lt.s32.totalorder %s878, 3
      %s882 = scalar_select %p881, %s878, 3
      %s883 = smul.addr %s880, 4
      %s884 = sadd.s32 %s882, %s883
      %s885 = smul.addr %s884, 4
      %s886 = scalar_lea.vmem %s2, %s885
      // Predicated region
      $region29: #{resnet_generator_forward.13} parent=27 // pred_check
        %p887 = pneg %p97
      $region30: #{resnet_generator_forward.13} parent=27 // pred_check_branch
        %889 = sbr.rel (%p887) target = $region32
      $region31: #{resnet_generator_forward.13} parent=27 // pred_region
        %s890 = smul.u32 4, %s18
      $region32: #{resnet_generator_forward.13} parent=27 // pred_fallthru
        _
    $region28: #{resnet_generator_forward.13} parent=5 // pred_fallthru
      _
    %p891 = scmp.le.s32.totalorder 2, %s8
    // Predicated region
    $region33: #{resnet_generator_forward.13} parent=5 // pred_check
      %p892 = pneg %p891
    $region34: #{resnet_generator_forward.13} parent=5 // pred_check_branch
      %894 = sbr.rel (%p892) target = $region36
    $region35: #{resnet_generator_forward.13} parent=5 // pred_region
      %s895 = ssub.s32 %s8, 2
      // Predicated region
      $region37: #{resnet_generator_forward.13} parent=35 // pred_check
        %p896 = pneg %p103
      $region38: #{resnet_generator_forward.13} parent=35 // pred_check_branch
        %898 = sbr.rel (%p896) target = $region40
      $region39: #{resnet_generator_forward.13} parent=35 // pred_region
        %s899 = smul.u32 4, %s20
        %p900 = scmp.lt.s32.totalorder %s19, 1
        %s901 = scalar_select %p900, %s19, 1
        %p902 = scmp.lt.s32.totalorder %s899, 3
        %s903 = scalar_select %p902, %s899, 3
        %s904 = smul.addr %s901, 4
        %s905 = sadd.s32 %s903, %s904
        %s906 = smul.addr %s905, 4
        %s907 = scalar_lea.vmem %s2, %s906
      $region40: #{resnet_generator_forward.13} parent=35 // pred_fallthru
        _
    $region36: #{resnet_generator_forward.13} parent=5 // pred_fallthru
      _
  $region6: #{resnet_generator_forward.13} parent=0 // loop_footer
    %s12 = sadd.s32 1, %s8
  $region7: #{resnet_generator_forward.13} parent=0 // loop_footer_branch
    %7 = sbr.rel target = $region3
  $region8: #{resnet_generator_forward.13} parent=0 // loop_exit
    _

// kernel: resnet_generator_forward.14
$region0: #{resnet_generator_forward.14}
  #allocation0 [shape = 'u32[]', space=smem, size = 0x4, offset = 0x4, fixed_abs, tag = 'smem constant byte address 0x4 - core index']
  #allocation1 [shape = 'u32[72,128]{1,0:T(1,128)}', space=vmem, size = 0x9000, scoped, tag = 'internal scratch']
  #allocation2 [shape = 'bf16[288,128]{1,0:T(8,128)(2,1)}', space=vmem, size = 0x12000, scoped, tag = 'scratch operand']
  #allocation3 [shape = 'f32[32,128]{1,0:T(8,128)}', space=vmem, size = 0x4000, scoped, tag = 'scratch operand']
  %s0 = inlined_call_operand.vmem [shape: bf16[2,32,256], index: 0, kind: input, shape index: {}]
  %s1 = inlined_call_operand.vmem [shape: bf16[32,288], index: 1, kind: input, shape index: {}]
  %s2 = inlined_call_operand.vmem [shape: bf16[2,32,128], index: 2, kind: input, shape index: {}]
  %s3 = inlined_call_operand.vmem [shape: bf16[2,32,128], index: 3, kind: output, shape index: {}]
  %s4 = sld [smem:[#allocation0]]
  $region45: #{resnet_generator_forward.14} parent=0
    _
  %s6 = ssub.s32 1, %s4
  %s7 = scalar_select 0, %s6, %s4
  loop: start=0, step=1, limit=4
  $region2: #{resnet_generator_forward.14} parent=0 // loop_pre_header
    _
  $region3: #{resnet_generator_forward.14} parent=0 // loop_header
    %s9 = sphi 0, %s13
    %p10 = scmp.ge.s32.totalorder %s9, 4
    %s16 = sphi 0, %s28
    %s17 = sphi 0, %s24
    %s18 = sphi 0, %s16
    %s19 = sphi 0, %s17
    %s20 = sphi 0, %s18
    %s21 = sphi 0, %s19
    %s31 = sphi 0, %s33
    %s34 = sphi 0, %s31
    %s35 = sphi 0, %s34
    %s51 = sphi 0, %s35
    %s57 = sphi 0, %s59
    %s60 = sphi 0, %s57
    %s61 = sphi 0, %s60
    %s77 = sphi 0, %s61
    %s85 = sphi 0, %s87
    %s88 = sphi 0, %s85
    %s89 = sphi 0, %s88
    %s105 = sphi 0, %s89
    %s113 = sphi 0, %s115
    %s116 = sphi 0, %s113
    %s117 = sphi 0, %s116
    %s133 = sphi 0, %s117
  $region4: #{resnet_generator_forward.14} parent=0 // loop_header_branch
    %12 = sbr.rel (%p10) target = $region8
  $region5: #{resnet_generator_forward.14} parent=0 // loop_body
    %s14 = ssub.s32 %s9, 1
    %s15 = ssub.s32 %s9, 2
    %s22 = sadd.s32 1, %s17
    %p23 = scmp.ge.s32.totalorder %s22, 1
    %s24 = scalar_select %p23, 0, %s22
    %s25 = sadd.s32 1, %s16
    %s26 = scalar_select %p23, %s25, %s16
    %p27 = scmp.ge.s32.totalorder %s26, 2
    %s28 = scalar_select %p27, 0, %s26
    %s29 = ssub.s32 %s16, %s28
    %p30 = scmp.eq.s32.totalorder %s29, 0
    %s32 = sadd.s32 %s31, 1
    %s33 = scalar_select %p30, %s31, %s32
    %p36 = pneg %p30
    %p37 = scmp.eq.s32.totalorder %s9, 1
    %p38 = por %p36, %p37
    %p39 = scmp.ne.s32.totalorder %s31, %s34
    %p40 = scmp.eq.s32.totalorder %s9, 0
    %p41 = por %p39, %p40
    %p42 = scmp.ne.s32.totalorder %s31, %s34
    %p43 = scmp.eq.s32.totalorder %s14, 1
    %p44 = por %p42, %p43
    %p45 = scmp.ne.s32.totalorder %s34, %s35
    %p46 = scmp.eq.s32.totalorder %s14, 0
    %p47 = por %p45, %p46
    %p48 = scmp.ne.s32.totalorder %s34, %s35
    %p49 = scmp.eq.s32.totalorder %s15, 1
    %p50 = por %p48, %p49
    %p52 = scmp.ne.s32.totalorder %s35, %s51
    %p53 = scmp.eq.s32.totalorder %s15, 0
    %p54 = por %p52, %p53
    %s55 = ssub.s32 %s17, %s24
    %p56 = scmp.eq.s32.totalorder %s55, 0
    %s58 = sadd.s32 %s57, 1
    %s59 = scalar_select %p56, %s57, %s58
    %p62 = pneg %p56
    %p63 = scmp.eq.s32.totalorder %s9, 1
    %p64 = por %p62, %p63
    %p65 = scmp.ne.s32.totalorder %s57, %s60
    %p66 = scmp.eq.s32.totalorder %s9, 0
    %p67 = por %p65, %p66
    %p68 = scmp.ne.s32.totalorder %s57, %s60
    %p69 = scmp.eq.s32.totalorder %s14, 1
    %p70 = por %p68, %p69
    %p71 = scmp.ne.s32.totalorder %s60, %s61
    %p72 = scmp.eq.s32.totalorder %s14, 0
    %p73 = por %p71, %p72
    %p74 = scmp.ne.s32.totalorder %s60, %s61
    %p75 = scmp.eq.s32.totalorder %s15, 1
    %p76 = por %p74, %p75
    %p78 = scmp.ne.s32.totalorder %s61, %s77
    %p79 = scmp.eq.s32.totalorder %s15, 0
    %p80 = por %p78, %p79
    %s81 = ssub.s32 %s16, %s28
    %s82 = ssub.s32 %s17, %s24
    %s83 = sor.u32 %s81, %s82
    %p84 = scmp.eq.s32.totalorder %s83, 0
    %s86 = sadd.s32 %s85, 1
    %s87 = scalar_select %p84, %s85, %s86
    %p90 = pneg %p84
    %p91 = scmp.eq.s32.totalorder %s9, 1
    %p92 = por %p90, %p91
    %p93 = scmp.ne.s32.totalorder %s85, %s88
    %p94 = scmp.eq.s32.totalorder %s9, 0
    %p95 = por %p93, %p94
    %p96 = scmp.ne.s32.totalorder %s85, %s88
    %p97 = scmp.eq.s32.totalorder %s14, 1
    %p98 = por %p96, %p97
    %p99 = scmp.ne.s32.totalorder %s88, %s89
    %p100 = scmp.eq.s32.totalorder %s14, 0
    %p101 = por %p99, %p100
    %p102 = scmp.ne.s32.totalorder %s88, %s89
    %p103 = scmp.eq.s32.totalorder %s15, 1
    %p104 = por %p102, %p103
    %p106 = scmp.ne.s32.totalorder %s89, %s105
    %p107 = scmp.eq.s32.totalorder %s15, 0
    %p108 = por %p106, %p107
    %s109 = ssub.s32 %s16, %s28
    %s110 = ssub.s32 %s17, %s24
    %s111 = sor.u32 %s109, %s110
    %p112 = scmp.eq.s32.totalorder %s111, 0
    %s114 = sadd.s32 %s113, 1
    %s115 = scalar_select %p112, %s113, %s114
    %p118 = pneg %p112
    %p119 = scmp.eq.s32.totalorder %s9, 1
    %p120 = por %p118, %p119
    %p121 = scmp.ne.s32.totalorder %s113, %s116
    %p122 = scmp.eq.s32.totalorder %s9, 0
    %p123 = por %p121, %p122
    %p124 = scmp.ne.s32.totalorder %s113, %s116
    %p125 = scmp.eq.s32.totalorder %s14, 1
    %p126 = por %p124, %p125
    %p127 = scmp.ne.s32.totalorder %s116, %s117
    %p128 = scmp.eq.s32.totalorder %s14, 0
    %p129 = por %p127, %p128
    %p130 = scmp.ne.s32.totalorder %s116, %s117
    %p131 = scmp.eq.s32.totalorder %s15, 1
    %p132 = por %p130, %p131
    %p134 = scmp.ne.s32.totalorder %s117, %s133
    %p135 = scmp.eq.s32.totalorder %s15, 0
    %p136 = por %p134, %p135
    %p137 = scmp.le.s32.totalorder 1, %s9
    %p138 = scmp.lt.s32.totalorder %s9, 3
    %p139 = pnand %p137, %p138
    %p140 = pneg %p139
    // Predicated region
    $region9: #{resnet_generator_forward.14} parent=5 // pred_check
      _
    $region10: #{resnet_generator_forward.14} parent=5 // pred_check_branch
      %142 = sbr.rel (%p139) target = $region12
    $region11: #{resnet_generator_forward.14} parent=5 // pred_region
      %s143 = ssub.s32 %s9, 1
      // Predicated region
      $region13: #{resnet_generator_forward.14} parent=11 // pred_check
        %p144 = pneg %p73
      $region14: #{resnet_generator_forward.14} parent=11 // pred_check_branch
        %146 = sbr.rel (%p144) target = $region16
      $region15: #{resnet_generator_forward.14} parent=11 // pred_region
        %s147 = smul.u32 4, %s19
        %p148 = scmp.lt.s32.totalorder %s147, 3
        %s149 = scalar_select %p148, %s147, 3
        %s150 = smul.addr %s149, 3
        %s151 = smul.addr %s150, 4
        %s152 = scalar_lea.vmem %s1, %s151
        %s153 = smul.u32 4, %s19
      $region16: #{resnet_generator_forward.14} parent=11 // pred_fallthru
        _
    $region12: #{resnet_generator_forward.14} parent=5 // pred_fallthru
      _
    %p154 = scmp.lt.s32.totalorder %s9, 2
    // Predicated region
    $region17: #{resnet_generator_forward.14} parent=5 // pred_check
      %p155 = pneg %p154
    $region18: #{resnet_generator_forward.14} parent=5 // pred_check_branch
      %157 = sbr.rel (%p155) target = $region20
    $region19: #{resnet_generator_forward.14} parent=5 // pred_region
      // Predicated region
      $region21: #{resnet_generator_forward.14} parent=19 // pred_check
        %p158 = pneg %p41
      $region22: #{resnet_generator_forward.14} parent=19 // pred_check_branch
        %160 = sbr.rel (%p158) target = $region24
      $region23: #{resnet_generator_forward.14} parent=19 // pred_region
        %p161 = scmp.lt.s32.totalorder %s16, 1
        %s162 = scalar_select %p161, %s16, 1
        %s163 = smul.addr %s162, 8
        %s164 = smul.addr %s163, 4
        %s165 = scalar_lea.vmem %s0, %s164
      $region24: #{resnet_generator_forward.14} parent=19 // pred_fallthru
        _
      // Predicated region
      $region25: #{resnet_generator_forward.14} parent=19 // pred_check
        %p166 = pneg %p95
      $region26: #{resnet_generator_forward.14} parent=19 // pred_check_branch
        %168 = sbr.rel (%p166) target = $region28
      $region27: #{resnet_generator_forward.14} parent=19 // pred_region
        %s169 = smul.u32 4, %s17
        %p170 = scmp.lt.s32.totalorder %s16, 1
        %s171 = scalar_select %p170, %s16, 1
        %p172 = scmp.lt.s32.totalorder %s169, 3
        %s173 = scalar_select %p172, %s169, 3
        %s174 = smul.addr %s171, 4
        %s175 = sadd.s32 %s173, %s174
        %s176 = smul.addr %s175, 4
        %s177 = scalar_lea.vmem %s2, %s176
        %s178 = smul.u32 4, %s17
      $region28: #{resnet_generator_forward.14} parent=19 // pred_fallthru
        _
    $region20: #{resnet_generator_forward.14} parent=5 // pred_fallthru
      _
    %p179 = scmp.le.s32.totalorder 1, %s9
    %p180 = scmp.lt.s32.totalorder %s9, 3
    %p181 = pnand %p179, %p180
    %p182 = pneg %p181
    // Predicated region
    $region29: #{resnet_generator_forward.14} parent=5 // pred_check
      _
    $region30: #{resnet_generator_forward.14} parent=5 // pred_check_branch
      %184 = sbr.rel (%p181) target = $region32
    $region31: #{resnet_generator_forward.14} parent=5 // pred_region
      %s185 = ssub.s32 %s9, 1
      %p186 = scmp.lt.s32.totalorder %s18, 1
      %s187 = scalar_select %p186, %s18, 1
      %s188 = smul.addr %s187, 8
      %s189 = smul.addr %s188, 4
      %s190 = scalar_lea.vmem %s0, %s189
      %p191 = pneg %p47
      %p192 = pneg %p44
      %s193 = smul.u32 4, %s19
      %p194 = scmp.lt.s32.totalorder %s193, 3
      %s195 = scalar_select %p194, %s193, 3
      %s196 = smul.addr %s195, 3
      %s197 = smul.addr %s196, 4
      %s198 = scalar_lea.vmem %s1, %s197
      %p199 = pneg %p73
      %p200 = pneg %p70
      %s201 = smul.u32 4, %s19
      %p202 = scmp.lt.s32.totalorder %s18, 1
      %s203 = scalar_select %p202, %s18, 1
      %p204 = scmp.lt.s32.totalorder %s201, 3
      %s205 = scalar_select %p204, %s201, 3
      %s206 = smul.addr %s203, 4
      %s207 = sadd.s32 %s205, %s206
      %s208 = smul.addr %s207, 4
      %s209 = scalar_lea.vmem %s2, %s208
      %p210 = pneg %p101
      %p211 = pneg %p98
      %p212 = pneg %p129
      %p213 = pneg %p126
      %s214 = smul.u32 4, %s19
      %p215 = scmp.lt.s32.totalorder %s18, 1
      %s216 = scalar_select %p215, %s18, 1
      %p217 = scmp.lt.s32.totalorder %s214, 3
      %s218 = scalar_select %p217, %s214, 3
      %s219 = smul.addr %s216, 4
      %s220 = sadd.s32 %s218, %s219
      %s221 = smul.addr %s220, 4
      %s222 = scalar_lea.vmem %s3, %s221
      %p223 = scmp.lt.s32.totalorder %s18, 1
      %s224 = scalar_select %p223, %s18, 1
      %s225 = smul.addr %s224, 8
      %s226 = smul.addr %s225, 4
      %s227 = scalar_lea.vmem %s0, %s226
      %s228 = smul.u32 4, %s19
      %p229 = scmp.lt.s32.totalorder %s228, 3
      %s230 = scalar_select %p229, %s228, 3
      %s231 = smul.addr %s230, 3
      %s232 = smul.addr %s231, 4
      %s233 = scalar_lea.vmem %s1, %s232
      %s234 = smul.u32 4, %s19
      %s235 = smul.u32 4, %s19
      %p236 = scmp.lt.s32.totalorder %s18, 1
      %s237 = scalar_select %p236, %s18, 1
      %p238 = scmp.lt.s32.totalorder %s235, 3
      %s239 = scalar_select %p238, %s235, 3
      %s240 = smul.addr %s237, 4
      %s241 = sadd.s32 %s239, %s240
      %s242 = smul.addr %s241, 4
      %s243 = scalar_lea.vmem %s2, %s242
      %s244 = smul.u32 4, %s19
      %s245 = smul.u32 4, %s19
      %p246 = scmp.lt.s32.totalorder %s18, 1
      %s247 = scalar_select %p246, %s18, 1
      %p248 = scmp.lt.s32.totalorder %s245, 3
      %s249 = scalar_select %p248, %s245, 3
      %s250 = smul.addr %s247, 4
      %s251 = sadd.s32 %s249, %s250
      %s252 = smul.addr %s251, 4
      %s253 = scalar_lea.vmem %s3, %s252
      %s254 = smul.u32 4, %s19
      %v256 = vld [vmem:[%s227] sm:$0xf]
      %v257 = vld [vmem:[%s227 + $0x8] sm:$0xf]
      %v258 = vld [vmem:[%s227 + $0x10] sm:$0xf]
      %v259 = vld [vmem:[%s227 + $0x18] sm:$0xf]
      %260 = vst [vmem:[#allocation2] sm:$0xf] %v256
      %261 = vst [vmem:[#allocation2 + $0x4] sm:$0xf] %v257
      %262 = vst [vmem:[#allocation2 + $0x8] sm:$0xf] %v258
      %263 = vst [vmem:[#allocation2 + $0xc] sm:$0xf] %v259
      %v264 = vld [vmem:[%s227] sm:$0xff]
      %v265 = vld [vmem:[%s227 + $0x8] sm:$0xff]
      %v266 = vld [vmem:[%s227 + $0x10] sm:$0xff]
      %v267 = vld [vmem:[%s227 + $0x18] sm:$0xff]
      %272 = vrot.lane.b32.xlu0 %v264, 127
      %v273 = vpop.permute.xlu0 %272
      %274 = vrot.lane.b32.xlu0 %v265, 127
      %v275 = vpop.permute.xlu0 %274
      %276 = vrot.lane.b32.xlu0 %v266, 127
      %v277 = vpop.permute.xlu0 %276
      %278 = vrot.lane.b32.xlu0 %v267, 127
      %v279 = vpop.permute.xlu0 %278
      %v280 = vrot.slane %v273, 4
      %v281 = vrot.slane %v275, 4
      %v282 = vrot.slane %v277, 4
      %v283 = vrot.slane %v279, 4
      %vm284 = vcmask 1039360
      %v285 = vsel %vm284, %v273, %v280
      %v286 = vsel %vm284, %v275, %v281
      %v287 = vsel %vm284, %v277, %v282
      %v288 = vsel %vm284, %v279, %v283
      %293 = vst [vmem:[#allocation2 + $0x10] sm:$0xf] %v285
      %294 = vst [vmem:[#allocation2 + $0x14] sm:$0xf] %v286
      %295 = vst [vmem:[#allocation2 + $0x18] sm:$0xf] %v287
      %296 = vst [vmem:[#allocation2 + $0x1c] sm:$0xf] %v288
      %v297 = vld [vmem:[%s227] sm:$0xff]
      %v298 = vld [vmem:[%s227 + $0x8] sm:$0xff]
      %v299 = vld [vmem:[%s227 + $0x10] sm:$0xff]
      %v300 = vld [vmem:[%s227 + $0x18] sm:$0xff]
      %305 = vrot.lane.b32.xlu0 %v297, 126
      %v306 = vpop.permute.xlu0 %305
      %307 = vrot.lane.b32.xlu0 %v298, 126
      %v308 = vpop.permute.xlu0 %307
      %309 = vrot.lane.b32.xlu0 %v299, 126
      %v310 = vpop.permute.xlu0 %309
      %311 = vrot.lane.b32.xlu0 %v300, 126
      %v312 = vpop.permute.xlu0 %311
      %v313 = vrot.slane %v306, 4
      %v314 = vrot.slane %v308, 4
      %v315 = vrot.slane %v310, 4
      %v316 = vrot.slane %v312, 4
      %vm317 = vcmask 1031168
      %v318 = vsel %vm317, %v306, %v313
      %v319 = vsel %vm317, %v308, %v314
      %v320 = vsel %vm317, %v310, %v315
      %v321 = vsel %vm317, %v312, %v316
      %326 = vst [vmem:[#allocation2 + $0x20] sm:$0xf] %v318
      %327 = vst [vmem:[#allocation2 + $0x24] sm:$0xf] %v319
      %328 = vst [vmem:[#allocation2 + $0x28] sm:$0xf] %v320
      %329 = vst [vmem:[#allocation2 + $0x2c] sm:$0xf] %v321
      %v330 = vld [vmem:[%s227] sm:$0xff]
      %v331 = vld [vmem:[%s227 + $0x8] sm:$0xff]
      %v332 = vld [vmem:[%s227 + $0x10] sm:$0xff]
      %v333 = vld [vmem:[%s227 + $0x18] sm:$0xff]
      %338 = vrot.lane.b32.xlu0 %v330, 122
      %v339 = vpop.permute.xlu0 %338
      %340 = vrot.lane.b32.xlu0 %v331, 122
      %v341 = vpop.permute.xlu0 %340
      %342 = vrot.lane.b32.xlu0 %v332, 122
      %v343 = vpop.permute.xlu0 %342
      %344 = vrot.lane.b32.xlu0 %v333, 122
      %v345 = vpop.permute.xlu0 %344
      %v346 = vrot.slane %v339, 4
      %v347 = vrot.slane %v341, 4
      %v348 = vrot.slane %v343, 4
      %v349 = vrot.slane %v345, 4
      %vm350 = vcmask 998400
      %v351 = vsel %vm350, %v339, %v346
      %v352 = vsel %vm350, %v341, %v347
      %v353 = vsel %vm350, %v343, %v348
      %v354 = vsel %vm350, %v345, %v349
      %359 = vst [vmem:[#allocation2 + $0x30] sm:$0xf] %v351
      %360 = vst [vmem:[#allocation2 + $0x34] sm:$0xf] %v352
      %361 = vst [vmem:[#allocation2 + $0x38] sm:$0xf] %v353
      %362 = vst [vmem:[#allocation2 + $0x3c] sm:$0xf] %v354
      %v363 = vld [vmem:[%s227] sm:$0xff]
      %v364 = vld [vmem:[%s227 + $0x8] sm:$0xff]
      %v365 = vld [vmem:[%s227 + $0x10] sm:$0xff]
      %v366 = vld [vmem:[%s227 + $0x18] sm:$0xff]
      %371 = vrot.lane.b32.xlu0 %v363, 121
      %v372 = vpop.permute.xlu0 %371
      %373 = vrot.lane.b32.xlu0 %v364, 121
      %v374 = vpop.permute.xlu0 %373
      %375 = vrot.lane.b32.xlu0 %v365, 121
      %v376 = vpop.permute.xlu0 %375
      %377 = vrot.lane.b32.xlu0 %v366, 121
      %v378 = vpop.permute.xlu0 %377
      %v379 = vrot.slane %v372, 4
      %v380 = vrot.slane %v374, 4
      %v381 = vrot.slane %v376, 4
      %v382 = vrot.slane %v378, 4
      %vm383 = vcmask 990208
      %v384 = vsel %vm383, %v372, %v379
      %v385 = vsel %vm383, %v374, %v380
      %v386 = vsel %vm383, %v376, %v381
      %v387 = vsel %vm383, %v378, %v382
      %392 = vst [vmem:[#allocation2 + $0x40] sm:$0xf] %v384
      %393 = vst [vmem:[#allocation2 + $0x44] sm:$0xf] %v385
      %394 = vst [vmem:[#allocation2 + $0x48] sm:$0xf] %v386
      %395 = vst [vmem:[#allocation2 + $0x4c] sm:$0xf] %v387
      %v396 = vld [vmem:[%s227] sm:$0xff]
      %v397 = vld [vmem:[%s227 + $0x8] sm:$0xff]
      %v398 = vld [vmem:[%s227 + $0x10] sm:$0xff]
      %v399 = vld [vmem:[%s227 + $0x18] sm:$0xff]
      %404 = vrot.lane.b32.xlu0 %v396, 120
      %v405 = vpop.permute.xlu0 %404
      %406 = vrot.lane.b32.xlu0 %v397, 120
      %v407 = vpop.permute.xlu0 %406
      %408 = vrot.lane.b32.xlu0 %v398, 120
      %v409 = vpop.permute.xlu0 %408
      %410 = vrot.lane.b32.xlu0 %v399, 120
      %v411 = vpop.permute.xlu0 %410
      %v412 = vrot.slane %v405, 4
      %v413 = vrot.slane %v407, 4
      %v414 = vrot.slane %v409, 4
      %v415 = vrot.slane %v411, 4
      %vm416 = vcmask 982016
      %v417 = vsel %vm416, %v405, %v412
      %v418 = vsel %vm416, %v407, %v413
      %v419 = vsel %vm416, %v409, %v414
      %v420 = vsel %vm416, %v411, %v415
      %425 = vst [vmem:[#allocation2 + $0x50] sm:$0xf] %v417
      %426 = vst [vmem:[#allocation2 + $0x54] sm:$0xf] %v418
      %427 = vst [vmem:[#allocation2 + $0x58] sm:$0xf] %v419
      %428 = vst [vmem:[#allocation2 + $0x5c] sm:$0xf] %v420
      %v429 = vld [vmem:[%s227] sm:$0xff]
      %v430 = vld [vmem:[%s227 + $0x8] sm:$0xff]
      %v431 = vld [vmem:[%s227 + $0x10] sm:$0xff]
      %v432 = vld [vmem:[%s227 + $0x18] sm:$0xff]
      %437 = vrot.lane.b32.xlu0 %v429, 116
      %v438 = vpop.permute.xlu0 %437
      %439 = vrot.lane.b32.xlu0 %v430, 116
      %v440 = vpop.permute.xlu0 %439
      %441 = vrot.lane.b32.xlu0 %v431, 116
      %v442 = vpop.permute.xlu0 %441
      %443 = vrot.lane.b32.xlu0 %v432, 116
      %v444 = vpop.permute.xlu0 %443
      %v445 = vrot.slane %v438, 4
      %v446 = vrot.slane %v440, 4
      %v447 = vrot.slane %v442, 4
      %v448 = vrot.slane %v444, 4
      %vm449 = vcmask 949248
      %v450 = vsel %vm449, %v438, %v445
      %v451 = vsel %vm449, %v440, %v446
      %v452 = vsel %vm449, %v442, %v447
      %v453 = vsel %vm449, %v444, %v448
      %458 = vst [vmem:[#allocation2 + $0x60] sm:$0xf] %v450
      %459 = vst [vmem:[#allocation2 + $0x64] sm:$0xf] %v451
      %460 = vst [vmem:[#allocation2 + $0x68] sm:$0xf] %v452
      %461 = vst [vmem:[#allocation2 + $0x6c] sm:$0xf] %v453
      %v462 = vld [vmem:[%s227] sm:$0xff]
      %v463 = vld [vmem:[%s227 + $0x8] sm:$0xff]
      %v464 = vld [vmem:[%s227 + $0x10] sm:$0xff]
      %v465 = vld [vmem:[%s227 + $0x18] sm:$0xff]
      %470 = vrot.lane.b32.xlu0 %v462, 115
      %v471 = vpop.permute.xlu0 %470
      %472 = vrot.lane.b32.xlu0 %v463, 115
      %v473 = vpop.permute.xlu0 %472
      %474 = vrot.lane.b32.xlu0 %v464, 115
      %v475 = vpop.permute.xlu0 %474
      %476 = vrot.lane.b32.xlu0 %v465, 115
      %v477 = vpop.permute.xlu0 %476
      %v478 = vrot.slane %v471, 4
      %v479 = vrot.slane %v473, 4
      %v480 = vrot.slane %v475, 4
      %v481 = vrot.slane %v477, 4
      %vm482 = vcmask 941056
      %v483 = vsel %vm482, %v471, %v478
      %v484 = vsel %vm482, %v473, %v479
      %v485 = vsel %vm482, %v475, %v480
      %v486 = vsel %vm482, %v477, %v481
      %491 = vst [vmem:[#allocation2 + $0x70] sm:$0xf] %v483
      %492 = vst [vmem:[#allocation2 + $0x74] sm:$0xf] %v484
      %493 = vst [vmem:[#allocation2 + $0x78] sm:$0xf] %v485
      %494 = vst [vmem:[#allocation2 + $0x7c] sm:$0xf] %v486
      %v495 = vld [vmem:[%s227] sm:$0xff]
      %v496 = vld [vmem:[%s227 + $0x8] sm:$0xff]
      %v497 = vld [vmem:[%s227 + $0x10] sm:$0xff]
      %v498 = vld [vmem:[%s227 + $0x18] sm:$0xff]
      %503 = vrot.lane.b32.xlu0 %v495, 114
      %v504 = vpop.permute.xlu0 %503
      %505 = vrot.lane.b32.xlu0 %v496, 114
      %v506 = vpop.permute.xlu0 %505
      %507 = vrot.lane.b32.xlu0 %v497, 114
      %v508 = vpop.permute.xlu0 %507
      %509 = vrot.lane.b32.xlu0 %v498, 114
      %v510 = vpop.permute.xlu0 %509
      %v511 = vrot.slane %v504, 4
      %v512 = vrot.slane %v506, 4
      %v513 = vrot.slane %v508, 4
      %v514 = vrot.slane %v510, 4
      %vm515 = vcmask 932864
      %v516 = vsel %vm515, %v504, %v511
      %v517 = vsel %vm515, %v506, %v512
      %v518 = vsel %vm515, %v508, %v513
      %v519 = vsel %vm515, %v510, %v514
      %524 = vst [vmem:[#allocation2 + $0x80] sm:$0xf] %v516
      %525 = vst [vmem:[#allocation2 + $0x84] sm:$0xf] %v517
      %526 = vst [vmem:[#allocation2 + $0x88] sm:$0xf] %v518
      %527 = vst [vmem:[#allocation2 + $0x8c] sm:$0xf] %v519
      %v528 = vld [vmem:[%s233] sm:$0xff]
      %v529 = vld [vmem:[%s233 + $0x8] sm:$0xf]
      %v530 = vld [vmem:[%s233 + $0xc] sm:$0xff]
      %v531 = vld [vmem:[%s233 + $0x14] sm:$0xf]
      %v532 = vld [vmem:[%s233 + $0x18] sm:$0xff]
      %v533 = vld [vmem:[%s233 + $0x20] sm:$0xf]
      %v534 = vld [vmem:[%s233 + $0x24] sm:$0xff]
      %v535 = vld [vmem:[%s233 + $0x2c] sm:$0xf]
      %v536 = vld [vmem:[#allocation2] sm:$0xf]
      %v537 = vld [vmem:[#allocation2 + $0x4] sm:$0xf]
      %v538 = vld [vmem:[#allocation2 + $0x8] sm:$0xf]
      %v539 = vld [vmem:[#allocation2 + $0xc] sm:$0xf]
      %v540 = vld [vmem:[#allocation2 + $0x10] sm:$0xf]
      %v541 = vld [vmem:[#allocation2 + $0x14] sm:$0xf]
      %v542 = vld [vmem:[#allocation2 + $0x18] sm:$0xf]
      %v543 = vld [vmem:[#allocation2 + $0x1c] sm:$0xf]
      %v544 = vld [vmem:[#allocation2 + $0x20] sm:$0xf]
      %v545 = vld [vmem:[#allocation2 + $0x24] sm:$0xf]
      %v546 = vld [vmem:[#allocation2 + $0x28] sm:$0xf]
      %v547 = vld [vmem:[#allocation2 + $0x2c] sm:$0xf]
      %v548 = vld [vmem:[#allocation2 + $0x30] sm:$0xf]
      %v549 = vld [vmem:[#allocation2 + $0x34] sm:$0xf]
      %v550 = vld [vmem:[#allocation2 + $0x38] sm:$0xf]
      %v551 = vld [vmem:[#allocation2 + $0x3c] sm:$0xf]
      %v552 = vld [vmem:[#allocation2 + $0x40] sm:$0xf]
      %v553 = vld [vmem:[#allocation2 + $0x44] sm:$0xf]
      %v554 = vld [vmem:[#allocation2 + $0x48] sm:$0xf]
      %v555 = vld [vmem:[#allocation2 + $0x4c] sm:$0xf]
      %v556 = vld [vmem:[#allocation2 + $0x50] sm:$0xf]
      %v557 = vld [vmem:[#allocation2 + $0x54] sm:$0xf]
      %v558 = vld [vmem:[#allocation2 + $0x58] sm:$0xf]
      %v559 = vld [vmem:[#allocation2 + $0x5c] sm:$0xf]
      %v560 = vld [vmem:[#allocation2 + $0x60] sm:$0xf]
      %v561 = vld [vmem:[#allocation2 + $0x64] sm:$0xf]
      %v562 = vld [vmem:[#allocation2 + $0x68] sm:$0xf]
      %v563 = vld [vmem:[#allocation2 + $0x6c] sm:$0xf]
      %v564 = vld [vmem:[#allocation2 + $0x70] sm:$0xf]
      %v565 = vld [vmem:[#allocation2 + $0x74] sm:$0xf]
      %v566 = vld [vmem:[#allocation2 + $0x78] sm:$0xf]
      %v567 = vld [vmem:[#allocation2 + $0x7c] sm:$0xf]
      %v568 = vld [vmem:[#allocation2 + $0x80] sm:$0xf]
      %v569 = vld [vmem:[#allocation2 + $0x84] sm:$0xf]
      %v570 = vld [vmem:[#allocation2 + $0x88] sm:$0xf]
      %v571 = vld [vmem:[#allocation2 + $0x8c] sm:$0xf]
      %v580 = vunpack.c.l.b16 %v528
      %v581 = vunpack.c.h.b16 %v528
      %v582 = vunpack.c.l.b16 %v529
      %v583 = vunpack.c.l.b16 %v530
      %v584 = vunpack.c.h.b16 %v530
      %v585 = vunpack.c.l.b16 %v531
      %v586 = vunpack.c.l.b16 %v532
      %v587 = vunpack.c.h.b16 %v532
      %v588 = vunpack.c.l.b16 %v533
      %v589 = vunpack.c.l.b16 %v534
      %v590 = vunpack.c.h.b16 %v534
      %v591 = vunpack.c.l.b16 %v535
      %v592 = vpack.c.b16 %v583, %v580
      %v593 = vpack.c.b16 %v584, %v581
      %v594 = vpack.c.b16 %v585, %v582
      %v595 = vpack.c.b16 %v589, %v586
      %v596 = vpack.c.b16 %v590, %v587
      %v597 = vpack.c.b16 %v591, %v588
      %v638 = vunpack.c.l.b16 %v536
      %v639 = vunpack.c.l.b16 %v537
      %v640 = vunpack.c.l.b16 %v538
      %v641 = vunpack.c.l.b16 %v539
      %v642 = vunpack.c.l.b16 %v540
      %v643 = vunpack.c.l.b16 %v541
      %v644 = vunpack.c.l.b16 %v542
      %v645 = vunpack.c.l.b16 %v543
      %v646 = vunpack.c.l.b16 %v544
      %v647 = vunpack.c.l.b16 %v545
      %v648 = vunpack.c.l.b16 %v546
      %v649 = vunpack.c.l.b16 %v547
      %v650 = vunpack.c.l.b16 %v548
      %v651 = vunpack.c.l.b16 %v549
      %v652 = vunpack.c.l.b16 %v550
      %v653 = vunpack.c.l.b16 %v551
      %v654 = vunpack.c.l.b16 %v552
      %v655 = vunpack.c.l.b16 %v553
      %v656 = vunpack.c.l.b16 %v554
      %v657 = vunpack.c.l.b16 %v555
      %v658 = vunpack.c.l.b16 %v556
      %v659 = vunpack.c.l.b16 %v557
      %v660 = vunpack.c.l.b16 %v558
      %v661 = vunpack.c.l.b16 %v559
      %v662 = vunpack.c.l.b16 %v560
      %v663 = vunpack.c.l.b16 %v561
      %v664 = vunpack.c.l.b16 %v562
      %v665 = vunpack.c.l.b16 %v563
      %v666 = vunpack.c.l.b16 %v564
      %v667 = vunpack.c.l.b16 %v565
      %v668 = vunpack.c.l.b16 %v566
      %v669 = vunpack.c.l.b16 %v567
      %v670 = vunpack.c.l.b16 %v568
      %v671 = vunpack.c.l.b16 %v569
      %v672 = vunpack.c.l.b16 %v570
      %v673 = vunpack.c.l.b16 %v571
      %v674 = vpack.c.b16 %v639, %v638
      %v675 = vpack.c.b16 %v641, %v640
      %v676 = vpack.c.b16 %v643, %v642
      %v677 = vpack.c.b16 %v645, %v644
      %v678 = vpack.c.b16 %v647, %v646
      %v679 = vpack.c.b16 %v649, %v648
      %v680 = vpack.c.b16 %v651, %v650
      %v681 = vpack.c.b16 %v653, %v652
      %v682 = vpack.c.b16 %v655, %v654
      %v683 = vpack.c.b16 %v657, %v656
      %v684 = vpack.c.b16 %v659, %v658
      %v685 = vpack.c.b16 %v661, %v660
      %v686 = vpack.c.b16 %v663, %v662
      %v687 = vpack.c.b16 %v665, %v664
      %v688 = vpack.c.b16 %v667, %v666
      %v689 = vpack.c.b16 %v669, %v668
      %v690 = vpack.c.b16 %v671, %v670
      %v691 = vpack.c.b16 %v673, %v672
      %vm710 = vcmask 261120
      %v712 = vsel %vm710, %v594, 0
      %v715 = vsel %vm710, %v597, 0
      %717 = vmatpush.bf16.msra.mxu0 %v681
      %718 = vmatpush.bf16.msra.mxu0 %v680
      %719 = vmatpush.bf16.msra.mxu0 %v679
      %720 = vmatpush.bf16.msra.mxu0 %v678
      %721 = vmatpush.bf16.msra.mxu0 %v677
      %722 = vmatpush.bf16.msra.mxu0 %v676
      %723 = vmatpush.bf16.msra.mxu0 %v675
      %724 = vmatpush.bf16.msra.mxu0 %v674
      %725 = vmatmul.bf16.gmra.mxu0 %v592
      %v726 = vpop.f32.mrf.mxu0
      %v727 = vadd.f32 0.0, %v726
      %v728 = vpop.f32.mrf.mxu0
      %v729 = vadd.f32 0.0, %v728
      %730 = vmatmul.bf16.gmra.mxu0 %v595
      %v731 = vpop.f32.mrf.mxu0
      %v732 = vadd.f32 0.0, %v731
      %v733 = vpop.f32.mrf.mxu0
      %v734 = vadd.f32 0.0, %v733
      %735 = vdwg.mxu0
      %736 = vmatpush.bf16.msra.mxu0 %v689
      %737 = vmatpush.bf16.msra.mxu0 %v688
      %738 = vmatpush.bf16.msra.mxu0 %v687
      %739 = vmatpush.bf16.msra.mxu0 %v686
      %740 = vmatpush.bf16.msra.mxu0 %v685
      %741 = vmatpush.bf16.msra.mxu0 %v684
      %742 = vmatpush.bf16.msra.mxu0 %v683
      %743 = vmatpush.bf16.msra.mxu0 %v682
      %744 = vmatmul.bf16.gmra.mxu0 %v593
      %v745 = vpop.f32.mrf.mxu0
      %v746 = vadd.f32 %v727, %v745
      %v747 = vpop.f32.mrf.mxu0
      %v748 = vadd.f32 %v729, %v747
      %749 = vmatmul.bf16.gmra.mxu0 %v596
      %v750 = vpop.f32.mrf.mxu0
      %v751 = vadd.f32 %v732, %v750
      %v752 = vpop.f32.mrf.mxu0
      %v753 = vadd.f32 %v734, %v752
      %754 = vdwg.mxu0
      %755 = vmatpush.bf16.msra.mxu0 0
      %756 = vmatpush.bf16.msra.mxu0 0
      %757 = vmatpush.bf16.msra.mxu0 0
      %758 = vmatpush.bf16.msra.mxu0 0
      %759 = vmatpush.bf16.msra.mxu0 0
      %760 = vmatpush.bf16.msra.mxu0 0
      %761 = vmatpush.bf16.msra.mxu0 %v691
      %762 = vmatpush.bf16.msra.mxu0 %v690
      %763 = vmatmul.bf16.gmra.mxu0 %v712
      %v764 = vpop.f32.mrf.mxu0
      %v765 = vadd.f32 %v746, %v764
      %v766 = vpop.f32.mrf.mxu0
      %v767 = vadd.f32 %v748, %v766
      %768 = vmatmul.bf16.gmra.mxu0 %v715
      %v769 = vpop.f32.mrf.mxu0
      %v770 = vadd.f32 %v751, %v769
      %v771 = vpop.f32.mrf.mxu0
      %v772 = vadd.f32 %v753, %v771
      %773 = vdwg.mxu0
      %v774 = vlaneseq
      %v775 = vand.u32 %v774, 127
      %v776 = vstv 0
      %v777 = vadd.s32 %v776, %v775
      %vm778 = vcmp.lt.s32.totalorder %v777, 0
      %v779 = vsub.s32 0, %v777
      %v780 = vsel %vm778, %v779, %v777
      %v781 = vand.u32 %v780, 65535
      %v782 = vshrl.u32 %v780, 16
      %v784 = vmul.u32 %v781, 43691
      %v785 = vmul.u32 %v781, 43690
      %v786 = vmul.u32 %v782, 43691
      %v787 = vmul.u32 %v782, 43690
      %v788 = vshll.u32 %v785, 16
      %v789 = vshrl.u32 %v785, 16
      %v790 = vshll.u32 %v786, 16
      %v791 = vshrl.u32 %v786, 16
      %vm792 = vc.u32 %v784, %v788
      %v793 = vsel %vm792, 1, 0
      %v794 = vadd.s32 %v784, %v788
      %v795 = vadd.s32 %v787, %v793
      %vm796 = vc.u32 %v794, %v790
      %v797 = vsel %vm796, 1, 0
      %v798 = vadd.s32 %v794, %v790
      %v799 = vadd.s32 %v795, %v797
      %v800 = vadd.s32 %v799, %v789
      %v801 = vadd.s32 %v800, %v791
      %v802 = vshrl.u32 %v801, 2
      %v803 = vmul.u32 %v802, 6
      %v804 = vsub.s32 %v780, %v803
      %v805 = vsub.s32 0, %v804
      %v806 = vsel %vm778, %v805, %v804
      %vm807 = vcmp.ne.s32.totalorder %v806, 0
      %vm808 = vcmp.lt.s32.totalorder %v806, 0
      %vm809 = vmand %vm808, %vm807
      %v810 = vadd.s32 %v806, 6
      %v811 = vsel %vm809, %v810, %v806
      %vm812 = vcmp.lt.s32.totalorder %v811, 4
      %vm813 = vcmp.lt.s32.totalorder %v777, 24
      %vm814 = vmand %vm812, %vm813
      %v815 = vsel %vm814, 1, 0
      %v816 = vcvt.s32.f32 %v815
      %v817 = vmul.f32 %v765, %v816
      %v818 = vmul.f32 %v767, %v816
      %v819 = vmul.f32 %v770, %v816
      %v820 = vmul.f32 %v772, %v816
      %821 = vadd.xlane.f32.xlu0 %v817
      %v822 = vpop.xlane.xlu0 %821
      %823 = vadd.xlane.f32.xlu0 %v818
      %v824 = vpop.xlane.xlu0 %823
      %825 = vadd.xlane.f32.xlu0 %v819
      %v826 = vpop.xlane.xlu0 %825
      %827 = vadd.xlane.f32.xlu0 %v820
      %v828 = vpop.xlane.xlu0 %827
      %v829 = vadd.f32 %v822, 0.0
      %v830 = vadd.f32 %v824, 0.0
      %v831 = vadd.f32 %v826, 0.0
      %v832 = vadd.f32 %v828, 0.0
      %v833 = vmul.f32 %v765, %v817
      %v834 = vmul.f32 %v767, %v818
      %v835 = vmul.f32 %v770, %v819
      %v836 = vmul.f32 %v772, %v820
      %837 = vadd.xlane.f32.xlu0 %v833
      %v838 = vpop.xlane.xlu0 %837
      %839 = vadd.xlane.f32.xlu0 %v834
      %v840 = vpop.xlane.xlu0 %839
      %841 = vadd.xlane.f32.xlu0 %v835
      %v842 = vpop.xlane.xlu0 %841
      %843 = vadd.xlane.f32.xlu0 %v836
      %v844 = vpop.xlane.xlu0 %843
      %v845 = vadd.f32 %v838, 0.0
      %v846 = vadd.f32 %v840, 0.0
      %v847 = vadd.f32 %v842, 0.0
      %v848 = vadd.f32 %v844, 0.0
      %849 = vst [vmem:[#allocation3] sm:$0xff] %v765
      %850 = vst [vmem:[#allocation3 + $0x8] sm:$0xff] %v767
      %851 = vst [vmem:[#allocation3 + $0x10] sm:$0xff] %v770
      %852 = vst [vmem:[#allocation3 + $0x18] sm:$0xff] %v772
      %v853 = vmul.f32 %v829, 0.0625
      %v854 = vmul.f32 %v830, 0.0625
      %v855 = vmul.f32 %v831, 0.0625
      %v856 = vmul.f32 %v832, 0.0625
      %v857 = vmul.f32 %v845, 0.0625
      %v858 = vmul.f32 %v846, 0.0625
      %v859 = vmul.f32 %v847, 0.0625
      %v860 = vmul.f32 %v848, 0.0625
      %v861 = vmul.f32 %v853, %v853
      %v862 = vmul.f32 %v854, %v854
      %v863 = vmul.f32 %v855, %v855
      %v864 = vmul.f32 %v856, %v856
      %v865 = vsub.f32 %v857, %v861
      %v866 = vsub.f32 %v858, %v862
      %v867 = vsub.f32 %v859, %v863
      %v868 = vsub.f32 %v860, %v864
      %v869 = vmax.f32 %v865, 0.0
      %v870 = vmax.f32 %v866, 0.0
      %v871 = vmax.f32 %v867, 0.0
      %v872 = vmax.f32 %v868, 0.0
      %v873 = vadd.f32 %v869, 1e-05
      %v874 = vadd.f32 %v870, 1e-05
      %v875 = vadd.f32 %v871, 1e-05
      %v876 = vadd.f32 %v872, 1e-05
      %v877 = vrsqrt.pop %v873
      %v878 = vmul.f32 %v877, %v873
      %v879 = vmul.f32 %v878, %v877
      %v880 = vmul.f32 0.5, %v879
      %v881 = vsub.f32 1.5, %v880
      %v882 = vmul.f32 %v877, %v881
      %vm883 = vweird.f32 %v873
      %vm884 = vweird.f32 %v877
      %vm885 = vmor %vm883, %vm884
      %v886 = vsel %vm885, %v877, %v882
      %v887 = vrsqrt.pop %v874
      %v888 = vmul.f32 %v887, %v874
      %v889 = vmul.f32 %v888, %v887
      %v890 = vmul.f32 0.5, %v889
      %v891 = vsub.f32 1.5, %v890
      %v892 = vmul.f32 %v887, %v891
      %vm893 = vweird.f32 %v874
      %vm894 = vweird.f32 %v887
      %vm895 = vmor %vm893, %vm894
      %v896 = vsel %vm895, %v887, %v892
      %v897 = vrsqrt.pop %v875
      %v898 = vmul.f32 %v897, %v875
      %v899 = vmul.f32 %v898, %v897
      %v900 = vmul.f32 0.5, %v899
      %v901 = vsub.f32 1.5, %v900
      %v902 = vmul.f32 %v897, %v901
      %vm903 = vweird.f32 %v875
      %vm904 = vweird.f32 %v897
      %vm905 = vmor %vm903, %vm904
      %v906 = vsel %vm905, %v897, %v902
      %v907 = vrsqrt.pop %v876
      %v908 = vmul.f32 %v907, %v876
      %v909 = vmul.f32 %v908, %v907
      %v910 = vmul.f32 0.5, %v909
      %v911 = vsub.f32 1.5, %v910
      %v912 = vmul.f32 %v907, %v911
      %vm913 = vweird.f32 %v876
      %vm914 = vweird.f32 %v907
      %vm915 = vmor %vm913, %vm914
      %v916 = vsel %vm915, %v907, %v912
      %v917 = vld [vmem:[#allocation3] sm:$0xff]
      %v918 = vld [vmem:[#allocation3 + $0x8] sm:$0xff]
      %v919 = vld [vmem:[#allocation3 + $0x10] sm:$0xff]
      %v920 = vld [vmem:[#allocation3 + $0x18] sm:$0xff]
      %v921 = vsub.f32 %v917, %v853
      %v922 = vsub.f32 %v918, %v854
      %v923 = vsub.f32 %v919, %v855
      %v924 = vsub.f32 %v920, %v856
      %v925 = vmul.f32 %v921, %v886
      %v926 = vmul.f32 %v922, %v896
      %v927 = vmul.f32 %v923, %v906
      %v928 = vmul.f32 %v924, %v916
      %v929 = vld [vmem:[%s243] sm:$0xf]
      %v930 = vld [vmem:[%s243 + $0x4] sm:$0xf]
      %v931 = vld [vmem:[%s243 + $0x8] sm:$0xf]
      %v932 = vld [vmem:[%s243 + $0xc] sm:$0xf]
      %v933 = vunpack.c.l.bf16 %v929
      %v934 = vunpack.c.l.bf16 %v930
      %v935 = vunpack.c.l.bf16 %v931
      %v936 = vunpack.c.l.bf16 %v932
      %v937 = vadd.f32 %v925, %v933
      %v938 = vadd.f32 %v926, %v934
      %v939 = vadd.f32 %v927, %v935
      %v940 = vadd.f32 %v928, %v936
      %v941 = vpack.c.bf16 %v937, %v937
      %v942 = vpack.c.bf16 %v938, %v938
      %v943 = vpack.c.bf16 %v939, %v939
      %v944 = vpack.c.bf16 %v940, %v940
      %945 = vst [vmem:[%s253] sm:$0xf] %v941
      %946 = vst [vmem:[%s253 + $0x4] sm:$0xf] %v942
      %947 = vst [vmem:[%s253 + $0x8] sm:$0xf] %v943
      %948 = vst [vmem:[%s253 + $0xc] sm:$0xf] %v944
      %s949 = smul.u32 4, %s19
      %p950 = scmp.lt.s32.totalorder %s18, 1
      %s951 = scalar_select %p950, %s18, 1
      %p952 = scmp.lt.s32.totalorder %s949, 3
      %s953 = scalar_select %p952, %s949, 3
      %s954 = smul.addr %s951, 4
      %s955 = sadd.s32 %s953, %s954
      %s956 = smul.addr %s955, 4
      %s957 = scalar_lea.vmem %s3, %s956
      // Predicated region
      $region33: #{resnet_generator_forward.14} parent=31 // pred_check
        %p958 = pneg %p126
      $region34: #{resnet_generator_forward.14} parent=31 // pred_check_branch
        %960 = sbr.rel (%p958) target = $region36
      $region35: #{resnet_generator_forward.14} parent=31 // pred_region
        %s961 = smul.u32 4, %s19
      $region36: #{resnet_generator_forward.14} parent=31 // pred_fallthru
        _
    $region32: #{resnet_generator_forward.14} parent=5 // pred_fallthru
      _
    %p962 = scmp.le.s32.totalorder 2, %s9
    // Predicated region
    $region37: #{resnet_generator_forward.14} parent=5 // pred_check
      %p963 = pneg %p962
    $region38: #{resnet_generator_forward.14} parent=5 // pred_check_branch
      %965 = sbr.rel (%p963) target = $region40
    $region39: #{resnet_generator_forward.14} parent=5 // pred_region
      %s966 = ssub.s32 %s9, 2
      // Predicated region
      $region41: #{resnet_generator_forward.14} parent=39 // pred_check
        %p967 = pneg %p132
      $region42: #{resnet_generator_forward.14} parent=39 // pred_check_branch
        %969 = sbr.rel (%p967) target = $region44
      $region43: #{resnet_generator_forward.14} parent=39 // pred_region
        %s970 = smul.u32 4, %s21
        %p971 = scmp.lt.s32.totalorder %s20, 1
        %s972 = scalar_select %p971, %s20, 1
        %p973 = scmp.lt.s32.totalorder %s970, 3
        %s974 = scalar_select %p973, %s970, 3
        %s975 = smul.addr %s972, 4
        %s976 = sadd.s32 %s974, %s975
        %s977 = smul.addr %s976, 4
        %s978 = scalar_lea.vmem %s3, %s977
      $region44: #{resnet_generator_forward.14} parent=39 // pred_fallthru
        _
    $region40: #{resnet_generator_forward.14} parent=5 // pred_fallthru
      _
  $region6: #{resnet_generator_forward.14} parent=0 // loop_footer
    %s13 = sadd.s32 1, %s9
  $region7: #{resnet_generator_forward.14} parent=0 // loop_footer_branch
    %8 = sbr.rel target = $region3
  $region8: #{resnet_generator_forward.14} parent=0 // loop_exit
    _

// kernel: resnet_generator_forward.17
$region0: #{resnet_generator_forward.17}
  #allocation0 [shape = 'u32[]', space=smem, size = 0x4, offset = 0x4, fixed_abs, tag = 'smem constant byte address 0x4 - core index']
  #allocation1 [shape = 'u32[72,128]{1,0:T(1,128)}', space=vmem, size = 0x9000, scoped, tag = 'internal scratch']
  #allocation2 [shape = 'bf16[128,128]{1,0:T(8,128)(2,1)}', space=vmem, size = 0x8000, scoped, tag = 'scratch operand']
  #allocation3 [shape = 'f32[64,128]{1,0:T(8,128)}', space=vmem, size = 0x8000, scoped, tag = 'scratch operand']
  %s0 = inlined_call_operand.vmem [shape: bf16[2,32,256], index: 0, kind: input, shape index: {}]
  %s1 = inlined_call_operand.vmem [shape: bf16[64,128], index: 1, kind: input, shape index: {}]
  %s2 = inlined_call_operand.vmem [shape: bf16[2,64,128], index: 2, kind: output, shape index: {}]
  %s3 = sld [smem:[#allocation0]]
  $region41: #{resnet_generator_forward.17} parent=0
    _
  %s5 = ssub.s32 1, %s3
  %s6 = scalar_select 0, %s5, %s3
  loop: start=0, step=1, limit=4
  $region2: #{resnet_generator_forward.17} parent=0 // loop_pre_header
    _
  $region3: #{resnet_generator_forward.17} parent=0 // loop_header
    %s8 = sphi 0, %s12
    %p9 = scmp.ge.s32.totalorder %s8, 4
    %s15 = sphi 0, %s27
    %s16 = sphi 0, %s23
    %s17 = sphi 0, %s15
    %s18 = sphi 0, %s16
    %s19 = sphi 0, %s17
    %s20 = sphi 0, %s18
    %s30 = sphi 0, %s32
    %s33 = sphi 0, %s30
    %s34 = sphi 0, %s33
    %s50 = sphi 0, %s34
    %s56 = sphi 0, %s58
    %s59 = sphi 0, %s56
    %s60 = sphi 0, %s59
    %s76 = sphi 0, %s60
    %s84 = sphi 0, %s86
    %s87 = sphi 0, %s84
    %s88 = sphi 0, %s87
    %s104 = sphi 0, %s88
  $region4: #{resnet_generator_forward.17} parent=0 // loop_header_branch
    %11 = sbr.rel (%p9) target = $region8
  $region5: #{resnet_generator_forward.17} parent=0 // loop_body
    %s13 = ssub.s32 %s8, 1
    %s14 = ssub.s32 %s8, 2
    %s21 = sadd.s32 1, %s16
    %p22 = scmp.ge.s32.totalorder %s21, 1
    %s23 = scalar_select %p22, 0, %s21
    %s24 = sadd.s32 1, %s15
    %s25 = scalar_select %p22, %s24, %s15
    %p26 = scmp.ge.s32.totalorder %s25, 2
    %s27 = scalar_select %p26, 0, %s25
    %s28 = ssub.s32 %s15, %s27
    %p29 = scmp.eq.s32.totalorder %s28, 0
    %s31 = sadd.s32 %s30, 1
    %s32 = scalar_select %p29, %s30, %s31
    %p35 = pneg %p29
    %p36 = scmp.eq.s32.totalorder %s8, 1
    %p37 = por %p35, %p36
    %p38 = scmp.ne.s32.totalorder %s30, %s33
    %p39 = scmp.eq.s32.totalorder %s8, 0
    %p40 = por %p38, %p39
    %p41 = scmp.ne.s32.totalorder %s30, %s33
    %p42 = scmp.eq.s32.totalorder %s13, 1
    %p43 = por %p41, %p42
    %p44 = scmp.ne.s32.totalorder %s33, %s34
    %p45 = scmp.eq.s32.totalorder %s13, 0
    %p46 = por %p44, %p45
    %p47 = scmp.ne.s32.totalorder %s33, %s34
    %p48 = scmp.eq.s32.totalorder %s14, 1
    %p49 = por %p47, %p48
    %p51 = scmp.ne.s32.totalorder %s34, %s50
    %p52 = scmp.eq.s32.totalorder %s14, 0
    %p53 = por %p51, %p52
    %s54 = ssub.s32 %s16, %s23
    %p55 = scmp.eq.s32.totalorder %s54, 0
    %s57 = sadd.s32 %s56, 1
    %s58 = scalar_select %p55, %s56, %s57
    %p61 = pneg %p55
    %p62 = scmp.eq.s32.totalorder %s8, 1
    %p63 = por %p61, %p62
    %p64 = scmp.ne.s32.totalorder %s56, %s59
    %p65 = scmp.eq.s32.totalorder %s8, 0
    %p66 = por %p64, %p65
    %p67 = scmp.ne.s32.totalorder %s56, %s59
    %p68 = scmp.eq.s32.totalorder %s13, 1
    %p69 = por %p67, %p68
    %p70 = scmp.ne.s32.totalorder %s59, %s60
    %p71 = scmp.eq.s32.totalorder %s13, 0
    %p72 = por %p70, %p71
    %p73 = scmp.ne.s32.totalorder %s59, %s60
    %p74 = scmp.eq.s32.totalorder %s14, 1
    %p75 = por %p73, %p74
    %p77 = scmp.ne.s32.totalorder %s60, %s76
    %p78 = scmp.eq.s32.totalorder %s14, 0
    %p79 = por %p77, %p78
    %s80 = ssub.s32 %s15, %s27
    %s81 = ssub.s32 %s16, %s23
    %s82 = sor.u32 %s80, %s81
    %p83 = scmp.eq.s32.totalorder %s82, 0
    %s85 = sadd.s32 %s84, 1
    %s86 = scalar_select %p83, %s84, %s85
    %p89 = pneg %p83
    %p90 = scmp.eq.s32.totalorder %s8, 1
    %p91 = por %p89, %p90
    %p92 = scmp.ne.s32.totalorder %s84, %s87
    %p93 = scmp.eq.s32.totalorder %s8, 0
    %p94 = por %p92, %p93
    %p95 = scmp.ne.s32.totalorder %s84, %s87
    %p96 = scmp.eq.s32.totalorder %s13, 1
    %p97 = por %p95, %p96
    %p98 = scmp.ne.s32.totalorder %s87, %s88
    %p99 = scmp.eq.s32.totalorder %s13, 0
    %p100 = por %p98, %p99
    %p101 = scmp.ne.s32.totalorder %s87, %s88
    %p102 = scmp.eq.s32.totalorder %s14, 1
    %p103 = por %p101, %p102
    %p105 = scmp.ne.s32.totalorder %s88, %s104
    %p106 = scmp.eq.s32.totalorder %s14, 0
    %p107 = por %p105, %p106
    %p108 = scmp.le.s32.totalorder 1, %s8
    %p109 = scmp.lt.s32.totalorder %s8, 3
    %p110 = pnand %p108, %p109
    %p111 = pneg %p110
    // Predicated region
    $region9: #{resnet_generator_forward.17} parent=5 // pred_check
      _
    $region10: #{resnet_generator_forward.17} parent=5 // pred_check_branch
      %113 = sbr.rel (%p110) target = $region12
    $region11: #{resnet_generator_forward.17} parent=5 // pred_region
      %s114 = ssub.s32 %s8, 1
      // Predicated region
      $region13: #{resnet_generator_forward.17} parent=11 // pred_check
        %p115 = pneg %p72
      $region14: #{resnet_generator_forward.17} parent=11 // pred_check_branch
        %117 = sbr.rel (%p115) target = $region16
      $region15: #{resnet_generator_forward.17} parent=11 // pred_region
        %s118 = smul.u32 8, %s18
        %p119 = scmp.lt.s32.totalorder %s118, 7
        %s120 = scalar_select %p119, %s118, 7
        %s121 = smul.addr %s120, 4
        %s122 = scalar_lea.vmem %s1, %s121
        %s123 = smul.u32 8, %s18
      $region16: #{resnet_generator_forward.17} parent=11 // pred_fallthru
        _
    $region12: #{resnet_generator_forward.17} parent=5 // pred_fallthru
      _
    %p124 = scmp.lt.s32.totalorder %s8, 2
    // Predicated region
    $region17: #{resnet_generator_forward.17} parent=5 // pred_check
      %p125 = pneg %p124
    $region18: #{resnet_generator_forward.17} parent=5 // pred_check_branch
      %127 = sbr.rel (%p125) target = $region20
    $region19: #{resnet_generator_forward.17} parent=5 // pred_region
      // Predicated region
      $region21: #{resnet_generator_forward.17} parent=19 // pred_check
        %p128 = pneg %p40
      $region22: #{resnet_generator_forward.17} parent=19 // pred_check_branch
        %130 = sbr.rel (%p128) target = $region24
      $region23: #{resnet_generator_forward.17} parent=19 // pred_region
        %p131 = scmp.lt.s32.totalorder %s15, 1
        %s132 = scalar_select %p131, %s15, 1
        %s133 = smul.addr %s132, 8
        %s134 = smul.addr %s133, 4
        %s135 = scalar_lea.vmem %s0, %s134
      $region24: #{resnet_generator_forward.17} parent=19 // pred_fallthru
        _
    $region20: #{resnet_generator_forward.17} parent=5 // pred_fallthru
      _
    %p136 = scmp.le.s32.totalorder 1, %s8
    %p137 = scmp.lt.s32.totalorder %s8, 3
    %p138 = pnand %p136, %p137
    %p139 = pneg %p138
    // Predicated region
    $region25: #{resnet_generator_forward.17} parent=5 // pred_check
      _
    $region26: #{resnet_generator_forward.17} parent=5 // pred_check_branch
      %141 = sbr.rel (%p138) target = $region28
    $region27: #{resnet_generator_forward.17} parent=5 // pred_region
      %s142 = ssub.s32 %s8, 1
      %p143 = scmp.lt.s32.totalorder %s17, 1
      %s144 = scalar_select %p143, %s17, 1
      %s145 = smul.addr %s144, 8
      %s146 = smul.addr %s145, 4
      %s147 = scalar_lea.vmem %s0, %s146
      %p148 = pneg %p46
      %p149 = pneg %p43
      %s150 = smul.u32 8, %s18
      %p151 = scmp.lt.s32.totalorder %s150, 7
      %s152 = scalar_select %p151, %s150, 7
      %s153 = smul.addr %s152, 4
      %s154 = scalar_lea.vmem %s1, %s153
      %p155 = pneg %p72
      %p156 = pneg %p69
      %p157 = pneg %p100
      %p158 = pneg %p97
      %s159 = smul.u32 8, %s18
      %p160 = scmp.lt.s32.totalorder %s17, 1
      %s161 = scalar_select %p160, %s17, 1
      %p162 = scmp.lt.s32.totalorder %s159, 7
      %s163 = scalar_select %p162, %s159, 7
      %s164 = smul.addr %s161, 8
      %s165 = sadd.s32 %s163, %s164
      %s166 = smul.addr %s165, 4
      %s167 = scalar_lea.vmem %s2, %s166
      %p168 = scmp.lt.s32.totalorder %s17, 1
      %s169 = scalar_select %p168, %s17, 1
      %s170 = smul.addr %s169, 8
      %s171 = smul.addr %s170, 4
      %s172 = scalar_lea.vmem %s0, %s171
      %s173 = smul.u32 8, %s18
      %p174 = scmp.lt.s32.totalorder %s173, 7
      %s175 = scalar_select %p174, %s173, 7
      %s176 = smul.addr %s175, 4
      %s177 = scalar_lea.vmem %s1, %s176
      %s178 = smul.u32 8, %s18
      %s179 = smul.u32 8, %s18
      %p180 = scmp.lt.s32.totalorder %s17, 1
      %s181 = scalar_select %p180, %s17, 1
      %p182 = scmp.lt.s32.totalorder %s179, 7
      %s183 = scalar_select %p182, %s179, 7
      %s184 = smul.addr %s181, 8
      %s185 = sadd.s32 %s183, %s184
      %s186 = smul.addr %s185, 4
      %s187 = scalar_lea.vmem %s2, %s186
      %s188 = smul.u32 8, %s18
      %v189 = vld [vmem:[%s172] sm:$0xf]
      %v190 = vld [vmem:[%s172 + $0x8] sm:$0xf]
      %v191 = vld [vmem:[%s172 + $0x10] sm:$0xf]
      %v192 = vld [vmem:[%s172 + $0x18] sm:$0xf]
      %193 = vst [vmem:[#allocation2] sm:$0xf] %v189
      %194 = vst [vmem:[#allocation2 + $0x4] sm:$0xf] %v190
      %195 = vst [vmem:[#allocation2 + $0x8] sm:$0xf] %v191
      %196 = vst [vmem:[#allocation2 + $0xc] sm:$0xf] %v192
      %v197 = vld [vmem:[%s172] sm:$0xff]
      %v198 = vld [vmem:[%s172 + $0x8] sm:$0xff]
      %v199 = vld [vmem:[%s172 + $0x10] sm:$0xff]
      %v200 = vld [vmem:[%s172 + $0x18] sm:$0xff]
      %205 = vrot.lane.b32.xlu0 %v197, 127
      %v206 = vpop.permute.xlu0 %205
      %207 = vrot.lane.b32.xlu0 %v198, 127
      %v208 = vpop.permute.xlu0 %207
      %209 = vrot.lane.b32.xlu0 %v199, 127
      %v210 = vpop.permute.xlu0 %209
      %211 = vrot.lane.b32.xlu0 %v200, 127
      %v212 = vpop.permute.xlu0 %211
      %v213 = vrot.slane %v206, 4
      %v214 = vrot.slane %v208, 4
      %v215 = vrot.slane %v210, 4
      %v216 = vrot.slane %v212, 4
      %vm217 = vcmask 1039360
      %v218 = vsel %vm217, %v206, %v213
      %v219 = vsel %vm217, %v208, %v214
      %v220 = vsel %vm217, %v210, %v215
      %v221 = vsel %vm217, %v212, %v216
      %226 = vst [vmem:[#allocation2 + $0x10] sm:$0xf] %v218
      %227 = vst [vmem:[#allocation2 + $0x14] sm:$0xf] %v219
      %228 = vst [vmem:[#allocation2 + $0x18] sm:$0xf] %v220
      %229 = vst [vmem:[#allocation2 + $0x1c] sm:$0xf] %v221
      %v230 = vld [vmem:[%s172] sm:$0xff]
      %v231 = vld [vmem:[%s172 + $0x8] sm:$0xff]
      %v232 = vld [vmem:[%s172 + $0x10] sm:$0xff]
      %v233 = vld [vmem:[%s172 + $0x18] sm:$0xff]
      %238 = vrot.lane.b32.xlu0 %v230, 123
      %v239 = vpop.permute.xlu0 %238
      %240 = vrot.lane.b32.xlu0 %v231, 123
      %v241 = vpop.permute.xlu0 %240
      %242 = vrot.lane.b32.xlu0 %v232, 123
      %v243 = vpop.permute.xlu0 %242
      %244 = vrot.lane.b32.xlu0 %v233, 123
      %v245 = vpop.permute.xlu0 %244
      %v246 = vrot.slane %v239, 4
      %v247 = vrot.slane %v241, 4
      %v248 = vrot.slane %v243, 4
      %v249 = vrot.slane %v245, 4
      %vm250 = vcmask 1006592
      %v251 = vsel %vm250, %v239, %v246
      %v252 = vsel %vm250, %v241, %v247
      %v253 = vsel %vm250, %v243, %v248
      %v254 = vsel %vm250, %v245, %v249
      %259 = vst [vmem:[#allocation2 + $0x20] sm:$0xf] %v251
      %260 = vst [vmem:[#allocation2 + $0x24] sm:$0xf] %v252
      %261 = vst [vmem:[#allocation2 + $0x28] sm:$0xf] %v253
      %262 = vst [vmem:[#allocation2 + $0x2c] sm:$0xf] %v254
      %v263 = vld [vmem:[%s172] sm:$0xff]
      %v264 = vld [vmem:[%s172 + $0x8] sm:$0xff]
      %v265 = vld [vmem:[%s172 + $0x10] sm:$0xff]
      %v266 = vld [vmem:[%s172 + $0x18] sm:$0xff]
      %271 = vrot.lane.b32.xlu0 %v263, 122
      %v272 = vpop.permute.xlu0 %271
      %273 = vrot.lane.b32.xlu0 %v264, 122
      %v274 = vpop.permute.xlu0 %273
      %275 = vrot.lane.b32.xlu0 %v265, 122
      %v276 = vpop.permute.xlu0 %275
      %277 = vrot.lane.b32.xlu0 %v266, 122
      %v278 = vpop.permute.xlu0 %277
      %v279 = vrot.slane %v272, 4
      %v280 = vrot.slane %v274, 4
      %v281 = vrot.slane %v276, 4
      %v282 = vrot.slane %v278, 4
      %vm283 = vcmask 998400
      %v284 = vsel %vm283, %v272, %v279
      %v285 = vsel %vm283, %v274, %v280
      %v286 = vsel %vm283, %v276, %v281
      %v287 = vsel %vm283, %v278, %v282
      %292 = vst [vmem:[#allocation2 + $0x30] sm:$0xf] %v284
      %293 = vst [vmem:[#allocation2 + $0x34] sm:$0xf] %v285
      %294 = vst [vmem:[#allocation2 + $0x38] sm:$0xf] %v286
      %295 = vst [vmem:[#allocation2 + $0x3c] sm:$0xf] %v287
      %v296 = vld [vmem:[%s177] sm:$0xf]
      %v297 = vld [vmem:[%s177 + $0x4] sm:$0xf]
      %v298 = vld [vmem:[%s177 + $0x8] sm:$0xf]
      %v299 = vld [vmem:[%s177 + $0xc] sm:$0xf]
      %v300 = vld [vmem:[%s177 + $0x10] sm:$0xf]
      %v301 = vld [vmem:[%s177 + $0x14] sm:$0xf]
      %v302 = vld [vmem:[%s177 + $0x18] sm:$0xf]
      %v303 = vld [vmem:[%s177 + $0x1c] sm:$0xf]
      %v304 = vld [vmem:[#allocation2] sm:$0xf]
      %v305 = vld [vmem:[#allocation2 + $0x4] sm:$0xf]
      %v306 = vld [vmem:[#allocation2 + $0x8] sm:$0xf]
      %v307 = vld [vmem:[#allocation2 + $0xc] sm:$0xf]
      %v308 = vld [vmem:[#allocation2 + $0x10] sm:$0xf]
      %v309 = vld [vmem:[#allocation2 + $0x14] sm:$0xf]
      %v310 = vld [vmem:[#allocation2 + $0x18] sm:$0xf]
      %v311 = vld [vmem:[#allocation2 + $0x1c] sm:$0xf]
      %v312 = vld [vmem:[#allocation2 + $0x20] sm:$0xf]
      %v313 = vld [vmem:[#allocation2 + $0x24] sm:$0xf]
      %v314 = vld [vmem:[#allocation2 + $0x28] sm:$0xf]
      %v315 = vld [vmem:[#allocation2 + $0x2c] sm:$0xf]
      %v316 = vld [vmem:[#allocation2 + $0x30] sm:$0xf]
      %v317 = vld [vmem:[#allocation2 + $0x34] sm:$0xf]
      %v318 = vld [vmem:[#allocation2 + $0x38] sm:$0xf]
      %v319 = vld [vmem:[#allocation2 + $0x3c] sm:$0xf]
      %v328 = vunpack.c.l.b16 %v296
      %v329 = vunpack.c.l.b16 %v297
      %v330 = vunpack.c.l.b16 %v298
      %v331 = vunpack.c.l.b16 %v299
      %v332 = vunpack.c.l.b16 %v300
      %v333 = vunpack.c.l.b16 %v301
      %v334 = vunpack.c.l.b16 %v302
      %v335 = vunpack.c.l.b16 %v303
      %v336 = vpack.c.b16 %v329, %v328
      %v337 = vpack.c.b16 %v331, %v330
      %v338 = vpack.c.b16 %v333, %v332
      %v339 = vpack.c.b16 %v335, %v334
      %v360 = vunpack.c.l.b16 %v304
      %v361 = vunpack.c.l.b16 %v305
      %v362 = vunpack.c.l.b16 %v306
      %v363 = vunpack.c.l.b16 %v307
      %v364 = vunpack.c.l.b16 %v308
      %v365 = vunpack.c.l.b16 %v309
      %v366 = vunpack.c.l.b16 %v310
      %v367 = vunpack.c.l.b16 %v311
      %v368 = vunpack.c.l.b16 %v312
      %v369 = vunpack.c.l.b16 %v313
      %v370 = vunpack.c.l.b16 %v314
      %v371 = vunpack.c.l.b16 %v315
      %v372 = vunpack.c.l.b16 %v316
      %v373 = vunpack.c.l.b16 %v317
      %v374 = vunpack.c.l.b16 %v318
      %v375 = vunpack.c.l.b16 %v319
      %v376 = vpack.c.b16 %v361, %v360
      %v377 = vpack.c.b16 %v363, %v362
      %v378 = vpack.c.b16 %v365, %v364
      %v379 = vpack.c.b16 %v367, %v366
      %v380 = vpack.c.b16 %v369, %v368
      %v381 = vpack.c.b16 %v371, %v370
      %v382 = vpack.c.b16 %v373, %v372
      %v383 = vpack.c.b16 %v375, %v374
      %392 = vmatpush.bf16.msra.mxu0 %v383
      %393 = vmatpush.bf16.msra.mxu0 %v382
      %394 = vmatpush.bf16.msra.mxu0 %v381
      %395 = vmatpush.bf16.msra.mxu0 %v380
      %396 = vmatpush.bf16.msra.mxu0 %v379
      %397 = vmatpush.bf16.msra.mxu0 %v378
      %398 = vmatpush.bf16.msra.mxu0 %v377
      %399 = vmatpush.bf16.msra.mxu0 %v376
      %400 = vmatmul.bf16.gmra.mxu0 %v336
      %v401 = vpop.f32.mrf.mxu0
      %v402 = vadd.f32 0.0, %v401
      %v403 = vpop.f32.mrf.mxu0
      %v404 = vadd.f32 0.0, %v403
      %405 = vmatmul.bf16.gmra.mxu0 %v337
      %v406 = vpop.f32.mrf.mxu0
      %v407 = vadd.f32 0.0, %v406
      %v408 = vpop.f32.mrf.mxu0
      %v409 = vadd.f32 0.0, %v408
      %410 = vmatmul.bf16.gmra.mxu0 %v338
      %v411 = vpop.f32.mrf.mxu0
      %v412 = vadd.f32 0.0, %v411
      %v413 = vpop.f32.mrf.mxu0
      %v414 = vadd.f32 0.0, %v413
      %415 = vmatmul.bf16.gmra.mxu0 %v339
      %v416 = vpop.f32.mrf.mxu0
      %v417 = vadd.f32 0.0, %v416
      %v418 = vpop.f32.mrf.mxu0
      %v419 = vadd.f32 0.0, %v418
      %420 = vdwg.mxu0
      %v421 = vlaneseq
      %v422 = vand.u32 %v421, 127
      %v423 = vstv 0
      %v424 = vadd.s32 %v423, %v422
      %vm425 = vcmp.lt.s32.totalorder %v424, 0
      %v426 = vsub.s32 0, %v424
      %v427 = vsel %vm425, %v426, %v424
      %v428 = vand.u32 %v427, 65535
      %v429 = vshrl.u32 %v427, 16
      %v431 = vmul.u32 %v428, 52429
      %v432 = vmul.u32 %v428, 52428
      %v433 = vmul.u32 %v429, 52429
      %v434 = vmul.u32 %v429, 52428
      %v435 = vshll.u32 %v432, 16
      %v436 = vshrl.u32 %v432, 16
      %v437 = vshll.u32 %v433, 16
      %v438 = vshrl.u32 %v433, 16
      %vm439 = vc.u32 %v431, %v435
      %v440 = vsel %vm439, 1, 0
      %v441 = vadd.s32 %v431, %v435
      %v442 = vadd.s32 %v434, %v440
      %vm443 = vc.u32 %v441, %v437
      %v444 = vsel %vm443, 1, 0
      %v445 = vadd.s32 %v441, %v437
      %v446 = vadd.s32 %v442, %v444
      %v447 = vadd.s32 %v446, %v436
      %v448 = vadd.s32 %v447, %v438
      %v449 = vshrl.u32 %v448, 2
      %v450 = vmul.u32 %v449, 5
      %v451 = vsub.s32 %v427, %v450
      %v452 = vsub.s32 0, %v451
      %v453 = vsel %vm425, %v452, %v451
      %vm454 = vcmp.ne.s32.totalorder %v453, 0
      %vm455 = vcmp.lt.s32.totalorder %v453, 0
      %vm456 = vmand %vm455, %vm454
      %v457 = vadd.s32 %v453, 5
      %v458 = vsel %vm456, %v457, %v453
      %vm459 = vcmp.lt.s32.totalorder %v458, 4
      %vm460 = vcmp.lt.s32.totalorder %v424, 20
      %vm461 = vmand %vm459, %vm460
      %v462 = vsel %vm461, 1, 0
      %v463 = vcvt.s32.f32 %v462
      %v464 = vmul.f32 %v402, %v463
      %v465 = vmul.f32 %v404, %v463
      %v466 = vmul.f32 %v407, %v463
      %v467 = vmul.f32 %v409, %v463
      %v468 = vmul.f32 %v412, %v463
      %v469 = vmul.f32 %v414, %v463
      %v470 = vmul.f32 %v417, %v463
      %v471 = vmul.f32 %v419, %v463
      %472 = vadd.xlane.f32.xlu0 %v464
      %v473 = vpop.xlane.xlu0 %472
      %474 = vadd.xlane.f32.xlu0 %v465
      %v475 = vpop.xlane.xlu0 %474
      %476 = vadd.xlane.f32.xlu0 %v466
      %v477 = vpop.xlane.xlu0 %476
      %478 = vadd.xlane.f32.xlu0 %v467
      %v479 = vpop.xlane.xlu0 %478
      %480 = vadd.xlane.f32.xlu0 %v468
      %v481 = vpop.xlane.xlu0 %480
      %482 = vadd.xlane.f32.xlu0 %v469
      %v483 = vpop.xlane.xlu0 %482
      %484 = vadd.xlane.f32.xlu0 %v470
      %v485 = vpop.xlane.xlu0 %484
      %486 = vadd.xlane.f32.xlu0 %v471
      %v487 = vpop.xlane.xlu0 %486
      %v488 = vadd.f32 %v473, 0.0
      %v489 = vadd.f32 %v475, 0.0
      %v490 = vadd.f32 %v477, 0.0
      %v491 = vadd.f32 %v479, 0.0
      %v492 = vadd.f32 %v481, 0.0
      %v493 = vadd.f32 %v483, 0.0
      %v494 = vadd.f32 %v485, 0.0
      %v495 = vadd.f32 %v487, 0.0
      %v496 = vmul.f32 %v402, %v464
      %v497 = vmul.f32 %v404, %v465
      %v498 = vmul.f32 %v407, %v466
      %v499 = vmul.f32 %v409, %v467
      %v500 = vmul.f32 %v412, %v468
      %v501 = vmul.f32 %v414, %v469
      %v502 = vmul.f32 %v417, %v470
      %v503 = vmul.f32 %v419, %v471
      %504 = vadd.xlane.f32.xlu0 %v496
      %v505 = vpop.xlane.xlu0 %504
      %506 = vadd.xlane.f32.xlu0 %v497
      %v507 = vpop.xlane.xlu0 %506
      %508 = vadd.xlane.f32.xlu0 %v498
      %v509 = vpop.xlane.xlu0 %508
      %510 = vadd.xlane.f32.xlu0 %v499
      %v511 = vpop.xlane.xlu0 %510
      %512 = vadd.xlane.f32.xlu0 %v500
      %v513 = vpop.xlane.xlu0 %512
      %514 = vadd.xlane.f32.xlu0 %v501
      %v515 = vpop.xlane.xlu0 %514
      %516 = vadd.xlane.f32.xlu0 %v502
      %v517 = vpop.xlane.xlu0 %516
      %518 = vadd.xlane.f32.xlu0 %v503
      %v519 = vpop.xlane.xlu0 %518
      %v520 = vadd.f32 %v505, 0.0
      %v521 = vadd.f32 %v507, 0.0
      %v522 = vadd.f32 %v509, 0.0
      %v523 = vadd.f32 %v511, 0.0
      %v524 = vadd.f32 %v513, 0.0
      %v525 = vadd.f32 %v515, 0.0
      %v526 = vadd.f32 %v517, 0.0
      %v527 = vadd.f32 %v519, 0.0
      %528 = vst [vmem:[#allocation3] sm:$0xff] %v402
      %529 = vst [vmem:[#allocation3 + $0x8] sm:$0xff] %v404
      %530 = vst [vmem:[#allocation3 + $0x10] sm:$0xff] %v407
      %531 = vst [vmem:[#allocation3 + $0x18] sm:$0xff] %v409
      %532 = vst [vmem:[#allocation3 + $0x20] sm:$0xff] %v412
      %533 = vst [vmem:[#allocation3 + $0x28] sm:$0xff] %v414
      %534 = vst [vmem:[#allocation3 + $0x30] sm:$0xff] %v417
      %535 = vst [vmem:[#allocation3 + $0x38] sm:$0xff] %v419
      %v536 = vadd.f32 %v488, %v490
      %v537 = vadd.f32 %v489, %v491
      %v538 = vadd.f32 %v520, %v522
      %v539 = vadd.f32 %v521, %v523
      %v540 = vadd.f32 %v536, %v492
      %v541 = vadd.f32 %v537, %v493
      %v542 = vadd.f32 %v538, %v524
      %v543 = vadd.f32 %v539, %v525
      %v544 = vadd.f32 %v540, %v494
      %v545 = vadd.f32 %v541, %v495
      %v546 = vadd.f32 %v542, %v526
      %v547 = vadd.f32 %v543, %v527
      %v548 = vmul.f32 %v544, 0.015625
      %v549 = vmul.f32 %v545, 0.015625
      %v550 = vmul.f32 %v546, 0.015625
      %v551 = vmul.f32 %v547, 0.015625
      %v552 = vmul.f32 %v548, %v548
      %v553 = vmul.f32 %v549, %v549
      %v554 = vsub.f32 %v550, %v552
      %v555 = vsub.f32 %v551, %v553
      %v556 = vmax.f32 %v554, 0.0
      %v557 = vmax.f32 %v555, 0.0
      %v558 = vadd.f32 %v556, 1e-05
      %v559 = vadd.f32 %v557, 1e-05
      %v560 = vrsqrt.pop %v558
      %v561 = vmul.f32 %v560, %v558
      %v562 = vmul.f32 %v561, %v560
      %v563 = vmul.f32 0.5, %v562
      %v564 = vsub.f32 1.5, %v563
      %v565 = vmul.f32 %v560, %v564
      %vm566 = vweird.f32 %v558
      %vm567 = vweird.f32 %v560
      %vm568 = vmor %vm566, %vm567
      %v569 = vsel %vm568, %v560, %v565
      %v570 = vrsqrt.pop %v559
      %v571 = vmul.f32 %v570, %v559
      %v572 = vmul.f32 %v571, %v570
      %v573 = vmul.f32 0.5, %v572
      %v574 = vsub.f32 1.5, %v573
      %v575 = vmul.f32 %v570, %v574
      %vm576 = vweird.f32 %v559
      %vm577 = vweird.f32 %v570
      %vm578 = vmor %vm576, %vm577
      %v579 = vsel %vm578, %v570, %v575
      %v580 = vld [vmem:[#allocation3] sm:$0xff]
      %v581 = vld [vmem:[#allocation3 + $0x8] sm:$0xff]
      %v582 = vld [vmem:[#allocation3 + $0x10] sm:$0xff]
      %v583 = vld [vmem:[#allocation3 + $0x18] sm:$0xff]
      %v584 = vld [vmem:[#allocation3 + $0x20] sm:$0xff]
      %v585 = vld [vmem:[#allocation3 + $0x28] sm:$0xff]
      %v586 = vld [vmem:[#allocation3 + $0x30] sm:$0xff]
      %v587 = vld [vmem:[#allocation3 + $0x38] sm:$0xff]
      %589 = vset.pattern.permute.xlu0 0
      %590 = vperm.xlu0 %589, %v548
      %v591 = vpop.permute.xlu0 %590
      %594 = vset.pattern.permute.xlu0 0
      %595 = vperm.xlu0 %594, %v549
      %v596 = vpop.permute.xlu0 %595
      %v598 = vsub.f32 %v580, %v591
      %v599 = vsub.f32 %v581, %v596
      %v600 = vsub.f32 %v582, %v591
      %v601 = vsub.f32 %v583, %v596
      %v602 = vsub.f32 %v584, %v591
      %v603 = vsub.f32 %v585, %v596
      %v604 = vsub.f32 %v586, %v591
      %v605 = vsub.f32 %v587, %v596
      %607 = vset.pattern.permute.xlu0 0
      %608 = vperm.xlu0 %607, %v569
      %v609 = vpop.permute.xlu0 %608
      %612 = vset.pattern.permute.xlu0 0
      %613 = vperm.xlu0 %612, %v579
      %v614 = vpop.permute.xlu0 %613
      %v616 = vmul.f32 %v598, %v609
      %v617 = vmul.f32 %v599, %v614
      %v618 = vmul.f32 %v600, %v609
      %v619 = vmul.f32 %v601, %v614
      %v620 = vmul.f32 %v602, %v609
      %v621 = vmul.f32 %v603, %v614
      %v622 = vmul.f32 %v604, %v609
      %v623 = vmul.f32 %v605, %v614
      %v624 = vmax.f32 %v616, 0.0
      %v625 = vmax.f32 %v617, 0.0
      %v626 = vmax.f32 %v618, 0.0
      %v627 = vmax.f32 %v619, 0.0
      %v628 = vmax.f32 %v620, 0.0
      %v629 = vmax.f32 %v621, 0.0
      %v630 = vmax.f32 %v622, 0.0
      %v631 = vmax.f32 %v623, 0.0
      %v632 = vpack.c.bf16 %v624, %v624
      %v633 = vpack.c.bf16 %v625, %v625
      %v634 = vpack.c.bf16 %v626, %v626
      %v635 = vpack.c.bf16 %v627, %v627
      %v636 = vpack.c.bf16 %v628, %v628
      %v637 = vpack.c.bf16 %v629, %v629
      %v638 = vpack.c.bf16 %v630, %v630
      %v639 = vpack.c.bf16 %v631, %v631
      %640 = vst [vmem:[%s187] sm:$0xf] %v632
      %641 = vst [vmem:[%s187 + $0x4] sm:$0xf] %v633
      %642 = vst [vmem:[%s187 + $0x8] sm:$0xf] %v634
      %643 = vst [vmem:[%s187 + $0xc] sm:$0xf] %v635
      %644 = vst [vmem:[%s187 + $0x10] sm:$0xf] %v636
      %645 = vst [vmem:[%s187 + $0x14] sm:$0xf] %v637
      %646 = vst [vmem:[%s187 + $0x18] sm:$0xf] %v638
      %647 = vst [vmem:[%s187 + $0x1c] sm:$0xf] %v639
      %s648 = smul.u32 8, %s18
      %p649 = scmp.lt.s32.totalorder %s17, 1
      %s650 = scalar_select %p649, %s17, 1
      %p651 = scmp.lt.s32.totalorder %s648, 7
      %s652 = scalar_select %p651, %s648, 7
      %s653 = smul.addr %s650, 8
      %s654 = sadd.s32 %s652, %s653
      %s655 = smul.addr %s654, 4
      %s656 = scalar_lea.vmem %s2, %s655
      // Predicated region
      $region29: #{resnet_generator_forward.17} parent=27 // pred_check
        %p657 = pneg %p97
      $region30: #{resnet_generator_forward.17} parent=27 // pred_check_branch
        %659 = sbr.rel (%p657) target = $region32
      $region31: #{resnet_generator_forward.17} parent=27 // pred_region
        %s660 = smul.u32 8, %s18
      $region32: #{resnet_generator_forward.17} parent=27 // pred_fallthru
        _
    $region28: #{resnet_generator_forward.17} parent=5 // pred_fallthru
      _
    %p661 = scmp.le.s32.totalorder 2, %s8
    // Predicated region
    $region33: #{resnet_generator_forward.17} parent=5 // pred_check
      %p662 = pneg %p661
    $region34: #{resnet_generator_forward.17} parent=5 // pred_check_branch
      %664 = sbr.rel (%p662) target = $region36
    $region35: #{resnet_generator_forward.17} parent=5 // pred_region
      %s665 = ssub.s32 %s8, 2
      // Predicated region
      $region37: #{resnet_generator_forward.17} parent=35 // pred_check
        %p666 = pneg %p103
      $region38: #{resnet_generator_forward.17} parent=35 // pred_check_branch
        %668 = sbr.rel (%p666) target = $region40
      $region39: #{resnet_generator_forward.17} parent=35 // pred_region
        %s669 = smul.u32 8, %s20
        %p670 = scmp.lt.s32.totalorder %s19, 1
        %s671 = scalar_select %p670, %s19, 1
        %p672 = scmp.lt.s32.totalorder %s669, 7
        %s673 = scalar_select %p672, %s669, 7
        %s674 = smul.addr %s671, 8
        %s675 = sadd.s32 %s673, %s674
        %s676 = smul.addr %s675, 4
        %s677 = scalar_lea.vmem %s2, %s676
      $region40: #{resnet_generator_forward.17} parent=35 // pred_fallthru
        _
    $region36: #{resnet_generator_forward.17} parent=5 // pred_fallthru
      _
  $region6: #{resnet_generator_forward.17} parent=0 // loop_footer
    %s12 = sadd.s32 1, %s8
  $region7: #{resnet_generator_forward.17} parent=0 // loop_footer_branch
    %7 = sbr.rel target = $region3
  $region8: #{resnet_generator_forward.17} parent=0 // loop_exit
    _

// kernel: resnet_generator_forward.18
$region0: #{resnet_generator_forward.18}
  #allocation0 [shape = 'u32[]', space=smem, size = 0x4, offset = 0x4, fixed_abs, tag = 'smem constant byte address 0x4 - core index']
  #allocation1 [shape = 'u32[72,128]{1,0:T(1,128)}', space=vmem, size = 0x9000, scoped, tag = 'internal scratch']
  #allocation2 [shape = 'bf16[64,128]{1,0:T(8,128)(2,1)}', space=vmem, size = 0x4000, scoped, tag = 'scratch operand']
  #allocation3 [shape = 'f32[32,128]{1,0:T(8,128)}', space=vmem, size = 0x4000, scoped, tag = 'scratch operand']
  %s0 = inlined_call_operand.vmem [shape: bf16[2,16,256], index: 0, kind: input, shape index: {}]
  %s1 = inlined_call_operand.vmem [shape: bf16[32,64], index: 1, kind: input, shape index: {}]
  %s2 = inlined_call_operand.vmem [shape: bf16[2,32,128], index: 2, kind: output, shape index: {}]
  %s3 = sld [smem:[#allocation0]]
  $region41: #{resnet_generator_forward.18} parent=0
    _
  %s5 = ssub.s32 1, %s3
  %s6 = scalar_select 0, %s5, %s3
  loop: start=0, step=1, limit=4
  $region2: #{resnet_generator_forward.18} parent=0 // loop_pre_header
    _
  $region3: #{resnet_generator_forward.18} parent=0 // loop_header
    %s8 = sphi 0, %s12
    %p9 = scmp.ge.s32.totalorder %s8, 4
    %s15 = sphi 0, %s27
    %s16 = sphi 0, %s23
    %s17 = sphi 0, %s15
    %s18 = sphi 0, %s16
    %s19 = sphi 0, %s17
    %s20 = sphi 0, %s18
    %s30 = sphi 0, %s32
    %s33 = sphi 0, %s30
    %s34 = sphi 0, %s33
    %s50 = sphi 0, %s34
    %s56 = sphi 0, %s58
    %s59 = sphi 0, %s56
    %s60 = sphi 0, %s59
    %s76 = sphi 0, %s60
    %s84 = sphi 0, %s86
    %s87 = sphi 0, %s84
    %s88 = sphi 0, %s87
    %s104 = sphi 0, %s88
  $region4: #{resnet_generator_forward.18} parent=0 // loop_header_branch
    %11 = sbr.rel (%p9) target = $region8
  $region5: #{resnet_generator_forward.18} parent=0 // loop_body
    %s13 = ssub.s32 %s8, 1
    %s14 = ssub.s32 %s8, 2
    %s21 = sadd.s32 1, %s16
    %p22 = scmp.ge.s32.totalorder %s21, 1
    %s23 = scalar_select %p22, 0, %s21
    %s24 = sadd.s32 1, %s15
    %s25 = scalar_select %p22, %s24, %s15
    %p26 = scmp.ge.s32.totalorder %s25, 2
    %s27 = scalar_select %p26, 0, %s25
    %s28 = ssub.s32 %s15, %s27
    %p29 = scmp.eq.s32.totalorder %s28, 0
    %s31 = sadd.s32 %s30, 1
    %s32 = scalar_select %p29, %s30, %s31
    %p35 = pneg %p29
    %p36 = scmp.eq.s32.totalorder %s8, 1
    %p37 = por %p35, %p36
    %p38 = scmp.ne.s32.totalorder %s30, %s33
    %p39 = scmp.eq.s32.totalorder %s8, 0
    %p40 = por %p38, %p39
    %p41 = scmp.ne.s32.totalorder %s30, %s33
    %p42 = scmp.eq.s32.totalorder %s13, 1
    %p43 = por %p41, %p42
    %p44 = scmp.ne.s32.totalorder %s33, %s34
    %p45 = scmp.eq.s32.totalorder %s13, 0
    %p46 = por %p44, %p45
    %p47 = scmp.ne.s32.totalorder %s33, %s34
    %p48 = scmp.eq.s32.totalorder %s14, 1
    %p49 = por %p47, %p48
    %p51 = scmp.ne.s32.totalorder %s34, %s50
    %p52 = scmp.eq.s32.totalorder %s14, 0
    %p53 = por %p51, %p52
    %s54 = ssub.s32 %s16, %s23
    %p55 = scmp.eq.s32.totalorder %s54, 0
    %s57 = sadd.s32 %s56, 1
    %s58 = scalar_select %p55, %s56, %s57
    %p61 = pneg %p55
    %p62 = scmp.eq.s32.totalorder %s8, 1
    %p63 = por %p61, %p62
    %p64 = scmp.ne.s32.totalorder %s56, %s59
    %p65 = scmp.eq.s32.totalorder %s8, 0
    %p66 = por %p64, %p65
    %p67 = scmp.ne.s32.totalorder %s56, %s59
    %p68 = scmp.eq.s32.totalorder %s13, 1
    %p69 = por %p67, %p68
    %p70 = scmp.ne.s32.totalorder %s59, %s60
    %p71 = scmp.eq.s32.totalorder %s13, 0
    %p72 = por %p70, %p71
    %p73 = scmp.ne.s32.totalorder %s59, %s60
    %p74 = scmp.eq.s32.totalorder %s14, 1
    %p75 = por %p73, %p74
    %p77 = scmp.ne.s32.totalorder %s60, %s76
    %p78 = scmp.eq.s32.totalorder %s14, 0
    %p79 = por %p77, %p78
    %s80 = ssub.s32 %s15, %s27
    %s81 = ssub.s32 %s16, %s23
    %s82 = sor.u32 %s80, %s81
    %p83 = scmp.eq.s32.totalorder %s82, 0
    %s85 = sadd.s32 %s84, 1
    %s86 = scalar_select %p83, %s84, %s85
    %p89 = pneg %p83
    %p90 = scmp.eq.s32.totalorder %s8, 1
    %p91 = por %p89, %p90
    %p92 = scmp.ne.s32.totalorder %s84, %s87
    %p93 = scmp.eq.s32.totalorder %s8, 0
    %p94 = por %p92, %p93
    %p95 = scmp.ne.s32.totalorder %s84, %s87
    %p96 = scmp.eq.s32.totalorder %s13, 1
    %p97 = por %p95, %p96
    %p98 = scmp.ne.s32.totalorder %s87, %s88
    %p99 = scmp.eq.s32.totalorder %s13, 0
    %p100 = por %p98, %p99
    %p101 = scmp.ne.s32.totalorder %s87, %s88
    %p102 = scmp.eq.s32.totalorder %s14, 1
    %p103 = por %p101, %p102
    %p105 = scmp.ne.s32.totalorder %s88, %s104
    %p106 = scmp.eq.s32.totalorder %s14, 0
    %p107 = por %p105, %p106
    %p108 = scmp.le.s32.totalorder 1, %s8
    %p109 = scmp.lt.s32.totalorder %s8, 3
    %p110 = pnand %p108, %p109
    %p111 = pneg %p110
    // Predicated region
    $region9: #{resnet_generator_forward.18} parent=5 // pred_check
      _
    $region10: #{resnet_generator_forward.18} parent=5 // pred_check_branch
      %113 = sbr.rel (%p110) target = $region12
    $region11: #{resnet_generator_forward.18} parent=5 // pred_region
      %s114 = ssub.s32 %s8, 1
      // Predicated region
      $region13: #{resnet_generator_forward.18} parent=11 // pred_check
        %p115 = pneg %p72
      $region14: #{resnet_generator_forward.18} parent=11 // pred_check_branch
        %117 = sbr.rel (%p115) target = $region16
      $region15: #{resnet_generator_forward.18} parent=11 // pred_region
        %s118 = smul.u32 4, %s18
        %p119 = scmp.lt.s32.totalorder %s118, 3
        %s120 = scalar_select %p119, %s118, 3
        %s121 = smul.addr %s120, 4
        %s122 = scalar_lea.vmem %s1, %s121
        %s123 = smul.u32 4, %s18
      $region16: #{resnet_generator_forward.18} parent=11 // pred_fallthru
        _
    $region12: #{resnet_generator_forward.18} parent=5 // pred_fallthru
      _
    %p124 = scmp.lt.s32.totalorder %s8, 2
    // Predicated region
    $region17: #{resnet_generator_forward.18} parent=5 // pred_check
      %p125 = pneg %p124
    $region18: #{resnet_generator_forward.18} parent=5 // pred_check_branch
      %127 = sbr.rel (%p125) target = $region20
    $region19: #{resnet_generator_forward.18} parent=5 // pred_region
      // Predicated region
      $region21: #{resnet_generator_forward.18} parent=19 // pred_check
        %p128 = pneg %p40
      $region22: #{resnet_generator_forward.18} parent=19 // pred_check_branch
        %130 = sbr.rel (%p128) target = $region24
      $region23: #{resnet_generator_forward.18} parent=19 // pred_region
        %p131 = scmp.lt.s32.totalorder %s15, 1
        %s132 = scalar_select %p131, %s15, 1
        %s133 = smul.addr %s132, 4
        %s134 = smul.addr %s133, 4
        %s135 = scalar_lea.vmem %s0, %s134
      $region24: #{resnet_generator_forward.18} parent=19 // pred_fallthru
        _
    $region20: #{resnet_generator_forward.18} parent=5 // pred_fallthru
      _
    %p136 = scmp.le.s32.totalorder 1, %s8
    %p137 = scmp.lt.s32.totalorder %s8, 3
    %p138 = pnand %p136, %p137
    %p139 = pneg %p138
    // Predicated region
    $region25: #{resnet_generator_forward.18} parent=5 // pred_check
      _
    $region26: #{resnet_generator_forward.18} parent=5 // pred_check_branch
      %141 = sbr.rel (%p138) target = $region28
    $region27: #{resnet_generator_forward.18} parent=5 // pred_region
      %s142 = ssub.s32 %s8, 1
      %p143 = scmp.lt.s32.totalorder %s17, 1
      %s144 = scalar_select %p143, %s17, 1
      %s145 = smul.addr %s144, 4
      %s146 = smul.addr %s145, 4
      %s147 = scalar_lea.vmem %s0, %s146
      %p148 = pneg %p46
      %p149 = pneg %p43
      %s150 = smul.u32 4, %s18
      %p151 = scmp.lt.s32.totalorder %s150, 3
      %s152 = scalar_select %p151, %s150, 3
      %s153 = smul.addr %s152, 4
      %s154 = scalar_lea.vmem %s1, %s153
      %p155 = pneg %p72
      %p156 = pneg %p69
      %p157 = pneg %p100
      %p158 = pneg %p97
      %s159 = smul.u32 4, %s18
      %p160 = scmp.lt.s32.totalorder %s17, 1
      %s161 = scalar_select %p160, %s17, 1
      %p162 = scmp.lt.s32.totalorder %s159, 3
      %s163 = scalar_select %p162, %s159, 3
      %s164 = smul.addr %s161, 4
      %s165 = sadd.s32 %s163, %s164
      %s166 = smul.addr %s165, 4
      %s167 = scalar_lea.vmem %s2, %s166
      %p168 = scmp.lt.s32.totalorder %s17, 1
      %s169 = scalar_select %p168, %s17, 1
      %s170 = smul.addr %s169, 4
      %s171 = smul.addr %s170, 4
      %s172 = scalar_lea.vmem %s0, %s171
      %s173 = smul.u32 4, %s18
      %p174 = scmp.lt.s32.totalorder %s173, 3
      %s175 = scalar_select %p174, %s173, 3
      %s176 = smul.addr %s175, 4
      %s177 = scalar_lea.vmem %s1, %s176
      %s178 = smul.u32 4, %s18
      %s179 = smul.u32 4, %s18
      %p180 = scmp.lt.s32.totalorder %s17, 1
      %s181 = scalar_select %p180, %s17, 1
      %p182 = scmp.lt.s32.totalorder %s179, 3
      %s183 = scalar_select %p182, %s179, 3
      %s184 = smul.addr %s181, 4
      %s185 = sadd.s32 %s183, %s184
      %s186 = smul.addr %s185, 4
      %s187 = scalar_lea.vmem %s2, %s186
      %s188 = smul.u32 4, %s18
      %v190 = vld [vmem:[%s172] sm:$0xf]
      %v191 = vld [vmem:[%s172 + $0x8] sm:$0xf]
      %192 = vst [vmem:[#allocation2] sm:$0xf] %v190
      %193 = vst [vmem:[#allocation2 + $0x4] sm:$0xf] %v191
      %v194 = vld [vmem:[%s172] sm:$0xff]
      %v195 = vld [vmem:[%s172 + $0x8] sm:$0xff]
      %198 = vrot.lane.b32.xlu0 %v194, 127
      %v199 = vpop.permute.xlu0 %198
      %200 = vrot.lane.b32.xlu0 %v195, 127
      %v201 = vpop.permute.xlu0 %200
      %v202 = vrot.slane %v199, 4
      %v203 = vrot.slane %v201, 4
      %vm204 = vcmask 1039360
      %v205 = vsel %vm204, %v199, %v202
      %v206 = vsel %vm204, %v201, %v203
      %209 = vst [vmem:[#allocation2 + $0x8] sm:$0xf] %v205
      %210 = vst [vmem:[#allocation2 + $0xc] sm:$0xf] %v206
      %v211 = vld [vmem:[%s172] sm:$0xff]
      %v212 = vld [vmem:[%s172 + $0x8] sm:$0xff]
      %215 = vrot.lane.b32.xlu0 %v211, 119
      %v216 = vpop.permute.xlu0 %215
      %217 = vrot.lane.b32.xlu0 %v212, 119
      %v218 = vpop.permute.xlu0 %217
      %v219 = vrot.slane %v216, 4
      %v220 = vrot.slane %v218, 4
      %vm221 = vcmask 973824
      %v222 = vsel %vm221, %v216, %v219
      %v223 = vsel %vm221, %v218, %v220
      %226 = vst [vmem:[#allocation2 + $0x10] sm:$0xf] %v222
      %227 = vst [vmem:[#allocation2 + $0x14] sm:$0xf] %v223
      %v228 = vld [vmem:[%s172] sm:$0xff]
      %v229 = vld [vmem:[%s172 + $0x8] sm:$0xff]
      %232 = vrot.lane.b32.xlu0 %v228, 118
      %v233 = vpop.permute.xlu0 %232
      %234 = vrot.lane.b32.xlu0 %v229, 118
      %v235 = vpop.permute.xlu0 %234
      %v236 = vrot.slane %v233, 4
      %v237 = vrot.slane %v235, 4
      %vm238 = vcmask 965632
      %v239 = vsel %vm238, %v233, %v236
      %v240 = vsel %vm238, %v235, %v237
      %243 = vst [vmem:[#allocation2 + $0x18] sm:$0xf] %v239
      %244 = vst [vmem:[#allocation2 + $0x1c] sm:$0xf] %v240
      %v245 = vld [vmem:[%s177] sm:$0xf]
      %v246 = vld [vmem:[%s177 + $0x4] sm:$0xf]
      %v247 = vld [vmem:[%s177 + $0x8] sm:$0xf]
      %v248 = vld [vmem:[%s177 + $0xc] sm:$0xf]
      %v249 = vld [vmem:[#allocation2] sm:$0xf]
      %v250 = vld [vmem:[#allocation2 + $0x4] sm:$0xf]
      %v251 = vld [vmem:[#allocation2 + $0x8] sm:$0xf]
      %v252 = vld [vmem:[#allocation2 + $0xc] sm:$0xf]
      %v253 = vld [vmem:[#allocation2 + $0x10] sm:$0xf]
      %v254 = vld [vmem:[#allocation2 + $0x14] sm:$0xf]
      %v255 = vld [vmem:[#allocation2 + $0x18] sm:$0xf]
      %v256 = vld [vmem:[#allocation2 + $0x1c] sm:$0xf]
      %v261 = vunpack.c.l.b16 %v245
      %v262 = vunpack.c.l.b16 %v246
      %v263 = vunpack.c.l.b16 %v247
      %v264 = vunpack.c.l.b16 %v248
      %v265 = vpack.c.b16 %v262, %v261
      %v266 = vpack.c.b16 %v264, %v263
      %v275 = vunpack.c.l.b16 %v249
      %v276 = vunpack.c.l.b16 %v250
      %v277 = vunpack.c.l.b16 %v251
      %v278 = vunpack.c.l.b16 %v252
      %v279 = vunpack.c.l.b16 %v253
      %v280 = vunpack.c.l.b16 %v254
      %v281 = vunpack.c.l.b16 %v255
      %v282 = vunpack.c.l.b16 %v256
      %v283 = vpack.c.b16 %v276, %v275
      %v284 = vpack.c.b16 %v278, %v277
      %v285 = vpack.c.b16 %v280, %v279
      %v286 = vpack.c.b16 %v282, %v281
      %vm291 = vcmask 523264
      %v293 = vsel %vm291, %v265, 0
      %v296 = vsel %vm291, %v266, 0
      %298 = vmatpush.bf16.msra.mxu0 0
      %299 = vmatpush.bf16.msra.mxu0 0
      %300 = vmatpush.bf16.msra.mxu0 0
      %301 = vmatpush.bf16.msra.mxu0 0
      %302 = vmatpush.bf16.msra.mxu0 %v286
      %303 = vmatpush.bf16.msra.mxu0 %v285
      %304 = vmatpush.bf16.msra.mxu0 %v284
      %305 = vmatpush.bf16.msra.mxu0 %v283
      %306 = vmatmul.bf16.gmra.mxu0 %v293
      %v307 = vpop.f32.mrf.mxu0
      %v308 = vadd.f32 0.0, %v307
      %v309 = vpop.f32.mrf.mxu0
      %v310 = vadd.f32 0.0, %v309
      %311 = vmatmul.bf16.gmra.mxu0 %v296
      %v312 = vpop.f32.mrf.mxu0
      %v313 = vadd.f32 0.0, %v312
      %v314 = vpop.f32.mrf.mxu0
      %v315 = vadd.f32 0.0, %v314
      %316 = vdwg.mxu0
      %v317 = vlaneseq
      %v318 = vand.u32 %v317, 127
      %v319 = vstv 0
      %v320 = vadd.s32 %v319, %v318
      %vm321 = vcmp.lt.s32.totalorder %v320, 0
      %v322 = vsub.s32 0, %v320
      %v323 = vsel %vm321, %v322, %v320
      %v324 = vand.u32 %v323, 65535
      %v325 = vshrl.u32 %v323, 16
      %v327 = vmul.u32 %v324, 14564
      %v328 = vmul.u32 %v324, 58254
      %v329 = vmul.u32 %v325, 14564
      %v330 = vmul.u32 %v325, 58254
      %v331 = vshll.u32 %v328, 16
      %v332 = vshrl.u32 %v328, 16
      %v333 = vshll.u32 %v329, 16
      %v334 = vshrl.u32 %v329, 16
      %vm335 = vc.u32 %v327, %v331
      %v336 = vsel %vm335, 1, 0
      %v337 = vadd.s32 %v327, %v331
      %v338 = vadd.s32 %v330, %v336
      %vm339 = vc.u32 %v337, %v333
      %v340 = vsel %vm339, 1, 0
      %v341 = vadd.s32 %v337, %v333
      %v342 = vadd.s32 %v338, %v340
      %v343 = vadd.s32 %v342, %v332
      %v344 = vadd.s32 %v343, %v334
      %v345 = vshrl.u32 %v344, 3
      %v346 = vmul.u32 %v345, 9
      %v347 = vsub.s32 %v323, %v346
      %v348 = vsub.s32 0, %v347
      %v349 = vsel %vm321, %v348, %v347
      %vm350 = vcmp.ne.s32.totalorder %v349, 0
      %vm351 = vcmp.lt.s32.totalorder %v349, 0
      %vm352 = vmand %vm351, %vm350
      %v353 = vadd.s32 %v349, 9
      %v354 = vsel %vm352, %v353, %v349
      %vm355 = vcmp.lt.s32.totalorder %v354, 8
      %vm356 = vcmp.lt.s32.totalorder %v320, 72
      %vm357 = vmand %vm355, %vm356
      %v358 = vsel %vm357, 1, 0
      %v359 = vcvt.s32.f32 %v358
      %v360 = vmul.f32 %v308, %v359
      %v361 = vmul.f32 %v310, %v359
      %v362 = vmul.f32 %v313, %v359
      %v363 = vmul.f32 %v315, %v359
      %364 = vadd.xlane.f32.xlu0 %v360
      %v365 = vpop.xlane.xlu0 %364
      %366 = vadd.xlane.f32.xlu0 %v361
      %v367 = vpop.xlane.xlu0 %366
      %368 = vadd.xlane.f32.xlu0 %v362
      %v369 = vpop.xlane.xlu0 %368
      %370 = vadd.xlane.f32.xlu0 %v363
      %v371 = vpop.xlane.xlu0 %370
      %v372 = vadd.f32 %v365, 0.0
      %v373 = vadd.f32 %v367, 0.0
      %v374 = vadd.f32 %v369, 0.0
      %v375 = vadd.f32 %v371, 0.0
      %v376 = vmul.f32 %v308, %v360
      %v377 = vmul.f32 %v310, %v361
      %v378 = vmul.f32 %v313, %v362
      %v379 = vmul.f32 %v315, %v363
      %380 = vadd.xlane.f32.xlu0 %v376
      %v381 = vpop.xlane.xlu0 %380
      %382 = vadd.xlane.f32.xlu0 %v377
      %v383 = vpop.xlane.xlu0 %382
      %384 = vadd.xlane.f32.xlu0 %v378
      %v385 = vpop.xlane.xlu0 %384
      %386 = vadd.xlane.f32.xlu0 %v379
      %v387 = vpop.xlane.xlu0 %386
      %v388 = vadd.f32 %v381, 0.0
      %v389 = vadd.f32 %v383, 0.0
      %v390 = vadd.f32 %v385, 0.0
      %v391 = vadd.f32 %v387, 0.0
      %392 = vst [vmem:[#allocation3] sm:$0xff] %v308
      %393 = vst [vmem:[#allocation3 + $0x8] sm:$0xff] %v310
      %394 = vst [vmem:[#allocation3 + $0x10] sm:$0xff] %v313
      %395 = vst [vmem:[#allocation3 + $0x18] sm:$0xff] %v315
      %v396 = vadd.f32 %v372, %v373
      %v397 = vadd.f32 %v388, %v389
      %v398 = vadd.f32 %v396, %v374
      %v399 = vadd.f32 %v397, %v390
      %v400 = vadd.f32 %v398, %v375
      %v401 = vadd.f32 %v399, %v391
      %v402 = vmul.f32 %v400, 0.00390625
      %v403 = vmul.f32 %v401, 0.00390625
      %v404 = vmul.f32 %v402, %v402
      %v405 = vsub.f32 %v403, %v404
      %v406 = vmax.f32 %v405, 0.0
      %v407 = vadd.f32 %v406, 1e-05
      %v408 = vrsqrt.pop %v407
      %v409 = vmul.f32 %v408, %v407
      %v410 = vmul.f32 %v409, %v408
      %v411 = vmul.f32 0.5, %v410
      %v412 = vsub.f32 1.5, %v411
      %v413 = vmul.f32 %v408, %v412
      %vm414 = vweird.f32 %v407
      %vm415 = vweird.f32 %v408
      %vm416 = vmor %vm414, %vm415
      %v417 = vsel %vm416, %v408, %v413
      %v418 = vld [vmem:[#allocation3] sm:$0xff]
      %v419 = vld [vmem:[#allocation3 + $0x8] sm:$0xff]
      %v420 = vld [vmem:[#allocation3 + $0x10] sm:$0xff]
      %v421 = vld [vmem:[#allocation3 + $0x18] sm:$0xff]
      %423 = vset.pattern.permute.xlu0 0
      %424 = vperm.xlu0 %423, %v402
      %v425 = vpop.permute.xlu0 %424
      %v427 = vsub.f32 %v418, %v425
      %v428 = vsub.f32 %v419, %v425
      %v429 = vsub.f32 %v420, %v425
      %v430 = vsub.f32 %v421, %v425
      %432 = vset.pattern.permute.xlu0 0
      %433 = vperm.xlu0 %432, %v417
      %v434 = vpop.permute.xlu0 %433
      %v436 = vmul.f32 %v427, %v434
      %v437 = vmul.f32 %v428, %v434
      %v438 = vmul.f32 %v429, %v434
      %v439 = vmul.f32 %v430, %v434
      %v440 = vmax.f32 %v436, 0.0
      %v441 = vmax.f32 %v437, 0.0
      %v442 = vmax.f32 %v438, 0.0
      %v443 = vmax.f32 %v439, 0.0
      %v444 = vpack.c.bf16 %v440, %v440
      %v445 = vpack.c.bf16 %v441, %v441
      %v446 = vpack.c.bf16 %v442, %v442
      %v447 = vpack.c.bf16 %v443, %v443
      %448 = vst [vmem:[%s187] sm:$0xf] %v444
      %449 = vst [vmem:[%s187 + $0x4] sm:$0xf] %v445
      %450 = vst [vmem:[%s187 + $0x8] sm:$0xf] %v446
      %451 = vst [vmem:[%s187 + $0xc] sm:$0xf] %v447
      %s452 = smul.u32 4, %s18
      %p453 = scmp.lt.s32.totalorder %s17, 1
      %s454 = scalar_select %p453, %s17, 1
      %p455 = scmp.lt.s32.totalorder %s452, 3
      %s456 = scalar_select %p455, %s452, 3
      %s457 = smul.addr %s454, 4
      %s458 = sadd.s32 %s456, %s457
      %s459 = smul.addr %s458, 4
      %s460 = scalar_lea.vmem %s2, %s459
      // Predicated region
      $region29: #{resnet_generator_forward.18} parent=27 // pred_check
        %p461 = pneg %p97
      $region30: #{resnet_generator_forward.18} parent=27 // pred_check_branch
        %463 = sbr.rel (%p461) target = $region32
      $region31: #{resnet_generator_forward.18} parent=27 // pred_region
        %s464 = smul.u32 4, %s18
      $region32: #{resnet_generator_forward.18} parent=27 // pred_fallthru
        _
    $region28: #{resnet_generator_forward.18} parent=5 // pred_fallthru
      _
    %p465 = scmp.le.s32.totalorder 2, %s8
    // Predicated region
    $region33: #{resnet_generator_forward.18} parent=5 // pred_check
      %p466 = pneg %p465
    $region34: #{resnet_generator_forward.18} parent=5 // pred_check_branch
      %468 = sbr.rel (%p466) target = $region36
    $region35: #{resnet_generator_forward.18} parent=5 // pred_region
      %s469 = ssub.s32 %s8, 2
      // Predicated region
      $region37: #{resnet_generator_forward.18} parent=35 // pred_check
        %p470 = pneg %p103
      $region38: #{resnet_generator_forward.18} parent=35 // pred_check_branch
        %472 = sbr.rel (%p470) target = $region40
      $region39: #{resnet_generator_forward.18} parent=35 // pred_region
        %s473 = smul.u32 4, %s20
        %p474 = scmp.lt.s32.totalorder %s19, 1
        %s475 = scalar_select %p474, %s19, 1
        %p476 = scmp.lt.s32.totalorder %s473, 3
        %s477 = scalar_select %p476, %s473, 3
        %s478 = smul.addr %s475, 4
        %s479 = sadd.s32 %s477, %s478
        %s480 = smul.addr %s479, 4
        %s481 = scalar_lea.vmem %s2, %s480
      $region40: #{resnet_generator_forward.18} parent=35 // pred_fallthru
        _
    $region36: #{resnet_generator_forward.18} parent=5 // pred_fallthru
      _
  $region6: #{resnet_generator_forward.18} parent=0 // loop_footer
    %s12 = sadd.s32 1, %s8
  $region7: #{resnet_generator_forward.18} parent=0 // loop_footer_branch
    %7 = sbr.rel target = $region3
  $region8: #{resnet_generator_forward.18} parent=0 // loop_exit
    _

// kernel: resnet_generator_forward.19
$region0: #{resnet_generator_forward.19}
  #allocation0 [shape = 'u32[]', space=smem, size = 0x4, offset = 0x4, fixed_abs, tag = 'smem constant byte address 0x4 - core index']
  #allocation1 [shape = 'u32[72,128]{1,0:T(1,128)}', space=vmem, size = 0x9000, scoped, tag = 'internal scratch']
  #allocation2 [shape = 'bf16[393,384]{1,0:T(8,128)(2,1)}', space=vmem, size = 0x4b000, scoped, tag = 'scratch operand']
  %s0 = inlined_call_operand.vmem [shape: bf16[2,8,640], index: 0, kind: input, shape index: {}]
  %s1 = inlined_call_operand.vmem [shape: bf16[3,393], index: 1, kind: input, shape index: {}]
  %s2 = inlined_call_operand.vmem [shape: f32[2,3,384], index: 2, kind: output, shape index: {}]
  %s3 = sld [smem:[#allocation0]]
  $region41: #{resnet_generator_forward.19} parent=0
    _
  %s5 = ssub.s32 1, %s3
  %s6 = scalar_select 0, %s5, %s3
  loop: start=0, step=1, limit=4
  $region2: #{resnet_generator_forward.19} parent=0 // loop_pre_header
    _
  $region3: #{resnet_generator_forward.19} parent=0 // loop_header
    %s8 = sphi 0, %s12
    %p9 = scmp.ge.s32.totalorder %s8, 4
    %s15 = sphi 0, %s27
    %s16 = sphi 0, %s23
    %s17 = sphi 0, %s15
    %s18 = sphi 0, %s16
    %s19 = sphi 0, %s17
    %s20 = sphi 0, %s18
    %s30 = sphi 0, %s32
    %s33 = sphi 0, %s30
    %s34 = sphi 0, %s33
    %s50 = sphi 0, %s34
    %s56 = sphi 0, %s58
    %s59 = sphi 0, %s56
    %s60 = sphi 0, %s59
    %s76 = sphi 0, %s60
    %s84 = sphi 0, %s86
    %s87 = sphi 0, %s84
    %s88 = sphi 0, %s87
    %s104 = sphi 0, %s88
  $region4: #{resnet_generator_forward.19} parent=0 // loop_header_branch
    %11 = sbr.rel (%p9) target = $region8
  $region5: #{resnet_generator_forward.19} parent=0 // loop_body
    %s13 = ssub.s32 %s8, 1
    %s14 = ssub.s32 %s8, 2
    %s21 = sadd.s32 1, %s16
    %p22 = scmp.ge.s32.totalorder %s21, 1
    %s23 = scalar_select %p22, 0, %s21
    %s24 = sadd.s32 1, %s15
    %s25 = scalar_select %p22, %s24, %s15
    %p26 = scmp.ge.s32.totalorder %s25, 2
    %s27 = scalar_select %p26, 0, %s25
    %s28 = ssub.s32 %s15, %s27
    %p29 = scmp.eq.s32.totalorder %s28, 0
    %s31 = sadd.s32 %s30, 1
    %s32 = scalar_select %p29, %s30, %s31
    %p35 = pneg %p29
    %p36 = scmp.eq.s32.totalorder %s8, 1
    %p37 = por %p35, %p36
    %p38 = scmp.ne.s32.totalorder %s30, %s33
    %p39 = scmp.eq.s32.totalorder %s8, 0
    %p40 = por %p38, %p39
    %p41 = scmp.ne.s32.totalorder %s30, %s33
    %p42 = scmp.eq.s32.totalorder %s13, 1
    %p43 = por %p41, %p42
    %p44 = scmp.ne.s32.totalorder %s33, %s34
    %p45 = scmp.eq.s32.totalorder %s13, 0
    %p46 = por %p44, %p45
    %p47 = scmp.ne.s32.totalorder %s33, %s34
    %p48 = scmp.eq.s32.totalorder %s14, 1
    %p49 = por %p47, %p48
    %p51 = scmp.ne.s32.totalorder %s34, %s50
    %p52 = scmp.eq.s32.totalorder %s14, 0
    %p53 = por %p51, %p52
    %s54 = ssub.s32 %s16, %s23
    %p55 = scmp.eq.s32.totalorder %s54, 0
    %s57 = sadd.s32 %s56, 1
    %s58 = scalar_select %p55, %s56, %s57
    %p61 = pneg %p55
    %p62 = scmp.eq.s32.totalorder %s8, 1
    %p63 = por %p61, %p62
    %p64 = scmp.ne.s32.totalorder %s56, %s59
    %p65 = scmp.eq.s32.totalorder %s8, 0
    %p66 = por %p64, %p65
    %p67 = scmp.ne.s32.totalorder %s56, %s59
    %p68 = scmp.eq.s32.totalorder %s13, 1
    %p69 = por %p67, %p68
    %p70 = scmp.ne.s32.totalorder %s59, %s60
    %p71 = scmp.eq.s32.totalorder %s13, 0
    %p72 = por %p70, %p71
    %p73 = scmp.ne.s32.totalorder %s59, %s60
    %p74 = scmp.eq.s32.totalorder %s14, 1
    %p75 = por %p73, %p74
    %p77 = scmp.ne.s32.totalorder %s60, %s76
    %p78 = scmp.eq.s32.totalorder %s14, 0
    %p79 = por %p77, %p78
    %s80 = ssub.s32 %s15, %s27
    %s81 = ssub.s32 %s16, %s23
    %s82 = sor.u32 %s80, %s81
    %p83 = scmp.eq.s32.totalorder %s82, 0
    %s85 = sadd.s32 %s84, 1
    %s86 = scalar_select %p83, %s84, %s85
    %p89 = pneg %p83
    %p90 = scmp.eq.s32.totalorder %s8, 1
    %p91 = por %p89, %p90
    %p92 = scmp.ne.s32.totalorder %s84, %s87
    %p93 = scmp.eq.s32.totalorder %s8, 0
    %p94 = por %p92, %p93
    %p95 = scmp.ne.s32.totalorder %s84, %s87
    %p96 = scmp.eq.s32.totalorder %s13, 1
    %p97 = por %p95, %p96
    %p98 = scmp.ne.s32.totalorder %s87, %s88
    %p99 = scmp.eq.s32.totalorder %s13, 0
    %p100 = por %p98, %p99
    %p101 = scmp.ne.s32.totalorder %s87, %s88
    %p102 = scmp.eq.s32.totalorder %s14, 1
    %p103 = por %p101, %p102
    %p105 = scmp.ne.s32.totalorder %s88, %s104
    %p106 = scmp.eq.s32.totalorder %s14, 0
    %p107 = por %p105, %p106
    %p108 = scmp.le.s32.totalorder 1, %s8
    %p109 = scmp.lt.s32.totalorder %s8, 3
    %p110 = pnand %p108, %p109
    %p111 = pneg %p110
    // Predicated region
    $region9: #{resnet_generator_forward.19} parent=5 // pred_check
      _
    $region10: #{resnet_generator_forward.19} parent=5 // pred_check_branch
      %113 = sbr.rel (%p110) target = $region12
    $region11: #{resnet_generator_forward.19} parent=5 // pred_region
      %s114 = ssub.s32 %s8, 1
      // Predicated region
      $region13: #{resnet_generator_forward.19} parent=11 // pred_check
        %p115 = pneg %p72
      $region14: #{resnet_generator_forward.19} parent=11 // pred_check_branch
        %117 = sbr.rel (%p115) target = $region16
      $region15: #{resnet_generator_forward.19} parent=11 // pred_region
        %p118 = scmp.lt.s32.totalorder %s18, 0
        %s119 = scalar_select %p118, %s18, 0
        %s120 = smul.addr %s119, 4
        %s121 = smul.addr %s120, 2
        %s122 = scalar_lea.vmem %s1, %s121
      $region16: #{resnet_generator_forward.19} parent=11 // pred_fallthru
        _
    $region12: #{resnet_generator_forward.19} parent=5 // pred_fallthru
      _
    %p123 = scmp.lt.s32.totalorder %s8, 2
    // Predicated region
    $region17: #{resnet_generator_forward.19} parent=5 // pred_check
      %p124 = pneg %p123
    $region18: #{resnet_generator_forward.19} parent=5 // pred_check_branch
      %126 = sbr.rel (%p124) target = $region20
    $region19: #{resnet_generator_forward.19} parent=5 // pred_region
      // Predicated region
      $region21: #{resnet_generator_forward.19} parent=19 // pred_check
        %p127 = pneg %p40
      $region22: #{resnet_generator_forward.19} parent=19 // pred_check_branch
        %129 = sbr.rel (%p127) target = $region24
      $region23: #{resnet_generator_forward.19} parent=19 // pred_region
        %p130 = scmp.lt.s32.totalorder %s15, 1
        %s131 = scalar_select %p130, %s15, 1
        %s132 = smul.addr %s131, 5
        %s133 = smul.addr %s132, 4
        %s134 = scalar_lea.vmem %s0, %s133
      $region24: #{resnet_generator_forward.19} parent=19 // pred_fallthru
        _
    $region20: #{resnet_generator_forward.19} parent=5 // pred_fallthru
      _
    %p135 = scmp.le.s32.totalorder 1, %s8
    %p136 = scmp.lt.s32.totalorder %s8, 3
    %p137 = pnand %p135, %p136
    %p138 = pneg %p137
    // Predicated region
    $region25: #{resnet_generator_forward.19} parent=5 // pred_check
      _
    $region26: #{resnet_generator_forward.19} parent=5 // pred_check_branch
      %140 = sbr.rel (%p137) target = $region28
    $region27: #{resnet_generator_forward.19} parent=5 // pred_region
      %s141 = ssub.s32 %s8, 1
      %p142 = scmp.lt.s32.totalorder %s17, 1
      %s143 = scalar_select %p142, %s17, 1
      %s144 = smul.addr %s143, 5
      %s145 = smul.addr %s144, 4
      %s146 = scalar_lea.vmem %s0, %s145
      %p147 = pneg %p46
      %p148 = pneg %p43
      %p149 = scmp.lt.s32.totalorder %s18, 0
      %s150 = scalar_select %p149, %s18, 0
      %s151 = smul.addr %s150, 4
      %s152 = smul.addr %s151, 2
      %s153 = scalar_lea.vmem %s1, %s152
      %p154 = pneg %p72
      %p155 = pneg %p69
      %p156 = pneg %p100
      %p157 = pneg %p97
      %p158 = scmp.lt.s32.totalorder %s17, 1
      %s159 = scalar_select %p158, %s17, 1
      %p160 = scmp.lt.s32.totalorder %s18, 0
      %s161 = scalar_select %p160, %s18, 0
      %s162 = smul.addr %s161, 3
      %s163 = smul.addr %s159, 3
      %s164 = sadd.s32 %s162, %s163
      %s165 = smul.addr %s164, 4
      %s166 = scalar_lea.vmem %s2, %s165
      %p167 = scmp.lt.s32.totalorder %s17, 1
      %s168 = scalar_select %p167, %s17, 1
      %s169 = smul.addr %s168, 5
      %s170 = smul.addr %s169, 4
      %s171 = scalar_lea.vmem %s0, %s170
      %p172 = scmp.lt.s32.totalorder %s18, 0
      %s173 = scalar_select %p172, %s18, 0
      %s174 = smul.addr %s173, 4
      %s175 = smul.addr %s174, 2
      %s176 = scalar_lea.vmem %s1, %s175
      %p177 = scmp.lt.s32.totalorder %s17, 1
      %s178 = scalar_select %p177, %s17, 1
      %p179 = scmp.lt.s32.totalorder %s18, 0
      %s180 = scalar_select %p179, %s18, 0
      %s181 = smul.addr %s180, 3
      %s182 = smul.addr %s178, 3
      %s183 = sadd.s32 %s181, %s182
      %s184 = smul.addr %s183, 4
      %s185 = scalar_lea.vmem %s2, %s184
      %vm188 = vcmask 1040384
      %vm189 = vsmask.f32 256
      %vm190 = vmand %vm188, %vm189
      %vm191 = vcmask 1044484
      %vm192 = vsmask.f32 4352
      %vm193 = vmand %vm191, %vm192
      %vm194 = vmor %vm193, %vm190
      %v195 = vld [vmem:[#allocation2 + $0x24c] sm:$0x11]
      %v196 = vsel %vm194, 1065369472, %v195
      %197 = vst [vmem:[#allocation2 + $0x24c] sm:$0x11] %v196
      %v198 = vld [vmem:[#allocation2 + $0x254] sm:$0x1]
      %v199 = vsel %vm190, 1065369472, %v198
      %200 = vst [vmem:[#allocation2 + $0x254] sm:$0x1] %v199
      %v201 = vld [vmem:[%s171] sm:$0xff]
      %v202 = vld [vmem:[%s171 + $0x8] sm:$0xf]
      %203 = vst [vmem:[#allocation2] sm:$0xff] %v201
      %204 = vst [vmem:[#allocation2 + $0x8] sm:$0xf] %v202
      %v205 = vld [vmem:[%s171] sm:$0xff]
      %v206 = vld [vmem:[%s171 + $0x8] sm:$0xff]
      %209 = vrot.lane.b32.xlu0 %v205, 127
      %v210 = vpop.permute.xlu0 %209
      %211 = vrot.lane.b32.xlu0 %v206, 127
      %v212 = vpop.permute.xlu0 %211
      %v213 = vrot.slane %v210, 4
      %v214 = vrot.slane %v212, 4
      %vm215 = vcmask 1043456
      %v216 = vsel %vm215, %v213, %v214
      %vm217 = vcmask 1039360
      %v218 = vsel %vm217, %v210, %v216
      %v219 = vsel %vm217, %v212, %v214
      %222 = vst [vmem:[#allocation2 + $0xc] sm:$0xff] %v218
      %223 = vst [vmem:[#allocation2 + $0x14] sm:$0xf] %v219
      %v224 = vld [vmem:[%s171] sm:$0xff]
      %v225 = vld [vmem:[%s171 + $0x8] sm:$0xff]
      %228 = vrot.lane.b32.xlu0 %v224, 126
      %v229 = vpop.permute.xlu0 %228
      %230 = vrot.lane.b32.xlu0 %v225, 126
      %v231 = vpop.permute.xlu0 %230
      %v232 = vrot.slane %v229, 4
      %v233 = vrot.slane %v231, 4
      %v234 = vsel %vm215, %v232, %v233
      %vm235 = vcmask 1031168
      %v236 = vsel %vm235, %v229, %v234
      %v237 = vsel %vm235, %v231, %v233
      %240 = vst [vmem:[#allocation2 + $0x18] sm:$0xff] %v236
      %241 = vst [vmem:[#allocation2 + $0x20] sm:$0xf] %v237
      %v242 = vld [vmem:[%s171] sm:$0xff]
      %v243 = vld [vmem:[%s171 + $0x8] sm:$0xff]
      %246 = vrot.lane.b32.xlu0 %v242, 125
      %v247 = vpop.permute.xlu0 %246
      %248 = vrot.lane.b32.xlu0 %v243, 125
      %v249 = vpop.permute.xlu0 %248
      %v250 = vrot.slane %v247, 4
      %v251 = vrot.slane %v249, 4
      %v252 = vsel %vm215, %v250, %v251
      %vm253 = vcmask 1022976
      %v254 = vsel %vm253, %v247, %v252
      %v255 = vsel %vm253, %v249, %v251
      %258 = vst [vmem:[#allocation2 + $0x24] sm:$0xff] %v254
      %259 = vst [vmem:[#allocation2 + $0x2c] sm:$0xf] %v255
      %v260 = vld [vmem:[%s171] sm:$0xff]
      %v261 = vld [vmem:[%s171 + $0x8] sm:$0xff]
      %264 = vrot.lane.b32.xlu0 %v260, 124
      %v265 = vpop.permute.xlu0 %264
      %266 = vrot.lane.b32.xlu0 %v261, 124
      %v267 = vpop.permute.xlu0 %266
      %v268 = vrot.slane %v265, 4
      %v269 = vrot.slane %v267, 4
      %v270 = vsel %vm215, %v268, %v269
      %vm271 = vcmask 1014784
      %v272 = vsel %vm271, %v265, %v270
      %v273 = vsel %vm271, %v267, %v269
      %276 = vst [vmem:[#allocation2 + $0x30] sm:$0xff] %v272
      %277 = vst [vmem:[#allocation2 + $0x38] sm:$0xf] %v273
      %v278 = vld [vmem:[%s171] sm:$0xff]
      %v279 = vld [vmem:[%s171 + $0x8] sm:$0xff]
      %282 = vrot.lane.b32.xlu0 %v278, 123
      %v283 = vpop.permute.xlu0 %282
      %284 = vrot.lane.b32.xlu0 %v279, 123
      %v285 = vpop.permute.xlu0 %284
      %v286 = vrot.slane %v283, 4
      %v287 = vrot.slane %v285, 4
      %v288 = vsel %vm215, %v286, %v287
      %vm289 = vcmask 1006592
      %v290 = vsel %vm289, %v283, %v288
      %v291 = vsel %vm289, %v285, %v287
      %294 = vst [vmem:[#allocation2 + $0x3c] sm:$0xff] %v290
      %295 = vst [vmem:[#allocation2 + $0x44] sm:$0xf] %v291
      %v296 = vld [vmem:[%s171] sm:$0xff]
      %v297 = vld [vmem:[%s171 + $0x8] sm:$0xff]
      %300 = vrot.lane.b32.xlu0 %v296, 122
      %v301 = vpop.permute.xlu0 %300
      %302 = vrot.lane.b32.xlu0 %v297, 122
      %v303 = vpop.permute.xlu0 %302
      %v304 = vrot.slane %v301, 4
      %v305 = vrot.slane %v303, 4
      %v306 = vsel %vm215, %v304, %v305
      %vm307 = vcmask 998400
      %v308 = vsel %vm307, %v301, %v306
      %v309 = vsel %vm307, %v303, %v305
      %312 = vst [vmem:[#allocation2 + $0x48] sm:$0xff] %v308
      %313 = vst [vmem:[#allocation2 + $0x50] sm:$0xf] %v309
      %v314 = vld [vmem:[%s171] sm:$0xff]
      %v315 = vld [vmem:[%s171 + $0x8] sm:$0xff]
      %318 = vrot.lane.b32.xlu0 %v314, 106
      %v319 = vpop.permute.xlu0 %318
      %320 = vrot.lane.b32.xlu0 %v315, 106
      %v321 = vpop.permute.xlu0 %320
      %v322 = vrot.slane %v319, 4
      %v323 = vrot.slane %v321, 4
      %v324 = vsel %vm215, %v322, %v323
      %vm325 = vcmask 867328
      %v326 = vsel %vm325, %v319, %v324
      %v327 = vsel %vm325, %v321, %v323
      %330 = vst [vmem:[#allocation2 + $0x54] sm:$0xff] %v326
      %331 = vst [vmem:[#allocation2 + $0x5c] sm:$0xf] %v327
      %v332 = vld [vmem:[%s171] sm:$0xff]
      %v333 = vld [vmem:[%s171 + $0x8] sm:$0xff]
      %336 = vrot.lane.b32.xlu0 %v332, 105
      %v337 = vpop.permute.xlu0 %336
      %338 = vrot.lane.b32.xlu0 %v333, 105
      %v339 = vpop.permute.xlu0 %338
      %v340 = vrot.slane %v337, 4
      %v341 = vrot.slane %v339, 4
      %v342 = vsel %vm215, %v340, %v341
      %vm343 = vcmask 859136
      %v344 = vsel %vm343, %v337, %v342
      %v345 = vsel %vm343, %v339, %v341
      %348 = vst [vmem:[#allocation2 + $0x60] sm:$0xff] %v344
      %349 = vst [vmem:[#allocation2 + $0x68] sm:$0xf] %v345
      %v350 = vld [vmem:[%s171] sm:$0xff]
      %v351 = vld [vmem:[%s171 + $0x8] sm:$0xff]
      %354 = vrot.lane.b32.xlu0 %v350, 104
      %v355 = vpop.permute.xlu0 %354
      %356 = vrot.lane.b32.xlu0 %v351, 104
      %v357 = vpop.permute.xlu0 %356
      %v358 = vrot.slane %v355, 4
      %v359 = vrot.slane %v357, 4
      %v360 = vsel %vm215, %v358, %v359
      %vm361 = vcmask 850944
      %v362 = vsel %vm361, %v355, %v360
      %v363 = vsel %vm361, %v357, %v359
      %366 = vst [vmem:[#allocation2 + $0x6c] sm:$0xff] %v362
      %367 = vst [vmem:[#allocation2 + $0x74] sm:$0xf] %v363
      %v368 = vld [vmem:[%s171] sm:$0xff]
      %v369 = vld [vmem:[%s171 + $0x8] sm:$0xff]
      %372 = vrot.lane.b32.xlu0 %v368, 103
      %v373 = vpop.permute.xlu0 %372
      %374 = vrot.lane.b32.xlu0 %v369, 103
      %v375 = vpop.permute.xlu0 %374
      %v376 = vrot.slane %v373, 4
      %v377 = vrot.slane %v375, 4
      %v378 = vsel %vm215, %v376, %v377
      %vm379 = vcmask 842752
      %v380 = vsel %vm379, %v373, %v378
      %v381 = vsel %vm379, %v375, %v377
      %384 = vst [vmem:[#allocation2 + $0x78] sm:$0xff] %v380
      %385 = vst [vmem:[#allocation2 + $0x80] sm:$0xf] %v381
      %v386 = vld [vmem:[%s171] sm:$0xff]
      %v387 = vld [vmem:[%s171 + $0x8] sm:$0xff]
      %390 = vrot.lane.b32.xlu0 %v386, 102
      %v391 = vpop.permute.xlu0 %390
      %392 = vrot.lane.b32.xlu0 %v387, 102
      %v393 = vpop.permute.xlu0 %392
      %v394 = vrot.slane %v391, 4
      %v395 = vrot.slane %v393, 4
      %v396 = vsel %vm215, %v394, %v395
      %vm397 = vcmask 834560
      %v398 = vsel %vm397, %v391, %v396
      %v399 = vsel %vm397, %v393, %v395
      %402 = vst [vmem:[#allocation2 + $0x84] sm:$0xff] %v398
      %403 = vst [vmem:[#allocation2 + $0x8c] sm:$0xf] %v399
      %v404 = vld [vmem:[%s171] sm:$0xff]
      %v405 = vld [vmem:[%s171 + $0x8] sm:$0xff]
      %408 = vrot.lane.b32.xlu0 %v404, 101
      %v409 = vpop.permute.xlu0 %408
      %410 = vrot.lane.b32.xlu0 %v405, 101
      %v411 = vpop.permute.xlu0 %410
      %v412 = vrot.slane %v409, 4
      %v413 = vrot.slane %v411, 4
      %v414 = vsel %vm215, %v412, %v413
      %vm415 = vcmask 826368
      %v416 = vsel %vm415, %v409, %v414
      %v417 = vsel %vm415, %v411, %v413
      %420 = vst [vmem:[#allocation2 + $0x90] sm:$0xff] %v416
      %421 = vst [vmem:[#allocation2 + $0x98] sm:$0xf] %v417
      %v422 = vld [vmem:[%s171] sm:$0xff]
      %v423 = vld [vmem:[%s171 + $0x8] sm:$0xff]
      %426 = vrot.lane.b32.xlu0 %v422, 100
      %v427 = vpop.permute.xlu0 %426
      %428 = vrot.lane.b32.xlu0 %v423, 100
      %v429 = vpop.permute.xlu0 %428
      %v430 = vrot.slane %v427, 4
      %v431 = vrot.slane %v429, 4
      %v432 = vsel %vm215, %v430, %v431
      %vm433 = vcmask 818176
      %v434 = vsel %vm433, %v427, %v432
      %v435 = vsel %vm433, %v429, %v431
      %438 = vst [vmem:[#allocation2 + $0x9c] sm:$0xff] %v434
      %439 = vst [vmem:[#allocation2 + $0xa4] sm:$0xf] %v435
      %v440 = vld [vmem:[%s171] sm:$0xff]
      %v441 = vld [vmem:[%s171 + $0x8] sm:$0xff]
      %444 = vrot.lane.b32.xlu0 %v440, 84
      %v445 = vpop.permute.xlu0 %444
      %446 = vrot.lane.b32.xlu0 %v441, 84
      %v447 = vpop.permute.xlu0 %446
      %v448 = vrot.slane %v445, 4
      %v449 = vrot.slane %v447, 4
      %v450 = vsel %vm215, %v448, %v449
      %vm451 = vcmask 687104
      %v452 = vsel %vm451, %v445, %v450
      %v453 = vsel %vm451, %v447, %v449
      %456 = vst [vmem:[#allocation2 + $0xa8] sm:$0xff] %v452
      %457 = vst [vmem:[#allocation2 + $0xb0] sm:$0xf] %v453
      %v458 = vld [vmem:[%s171] sm:$0xff]
      %v459 = vld [vmem:[%s171 + $0x8] sm:$0xff]
      %462 = vrot.lane.b32.xlu0 %v458, 83
      %v463 = vpop.permute.xlu0 %462
      %464 = vrot.lane.b32.xlu0 %v459, 83
      %v465 = vpop.permute.xlu0 %464
      %v466 = vrot.slane %v463, 4
      %v467 = vrot.slane %v465, 4
      %v468 = vsel %vm215, %v466, %v467
      %vm469 = vcmask 678912
      %v470 = vsel %vm469, %v463, %v468
      %v471 = vsel %vm469, %v465, %v467
      %474 = vst [vmem:[#allocation2 + $0xb4] sm:$0xff] %v470
      %475 = vst [vmem:[#allocation2 + $0xbc] sm:$0xf] %v471
      %v476 = vld [vmem:[%s171] sm:$0xff]
      %v477 = vld [vmem:[%s171 + $0x8] sm:$0xff]
      %480 = vrot.lane.b32.xlu0 %v476, 82
      %v481 = vpop.permute.xlu0 %480
      %482 = vrot.lane.b32.xlu0 %v477, 82
      %v483 = vpop.permute.xlu0 %482
      %v484 = vrot.slane %v481, 4
      %v485 = vrot.slane %v483, 4
      %v486 = vsel %vm215, %v484, %v485
      %vm487 = vcmask 670720
      %v488 = vsel %vm487, %v481, %v486
      %v489 = vsel %vm487, %v483, %v485
      %492 = vst [vmem:[#allocation2 + $0xc0] sm:$0xff] %v488
      %493 = vst [vmem:[#allocation2 + $0xc8] sm:$0xf] %v489
      %v494 = vld [vmem:[%s171] sm:$0xff]
      %v495 = vld [vmem:[%s171 + $0x8] sm:$0xff]
      %498 = vrot.lane.b32.xlu0 %v494, 81
      %v499 = vpop.permute.xlu0 %498
      %500 = vrot.lane.b32.xlu0 %v495, 81
      %v501 = vpop.permute.xlu0 %500
      %v502 = vrot.slane %v499, 4
      %v503 = vrot.slane %v501, 4
      %v504 = vsel %vm215, %v502, %v503
      %vm505 = vcmask 662528
      %v506 = vsel %vm505, %v499, %v504
      %v507 = vsel %vm505, %v501, %v503
      %510 = vst [vmem:[#allocation2 + $0xcc] sm:$0xff] %v506
      %511 = vst [vmem:[#allocation2 + $0xd4] sm:$0xf] %v507
      %v512 = vld [vmem:[%s171] sm:$0xff]
      %v513 = vld [vmem:[%s171 + $0x8] sm:$0xff]
      %516 = vrot.lane.b32.xlu0 %v512, 80
      %v517 = vpop.permute.xlu0 %516
      %518 = vrot.lane.b32.xlu0 %v513, 80
      %v519 = vpop.permute.xlu0 %518
      %v520 = vrot.slane %v517, 4
      %v521 = vrot.slane %v519, 4
      %v522 = vsel %vm215, %v520, %v521
      %vm523 = vcmask 654336
      %v524 = vsel %vm523, %v517, %v522
      %v525 = vsel %vm523, %v519, %v521
      %528 = vst [vmem:[#allocation2 + $0xd8] sm:$0xff] %v524
      %529 = vst [vmem:[#allocation2 + $0xe0] sm:$0xf] %v525
      %v530 = vld [vmem:[%s171] sm:$0xff]
      %v531 = vld [vmem:[%s171 + $0x8] sm:$0xff]
      %534 = vrot.lane.b32.xlu0 %v530, 79
      %v535 = vpop.permute.xlu0 %534
      %536 = vrot.lane.b32.xlu0 %v531, 79
      %v537 = vpop.permute.xlu0 %536
      %v538 = vrot.slane %v535, 4
      %v539 = vrot.slane %v537, 4
      %v540 = vsel %vm215, %v538, %v539
      %vm541 = vcmask 646144
      %v542 = vsel %vm541, %v535, %v540
      %v543 = vsel %vm541, %v537, %v539
      %546 = vst [vmem:[#allocation2 + $0xe4] sm:$0xff] %v542
      %547 = vst [vmem:[#allocation2 + $0xec] sm:$0xf] %v543
      %v548 = vld [vmem:[%s171] sm:$0xff]
      %v549 = vld [vmem:[%s171 + $0x8] sm:$0xff]
      %552 = vrot.lane.b32.xlu0 %v548, 78
      %v553 = vpop.permute.xlu0 %552
      %554 = vrot.lane.b32.xlu0 %v549, 78
      %v555 = vpop.permute.xlu0 %554
      %v556 = vrot.slane %v553, 4
      %v557 = vrot.slane %v555, 4
      %v558 = vsel %vm215, %v556, %v557
      %vm559 = vcmask 637952
      %v560 = vsel %vm559, %v553, %v558
      %v561 = vsel %vm559, %v555, %v557
      %564 = vst [vmem:[#allocation2 + $0xf0] sm:$0xff] %v560
      %565 = vst [vmem:[#allocation2 + $0xf8] sm:$0xf] %v561
      %v566 = vld [vmem:[%s171] sm:$0xff]
      %v567 = vld [vmem:[%s171 + $0x8] sm:$0xff]
      %570 = vrot.lane.b32.xlu0 %v566, 62
      %v571 = vpop.permute.xlu0 %570
      %572 = vrot.lane.b32.xlu0 %v567, 62
      %v573 = vpop.permute.xlu0 %572
      %v574 = vrot.slane %v571, 4
      %v575 = vrot.slane %v573, 4
      %v576 = vsel %vm215, %v574, %v575
      %vm577 = vcmask 506880
      %v578 = vsel %vm577, %v571, %v576
      %v579 = vsel %vm577, %v573, %v575
      %582 = vst [vmem:[#allocation2 + $0xfc] sm:$0xff] %v578
      %583 = vst [vmem:[#allocation2 + $0x104] sm:$0xf] %v579
      %v584 = vld [vmem:[%s171] sm:$0xff]
      %v585 = vld [vmem:[%s171 + $0x8] sm:$0xff]
      %588 = vrot.lane.b32.xlu0 %v584, 61
      %v589 = vpop.permute.xlu0 %588
      %590 = vrot.lane.b32.xlu0 %v585, 61
      %v591 = vpop.permute.xlu0 %590
      %v592 = vrot.slane %v589, 4
      %v593 = vrot.slane %v591, 4
      %v594 = vsel %vm215, %v592, %v593
      %vm595 = vcmask 498688
      %v596 = vsel %vm595, %v589, %v594
      %v597 = vsel %vm595, %v591, %v593
      %600 = vst [vmem:[#allocation2 + $0x108] sm:$0xff] %v596
      %601 = vst [vmem:[#allocation2 + $0x110] sm:$0xf] %v597
      %v602 = vld [vmem:[%s171] sm:$0xff]
      %v603 = vld [vmem:[%s171 + $0x8] sm:$0xff]
      %606 = vrot.lane.b32.xlu0 %v602, 60
      %v607 = vpop.permute.xlu0 %606
      %608 = vrot.lane.b32.xlu0 %v603, 60
      %v609 = vpop.permute.xlu0 %608
      %v610 = vrot.slane %v607, 4
      %v611 = vrot.slane %v609, 4
      %v612 = vsel %vm215, %v610, %v611
      %vm613 = vcmask 490496
      %v614 = vsel %vm613, %v607, %v612
      %v615 = vsel %vm613, %v609, %v611
      %618 = vst [vmem:[#allocation2 + $0x114] sm:$0xff] %v614
      %619 = vst [vmem:[#allocation2 + $0x11c] sm:$0xf] %v615
      %v620 = vld [vmem:[%s171] sm:$0xff]
      %v621 = vld [vmem:[%s171 + $0x8] sm:$0xff]
      %624 = vrot.lane.b32.xlu0 %v620, 59
      %v625 = vpop.permute.xlu0 %624
      %626 = vrot.lane.b32.xlu0 %v621, 59
      %v627 = vpop.permute.xlu0 %626
      %v628 = vrot.slane %v625, 4
      %v629 = vrot.slane %v627, 4
      %v630 = vsel %vm215, %v628, %v629
      %vm631 = vcmask 482304
      %v632 = vsel %vm631, %v625, %v630
      %v633 = vsel %vm631, %v627, %v629
      %636 = vst [vmem:[#allocation2 + $0x120] sm:$0xff] %v632
      %637 = vst [vmem:[#allocation2 + $0x128] sm:$0xf] %v633
      %v638 = vld [vmem:[%s171] sm:$0xff]
      %v639 = vld [vmem:[%s171 + $0x8] sm:$0xff]
      %642 = vrot.lane.b32.xlu0 %v638, 58
      %v643 = vpop.permute.xlu0 %642
      %644 = vrot.lane.b32.xlu0 %v639, 58
      %v645 = vpop.permute.xlu0 %644
      %v646 = vrot.slane %v643, 4
      %v647 = vrot.slane %v645, 4
      %v648 = vsel %vm215, %v646, %v647
      %vm649 = vcmask 474112
      %v650 = vsel %vm649, %v643, %v648
      %v651 = vsel %vm649, %v645, %v647
      %654 = vst [vmem:[#allocation2 + $0x12c] sm:$0xff] %v650
      %655 = vst [vmem:[#allocation2 + $0x134] sm:$0xf] %v651
      %v656 = vld [vmem:[%s171] sm:$0xff]
      %v657 = vld [vmem:[%s171 + $0x8] sm:$0xff]
      %660 = vrot.lane.b32.xlu0 %v656, 57
      %v661 = vpop.permute.xlu0 %660
      %662 = vrot.lane.b32.xlu0 %v657, 57
      %v663 = vpop.permute.xlu0 %662
      %v664 = vrot.slane %v661, 4
      %v665 = vrot.slane %v663, 4
      %v666 = vsel %vm215, %v664, %v665
      %vm667 = vcmask 465920
      %v668 = vsel %vm667, %v661, %v666
      %v669 = vsel %vm667, %v663, %v665
      %672 = vst [vmem:[#allocation2 + $0x138] sm:$0xff] %v668
      %673 = vst [vmem:[#allocation2 + $0x140] sm:$0xf] %v669
      %v674 = vld [vmem:[%s171] sm:$0xff]
      %v675 = vld [vmem:[%s171 + $0x8] sm:$0xff]
      %678 = vrot.lane.b32.xlu0 %v674, 56
      %v679 = vpop.permute.xlu0 %678
      %680 = vrot.lane.b32.xlu0 %v675, 56
      %v681 = vpop.permute.xlu0 %680
      %v682 = vrot.slane %v679, 4
      %v683 = vrot.slane %v681, 4
      %v684 = vsel %vm215, %v682, %v683
      %vm685 = vcmask 457728
      %v686 = vsel %vm685, %v679, %v684
      %v687 = vsel %vm685, %v681, %v683
      %690 = vst [vmem:[#allocation2 + $0x144] sm:$0xff] %v686
      %691 = vst [vmem:[#allocation2 + $0x14c] sm:$0xf] %v687
      %v692 = vld [vmem:[%s171] sm:$0xff]
      %v693 = vld [vmem:[%s171 + $0x8] sm:$0xff]
      %696 = vrot.lane.b32.xlu0 %v692, 40
      %v697 = vpop.permute.xlu0 %696
      %698 = vrot.lane.b32.xlu0 %v693, 40
      %v699 = vpop.permute.xlu0 %698
      %v700 = vrot.slane %v697, 4
      %v701 = vrot.slane %v699, 4
      %v702 = vsel %vm215, %v700, %v701
      %vm703 = vcmask 326656
      %v704 = vsel %vm703, %v697, %v702
      %v705 = vsel %vm703, %v699, %v701
      %708 = vst [vmem:[#allocation2 + $0x150] sm:$0xff] %v704
      %709 = vst [vmem:[#allocation2 + $0x158] sm:$0xf] %v705
      %v710 = vld [vmem:[%s171] sm:$0xff]
      %v711 = vld [vmem:[%s171 + $0x8] sm:$0xff]
      %714 = vrot.lane.b32.xlu0 %v710, 39
      %v715 = vpop.permute.xlu0 %714
      %716 = vrot.lane.b32.xlu0 %v711, 39
      %v717 = vpop.permute.xlu0 %716
      %v718 = vrot.slane %v715, 4
      %v719 = vrot.slane %v717, 4
      %v720 = vsel %vm215, %v718, %v719
      %vm721 = vcmask 318464
      %v722 = vsel %vm721, %v715, %v720
      %v723 = vsel %vm721, %v717, %v719
      %726 = vst [vmem:[#allocation2 + $0x15c] sm:$0xff] %v722
      %727 = vst [vmem:[#allocation2 + $0x164] sm:$0xf] %v723
      %v728 = vld [vmem:[%s171] sm:$0xff]
      %v729 = vld [vmem:[%s171 + $0x8] sm:$0xff]
      %732 = vrot.lane.b32.xlu0 %v728, 38
      %v733 = vpop.permute.xlu0 %732
      %734 = vrot.lane.b32.xlu0 %v729, 38
      %v735 = vpop.permute.xlu0 %734
      %v736 = vrot.slane %v733, 4
      %v737 = vrot.slane %v735, 4
      %v738 = vsel %vm215, %v736, %v737
      %vm739 = vcmask 310272
      %v740 = vsel %vm739, %v733, %v738
      %v741 = vsel %vm739, %v735, %v737
      %744 = vst [vmem:[#allocation2 + $0x168] sm:$0xff] %v740
      %745 = vst [vmem:[#allocation2 + $0x170] sm:$0xf] %v741
      %v746 = vld [vmem:[%s171] sm:$0xff]
      %v747 = vld [vmem:[%s171 + $0x8] sm:$0xff]
      %750 = vrot.lane.b32.xlu0 %v746, 37
      %v751 = vpop.permute.xlu0 %750
      %752 = vrot.lane.b32.xlu0 %v747, 37
      %v753 = vpop.permute.xlu0 %752
      %v754 = vrot.slane %v751, 4
      %v755 = vrot.slane %v753, 4
      %v756 = vsel %vm215, %v754, %v755
      %vm757 = vcmask 302080
      %v758 = vsel %vm757, %v751, %v756
      %v759 = vsel %vm757, %v753, %v755
      %762 = vst [vmem:[#allocation2 + $0x174] sm:$0xff] %v758
      %763 = vst [vmem:[#allocation2 + $0x17c] sm:$0xf] %v759
      %v764 = vld [vmem:[%s171] sm:$0xff]
      %v765 = vld [vmem:[%s171 + $0x8] sm:$0xff]
      %768 = vrot.lane.b32.xlu0 %v764, 36
      %v769 = vpop.permute.xlu0 %768
      %770 = vrot.lane.b32.xlu0 %v765, 36
      %v771 = vpop.permute.xlu0 %770
      %v772 = vrot.slane %v769, 4
      %v773 = vrot.slane %v771, 4
      %v774 = vsel %vm215, %v772, %v773
      %vm775 = vcmask 293888
      %v776 = vsel %vm775, %v769, %v774
      %v777 = vsel %vm775, %v771, %v773
      %780 = vst [vmem:[#allocation2 + $0x180] sm:$0xff] %v776
      %781 = vst [vmem:[#allocation2 + $0x188] sm:$0xf] %v777
      %v782 = vld [vmem:[%s171] sm:$0xff]
      %v783 = vld [vmem:[%s171 + $0x8] sm:$0xff]
      %786 = vrot.lane.b32.xlu0 %v782, 35
      %v787 = vpop.permute.xlu0 %786
      %788 = vrot.lane.b32.xlu0 %v783, 35
      %v789 = vpop.permute.xlu0 %788
      %v790 = vrot.slane %v787, 4
      %v791 = vrot.slane %v789, 4
      %v792 = vsel %vm215, %v790, %v791
      %vm793 = vcmask 285696
      %v794 = vsel %vm793, %v787, %v792
      %v795 = vsel %vm793, %v789, %v791
      %798 = vst [vmem:[#allocation2 + $0x18c] sm:$0xff] %v794
      %799 = vst [vmem:[#allocation2 + $0x194] sm:$0xf] %v795
      %v800 = vld [vmem:[%s171] sm:$0xff]
      %v801 = vld [vmem:[%s171 + $0x8] sm:$0xff]
      %804 = vrot.lane.b32.xlu0 %v800, 34
      %v805 = vpop.permute.xlu0 %804
      %806 = vrot.lane.b32.xlu0 %v801, 34
      %v807 = vpop.permute.xlu0 %806
      %v808 = vrot.slane %v805, 4
      %v809 = vrot.slane %v807, 4
      %v810 = vsel %vm215, %v808, %v809
      %vm811 = vcmask 277504
      %v812 = vsel %vm811, %v805, %v810
      %v813 = vsel %vm811, %v807, %v809
      %816 = vst [vmem:[#allocation2 + $0x198] sm:$0xff] %v812
      %817 = vst [vmem:[#allocation2 + $0x1a0] sm:$0xf] %v813
      %v818 = vld [vmem:[%s171] sm:$0xff]
      %v819 = vld [vmem:[%s171 + $0x8] sm:$0xff]
      %822 = vrot.lane.b32.xlu0 %v818, 18
      %v823 = vpop.permute.xlu0 %822
      %824 = vrot.lane.b32.xlu0 %v819, 18
      %v825 = vpop.permute.xlu0 %824
      %v826 = vrot.slane %v823, 4
      %v827 = vrot.slane %v825, 4
      %v828 = vsel %vm215, %v826, %v827
      %vm829 = vcmask 146432
      %v830 = vsel %vm829, %v823, %v828
      %v831 = vsel %vm829, %v825, %v827
      %834 = vst [vmem:[#allocation2 + $0x1a4] sm:$0xff] %v830
      %835 = vst [vmem:[#allocation2 + $0x1ac] sm:$0xf] %v831
      %v836 = vld [vmem:[%s171] sm:$0xff]
      %v837 = vld [vmem:[%s171 + $0x8] sm:$0xff]
      %840 = vrot.lane.b32.xlu0 %v836, 17
      %v841 = vpop.permute.xlu0 %840
      %842 = vrot.lane.b32.xlu0 %v837, 17
      %v843 = vpop.permute.xlu0 %842
      %v844 = vrot.slane %v841, 4
      %v845 = vrot.slane %v843, 4
      %v846 = vsel %vm215, %v844, %v845
      %vm847 = vcmask 138240
      %v848 = vsel %vm847, %v841, %v846
      %v849 = vsel %vm847, %v843, %v845
      %852 = vst [vmem:[#allocation2 + $0x1b0] sm:$0xff] %v848
      %853 = vst [vmem:[#allocation2 + $0x1b8] sm:$0xf] %v849
      %v854 = vld [vmem:[%s171] sm:$0xff]
      %v855 = vld [vmem:[%s171 + $0x8] sm:$0xff]
      %858 = vrot.lane.b32.xlu0 %v854, 16
      %v859 = vpop.permute.xlu0 %858
      %860 = vrot.lane.b32.xlu0 %v855, 16
      %v861 = vpop.permute.xlu0 %860
      %v862 = vrot.slane %v859, 4
      %v863 = vrot.slane %v861, 4
      %v864 = vsel %vm215, %v862, %v863
      %vm865 = vcmask 130048
      %v866 = vsel %vm865, %v859, %v864
      %v867 = vsel %vm865, %v861, %v863
      %870 = vst [vmem:[#allocation2 + $0x1bc] sm:$0xff] %v866
      %871 = vst [vmem:[#allocation2 + $0x1c4] sm:$0xf] %v867
      %v872 = vld [vmem:[%s171] sm:$0xff]
      %v873 = vld [vmem:[%s171 + $0x8] sm:$0xff]
      %876 = vrot.lane.b32.xlu0 %v872, 15
      %v877 = vpop.permute.xlu0 %876
      %878 = vrot.lane.b32.xlu0 %v873, 15
      %v879 = vpop.permute.xlu0 %878
      %v880 = vrot.slane %v877, 4
      %v881 = vrot.slane %v879, 4
      %v882 = vsel %vm215, %v880, %v881
      %vm883 = vcmask 121856
      %v884 = vsel %vm883, %v877, %v882
      %v885 = vsel %vm883, %v879, %v881
      %888 = vst [vmem:[#allocation2 + $0x1c8] sm:$0xff] %v884
      %889 = vst [vmem:[#allocation2 + $0x1d0] sm:$0xf] %v885
      %v890 = vld [vmem:[%s171] sm:$0xff]
      %v891 = vld [vmem:[%s171 + $0x8] sm:$0xff]
      %894 = vrot.lane.b32.xlu0 %v890, 14
      %v895 = vpop.permute.xlu0 %894
      %896 = vrot.lane.b32.xlu0 %v891, 14
      %v897 = vpop.permute.xlu0 %896
      %v898 = vrot.slane %v895, 4
      %v899 = vrot.slane %v897, 4
      %v900 = vsel %vm215, %v898, %v899
      %vm901 = vcmask 113664
      %v902 = vsel %vm901, %v895, %v900
      %v903 = vsel %vm901, %v897, %v899
      %906 = vst [vmem:[#allocation2 + $0x1d4] sm:$0xff] %v902
      %907 = vst [vmem:[#allocation2 + $0x1dc] sm:$0xf] %v903
      %v908 = vld [vmem:[%s171] sm:$0xff]
      %v909 = vld [vmem:[%s171 + $0x8] sm:$0xff]
      %912 = vrot.lane.b32.xlu0 %v908, 13
      %v913 = vpop.permute.xlu0 %912
      %914 = vrot.lane.b32.xlu0 %v909, 13
      %v915 = vpop.permute.xlu0 %914
      %v916 = vrot.slane %v913, 4
      %v917 = vrot.slane %v915, 4
      %v918 = vsel %vm215, %v916, %v917
      %vm919 = vcmask 105472
      %v920 = vsel %vm919, %v913, %v918
      %v921 = vsel %vm919, %v915, %v917
      %924 = vst [vmem:[#allocation2 + $0x1e0] sm:$0xff] %v920
      %925 = vst [vmem:[#allocation2 + $0x1e8] sm:$0xf] %v921
      %v926 = vld [vmem:[%s171] sm:$0xff]
      %v927 = vld [vmem:[%s171 + $0x8] sm:$0xff]
      %930 = vrot.lane.b32.xlu0 %v926, 12
      %v931 = vpop.permute.xlu0 %930
      %932 = vrot.lane.b32.xlu0 %v927, 12
      %v933 = vpop.permute.xlu0 %932
      %v934 = vrot.slane %v931, 4
      %v935 = vrot.slane %v933, 4
      %v936 = vsel %vm215, %v934, %v935
      %vm937 = vcmask 97280
      %v938 = vsel %vm937, %v931, %v936
      %v939 = vsel %vm937, %v933, %v935
      %942 = vst [vmem:[#allocation2 + $0x1ec] sm:$0xff] %v938
      %943 = vst [vmem:[#allocation2 + $0x1f4] sm:$0xf] %v939
      %v944 = vld [vmem:[%s171 + $0x4] sm:$0xff]
      %v945 = vld [vmem:[%s171 + $0xc] sm:$0xff]
      %948 = vrot.lane.b32.xlu0 %v944, 124
      %v949 = vpop.permute.xlu0 %948
      %950 = vrot.lane.b32.xlu0 %v945, 124
      %v951 = vpop.permute.xlu0 %950
      %v952 = vrot.slane %v949, 4
      %v953 = vrot.slane %v951, 4
      %v954 = vsel %vm215, %v952, %v953
      %v955 = vsel %vm271, %v949, %v954
      %v956 = vsel %vm271, %v951, %v953
      %959 = vst [vmem:[#allocation2 + $0x1f8] sm:$0xff] %v955
      %960 = vst [vmem:[#allocation2 + $0x200] sm:$0xf] %v956
      %v961 = vld [vmem:[%s171 + $0x4] sm:$0xff]
      %v962 = vld [vmem:[%s171 + $0xc] sm:$0xff]
      %965 = vrot.lane.b32.xlu0 %v961, 123
      %v966 = vpop.permute.xlu0 %965
      %967 = vrot.lane.b32.xlu0 %v962, 123
      %v968 = vpop.permute.xlu0 %967
      %v969 = vrot.slane %v966, 4
      %v970 = vrot.slane %v968, 4
      %v971 = vsel %vm215, %v969, %v970
      %v972 = vsel %vm289, %v966, %v971
      %v973 = vsel %vm289, %v968, %v970
      %976 = vst [vmem:[#allocation2 + $0x204] sm:$0xff] %v972
      %977 = vst [vmem:[#allocation2 + $0x20c] sm:$0xf] %v973
      %v978 = vld [vmem:[%s171 + $0x4] sm:$0xff]
      %v979 = vld [vmem:[%s171 + $0xc] sm:$0xff]
      %982 = vrot.lane.b32.xlu0 %v978, 122
      %v983 = vpop.permute.xlu0 %982
      %984 = vrot.lane.b32.xlu0 %v979, 122
      %v985 = vpop.permute.xlu0 %984
      %v986 = vrot.slane %v983, 4
      %v987 = vrot.slane %v985, 4
      %v988 = vsel %vm215, %v986, %v987
      %v989 = vsel %vm307, %v983, %v988
      %v990 = vsel %vm307, %v985, %v987
      %993 = vst [vmem:[#allocation2 + $0x210] sm:$0xff] %v989
      %994 = vst [vmem:[#allocation2 + $0x218] sm:$0xf] %v990
      %v995 = vld [vmem:[%s171 + $0x4] sm:$0xff]
      %v996 = vld [vmem:[%s171 + $0xc] sm:$0xff]
      %999 = vrot.lane.b32.xlu0 %v995, 121
      %v1000 = vpop.permute.xlu0 %999
      %1001 = vrot.lane.b32.xlu0 %v996, 121
      %v1002 = vpop.permute.xlu0 %1001
      %v1003 = vrot.slane %v1000, 4
      %v1004 = vrot.slane %v1002, 4
      %v1005 = vsel %vm215, %v1003, %v1004
      %vm1006 = vcmask 990208
      %v1007 = vsel %vm1006, %v1000, %v1005
      %v1008 = vsel %vm1006, %v1002, %v1004
      %1011 = vst [vmem:[#allocation2 + $0x21c] sm:$0xff] %v1007
      %1012 = vst [vmem:[#allocation2 + $0x224] sm:$0xf] %v1008
      %v1013 = vld [vmem:[%s171 + $0x4] sm:$0xff]
      %v1014 = vld [vmem:[%s171 + $0xc] sm:$0xff]
      %1017 = vrot.lane.b32.xlu0 %v1013, 120
      %v1018 = vpop.permute.xlu0 %1017
      %1019 = vrot.lane.b32.xlu0 %v1014, 120
      %v1020 = vpop.permute.xlu0 %1019
      %v1021 = vrot.slane %v1018, 4
      %v1022 = vrot.slane %v1020, 4
      %v1023 = vsel %vm215, %v1021, %v1022
      %vm1024 = vcmask 982016
      %v1025 = vsel %vm1024, %v1018, %v1023
      %v1026 = vsel %vm1024, %v1020, %v1022
      %1029 = vst [vmem:[#allocation2 + $0x228] sm:$0xff] %v1025
      %1030 = vst [vmem:[#allocation2 + $0x230] sm:$0xf] %v1026
      %v1031 = vld [vmem:[%s171 + $0x4] sm:$0xff]
      %v1032 = vld [vmem:[%s171 + $0xc] sm:$0xff]
      %1035 = vrot.lane.b32.xlu0 %v1031, 119
      %v1036 = vpop.permute.xlu0 %1035
      %1037 = vrot.lane.b32.xlu0 %v1032, 119
      %v1038 = vpop.permute.xlu0 %1037
      %v1039 = vrot.slane %v1036, 4
      %v1040 = vrot.slane %v1038, 4
      %v1041 = vsel %vm215, %v1039, %v1040
      %vm1042 = vcmask 973824
      %v1043 = vsel %vm1042, %v1036, %v1041
      %v1044 = vsel %vm1042, %v1038, %v1040
      %1047 = vst [vmem:[#allocation2 + $0x234] sm:$0xff] %v1043
      %1048 = vst [vmem:[#allocation2 + $0x23c] sm:$0xf] %v1044
      %v1049 = vld [vmem:[%s171 + $0x4] sm:$0xff]
      %v1050 = vld [vmem:[%s171 + $0xc] sm:$0xff]
      %1053 = vrot.lane.b32.xlu0 %v1049, 118
      %v1054 = vpop.permute.xlu0 %1053
      %1055 = vrot.lane.b32.xlu0 %v1050, 118
      %v1056 = vpop.permute.xlu0 %1055
      %v1057 = vrot.slane %v1054, 4
      %v1058 = vrot.slane %v1056, 4
      %v1059 = vsel %vm215, %v1057, %v1058
      %vm1060 = vcmask 965632
      %v1061 = vsel %vm1060, %v1054, %v1059
      %v1062 = vsel %vm1060, %v1056, %v1058
      %1065 = vst [vmem:[#allocation2 + $0x240] sm:$0xff] %v1061
      %1066 = vst [vmem:[#allocation2 + $0x248] sm:$0xf] %v1062
      %v1067 = vld [vmem:[%s176] sm:$0xff]
      %v1068 = vld [vmem:[#allocation2] sm:$0xff]
      %v1069 = vld [vmem:[#allocation2 + $0x8] sm:$0xf]
      %v1070 = vld [vmem:[#allocation2 + $0xc] sm:$0xff]
      %v1071 = vld [vmem:[#allocation2 + $0x14] sm:$0xf]
      %v1072 = vld [vmem:[#allocation2 + $0x18] sm:$0xff]
      %v1073 = vld [vmem:[#allocation2 + $0x20] sm:$0xf]
      %v1074 = vld [vmem:[#allocation2 + $0x24] sm:$0xff]
      %v1075 = vld [vmem:[#allocation2 + $0x2c] sm:$0xf]
      %v1076 = vld [vmem:[#allocation2 + $0x30] sm:$0xff]
      %v1077 = vld [vmem:[#allocation2 + $0x38] sm:$0xf]
      %v1078 = vld [vmem:[#allocation2 + $0x3c] sm:$0xff]
      %v1079 = vld [vmem:[#allocation2 + $0x44] sm:$0xf]
      %v1080 = vld [vmem:[#allocation2 + $0x48] sm:$0xff]
      %v1081 = vld [vmem:[#allocation2 + $0x50] sm:$0xf]
      %v1082 = vld [vmem:[#allocation2 + $0x54] sm:$0xff]
      %v1083 = vld [vmem:[#allocation2 + $0x5c] sm:$0xf]
      %v1084 = vld [vmem:[#allocation2 + $0x60] sm:$0xff]
      %v1085 = vld [vmem:[#allocation2 + $0x68] sm:$0xf]
      %v1086 = vld [vmem:[#allocation2 + $0x6c] sm:$0xff]
      %v1087 = vld [vmem:[#allocation2 + $0x74] sm:$0xf]
      %v1088 = vld [vmem:[#allocation2 + $0x78] sm:$0xff]
      %v1089 = vld [vmem:[#allocation2 + $0x80] sm:$0xf]
      %v1090 = vld [vmem:[#allocation2 + $0x84] sm:$0xff]
      %v1091 = vld [vmem:[#allocation2 + $0x8c] sm:$0xf]
      %v1092 = vld [vmem:[#allocation2 + $0x90] sm:$0xff]
      %v1093 = vld [vmem:[#allocation2 + $0x98] sm:$0xf]
      %v1094 = vld [vmem:[#allocation2 + $0x9c] sm:$0xff]
      %v1095 = vld [vmem:[#allocation2 + $0xa4] sm:$0xf]
      %v1096 = vld [vmem:[#allocation2 + $0xa8] sm:$0xff]
      %v1097 = vld [vmem:[#allocation2 + $0xb0] sm:$0xf]
      %v1098 = vld [vmem:[#allocation2 + $0xb4] sm:$0xff]
      %v1099 = vld [vmem:[#allocation2 + $0xbc] sm:$0xf]
      %v1100 = vld [vmem:[#allocation2 + $0xc0] sm:$0xff]
      %v1101 = vld [vmem:[#allocation2 + $0xc8] sm:$0xf]
      %v1102 = vld [vmem:[#allocation2 + $0xcc] sm:$0xff]
      %v1103 = vld [vmem:[#allocation2 + $0xd4] sm:$0xf]
      %v1104 = vld [vmem:[#allocation2 + $0xd8] sm:$0xff]
      %v1105 = vld [vmem:[#allocation2 + $0xe0] sm:$0xf]
      %v1106 = vld [vmem:[#allocation2 + $0xe4] sm:$0xff]
      %v1107 = vld [vmem:[#allocation2 + $0xec] sm:$0xf]
      %v1108 = vld [vmem:[#allocation2 + $0xf0] sm:$0xff]
      %v1109 = vld [vmem:[#allocation2 + $0xf8] sm:$0xf]
      %v1110 = vld [vmem:[#allocation2 + $0xfc] sm:$0xff]
      %v1111 = vld [vmem:[#allocation2 + $0x104] sm:$0xf]
      %v1112 = vld [vmem:[#allocation2 + $0x108] sm:$0xff]
      %v1113 = vld [vmem:[#allocation2 + $0x110] sm:$0xf]
      %v1114 = vld [vmem:[#allocation2 + $0x114] sm:$0xff]
      %v1115 = vld [vmem:[#allocation2 + $0x11c] sm:$0xf]
      %v1116 = vld [vmem:[#allocation2 + $0x120] sm:$0xff]
      %v1117 = vld [vmem:[#allocation2 + $0x128] sm:$0xf]
      %v1118 = vld [vmem:[#allocation2 + $0x12c] sm:$0xff]
      %v1119 = vld [vmem:[#allocation2 + $0x134] sm:$0xf]
      %v1120 = vld [vmem:[#allocation2 + $0x138] sm:$0xff]
      %v1121 = vld [vmem:[#allocation2 + $0x140] sm:$0xf]
      %v1122 = vld [vmem:[#allocation2 + $0x144] sm:$0xff]
      %v1123 = vld [vmem:[#allocation2 + $0x14c] sm:$0xf]
      %v1124 = vld [vmem:[#allocation2 + $0x150] sm:$0xff]
      %v1125 = vld [vmem:[#allocation2 + $0x158] sm:$0xf]
      %v1126 = vld [vmem:[#allocation2 + $0x15c] sm:$0xff]
      %v1127 = vld [vmem:[#allocation2 + $0x164] sm:$0xf]
      %v1128 = vld [vmem:[#allocation2 + $0x168] sm:$0xff]
      %v1129 = vld [vmem:[#allocation2 + $0x170] sm:$0xf]
      %v1130 = vld [vmem:[#allocation2 + $0x174] sm:$0xff]
      %v1131 = vld [vmem:[#allocation2 + $0x17c] sm:$0xf]
      %v1132 = vld [vmem:[#allocation2 + $0x180] sm:$0xff]
      %v1133 = vld [vmem:[#allocation2 + $0x188] sm:$0xf]
      %v1134 = vld [vmem:[#allocation2 + $0x18c] sm:$0xff]
      %v1135 = vld [vmem:[#allocation2 + $0x194] sm:$0xf]
      %v1136 = vld [vmem:[#allocation2 + $0x198] sm:$0xff]
      %v1137 = vld [vmem:[#allocation2 + $0x1a0] sm:$0xf]
      %v1138 = vld [vmem:[#allocation2 + $0x1a4] sm:$0xff]
      %v1139 = vld [vmem:[#allocation2 + $0x1ac] sm:$0xf]
      %v1140 = vld [vmem:[#allocation2 + $0x1b0] sm:$0xff]
      %v1141 = vld [vmem:[#allocation2 + $0x1b8] sm:$0xf]
      %v1142 = vld [vmem:[#allocation2 + $0x1bc] sm:$0xff]
      %v1143 = vld [vmem:[#allocation2 + $0x1c4] sm:$0xf]
      %v1144 = vld [vmem:[#allocation2 + $0x1c8] sm:$0xff]
      %v1145 = vld [vmem:[#allocation2 + $0x1d0] sm:$0xf]
      %v1146 = vld [vmem:[#allocation2 + $0x1d4] sm:$0xff]
      %v1147 = vld [vmem:[#allocation2 + $0x1dc] sm:$0xf]
      %v1148 = vld [vmem:[#allocation2 + $0x1e0] sm:$0xff]
      %v1149 = vld [vmem:[#allocation2 + $0x1e8] sm:$0xf]
      %v1150 = vld [vmem:[#allocation2 + $0x1ec] sm:$0xff]
      %v1151 = vld [vmem:[#allocation2 + $0x1f4] sm:$0xf]
      %v1152 = vld [vmem:[#allocation2 + $0x1f8] sm:$0xff]
      %v1153 = vld [vmem:[#allocation2 + $0x200] sm:$0xf]
      %v1154 = vld [vmem:[#allocation2 + $0x204] sm:$0xff]
      %v1155 = vld [vmem:[#allocation2 + $0x20c] sm:$0xf]
      %v1156 = vld [vmem:[#allocation2 + $0x210] sm:$0xff]
      %v1157 = vld [vmem:[#allocation2 + $0x218] sm:$0xf]
      %v1158 = vld [vmem:[#allocation2 + $0x21c] sm:$0xff]
      %v1159 = vld [vmem:[#allocation2 + $0x224] sm:$0xf]
      %v1160 = vld [vmem:[#allocation2 + $0x228] sm:$0xff]
      %v1161 = vld [vmem:[#allocation2 + $0x230] sm:$0xf]
      %v1162 = vld [vmem:[#allocation2 + $0x234] sm:$0xff]
      %v1163 = vld [vmem:[#allocation2 + $0x23c] sm:$0xf]
      %v1164 = vld [vmem:[#allocation2 + $0x240] sm:$0xff]
      %v1165 = vld [vmem:[#allocation2 + $0x248] sm:$0xf]
      %v1166 = vld [vmem:[#allocation2 + $0x24c] sm:$0x11]
      %v1167 = vld [vmem:[#allocation2 + $0x254] sm:$0x1]
      %1169 = vst [vmem:[#allocation1] ss:$4 sm:$0xff] %v1067
      %v1170 = vld.sshfl [vmem:[#allocation1] sm:$0xff pattern:$0x73625140]
      %v1171 = vld.sshfl [vmem:[#allocation1 + $0x8] sm:$0xff pattern:$0x73625140]
      %v1172 = vld.sshfl [vmem:[#allocation1 + $0x10] sm:$0xff pattern:$0x73625140]
      %v1173 = vld.sshfl [vmem:[#allocation1 + $0x18] sm:$0xff pattern:$0x73625140]
      %v1277 = vunpack.c.l.b16 %v1068
      %v1278 = vunpack.c.h.b16 %v1068
      %v1279 = vunpack.c.l.b16 %v1069
      %v1280 = vunpack.c.l.b16 %v1070
      %v1281 = vunpack.c.h.b16 %v1070
      %v1282 = vunpack.c.l.b16 %v1071
      %v1283 = vunpack.c.l.b16 %v1072
      %v1284 = vunpack.c.h.b16 %v1072
      %v1285 = vunpack.c.l.b16 %v1073
      %v1286 = vunpack.c.l.b16 %v1074
      %v1287 = vunpack.c.h.b16 %v1074
      %v1288 = vunpack.c.l.b16 %v1075
      %v1289 = vunpack.c.l.b16 %v1076
      %v1290 = vunpack.c.h.b16 %v1076
      %v1291 = vunpack.c.l.b16 %v1077
      %v1292 = vunpack.c.l.b16 %v1078
      %v1293 = vunpack.c.h.b16 %v1078
      %v1294 = vunpack.c.l.b16 %v1079
      %v1295 = vunpack.c.l.b16 %v1080
      %v1296 = vunpack.c.h.b16 %v1080
      %v1297 = vunpack.c.l.b16 %v1081
      %v1298 = vunpack.c.l.b16 %v1082
      %v1299 = vunpack.c.h.b16 %v1082
      %v1300 = vunpack.c.l.b16 %v1083
      %v1301 = vunpack.c.l.b16 %v1084
      %v1302 = vunpack.c.h.b16 %v1084
      %v1303 = vunpack.c.l.b16 %v1085
      %v1304 = vunpack.c.l.b16 %v1086
      %v1305 = vunpack.c.h.b16 %v1086
      %v1306 = vunpack.c.l.b16 %v1087
      %v1307 = vunpack.c.l.b16 %v1088
      %v1308 = vunpack.c.h.b16 %v1088
      %v1309 = vunpack.c.l.b16 %v1089
      %v1310 = vunpack.c.l.b16 %v1090
      %v1311 = vunpack.c.h.b16 %v1090
      %v1312 = vunpack.c.l.b16 %v1091
      %v1313 = vunpack.c.l.b16 %v1092
      %v1314 = vunpack.c.h.b16 %v1092
      %v1315 = vunpack.c.l.b16 %v1093
      %v1316 = vunpack.c.l.b16 %v1094
      %v1317 = vunpack.c.h.b16 %v1094
      %v1318 = vunpack.c.l.b16 %v1095
      %v1319 = vunpack.c.l.b16 %v1096
      %v1320 = vunpack.c.h.b16 %v1096
      %v1321 = vunpack.c.l.b16 %v1097
      %v1322 = vunpack.c.l.b16 %v1098
      %v1323 = vunpack.c.h.b16 %v1098
      %v1324 = vunpack.c.l.b16 %v1099
      %v1325 = vunpack.c.l.b16 %v1100
      %v1326 = vunpack.c.h.b16 %v1100
      %v1327 = vunpack.c.l.b16 %v1101
      %v1328 = vunpack.c.l.b16 %v1102
      %v1329 = vunpack.c.h.b16 %v1102
      %v1330 = vunpack.c.l.b16 %v1103
      %v1331 = vunpack.c.l.b16 %v1104
      %v1332 = vunpack.c.h.b16 %v1104
      %v1333 = vunpack.c.l.b16 %v1105
      %v1334 = vunpack.c.l.b16 %v1106
      %v1335 = vunpack.c.h.b16 %v1106
      %v1336 = vunpack.c.l.b16 %v1107
      %v1337 = vunpack.c.l.b16 %v1108
      %v1338 = vunpack.c.h.b16 %v1108
      %v1339 = vunpack.c.l.b16 %v1109
      %v1340 = vunpack.c.l.b16 %v1110
      %v1341 = vunpack.c.h.b16 %v1110
      %v1342 = vunpack.c.l.b16 %v1111
      %v1343 = vunpack.c.l.b16 %v1112
      %v1344 = vunpack.c.h.b16 %v1112
      %v1345 = vunpack.c.l.b16 %v1113
      %v1346 = vunpack.c.l.b16 %v1114
      %v1347 = vunpack.c.h.b16 %v1114
      %v1348 = vunpack.c.l.b16 %v1115
      %v1349 = vunpack.c.l.b16 %v1116
      %v1350 = vunpack.c.h.b16 %v1116
      %v1351 = vunpack.c.l.b16 %v1117
      %v1352 = vunpack.c.l.b16 %v1118
      %v1353 = vunpack.c.h.b16 %v1118
      %v1354 = vunpack.c.l.b16 %v1119
      %v1355 = vunpack.c.l.b16 %v1120
      %v1356 = vunpack.c.h.b16 %v1120
      %v1357 = vunpack.c.l.b16 %v1121
      %v1358 = vunpack.c.l.b16 %v1122
      %v1359 = vunpack.c.h.b16 %v1122
      %v1360 = vunpack.c.l.b16 %v1123
      %v1361 = vunpack.c.l.b16 %v1124
      %v1362 = vunpack.c.h.b16 %v1124
      %v1363 = vunpack.c.l.b16 %v1125
      %v1364 = vunpack.c.l.b16 %v1126
      %v1365 = vunpack.c.h.b16 %v1126
      %v1366 = vunpack.c.l.b16 %v1127
      %v1367 = vunpack.c.l.b16 %v1128
      %v1368 = vunpack.c.h.b16 %v1128
      %v1369 = vunpack.c.l.b16 %v1129
      %v1370 = vunpack.c.l.b16 %v1130
      %v1371 = vunpack.c.h.b16 %v1130
      %v1372 = vunpack.c.l.b16 %v1131
      %v1373 = vunpack.c.l.b16 %v1132
      %v1374 = vunpack.c.h.b16 %v1132
      %v1375 = vunpack.c.l.b16 %v1133
      %v1376 = vunpack.c.l.b16 %v1134
      %v1377 = vunpack.c.h.b16 %v1134
      %v1378 = vunpack.c.l.b16 %v1135
      %v1379 = vunpack.c.l.b16 %v1136
      %v1380 = vunpack.c.h.b16 %v1136
      %v1381 = vunpack.c.l.b16 %v1137
      %v1382 = vunpack.c.l.b16 %v1138
      %v1383 = vunpack.c.h.b16 %v1138
      %v1384 = vunpack.c.l.b16 %v1139
      %v1385 = vunpack.c.l.b16 %v1140
      %v1386 = vunpack.c.h.b16 %v1140
      %v1387 = vunpack.c.l.b16 %v1141
      %v1388 = vunpack.c.l.b16 %v1142
      %v1389 = vunpack.c.h.b16 %v1142
      %v1390 = vunpack.c.l.b16 %v1143
      %v1391 = vunpack.c.l.b16 %v1144
      %v1392 = vunpack.c.h.b16 %v1144
      %v1393 = vunpack.c.l.b16 %v1145
      %v1394 = vunpack.c.l.b16 %v1146
      %v1395 = vunpack.c.h.b16 %v1146
      %v1396 = vunpack.c.l.b16 %v1147
      %v1397 = vunpack.c.l.b16 %v1148
      %v1398 = vunpack.c.h.b16 %v1148
      %v1399 = vunpack.c.l.b16 %v1149
      %v1400 = vunpack.c.l.b16 %v1150
      %v1401 = vunpack.c.h.b16 %v1150
      %v1402 = vunpack.c.l.b16 %v1151
      %v1403 = vunpack.c.l.b16 %v1152
      %v1404 = vunpack.c.h.b16 %v1152
      %v1405 = vunpack.c.l.b16 %v1153
      %v1406 = vunpack.c.l.b16 %v1154
      %v1407 = vunpack.c.h.b16 %v1154
      %v1408 = vunpack.c.l.b16 %v1155
      %v1409 = vunpack.c.l.b16 %v1156
      %v1410 = vunpack.c.h.b16 %v1156
      %v1411 = vunpack.c.l.b16 %v1157
      %v1412 = vunpack.c.l.b16 %v1158
      %v1413 = vunpack.c.h.b16 %v1158
      %v1414 = vunpack.c.l.b16 %v1159
      %v1415 = vunpack.c.l.b16 %v1160
      %v1416 = vunpack.c.h.b16 %v1160
      %v1417 = vunpack.c.l.b16 %v1161
      %v1418 = vunpack.c.l.b16 %v1162
      %v1419 = vunpack.c.h.b16 %v1162
      %v1420 = vunpack.c.l.b16 %v1163
      %v1421 = vunpack.c.l.b16 %v1164
      %v1422 = vunpack.c.h.b16 %v1164
      %v1423 = vunpack.c.l.b16 %v1165
      %v1424 = vunpack.c.l.b16 %v1166
      %v1425 = vunpack.c.h.b16 %v1166
      %v1426 = vunpack.c.l.b16 %v1167
      %v1427 = vpack.c.b16 %v1280, %v1277
      %v1428 = vpack.c.b16 %v1281, %v1278
      %v1429 = vpack.c.b16 %v1282, %v1279
      %v1430 = vpack.c.b16 %v1286, %v1283
      %v1431 = vpack.c.b16 %v1287, %v1284
      %v1432 = vpack.c.b16 %v1288, %v1285
      %v1433 = vpack.c.b16 %v1292, %v1289
      %v1434 = vpack.c.b16 %v1293, %v1290
      %v1435 = vpack.c.b16 %v1294, %v1291
      %v1436 = vpack.c.b16 %v1298, %v1295
      %v1437 = vpack.c.b16 %v1299, %v1296
      %v1438 = vpack.c.b16 %v1300, %v1297
      %v1439 = vpack.c.b16 %v1304, %v1301
      %v1440 = vpack.c.b16 %v1305, %v1302
      %v1441 = vpack.c.b16 %v1306, %v1303
      %v1442 = vpack.c.b16 %v1310, %v1307
      %v1443 = vpack.c.b16 %v1311, %v1308
      %v1444 = vpack.c.b16 %v1312, %v1309
      %v1445 = vpack.c.b16 %v1316, %v1313
      %v1446 = vpack.c.b16 %v1317, %v1314
      %v1447 = vpack.c.b16 %v1318, %v1315
      %v1448 = vpack.c.b16 %v1322, %v1319
      %v1449 = vpack.c.b16 %v1323, %v1320
      %v1450 = vpack.c.b16 %v1324, %v1321
      %v1451 = vpack.c.b16 %v1328, %v1325
      %v1452 = vpack.c.b16 %v1329, %v1326
      %v1453 = vpack.c.b16 %v1330, %v1327
      %v1454 = vpack.c.b16 %v1334, %v1331
      %v1455 = vpack.c.b16 %v1335, %v1332
      %v1456 = vpack.c.b16 %v1336, %v1333
      %v1457 = vpack.c.b16 %v1340, %v1337
      %v1458 = vpack.c.b16 %v1341, %v1338
      %v1459 = vpack.c.b16 %v1342, %v1339
      %v1460 = vpack.c.b16 %v1346, %v1343
      %v1461 = vpack.c.b16 %v1347, %v1344
      %v1462 = vpack.c.b16 %v1348, %v1345
      %v1463 = vpack.c.b16 %v1352, %v1349
      %v1464 = vpack.c.b16 %v1353, %v1350
      %v1465 = vpack.c.b16 %v1354, %v1351
      %v1466 = vpack.c.b16 %v1358, %v1355
      %v1467 = vpack.c.b16 %v1359, %v1356
      %v1468 = vpack.c.b16 %v1360, %v1357
      %v1469 = vpack.c.b16 %v1364, %v1361
      %v1470 = vpack.c.b16 %v1365, %v1362
      %v1471 = vpack.c.b16 %v1366, %v1363
      %v1472 = vpack.c.b16 %v1370, %v1367
      %v1473 = vpack.c.b16 %v1371, %v1368
      %v1474 = vpack.c.b16 %v1372, %v1369
      %v1475 = vpack.c.b16 %v1376, %v1373
      %v1476 = vpack.c.b16 %v1377, %v1374
      %v1477 = vpack.c.b16 %v1378, %v1375
      %v1478 = vpack.c.b16 %v1382, %v1379
      %v1479 = vpack.c.b16 %v1383, %v1380
      %v1480 = vpack.c.b16 %v1384, %v1381
      %v1481 = vpack.c.b16 %v1388, %v1385
      %v1482 = vpack.c.b16 %v1389, %v1386
      %v1483 = vpack.c.b16 %v1390, %v1387
      %v1484 = vpack.c.b16 %v1394, %v1391
      %v1485 = vpack.c.b16 %v1395, %v1392
      %v1486 = vpack.c.b16 %v1396, %v1393
      %v1487 = vpack.c.b16 %v1400, %v1397
      %v1488 = vpack.c.b16 %v1401, %v1398
      %v1489 = vpack.c.b16 %v1402, %v1399
      %v1490 = vpack.c.b16 %v1406, %v1403
      %v1491 = vpack.c.b16 %v1407, %v1404
      %v1492 = vpack.c.b16 %v1408, %v1405
      %v1493 = vpack.c.b16 %v1412, %v1409
      %v1494 = vpack.c.b16 %v1413, %v1410
      %v1495 = vpack.c.b16 %v1414, %v1411
      %v1496 = vpack.c.b16 %v1418, %v1415
      %v1497 = vpack.c.b16 %v1419, %v1416
      %v1498 = vpack.c.b16 %v1420, %v1417
      %v1499 = vpack.c.b16 %v1424, %v1421
      %v1500 = vpack.c.b16 %v1425, %v1422
      %v1501 = vpack.c.b16 %v1426, %v1423
      %vm1574 = vcmask 72704
      %v1575 = vsel %vm1574, %v1173, 0
      %vm1577 = vcmask 1043456
      %vm1578 = vcmask 1044480
      %v1579 = vsel %vm1577, 4294967295, 65535
      %v1580 = vsel %vm1578, %v1579, 0
      %v1582 = vand.u32 %v1499, %v1580
      %v1585 = vand.u32 %v1500, %v1580
      %v1588 = vand.u32 %v1501, %v1580
      %1590 = vmatpush.bf16.msra.mxu0 %v1448
      %1591 = vmatpush.bf16.msra.mxu0 %v1445
      %1592 = vmatpush.bf16.msra.mxu0 %v1442
      %1593 = vmatpush.bf16.msra.mxu0 %v1439
      %1594 = vmatpush.bf16.msra.mxu0 %v1436
      %1595 = vmatpush.bf16.msra.mxu0 %v1433
      %1596 = vmatpush.bf16.msra.mxu0 %v1430
      %1597 = vmatpush.bf16.msra.mxu0 %v1427
      %1598 = vmatmul.bf16.gmra.mxu0 %v1170
      %v1599 = vpop.f32.mrf.mxu0
      %v1600 = vadd.f32 0.0, %v1599
      %v1601 = vpop.f32.mrf.mxu0
      %1602 = vdwg.mxu0
      %1603 = vmatpush.bf16.msra.mxu0 %v1472
      %1604 = vmatpush.bf16.msra.mxu0 %v1469
      %1605 = vmatpush.bf16.msra.mxu0 %v1466
      %1606 = vmatpush.bf16.msra.mxu0 %v1463
      %1607 = vmatpush.bf16.msra.mxu0 %v1460
      %1608 = vmatpush.bf16.msra.mxu0 %v1457
      %1609 = vmatpush.bf16.msra.mxu0 %v1454
      %1610 = vmatpush.bf16.msra.mxu0 %v1451
      %1611 = vmatmul.bf16.gmra.mxu0 %v1171
      %v1612 = vpop.f32.mrf.mxu0
      %v1613 = vadd.f32 %v1600, %v1612
      %v1614 = vpop.f32.mrf.mxu0
      %1615 = vdwg.mxu0
      %1616 = vmatpush.bf16.msra.mxu0 %v1496
      %1617 = vmatpush.bf16.msra.mxu0 %v1493
      %1618 = vmatpush.bf16.msra.mxu0 %v1490
      %1619 = vmatpush.bf16.msra.mxu0 %v1487
      %1620 = vmatpush.bf16.msra.mxu0 %v1484
      %1621 = vmatpush.bf16.msra.mxu0 %v1481
      %1622 = vmatpush.bf16.msra.mxu0 %v1478
      %1623 = vmatpush.bf16.msra.mxu0 %v1475
      %1624 = vmatmul.bf16.gmra.mxu0 %v1172
      %v1625 = vpop.f32.mrf.mxu0
      %v1626 = vadd.f32 %v1613, %v1625
      %v1627 = vpop.f32.mrf.mxu0
      %1628 = vdwg.mxu0
      %1629 = vmatpush.bf16.msra.mxu0 0
      %1630 = vmatpush.bf16.msra.mxu0 0
      %1631 = vmatpush.bf16.msra.mxu0 0
      %1632 = vmatpush.bf16.msra.mxu0 0
      %1633 = vmatpush.bf16.msra.mxu0 0
      %1634 = vmatpush.bf16.msra.mxu0 0
      %1635 = vmatpush.bf16.msra.mxu0 0
      %1636 = vmatpush.bf16.msra.mxu0 %v1582
      %1637 = vmatmul.bf16.gmra.mxu0 %v1575
      %v1638 = vpop.f32.mrf.mxu0
      %v1639 = vadd.f32 %v1626, %v1638
      %v1640 = vpop.f32.mrf.mxu0
      %1641 = vdwg.mxu0
      %1642 = vmatpush.bf16.msra.mxu0 %v1449
      %1643 = vmatpush.bf16.msra.mxu0 %v1446
      %1644 = vmatpush.bf16.msra.mxu0 %v1443
      %1645 = vmatpush.bf16.msra.mxu0 %v1440
      %1646 = vmatpush.bf16.msra.mxu0 %v1437
      %1647 = vmatpush.bf16.msra.mxu0 %v1434
      %1648 = vmatpush.bf16.msra.mxu0 %v1431
      %1649 = vmatpush.bf16.msra.mxu0 %v1428
      %1650 = vmatmul.bf16.gmra.mxu0 %v1170
      %v1651 = vpop.f32.mrf.mxu0
      %v1652 = vadd.f32 0.0, %v1651
      %v1653 = vpop.f32.mrf.mxu0
      %1654 = vdwg.mxu0
      %1655 = vmatpush.bf16.msra.mxu0 %v1473
      %1656 = vmatpush.bf16.msra.mxu0 %v1470
      %1657 = vmatpush.bf16.msra.mxu0 %v1467
      %1658 = vmatpush.bf16.msra.mxu0 %v1464
      %1659 = vmatpush.bf16.msra.mxu0 %v1461
      %1660 = vmatpush.bf16.msra.mxu0 %v1458
      %1661 = vmatpush.bf16.msra.mxu0 %v1455
      %1662 = vmatpush.bf16.msra.mxu0 %v1452
      %1663 = vmatmul.bf16.gmra.mxu0 %v1171
      %v1664 = vpop.f32.mrf.mxu0
      %v1665 = vadd.f32 %v1652, %v1664
      %v1666 = vpop.f32.mrf.mxu0
      %1667 = vdwg.mxu0
      %1668 = vmatpush.bf16.msra.mxu0 %v1497
      %1669 = vmatpush.bf16.msra.mxu0 %v1494
      %1670 = vmatpush.bf16.msra.mxu0 %v1491
      %1671 = vmatpush.bf16.msra.mxu0 %v1488
      %1672 = vmatpush.bf16.msra.mxu0 %v1485
      %1673 = vmatpush.bf16.msra.mxu0 %v1482
      %1674 = vmatpush.bf16.msra.mxu0 %v1479
      %1675 = vmatpush.bf16.msra.mxu0 %v1476
      %1676 = vmatmul.bf16.gmra.mxu0 %v1172
      %v1677 = vpop.f32.mrf.mxu0
      %v1678 = vadd.f32 %v1665, %v1677
      %v1679 = vpop.f32.mrf.mxu0
      %1680 = vdwg.mxu0
      %1681 = vmatpush.bf16.msra.mxu0 0
      %1682 = vmatpush.bf16.msra.mxu0 0
      %1683 = vmatpush.bf16.msra.mxu0 0
      %1684 = vmatpush.bf16.msra.mxu0 0
      %1685 = vmatpush.bf16.msra.mxu0 0
      %1686 = vmatpush.bf16.msra.mxu0 0
      %1687 = vmatpush.bf16.msra.mxu0 0
      %1688 = vmatpush.bf16.msra.mxu0 %v1585
      %1689 = vmatmul.bf16.gmra.mxu0 %v1575
      %v1690 = vpop.f32.mrf.mxu0
      %v1691 = vadd.f32 %v1678, %v1690
      %v1692 = vpop.f32.mrf.mxu0
      %1693 = vdwg.mxu0
      %1694 = vmatpush.bf16.msra.mxu0 %v1450
      %1695 = vmatpush.bf16.msra.mxu0 %v1447
      %1696 = vmatpush.bf16.msra.mxu0 %v1444
      %1697 = vmatpush.bf16.msra.mxu0 %v1441
      %1698 = vmatpush.bf16.msra.mxu0 %v1438
      %1699 = vmatpush.bf16.msra.mxu0 %v1435
      %1700 = vmatpush.bf16.msra.mxu0 %v1432
      %1701 = vmatpush.bf16.msra.mxu0 %v1429
      %1702 = vmatmul.bf16.gmra.mxu0 %v1170
      %v1703 = vpop.f32.mrf.mxu0
      %v1704 = vadd.f32 0.0, %v1703
      %v1705 = vpop.f32.mrf.mxu0
      %1706 = vdwg.mxu0
      %1707 = vmatpush.bf16.msra.mxu0 %v1474
      %1708 = vmatpush.bf16.msra.mxu0 %v1471
      %1709 = vmatpush.bf16.msra.mxu0 %v1468
      %1710 = vmatpush.bf16.msra.mxu0 %v1465
      %1711 = vmatpush.bf16.msra.mxu0 %v1462
      %1712 = vmatpush.bf16.msra.mxu0 %v1459
      %1713 = vmatpush.bf16.msra.mxu0 %v1456
      %1714 = vmatpush.bf16.msra.mxu0 %v1453
      %1715 = vmatmul.bf16.gmra.mxu0 %v1171
      %v1716 = vpop.f32.mrf.mxu0
      %v1717 = vadd.f32 %v1704, %v1716
      %v1718 = vpop.f32.mrf.mxu0
      %1719 = vdwg.mxu0
      %1720 = vmatpush.bf16.msra.mxu0 %v1498
      %1721 = vmatpush.bf16.msra.mxu0 %v1495
      %1722 = vmatpush.bf16.msra.mxu0 %v1492
      %1723 = vmatpush.bf16.msra.mxu0 %v1489
      %1724 = vmatpush.bf16.msra.mxu0 %v1486
      %1725 = vmatpush.bf16.msra.mxu0 %v1483
      %1726 = vmatpush.bf16.msra.mxu0 %v1480
      %1727 = vmatpush.bf16.msra.mxu0 %v1477
      %1728 = vmatmul.bf16.gmra.mxu0 %v1172
      %v1729 = vpop.f32.mrf.mxu0
      %v1730 = vadd.f32 %v1717, %v1729
      %v1731 = vpop.f32.mrf.mxu0
      %1732 = vdwg.mxu0
      %1733 = vmatpush.bf16.msra.mxu0 0
      %1734 = vmatpush.bf16.msra.mxu0 0
      %1735 = vmatpush.bf16.msra.mxu0 0
      %1736 = vmatpush.bf16.msra.mxu0 0
      %1737 = vmatpush.bf16.msra.mxu0 0
      %1738 = vmatpush.bf16.msra.mxu0 0
      %1739 = vmatpush.bf16.msra.mxu0 0
      %1740 = vmatpush.bf16.msra.mxu0 %v1588
      %1741 = vmatmul.bf16.gmra.mxu0 %v1575
      %v1742 = vpop.f32.mrf.mxu0
      %v1743 = vadd.f32 %v1730, %v1742
      %v1744 = vpop.f32.mrf.mxu0
      %1745 = vdwg.mxu0
      %v1746 = vtanh.pop %v1639
      %v1747 = vtanh.pop %v1691
      %v1748 = vtanh.pop %v1743
      %v1751 = vrot.slane %v1747, 4
      %v1752 = vsel %vm1577, %v1746, %v1751
      %1754 = vst [vmem:[%s185] sm:$0x77] %v1752
      %1755 = vst [vmem:[%s185 + $0x8] sm:$0x7] %v1748
      %p1756 = scmp.lt.s32.totalorder %s17, 1
      %s1757 = scalar_select %p1756, %s17, 1
      %p1758 = scmp.lt.s32.totalorder %s18, 0
      %s1759 = scalar_select %p1758, %s18, 0
      %s1760 = smul.addr %s1759, 3
      %s1761 = smul.addr %s1757, 3
      %s1762 = sadd.s32 %s1760, %s1761
      %s1763 = smul.addr %s1762, 4
      %s1764 = scalar_lea.vmem %s2, %s1763
      // Predicated region
      $region29: #{resnet_generator_forward.19} parent=27 // pred_check
        %p1765 = pneg %p97
      $region30: #{resnet_generator_forward.19} parent=27 // pred_check_branch
        %1767 = sbr.rel (%p1765) target = $region32
      $region31: #{resnet_generator_forward.19} parent=27 // pred_region
        _
      $region32: #{resnet_generator_forward.19} parent=27 // pred_fallthru
        _
    $region28: #{resnet_generator_forward.19} parent=5 // pred_fallthru
      _
    %p1768 = scmp.le.s32.totalorder 2, %s8
    // Predicated region
    $region33: #{resnet_generator_forward.19} parent=5 // pred_check
      %p1769 = pneg %p1768
    $region34: #{resnet_generator_forward.19} parent=5 // pred_check_branch
      %1771 = sbr.rel (%p1769) target = $region36
    $region35: #{resnet_generator_forward.19} parent=5 // pred_region
      %s1772 = ssub.s32 %s8, 2
      // Predicated region
      $region37: #{resnet_generator_forward.19} parent=35 // pred_check
        %p1773 = pneg %p103
      $region38: #{resnet_generator_forward.19} parent=35 // pred_check_branch
        %1775 = sbr.rel (%p1773) target = $region40
      $region39: #{resnet_generator_forward.19} parent=35 // pred_region
        %p1776 = scmp.lt.s32.totalorder %s19, 1
        %s1777 = scalar_select %p1776, %s19, 1
        %p1778 = scmp.lt.s32.totalorder %s20, 0
        %s1779 = scalar_select %p1778, %s20, 0
        %s1780 = smul.addr %s1779, 3
        %s1781 = smul.addr %s1777, 3
        %s1782 = sadd.s32 %s1780, %s1781
        %s1783 = smul.addr %s1782, 4
        %s1784 = scalar_lea.vmem %s2, %s1783
      $region40: #{resnet_generator_forward.19} parent=35 // pred_fallthru
        _
    $region36: #{resnet_generator_forward.19} parent=5 // pred_fallthru
      _
  $region6: #{resnet_generator_forward.19} parent=0 // loop_footer
    %s12 = sadd.s32 1, %s8
  $region7: #{resnet_generator_forward.19} parent=0 // loop_footer_branch
    %7 = sbr.rel target = $region3
  $region8: #{resnet_generator_forward.19} parent=0 // loop_exit
    _

</llo_original>
